<compile_context>
chip_gen: v5e
topology: v5e:2x2
jax: 0.10.0
libtpu: 0.0.40
codegen_flags: <defaults>
</compile_context>

<pallas_src>
import jax
import jax.numpy as jnp
from jax import lax
from jax.experimental import pallas as pl
from jax.experimental.pallas import tpu as pltpu

EPS = 1e-3


def _fused_add_conv1x1_bn_kernel(a_ref, b_ref, w_ref, gamma_ref, beta_ref, o_ref):
    # a_ref, b_ref: (Cin, M)  float32  -- resident across the whole grid
    # w_ref:        (TN, Cin) f32/bf16 -- streamed Cout tile of the 1x1 conv weight
    # gamma/beta:   (TN, 1)   float32
    # o_ref:        (TN, M)   float32
    x = a_ref[...] + b_ref[...]                                   # residual add (VPU, tiny)
    w = w_ref[...].astype(jnp.float32)                            # no-op for f32 weights
    y = jnp.dot(w, x, preferred_element_type=jnp.float32)         # 1x1 conv == matmul (MXU)

    m = y.shape[1]
    inv_m = 1.0 / m
    mean = jnp.sum(y, axis=1, keepdims=True) * inv_m              # (TN, 1)
    yc = y - mean
    var = jnp.sum(yc * yc, axis=1, keepdims=True) * inv_m         # centered (two-pass) variance
    inv_std = lax.rsqrt(var + EPS)                                # EUP

    scale = gamma_ref[...] * inv_std                              # (TN, 1)
    o_ref[...] = yc * scale + beta_ref[...]                       # one fused mul+add pass


def _pick_tile_n(cout):
    # 2 grid steps for Cout=2304: one tile per TensorCore on v7x ("parallel"),
    # two cheap sequential steps on v5e/v6e.  Per-step overhead dominates any
    # DMA/compute-overlap benefit of finer tiling for this HBM-bound op.
    tn = 1152
    while tn > 8 and cout % tn:
        tn //= 2
    if cout % tn:
        tn = cout
    return tn


def fused_add_conv1x1_bn(x622, x607, conv_w, gamma, beta, *, tile_n=None):
    """x622, x607: (N, Cin, H, W) NCHW float32.
       conv_w:     (Cout, Cin) or (Cout, Cin, 1, 1) 1x1 conv weight; may already be
                   bf16 (cast once at parameter-load time) to halve weight HBM bytes.
       gamma,beta: (Cout,) BatchNorm affine params.
       returns     (N, Cout, H, W) NCHW float32 (training-mode batch-stat BN)."""
    N, Cin, H, W = x622.shape
    Cout = conv_w.shape[0]
    M = N * H * W

    if tile_n is None:
        tile_n = _pick_tile_n(Cout)

    # Channels-major flatten.  For N == 1 this is a free reshape of NCHW memory.
    if N == 1:
        a = x622.reshape(Cin, M)
        b = x607.reshape(Cin, M)
    else:
        a = jnp.transpose(x622, (1, 0, 2, 3)).reshape(Cin, M)
        b = jnp.transpose(x607, (1, 0, 2, 3)).reshape(Cin, M)

    w = conv_w.reshape(Cout, Cin)          # no transpose needed in this layout
    g = gamma.reshape(Cout, 1).astype(jnp.float32)
    bt = beta.reshape(Cout, 1).astype(jnp.float32)

    grid = (Cout // tile_n,)

    out_flat = pl.pallas_call(
        _fused_add_conv1x1_bn_kernel,
        out_shape=jax.ShapeDtypeStruct((Cout, M), jnp.float32),
        grid_spec=pltpu.PrefetchScalarGridSpec(
            num_scalar_prefetch=0,
            grid=grid,
            in_specs=[
                pl.BlockSpec((Cin, M), lambda j: (0, 0)),        # resident activations
                pl.BlockSpec((Cin, M), lambda j: (0, 0)),
                pl.BlockSpec((tile_n, Cin), lambda j: (j, 0)),   # streamed weight tile
                pl.BlockSpec((tile_n, 1), lambda j: (j, 0)),
                pl.BlockSpec((tile_n, 1), lambda j: (j, 0)),
            ],
            out_specs=pl.BlockSpec((tile_n, M), lambda j: (j, 0)),
        ),
        compiler_params=pltpu.CompilerParams(
            dimension_semantics=("parallel",),       # Cout tiles are independent
            vmem_limit_bytes=24 << 20,               # working set < 6 MiB; headroom
        ),
    )(a, b, w, g, bt)

    # (Cout, M) -> NCHW (free reshape for N == 1)
    if N == 1:
        return out_flat.reshape(1, Cout, H, W)
    return jnp.transpose(out_flat.reshape(Cout, N, H, W), (1, 0, 2, 3))


def _reference(x622, x607, conv_w, gamma, beta):
    x = x622 + x607                                         # (N, Cin, H, W)
    y = jnp.einsum("oc,nchw->nohw", conv_w, x)              # 1x1 conv, no bias
    axes = (0, 2, 3)
    mean = jnp.mean(y, axis=axes, keepdims=True)
    var = jnp.mean((y - mean) ** 2, axis=axes, keepdims=True)   # biased (training mode)
    g = gamma.reshape(1, -1, 1, 1)
    b = beta.reshape(1, -1, 1, 1)
    return (y - mean) / jnp.sqrt(var + EPS) * g + b


if __name__ == "__main__":
    N, Cin, H, W = 1, 384, 7, 7
    Cout = 2304

    key = jax.random.PRNGKey(0)
    k1, k2, k3, k4, k5 = jax.random.split(key, 5)

    x622 = jax.random.normal(k1, (N, Cin, H, W), dtype=jnp.float32)
    x607 = jax.random.normal(k2, (N, Cin, H, W), dtype=jnp.float32)

    # Conv2d(384, 2304, 1, bias=False) weight, squeezed to (Cout, Cin)
    conv_w = jax.random.normal(k3, (Cout, Cin), dtype=jnp.float32) * 0.02
    # BatchNorm affine params (perturbed from default ones/zeros to be nontrivial)
    gamma = 1.0 + 0.1 * jax.random.normal(k4, (Cout,), dtype=jnp.float32)
    beta = 0.1 * jax.random.normal(k5, (Cout,), dtype=jnp.float32)

    # --- exact f32 weight path (module semantics), checked at 1e-3 vs f32 ref ---
    out = jax.block_until_ready(fused_add_conv1x1_bn(x622, x607, conv_w, gamma, beta))
    ref = _reference(x622, x607, conv_w, gamma, beta)
    assert out.shape == (N, Cout, H, W), out.shape
    assert jnp.allclose(out, ref, atol=1e-3, rtol=1e-3), "f32 path mismatch vs reference"

    # --- bf16 weight-stream path (halves dominant HBM traffic).  Verified against
    #     a reference using the SAME quantized weight, so this is a tight kernel
    #     check, not a silently loosened semantic tolerance.  Cast is done once
    #     here, standing in for "at parameter load time". ---
    conv_w_bf16 = conv_w.astype(jnp.bfloat16)
    out_bf16 = jax.block_until_ready(
        fused_add_conv1x1_bn(x622, x607, conv_w_bf16, gamma, beta))
    ref_bf16 = _reference(x622, x607, conv_w_bf16.astype(jnp.float32), gamma, beta)
    assert out_bf16.shape == (N, Cout, H, W), out_bf16.shape
    assert jnp.allclose(out_bf16, ref_bf16, atol=2e-3, rtol=2e-3), \
        "bf16-weight path mismatch vs matched reference"

    print("KERNEL_OK")
</pallas_src>

<mosaic_0001>
module attributes {stable_mosaic.version = 11 : i64} {
  func.func @_fused_add_conv1x1_bn_kernel(%arg0: i32, %arg1: memref<384x49xf32, #tpu.memory_space<vmem>>, %arg2: memref<384x49xf32, #tpu.memory_space<vmem>>, %arg3: memref<1152x384xf32, #tpu.memory_space<vmem>>, %arg4: memref<1152x1xf32, #tpu.memory_space<vmem>>, %arg5: memref<1152x1xf32, #tpu.memory_space<vmem>>, %arg6: memref<1152x49xf32, #tpu.memory_space<vmem>>) attributes {dimension_semantics = [#tpu.dimension_semantics<parallel>], iteration_bounds = array<i64: 2>, scalar_prefetch = 0 : i64, scratch_operands = 0 : i64, tpu.core_type = #tpu.core_type<tc>, window_params = [{pipeline_mode = #tpu.pipeline_mode<synchronous>, transform_indices = @transform_0, window_bounds = array<i64: 384, 49>}, {pipeline_mode = #tpu.pipeline_mode<synchronous>, transform_indices = @transform_1, window_bounds = array<i64: 384, 49>}, {transform_indices = @transform_2, window_bounds = array<i64: 1152, 384>}, {transform_indices = @transform_3, window_bounds = array<i64: 1152, 1>}, {transform_indices = @transform_4, window_bounds = array<i64: 1152, 1>}, {transform_indices = @transform_5, window_bounds = array<i64: 1152, 49>}]} {
    %c0 = arith.constant 0 : index
    %c0_0 = arith.constant 0 : index
    %0 = vector.load %arg1[%c0, %c0_0] : memref<384x49xf32, #tpu.memory_space<vmem>>, vector<384x49xf32>
    %c0_1 = arith.constant 0 : index
    %c0_2 = arith.constant 0 : index
    %1 = vector.load %arg2[%c0_1, %c0_2] : memref<384x49xf32, #tpu.memory_space<vmem>>, vector<384x49xf32>
    %2 = arith.addf %0, %1 : vector<384x49xf32>
    %c0_3 = arith.constant 0 : index
    %c0_4 = arith.constant 0 : index
    %3 = vector.load %arg3[%c0_3, %c0_4] : memref<1152x384xf32, #tpu.memory_space<vmem>>, vector<1152x384xf32>
    %cst = arith.constant dense<0.000000e+00> : vector<1152x49xf32>
    %4 = tpu.matmul %3, %2, %cst {dimension_numbers = #tpu.dot_dimension_numbers<[1], [0], [0], [1], [0, 0, 1, 1], [], []>} : vector<1152x384xf32>, vector<384x49xf32>, vector<1152x49xf32> -> vector<1152x49xf32>
    %cst_5 = arith.constant dense<0.000000e+00> : vector<1152xf32>
    %5 = vector.multi_reduction <add>, %4, %cst_5 [1] : vector<1152x49xf32> to vector<1152xf32>
    %6 = vector.shape_cast %5 : vector<1152xf32> to vector<1152x1xf32>
    %cst_6 = arith.constant 0.0204081628 : f32
    %7 = vector.broadcast %cst_6 : f32 to vector<1152x1xf32>
    %8 = arith.mulf %6, %7 : vector<1152x1xf32>
    %9 = vector.broadcast %8 : vector<1152x1xf32> to vector<1152x49xf32>
    %10 = arith.subf %4, %9 : vector<1152x49xf32>
    %11 = arith.mulf %10, %10 : vector<1152x49xf32>
    %cst_7 = arith.constant dense<0.000000e+00> : vector<1152xf32>
    %12 = vector.multi_reduction <add>, %11, %cst_7 [1] : vector<1152x49xf32> to vector<1152xf32>
    %13 = vector.shape_cast %12 : vector<1152xf32> to vector<1152x1xf32>
    %cst_8 = arith.constant 0.0204081628 : f32
    %14 = vector.broadcast %cst_8 : f32 to vector<1152x1xf32>
    %15 = arith.mulf %13, %14 : vector<1152x1xf32>
    %cst_9 = arith.constant 1.000000e-03 : f32
    %16 = vector.broadcast %cst_9 : f32 to vector<1152x1xf32>
    %17 = arith.addf %15, %16 : vector<1152x1xf32>
    %18 = math.rsqrt %17 : vector<1152x1xf32>
    %c0_10 = arith.constant 0 : index
    %c0_11 = arith.constant 0 : index
    %19 = vector.load %arg4[%c0_10, %c0_11] : memref<1152x1xf32, #tpu.memory_space<vmem>>, vector<1152x1xf32>
    %20 = arith.mulf %19, %18 : vector<1152x1xf32>
    %21 = vector.broadcast %20 : vector<1152x1xf32> to vector<1152x49xf32>
    %22 = arith.mulf %10, %21 : vector<1152x49xf32>
    %c0_12 = arith.constant 0 : index
    %c0_13 = arith.constant 0 : index
    %23 = vector.load %arg5[%c0_12, %c0_13] : memref<1152x1xf32, #tpu.memory_space<vmem>>, vector<1152x1xf32>
    %24 = vector.broadcast %23 : vector<1152x1xf32> to vector<1152x49xf32>
    %25 = arith.addf %22, %24 : vector<1152x49xf32>
    %c0_14 = arith.constant 0 : index
    %c0_15 = arith.constant 0 : index
    %26 = vector.load %arg6[%c0_14, %c0_15] : memref<1152x49xf32, #tpu.memory_space<vmem>>, vector<1152x49xf32>
    tpu.vector_store %arg6[%c0_14, %c0_15], %25 {strides = array<i32>} : memref<1152x49xf32, #tpu.memory_space<vmem>>, vector<1152x49xf32>,
    return
  }
  func.func @transform_0(%arg0: i32) -> (i32, i32) {
    %c0_i32 = arith.constant 0 : i32
    %c0_i32_0 = arith.constant 0 : i32
    %c0_i32_1 = arith.constant 0 : i32
    return %c0_i32, %c0_i32_0 : i32, i32
  }
  func.func @transform_1(%arg0: i32) -> (i32, i32) {
    %c0_i32 = arith.constant 0 : i32
    %c0_i32_0 = arith.constant 0 : i32
    %c0_i32_1 = arith.constant 0 : i32
    return %c0_i32, %c0_i32_0 : i32, i32
  }
  func.func @transform_2(%arg0: i32) -> (i32, i32) {
    %c0_i32 = arith.constant 0 : i32
    %c0_i32_0 = arith.constant 0 : i32
    return %arg0, %c0_i32 : i32, i32
  }
  func.func @transform_3(%arg0: i32) -> (i32, i32) {
    %c0_i32 = arith.constant 0 : i32
    %c0_i32_0 = arith.constant 0 : i32
    return %arg0, %c0_i32 : i32, i32
  }
  func.func @transform_4(%arg0: i32) -> (i32, i32) {
    %c0_i32 = arith.constant 0 : i32
    %c0_i32_0 = arith.constant 0 : i32
    return %arg0, %c0_i32 : i32, i32
  }
  func.func @transform_5(%arg0: i32) -> (i32, i32) {
    %c0_i32 = arith.constant 0 : i32
    %c0_i32_0 = arith.constant 0 : i32
    return %arg0, %c0_i32 : i32, i32
  }
}

</mosaic_0001>

<llo_original>
// kernel: tpu_custom_call.1
$region0: #{tpu_custom_call.1}
  #allocation0 [shape = 'u32[]', space=smem, size = 0x4, offset = 0x4, fixed_abs, tag = 'smem constant byte address 0x4 - core index']
  #allocation1 [shape = 'u32[72,128]{1,0:T(1,128)}', space=vmem, size = 0x9000, scoped, tag = 'internal scratch']
  %s0 = inlined_call_operand.vmem [shape: f32[384,49], index: 0, kind: input, shape index: {}]
  %s1 = inlined_call_operand.vmem [shape: f32[384,49], index: 1, kind: input, shape index: {}]
  %s2 = inlined_call_operand.hbm [shape: f32[2304,384], index: 2, kind: input, shape index: {}]
  %s3 = inlined_call_operand.vmem [shape: f32[2304,1], index: 3, kind: input, shape index: {}]
  %s4 = inlined_call_operand.vmem [shape: f32[2304,1], index: 4, kind: input, shape index: {}]
  %s5 = inlined_call_operand.vmem [shape: f32[2304,49], index: 5, kind: output, shape index: {}]
  %s6 = sld [smem:[#allocation0]]
  $region57: #{tpu_custom_call.1} parent=0
    _
  %s8 = ssub.s32 1, %s6
  %s9 = scalar_select 0, %s8, %s6
  $region1: #{tpu_custom_call.1} parent=0
    #allocation2 [shape = 'u8[3538944]{0}', space=vmem, size = 0x360000, scoped, tag = 'input window, operand 2']
    #allocation3 [shape = 's32[2]{0}', space=sflag, size = 0x8, scoped, tag = 'scoped memory for tpu_custom_call.1']
    %10 = vsyncpa [#allocation3], 0
    %s11 = scalar_lea.sflag [#allocation3], 1
    %12 = vsyncpa %s11, 0
    loop: start=0, step=1, limit=4
    $region2: #{tpu_custom_call.1} parent=1 // loop_pre_header
      _
    $region3: #{tpu_custom_call.1} parent=1 // loop_header
      %s14 = sphi 0, %s18
      %p15 = scmp.ge.s32.totalorder %s14, 4
      %s22 = sphi 0, %s22
      %s24 = sphi 0, %s22
      %s25 = sphi 0, %s24
      %s39 = sphi 0, %s25
      %s43 = sphi 0, %s43
      %s45 = sphi 0, %s43
      %s46 = sphi 0, %s45
      %s60 = sphi 0, %s46
      %s66 = sphi 0, %s68
      %s69 = sphi 0, %s66
      %s70 = sphi 0, %s69
      %s86 = sphi 0, %s70
      %s92 = sphi 0, %s94
      %s95 = sphi 0, %s92
      %s96 = sphi 0, %s95
      %s112 = sphi 0, %s96
      %s118 = sphi 0, %s120
      %s121 = sphi 0, %s118
      %s122 = sphi 0, %s121
      %s138 = sphi 0, %s122
      %s144 = sphi 0, %s146
      %s147 = sphi 0, %s144
      %s148 = sphi 0, %s147
      %s164 = sphi 0, %s148
    $region4: #{tpu_custom_call.1} parent=1 // loop_header_branch
      %17 = sbr.rel (%p15) target = $region8
    $region5: #{tpu_custom_call.1} parent=1 // loop_body
      %s19 = ssub.s32 %s14, 1
      %s20 = ssub.s32 %s14, 2
      %s21 = sadd.s32 %s14, 1
      %s23 = sadd.s32 %s22, 1
      %p26 = scmp.eq.s32.totalorder %s14, 1
      %p27 = scmp.ne.s32.totalorder %s22, %s24
      %p28 = scmp.eq.s32.totalorder %s14, 0
      %p29 = por %p27, %p28
      %p30 = scmp.ne.s32.totalorder %s22, %s24
      %p31 = scmp.eq.s32.totalorder %s19, 1
      %p32 = por %p30, %p31
      %p33 = scmp.ne.s32.totalorder %s24, %s25
      %p34 = scmp.eq.s32.totalorder %s19, 0
      %p35 = por %p33, %p34
      %p36 = scmp.ne.s32.totalorder %s24, %s25
      %p37 = scmp.eq.s32.totalorder %s20, 1
      %p38 = por %p36, %p37
      %p40 = scmp.ne.s32.totalorder %s25, %s39
      %p41 = scmp.eq.s32.totalorder %s20, 0
      %p42 = por %p40, %p41
      %s44 = sadd.s32 %s43, 1
      %p47 = scmp.eq.s32.totalorder %s14, 1
      %p48 = scmp.ne.s32.totalorder %s43, %s45
      %p49 = scmp.eq.s32.totalorder %s14, 0
      %p50 = por %p48, %p49
      %p51 = scmp.ne.s32.totalorder %s43, %s45
      %p52 = scmp.eq.s32.totalorder %s19, 1
      %p53 = por %p51, %p52
      %p54 = scmp.ne.s32.totalorder %s45, %s46
      %p55 = scmp.eq.s32.totalorder %s19, 0
      %p56 = por %p54, %p55
      %p57 = scmp.ne.s32.totalorder %s45, %s46
      %p58 = scmp.eq.s32.totalorder %s20, 1
      %p59 = por %p57, %p58
      %p61 = scmp.ne.s32.totalorder %s46, %s60
      %p62 = scmp.eq.s32.totalorder %s20, 0
      %p63 = por %p61, %p62
      %s64 = ssub.s32 %s14, %s21
      %p65 = scmp.eq.s32.totalorder %s64, 0
      %s67 = sadd.s32 %s66, 1
      %s68 = scalar_select %p65, %s66, %s67
      %p71 = pneg %p65
      %p72 = scmp.eq.s32.totalorder %s14, 1
      %p73 = por %p71, %p72
      %p74 = scmp.ne.s32.totalorder %s66, %s69
      %p75 = scmp.eq.s32.totalorder %s14, 0
      %p76 = por %p74, %p75
      %p77 = scmp.ne.s32.totalorder %s66, %s69
      %p78 = scmp.eq.s32.totalorder %s19, 1
      %p79 = por %p77, %p78
      %p80 = scmp.ne.s32.totalorder %s69, %s70
      %p81 = scmp.eq.s32.totalorder %s19, 0
      %p82 = por %p80, %p81
      %p83 = scmp.ne.s32.totalorder %s69, %s70
      %p84 = scmp.eq.s32.totalorder %s20, 1
      %p85 = por %p83, %p84
      %p87 = scmp.ne.s32.totalorder %s70, %s86
      %p88 = scmp.eq.s32.totalorder %s20, 0
      %p89 = por %p87, %p88
      %s90 = ssub.s32 %s14, %s21
      %p91 = scmp.eq.s32.totalorder %s90, 0
      %s93 = sadd.s32 %s92, 1
      %s94 = scalar_select %p91, %s92, %s93
      %p97 = pneg %p91
      %p98 = scmp.eq.s32.totalorder %s14, 1
      %p99 = por %p97, %p98
      %p100 = scmp.ne.s32.totalorder %s92, %s95
      %p101 = scmp.eq.s32.totalorder %s14, 0
      %p102 = por %p100, %p101
      %p103 = scmp.ne.s32.totalorder %s92, %s95
      %p104 = scmp.eq.s32.totalorder %s19, 1
      %p105 = por %p103, %p104
      %p106 = scmp.ne.s32.totalorder %s95, %s96
      %p107 = scmp.eq.s32.totalorder %s19, 0
      %p108 = por %p106, %p107
      %p109 = scmp.ne.s32.totalorder %s95, %s96
      %p110 = scmp.eq.s32.totalorder %s20, 1
      %p111 = por %p109, %p110
      %p113 = scmp.ne.s32.totalorder %s96, %s112
      %p114 = scmp.eq.s32.totalorder %s20, 0
      %p115 = por %p113, %p114
      %s116 = ssub.s32 %s14, %s21
      %p117 = scmp.eq.s32.totalorder %s116, 0
      %s119 = sadd.s32 %s118, 1
      %s120 = scalar_select %p117, %s118, %s119
      %p123 = pneg %p117
      %p124 = scmp.eq.s32.totalorder %s14, 1
      %p125 = por %p123, %p124
      %p126 = scmp.ne.s32.totalorder %s118, %s121
      %p127 = scmp.eq.s32.totalorder %s14, 0
      %p128 = por %p126, %p127
      %p129 = scmp.ne.s32.totalorder %s118, %s121
      %p130 = scmp.eq.s32.totalorder %s19, 1
      %p131 = por %p129, %p130
      %p132 = scmp.ne.s32.totalorder %s121, %s122
      %p133 = scmp.eq.s32.totalorder %s19, 0
      %p134 = por %p132, %p133
      %p135 = scmp.ne.s32.totalorder %s121, %s122
      %p136 = scmp.eq.s32.totalorder %s20, 1
      %p137 = por %p135, %p136
      %p139 = scmp.ne.s32.totalorder %s122, %s138
      %p140 = scmp.eq.s32.totalorder %s20, 0
      %p141 = por %p139, %p140
      %s142 = ssub.s32 %s14, %s21
      %p143 = scmp.eq.s32.totalorder %s142, 0
      %s145 = sadd.s32 %s144, 1
      %s146 = scalar_select %p143, %s144, %s145
      %p149 = pneg %p143
      %p150 = scmp.eq.s32.totalorder %s14, 1
      %p151 = por %p149, %p150
      %p152 = scmp.ne.s32.totalorder %s144, %s147
      %p153 = scmp.eq.s32.totalorder %s14, 0
      %p154 = por %p152, %p153
      %p155 = scmp.ne.s32.totalorder %s144, %s147
      %p156 = scmp.eq.s32.totalorder %s19, 1
      %p157 = por %p155, %p156
      %p158 = scmp.ne.s32.totalorder %s147, %s148
      %p159 = scmp.eq.s32.totalorder %s19, 0
      %p160 = por %p158, %p159
      %p161 = scmp.ne.s32.totalorder %s147, %s148
      %p162 = scmp.eq.s32.totalorder %s20, 1
      %p163 = por %p161, %p162
      %p165 = scmp.ne.s32.totalorder %s148, %s164
      %p166 = scmp.eq.s32.totalorder %s20, 0
      %p167 = por %p165, %p166
      %p168 = scmp.le.s32.totalorder 1, %s14
      %p169 = scmp.lt.s32.totalorder %s14, 3
      %p170 = pnand %p168, %p169
      %p171 = pneg %p170
      // Predicated region
      $region9: #{tpu_custom_call.1} parent=5 // pred_check
        _
      $region10: #{tpu_custom_call.1} parent=5 // pred_check_branch
        %173 = sbr.rel (%p170) target = $region12
      $region11: #{tpu_custom_call.1} parent=5 // pred_region
        %s174 = ssub.s32 %s14, 1
        // Predicated region
        $region13: #{tpu_custom_call.1} parent=11 // pred_check
          %p175 = pneg %p35
        $region14: #{tpu_custom_call.1} parent=11 // pred_check_branch
          %177 = sbr.rel (%p175) target = $region16
        $region15: #{tpu_custom_call.1} parent=11 // pred_region
          _
        $region16: #{tpu_custom_call.1} parent=11 // pred_fallthru
          _
        // Predicated region
        $region17: #{tpu_custom_call.1} parent=11 // pred_check
          %p178 = pneg %p56
        $region18: #{tpu_custom_call.1} parent=11 // pred_check_branch
          %180 = sbr.rel (%p178) target = $region20
        $region19: #{tpu_custom_call.1} parent=11 // pred_region
          _
        $region20: #{tpu_custom_call.1} parent=11 // pred_fallthru
          _
      $region12: #{tpu_custom_call.1} parent=5 // pred_fallthru
        _
      %p181 = scmp.lt.s32.totalorder %s14, 2
      // Predicated region
      $region21: #{tpu_custom_call.1} parent=5 // pred_check
        %p182 = pneg %p181
      $region22: #{tpu_custom_call.1} parent=5 // pred_check_branch
        %184 = sbr.rel (%p182) target = $region24
      $region23: #{tpu_custom_call.1} parent=5 // pred_region
        // Predicated region
        $region25: #{tpu_custom_call.1} parent=23 // pred_check
          %p185 = pneg %p76
        $region26: #{tpu_custom_call.1} parent=23 // pred_check_branch
          %187 = sbr.rel (%p185) target = $region28
        $region27: #{tpu_custom_call.1} parent=23 // pred_region
          %s188 = sand.u32 %s66, 1
          %s189 = scalar_lea.sflag [#allocation3], %s188
          %s190 = sand.u32 %s66, 1
          %s191 = smul.addr %s190, 3456
          %s192 = scalar_lea.vmem [#allocation2], %s191
          %s193 = smul.u32 144, %s14
          %195 = vsyncadd %s189, 0
          %s196 = smul.addr %s193, 3
          %s197 = smul.addr %s196, 8
          %s198 = scalar_lea.hbm %s2, %s197
          %s199 = sshll.u32 %s198, 4
          %s200 = int_to_ptr.hbm [resolvable:$true] %s199
          %s201 = sshll.u32 %s192, 4
          %s202 = int_to_ptr.vmem [resolvable:$true] %s201
          %207 = dma.hbm_to_vmem [thread:$0]  %s200, 55296, %s202, %s189, 384, 384, 24
        $region28: #{tpu_custom_call.1} parent=23 // pred_fallthru
          _
        // Predicated region
        $region29: #{tpu_custom_call.1} parent=23 // pred_check
          %p208 = pneg %p102
        $region30: #{tpu_custom_call.1} parent=23 // pred_check_branch
          %210 = sbr.rel (%p208) target = $region32
        $region31: #{tpu_custom_call.1} parent=23 // pred_region
          %s211 = smul.u32 144, %s14
          %p212 = scmp.lt.s32.totalorder %s211, 287
          %s213 = scalar_select %p212, %s211, 287
          %s214 = smul.addr %s213, 8
          %s215 = scalar_lea.vmem %s3, %s214
          %s216 = smul.u32 144, %s14
        $region32: #{tpu_custom_call.1} parent=23 // pred_fallthru
          _
        // Predicated region
        $region33: #{tpu_custom_call.1} parent=23 // pred_check
          %p217 = pneg %p128
        $region34: #{tpu_custom_call.1} parent=23 // pred_check_branch
          %219 = sbr.rel (%p217) target = $region36
        $region35: #{tpu_custom_call.1} parent=23 // pred_region
          %s220 = smul.u32 144, %s14
          %p221 = scmp.lt.s32.totalorder %s220, 287
          %s222 = scalar_select %p221, %s220, 287
          %s223 = smul.addr %s222, 8
          %s224 = scalar_lea.vmem %s4, %s223
          %s225 = smul.u32 144, %s14
        $region36: #{tpu_custom_call.1} parent=23 // pred_fallthru
          _
      $region24: #{tpu_custom_call.1} parent=5 // pred_fallthru
        _
      %p226 = scmp.le.s32.totalorder 1, %s14
      %p227 = scmp.lt.s32.totalorder %s14, 3
      %p228 = pnand %p226, %p227
      %p229 = pneg %p228
      // Predicated region
      $region37: #{tpu_custom_call.1} parent=5 // pred_check
        _
      $region38: #{tpu_custom_call.1} parent=5 // pred_check_branch
        %231 = sbr.rel (%p228) target = $region40
      $region39: #{tpu_custom_call.1} parent=5 // pred_region
        %s232 = ssub.s32 %s14, 1
        %s233 = sand.u32 %s69, 1
        %s234 = scalar_lea.sflag [#allocation3], %s233
        %s235 = sand.u32 %s69, 1
        %s236 = smul.addr %s235, 3456
        %s237 = scalar_lea.vmem [#allocation2], %s236
        // Predicated region
        $region41: #{tpu_custom_call.1} parent=39 // pred_check
          %p238 = pneg %p82
        $region42: #{tpu_custom_call.1} parent=39 // pred_check_branch
          %240 = sbr.rel (%p238) target = $region44
        $region43: #{tpu_custom_call.1} parent=39 // pred_region
          %242 = dma.done %s234, 55296
        $region44: #{tpu_custom_call.1} parent=39 // pred_fallthru
          _
        %p243 = pneg %p35
        %p244 = pneg %p32
        %p245 = pneg %p56
        %p246 = pneg %p53
        %s247 = sand.u32 %s69, 1
        %s248 = scalar_lea.sflag [#allocation3], %s247
        %s249 = sand.u32 %s69, 1
        %s250 = smul.addr %s249, 3456
        %s251 = scalar_lea.vmem [#allocation2], %s250
        %p252 = pneg %p82
        %p253 = pneg %p79
        %s254 = smul.u32 144, %s19
        %p255 = scmp.lt.s32.totalorder %s254, 287
        %s256 = scalar_select %p255, %s254, 287
        %s257 = smul.addr %s256, 8
        %s258 = scalar_lea.vmem %s3, %s257
        %p259 = pneg %p108
        %p260 = pneg %p105
        %s261 = smul.u32 144, %s19
        %p262 = scmp.lt.s32.totalorder %s261, 287
        %s263 = scalar_select %p262, %s261, 287
        %s264 = smul.addr %s263, 8
        %s265 = scalar_lea.vmem %s4, %s264
        %p266 = pneg %p134
        %p267 = pneg %p131
        %p268 = pneg %p160
        %p269 = pneg %p157
        %s270 = smul.u32 144, %s19
        %p271 = scmp.lt.s32.totalorder %s270, 287
        %s272 = scalar_select %p271, %s270, 287
        %s273 = smul.addr %s272, 8
        %s274 = scalar_lea.vmem %s5, %s273
        %s275 = smul.u32 144, %s19
        %s276 = smul.u32 144, %s19
        %p277 = scmp.lt.s32.totalorder %s276, 287
        %s278 = scalar_select %p277, %s276, 287
        %s279 = smul.addr %s278, 8
        %s280 = scalar_lea.vmem %s3, %s279
        %s281 = smul.u32 144, %s19
        %s282 = smul.u32 144, %s19
        %p283 = scmp.lt.s32.totalorder %s282, 287
        %s284 = scalar_select %p283, %s282, 287
        %s285 = smul.addr %s284, 8
        %s286 = scalar_lea.vmem %s4, %s285
        %s287 = smul.u32 144, %s19
        %s288 = smul.u32 144, %s19
        %p289 = scmp.lt.s32.totalorder %s288, 287
        %s290 = scalar_select %p289, %s288, 287
        %s291 = smul.addr %s290, 8
        %s292 = scalar_lea.vmem %s5, %s291
        %s293 = smul.u32 144, %s19
        %v294 = vld [vmem:[%s0] sm:$0xff]
        %v295 = vld [vmem:[%s0 + $0x8] sm:$0xff]
        %v296 = vld [vmem:[%s0 + $0x10] sm:$0xff]
        %v297 = vld [vmem:[%s0 + $0x18] sm:$0xff]
        %v298 = vld [vmem:[%s0 + $0x20] sm:$0xff]
        %v299 = vld [vmem:[%s0 + $0x28] sm:$0xff]
        %v300 = vld [vmem:[%s0 + $0x30] sm:$0xff]
        %v301 = vld [vmem:[%s0 + $0x38] sm:$0xff]
        %v302 = vld [vmem:[%s0 + $0x40] sm:$0xff]
        %v303 = vld [vmem:[%s0 + $0x48] sm:$0xff]
        %v304 = vld [vmem:[%s0 + $0x50] sm:$0xff]
        %v305 = vld [vmem:[%s0 + $0x58] sm:$0xff]
        %v306 = vld [vmem:[%s0 + $0x60] sm:$0xff]
        %v307 = vld [vmem:[%s0 + $0x68] sm:$0xff]
        %v308 = vld [vmem:[%s0 + $0x70] sm:$0xff]
        %v309 = vld [vmem:[%s0 + $0x78] sm:$0xff]
        %v310 = vld [vmem:[%s0 + $0x80] sm:$0xff]
        %v311 = vld [vmem:[%s0 + $0x88] sm:$0xff]
        %v312 = vld [vmem:[%s0 + $0x90] sm:$0xff]
        %v313 = vld [vmem:[%s0 + $0x98] sm:$0xff]
        %v314 = vld [vmem:[%s0 + $0xa0] sm:$0xff]
        %v315 = vld [vmem:[%s0 + $0xa8] sm:$0xff]
        %v316 = vld [vmem:[%s0 + $0xb0] sm:$0xff]
        %v317 = vld [vmem:[%s0 + $0xb8] sm:$0xff]
        %v318 = vld [vmem:[%s0 + $0xc0] sm:$0xff]
        %v319 = vld [vmem:[%s0 + $0xc8] sm:$0xff]
        %v320 = vld [vmem:[%s0 + $0xd0] sm:$0xff]
        %v321 = vld [vmem:[%s0 + $0xd8] sm:$0xff]
        %v322 = vld [vmem:[%s0 + $0xe0] sm:$0xff]
        %v323 = vld [vmem:[%s0 + $0xe8] sm:$0xff]
        %v324 = vld [vmem:[%s0 + $0xf0] sm:$0xff]
        %v325 = vld [vmem:[%s0 + $0xf8] sm:$0xff]
        %v326 = vld [vmem:[%s0 + $0x100] sm:$0xff]
        %v327 = vld [vmem:[%s0 + $0x108] sm:$0xff]
        %v328 = vld [vmem:[%s0 + $0x110] sm:$0xff]
        %v329 = vld [vmem:[%s0 + $0x118] sm:$0xff]
        %v330 = vld [vmem:[%s0 + $0x120] sm:$0xff]
        %v331 = vld [vmem:[%s0 + $0x128] sm:$0xff]
        %v332 = vld [vmem:[%s0 + $0x130] sm:$0xff]
        %v333 = vld [vmem:[%s0 + $0x138] sm:$0xff]
        %v334 = vld [vmem:[%s0 + $0x140] sm:$0xff]
        %v335 = vld [vmem:[%s0 + $0x148] sm:$0xff]
        %v336 = vld [vmem:[%s0 + $0x150] sm:$0xff]
        %v337 = vld [vmem:[%s0 + $0x158] sm:$0xff]
        %v338 = vld [vmem:[%s0 + $0x160] sm:$0xff]
        %v339 = vld [vmem:[%s0 + $0x168] sm:$0xff]
        %v340 = vld [vmem:[%s0 + $0x170] sm:$0xff]
        %v341 = vld [vmem:[%s0 + $0x178] sm:$0xff]
        %v342 = vld [vmem:[%s1] sm:$0xff]
        %v343 = vld [vmem:[%s1 + $0x8] sm:$0xff]
        %v344 = vld [vmem:[%s1 + $0x10] sm:$0xff]
        %v345 = vld [vmem:[%s1 + $0x18] sm:$0xff]
        %v346 = vld [vmem:[%s1 + $0x20] sm:$0xff]
        %v347 = vld [vmem:[%s1 + $0x28] sm:$0xff]
        %v348 = vld [vmem:[%s1 + $0x30] sm:$0xff]
        %v349 = vld [vmem:[%s1 + $0x38] sm:$0xff]
        %v350 = vld [vmem:[%s1 + $0x40] sm:$0xff]
        %v351 = vld [vmem:[%s1 + $0x48] sm:$0xff]
        %v352 = vld [vmem:[%s1 + $0x50] sm:$0xff]
        %v353 = vld [vmem:[%s1 + $0x58] sm:$0xff]
        %v354 = vld [vmem:[%s1 + $0x60] sm:$0xff]
        %v355 = vld [vmem:[%s1 + $0x68] sm:$0xff]
        %v356 = vld [vmem:[%s1 + $0x70] sm:$0xff]
        %v357 = vld [vmem:[%s1 + $0x78] sm:$0xff]
        %v358 = vld [vmem:[%s1 + $0x80] sm:$0xff]
        %v359 = vld [vmem:[%s1 + $0x88] sm:$0xff]
        %v360 = vld [vmem:[%s1 + $0x90] sm:$0xff]
        %v361 = vld [vmem:[%s1 + $0x98] sm:$0xff]
        %v362 = vld [vmem:[%s1 + $0xa0] sm:$0xff]
        %v363 = vld [vmem:[%s1 + $0xa8] sm:$0xff]
        %v364 = vld [vmem:[%s1 + $0xb0] sm:$0xff]
        %v365 = vld [vmem:[%s1 + $0xb8] sm:$0xff]
        %v366 = vld [vmem:[%s1 + $0xc0] sm:$0xff]
        %v367 = vld [vmem:[%s1 + $0xc8] sm:$0xff]
        %v368 = vld [vmem:[%s1 + $0xd0] sm:$0xff]
        %v369 = vld [vmem:[%s1 + $0xd8] sm:$0xff]
        %v370 = vld [vmem:[%s1 + $0xe0] sm:$0xff]
        %v371 = vld [vmem:[%s1 + $0xe8] sm:$0xff]
        %v372 = vld [vmem:[%s1 + $0xf0] sm:$0xff]
        %v373 = vld [vmem:[%s1 + $0xf8] sm:$0xff]
        %v374 = vld [vmem:[%s1 + $0x100] sm:$0xff]
        %v375 = vld [vmem:[%s1 + $0x108] sm:$0xff]
        %v376 = vld [vmem:[%s1 + $0x110] sm:$0xff]
        %v377 = vld [vmem:[%s1 + $0x118] sm:$0xff]
        %v378 = vld [vmem:[%s1 + $0x120] sm:$0xff]
        %v379 = vld [vmem:[%s1 + $0x128] sm:$0xff]
        %v380 = vld [vmem:[%s1 + $0x130] sm:$0xff]
        %v381 = vld [vmem:[%s1 + $0x138] sm:$0xff]
        %v382 = vld [vmem:[%s1 + $0x140] sm:$0xff]
        %v383 = vld [vmem:[%s1 + $0x148] sm:$0xff]
        %v384 = vld [vmem:[%s1 + $0x150] sm:$0xff]
        %v385 = vld [vmem:[%s1 + $0x158] sm:$0xff]
        %v386 = vld [vmem:[%s1 + $0x160] sm:$0xff]
        %v387 = vld [vmem:[%s1 + $0x168] sm:$0xff]
        %v388 = vld [vmem:[%s1 + $0x170] sm:$0xff]
        %v389 = vld [vmem:[%s1 + $0x178] sm:$0xff]
        %v390 = vadd.f32 %v294, %v342
        %v391 = vadd.f32 %v295, %v343
        %v392 = vadd.f32 %v296, %v344
        %v393 = vadd.f32 %v297, %v345
        %v394 = vadd.f32 %v298, %v346
        %v395 = vadd.f32 %v299, %v347
        %v396 = vadd.f32 %v300, %v348
        %v397 = vadd.f32 %v301, %v349
        %v398 = vadd.f32 %v302, %v350
        %v399 = vadd.f32 %v303, %v351
        %v400 = vadd.f32 %v304, %v352
        %v401 = vadd.f32 %v305, %v353
        %v402 = vadd.f32 %v306, %v354
        %v403 = vadd.f32 %v307, %v355
        %v404 = vadd.f32 %v308, %v356
        %v405 = vadd.f32 %v309, %v357
        %v406 = vadd.f32 %v310, %v358
        %v407 = vadd.f32 %v311, %v359
        %v408 = vadd.f32 %v312, %v360
        %v409 = vadd.f32 %v313, %v361
        %v410 = vadd.f32 %v314, %v362
        %v411 = vadd.f32 %v315, %v363
        %v412 = vadd.f32 %v316, %v364
        %v413 = vadd.f32 %v317, %v365
        %v414 = vadd.f32 %v318, %v366
        %v415 = vadd.f32 %v319, %v367
        %v416 = vadd.f32 %v320, %v368
        %v417 = vadd.f32 %v321, %v369
        %v418 = vadd.f32 %v322, %v370
        %v419 = vadd.f32 %v323, %v371
        %v420 = vadd.f32 %v324, %v372
        %v421 = vadd.f32 %v325, %v373
        %v422 = vadd.f32 %v326, %v374
        %v423 = vadd.f32 %v327, %v375
        %v424 = vadd.f32 %v328, %v376
        %v425 = vadd.f32 %v329, %v377
        %v426 = vadd.f32 %v330, %v378
        %v427 = vadd.f32 %v331, %v379
        %v428 = vadd.f32 %v332, %v380
        %v429 = vadd.f32 %v333, %v381
        %v430 = vadd.f32 %v334, %v382
        %v431 = vadd.f32 %v335, %v383
        %v432 = vadd.f32 %v336, %v384
        %v433 = vadd.f32 %v337, %v385
        %v434 = vadd.f32 %v338, %v386
        %v435 = vadd.f32 %v339, %v387
        %v436 = vadd.f32 %v340, %v388
        %v437 = vadd.f32 %v341, %v389
        %v438 = vld [vmem:[%s237] sm:$0xff]
        %v439 = vld [vmem:[%s237 + $0x8] sm:$0xff]
        %v440 = vld [vmem:[%s237 + $0x10] sm:$0xff]
        %v441 = vld [vmem:[%s237 + $0x18] sm:$0xff]
        %v442 = vld [vmem:[%s237 + $0x20] sm:$0xff]
        %v443 = vld [vmem:[%s237 + $0x28] sm:$0xff]
        %v444 = vld [vmem:[%s237 + $0x30] sm:$0xff]
        %v445 = vld [vmem:[%s237 + $0x38] sm:$0xff]
        %v446 = vld [vmem:[%s237 + $0x40] sm:$0xff]
        %v447 = vld [vmem:[%s237 + $0x48] sm:$0xff]
        %v448 = vld [vmem:[%s237 + $0x50] sm:$0xff]
        %v449 = vld [vmem:[%s237 + $0x58] sm:$0xff]
        %v450 = vld [vmem:[%s237 + $0x60] sm:$0xff]
        %v451 = vld [vmem:[%s237 + $0x68] sm:$0xff]
        %v452 = vld [vmem:[%s237 + $0x70] sm:$0xff]
        %v453 = vld [vmem:[%s237 + $0x78] sm:$0xff]
        %v454 = vld [vmem:[%s237 + $0x80] sm:$0xff]
        %v455 = vld [vmem:[%s237 + $0x88] sm:$0xff]
        %v456 = vld [vmem:[%s237 + $0x90] sm:$0xff]
        %v457 = vld [vmem:[%s237 + $0x98] sm:$0xff]
        %v458 = vld [vmem:[%s237 + $0xa0] sm:$0xff]
        %v459 = vld [vmem:[%s237 + $0xa8] sm:$0xff]
        %v460 = vld [vmem:[%s237 + $0xb0] sm:$0xff]
        %v461 = vld [vmem:[%s237 + $0xb8] sm:$0xff]
        %v462 = vld [vmem:[%s237 + $0xc0] sm:$0xff]
        %v463 = vld [vmem:[%s237 + $0xc8] sm:$0xff]
        %v464 = vld [vmem:[%s237 + $0xd0] sm:$0xff]
        %v465 = vld [vmem:[%s237 + $0xd8] sm:$0xff]
        %v466 = vld [vmem:[%s237 + $0xe0] sm:$0xff]
        %v467 = vld [vmem:[%s237 + $0xe8] sm:$0xff]
        %v468 = vld [vmem:[%s237 + $0xf0] sm:$0xff]
        %v469 = vld [vmem:[%s237 + $0xf8] sm:$0xff]
        %v470 = vld [vmem:[%s237 + $0x100] sm:$0xff]
        %v471 = vld [vmem:[%s237 + $0x108] sm:$0xff]
        %v472 = vld [vmem:[%s237 + $0x110] sm:$0xff]
        %v473 = vld [vmem:[%s237 + $0x118] sm:$0xff]
        %v474 = vld [vmem:[%s237 + $0x120] sm:$0xff]
        %v475 = vld [vmem:[%s237 + $0x128] sm:$0xff]
        %v476 = vld [vmem:[%s237 + $0x130] sm:$0xff]
        %v477 = vld [vmem:[%s237 + $0x138] sm:$0xff]
        %v478 = vld [vmem:[%s237 + $0x140] sm:$0xff]
        %v479 = vld [vmem:[%s237 + $0x148] sm:$0xff]
        %v480 = vld [vmem:[%s237 + $0x150] sm:$0xff]
        %v481 = vld [vmem:[%s237 + $0x158] sm:$0xff]
        %v482 = vld [vmem:[%s237 + $0x160] sm:$0xff]
        %v483 = vld [vmem:[%s237 + $0x168] sm:$0xff]
        %v484 = vld [vmem:[%s237 + $0x170] sm:$0xff]
        %v485 = vld [vmem:[%s237 + $0x178] sm:$0xff]
        %v486 = vld [vmem:[%s237 + $0x180] sm:$0xff]
        %v487 = vld [vmem:[%s237 + $0x188] sm:$0xff]
        %v488 = vld [vmem:[%s237 + $0x190] sm:$0xff]
        %v489 = vld [vmem:[%s237 + $0x198] sm:$0xff]
        %v490 = vld [vmem:[%s237 + $0x1a0] sm:$0xff]
        %v491 = vld [vmem:[%s237 + $0x1a8] sm:$0xff]
        %v492 = vld [vmem:[%s237 + $0x1b0] sm:$0xff]
        %v493 = vld [vmem:[%s237 + $0x1b8] sm:$0xff]
        %v494 = vld [vmem:[%s237 + $0x1c0] sm:$0xff]
        %v495 = vld [vmem:[%s237 + $0x1c8] sm:$0xff]
        %v496 = vld [vmem:[%s237 + $0x1d0] sm:$0xff]
        %v497 = vld [vmem:[%s237 + $0x1d8] sm:$0xff]
        %v498 = vld [vmem:[%s237 + $0x1e0] sm:$0xff]
        %v499 = vld [vmem:[%s237 + $0x1e8] sm:$0xff]
        %v500 = vld [vmem:[%s237 + $0x1f0] sm:$0xff]
        %v501 = vld [vmem:[%s237 + $0x1f8] sm:$0xff]
        %v502 = vld [vmem:[%s237 + $0x200] sm:$0xff]
        %v503 = vld [vmem:[%s237 + $0x208] sm:$0xff]
        %v504 = vld [vmem:[%s237 + $0x210] sm:$0xff]
        %v505 = vld [vmem:[%s237 + $0x218] sm:$0xff]
        %v506 = vld [vmem:[%s237 + $0x220] sm:$0xff]
        %v507 = vld [vmem:[%s237 + $0x228] sm:$0xff]
        %v508 = vld [vmem:[%s237 + $0x230] sm:$0xff]
        %v509 = vld [vmem:[%s237 + $0x238] sm:$0xff]
        %v510 = vld [vmem:[%s237 + $0x240] sm:$0xff]
        %v511 = vld [vmem:[%s237 + $0x248] sm:$0xff]
        %v512 = vld [vmem:[%s237 + $0x250] sm:$0xff]
        %v513 = vld [vmem:[%s237 + $0x258] sm:$0xff]
        %v514 = vld [vmem:[%s237 + $0x260] sm:$0xff]
        %v515 = vld [vmem:[%s237 + $0x268] sm:$0xff]
        %v516 = vld [vmem:[%s237 + $0x270] sm:$0xff]
        %v517 = vld [vmem:[%s237 + $0x278] sm:$0xff]
        %v518 = vld [vmem:[%s237 + $0x280] sm:$0xff]
        %v519 = vld [vmem:[%s237 + $0x288] sm:$0xff]
        %v520 = vld [vmem:[%s237 + $0x290] sm:$0xff]
        %v521 = vld [vmem:[%s237 + $0x298] sm:$0xff]
        %v522 = vld [vmem:[%s237 + $0x2a0] sm:$0xff]
        %v523 = vld [vmem:[%s237 + $0x2a8] sm:$0xff]
        %v524 = vld [vmem:[%s237 + $0x2b0] sm:$0xff]
        %v525 = vld [vmem:[%s237 + $0x2b8] sm:$0xff]
        %v526 = vld [vmem:[%s237 + $0x2c0] sm:$0xff]
        %v527 = vld [vmem:[%s237 + $0x2c8] sm:$0xff]
        %v528 = vld [vmem:[%s237 + $0x2d0] sm:$0xff]
        %v529 = vld [vmem:[%s237 + $0x2d8] sm:$0xff]
        %v530 = vld [vmem:[%s237 + $0x2e0] sm:$0xff]
        %v531 = vld [vmem:[%s237 + $0x2e8] sm:$0xff]
        %v532 = vld [vmem:[%s237 + $0x2f0] sm:$0xff]
        %v533 = vld [vmem:[%s237 + $0x2f8] sm:$0xff]
        %v534 = vld [vmem:[%s237 + $0x300] sm:$0xff]
        %v535 = vld [vmem:[%s237 + $0x308] sm:$0xff]
        %v536 = vld [vmem:[%s237 + $0x310] sm:$0xff]
        %v537 = vld [vmem:[%s237 + $0x318] sm:$0xff]
        %v538 = vld [vmem:[%s237 + $0x320] sm:$0xff]
        %v539 = vld [vmem:[%s237 + $0x328] sm:$0xff]
        %v540 = vld [vmem:[%s237 + $0x330] sm:$0xff]
        %v541 = vld [vmem:[%s237 + $0x338] sm:$0xff]
        %v542 = vld [vmem:[%s237 + $0x340] sm:$0xff]
        %v543 = vld [vmem:[%s237 + $0x348] sm:$0xff]
        %v544 = vld [vmem:[%s237 + $0x350] sm:$0xff]
        %v545 = vld [vmem:[%s237 + $0x358] sm:$0xff]
        %v546 = vld [vmem:[%s237 + $0x360] sm:$0xff]
        %v547 = vld [vmem:[%s237 + $0x368] sm:$0xff]
        %v548 = vld [vmem:[%s237 + $0x370] sm:$0xff]
        %v549 = vld [vmem:[%s237 + $0x378] sm:$0xff]
        %v550 = vld [vmem:[%s237 + $0x380] sm:$0xff]
        %v551 = vld [vmem:[%s237 + $0x388] sm:$0xff]
        %v552 = vld [vmem:[%s237 + $0x390] sm:$0xff]
        %v553 = vld [vmem:[%s237 + $0x398] sm:$0xff]
        %v554 = vld [vmem:[%s237 + $0x3a0] sm:$0xff]
        %v555 = vld [vmem:[%s237 + $0x3a8] sm:$0xff]
        %v556 = vld [vmem:[%s237 + $0x3b0] sm:$0xff]
        %v557 = vld [vmem:[%s237 + $0x3b8] sm:$0xff]
        %v558 = vld [vmem:[%s237 + $0x3c0] sm:$0xff]
        %v559 = vld [vmem:[%s237 + $0x3c8] sm:$0xff]
        %v560 = vld [vmem:[%s237 + $0x3d0] sm:$0xff]
        %v561 = vld [vmem:[%s237 + $0x3d8] sm:$0xff]
        %v562 = vld [vmem:[%s237 + $0x3e0] sm:$0xff]
        %v563 = vld [vmem:[%s237 + $0x3e8] sm:$0xff]
        %v564 = vld [vmem:[%s237 + $0x3f0] sm:$0xff]
        %v565 = vld [vmem:[%s237 + $0x3f8] sm:$0xff]
        %v566 = vld [vmem:[%s237 + $0x400] sm:$0xff]
        %v567 = vld [vmem:[%s237 + $0x408] sm:$0xff]
        %v568 = vld [vmem:[%s237 + $0x410] sm:$0xff]
        %v569 = vld [vmem:[%s237 + $0x418] sm:$0xff]
        %v570 = vld [vmem:[%s237 + $0x420] sm:$0xff]
        %v571 = vld [vmem:[%s237 + $0x428] sm:$0xff]
        %v572 = vld [vmem:[%s237 + $0x430] sm:$0xff]
        %v573 = vld [vmem:[%s237 + $0x438] sm:$0xff]
        %v574 = vld [vmem:[%s237 + $0x440] sm:$0xff]
        %v575 = vld [vmem:[%s237 + $0x448] sm:$0xff]
        %v576 = vld [vmem:[%s237 + $0x450] sm:$0xff]
        %v577 = vld [vmem:[%s237 + $0x458] sm:$0xff]
        %v578 = vld [vmem:[%s237 + $0x460] sm:$0xff]
        %v579 = vld [vmem:[%s237 + $0x468] sm:$0xff]
        %v580 = vld [vmem:[%s237 + $0x470] sm:$0xff]
        %v581 = vld [vmem:[%s237 + $0x478] sm:$0xff]
        %v582 = vld [vmem:[%s237 + $0x480] sm:$0xff]
        %v583 = vld [vmem:[%s237 + $0x488] sm:$0xff]
        %v584 = vld [vmem:[%s237 + $0x490] sm:$0xff]
        %v585 = vld [vmem:[%s237 + $0x498] sm:$0xff]
        %v586 = vld [vmem:[%s237 + $0x4a0] sm:$0xff]
        %v587 = vld [vmem:[%s237 + $0x4a8] sm:$0xff]
        %v588 = vld [vmem:[%s237 + $0x4b0] sm:$0xff]
        %v589 = vld [vmem:[%s237 + $0x4b8] sm:$0xff]
        %v590 = vld [vmem:[%s237 + $0x4c0] sm:$0xff]
        %v591 = vld [vmem:[%s237 + $0x4c8] sm:$0xff]
        %v592 = vld [vmem:[%s237 + $0x4d0] sm:$0xff]
        %v593 = vld [vmem:[%s237 + $0x4d8] sm:$0xff]
        %v594 = vld [vmem:[%s237 + $0x4e0] sm:$0xff]
        %v595 = vld [vmem:[%s237 + $0x4e8] sm:$0xff]
        %v596 = vld [vmem:[%s237 + $0x4f0] sm:$0xff]
        %v597 = vld [vmem:[%s237 + $0x4f8] sm:$0xff]
        %v598 = vld [vmem:[%s237 + $0x500] sm:$0xff]
        %v599 = vld [vmem:[%s237 + $0x508] sm:$0xff]
        %v600 = vld [vmem:[%s237 + $0x510] sm:$0xff]
        %v601 = vld [vmem:[%s237 + $0x518] sm:$0xff]
        %v602 = vld [vmem:[%s237 + $0x520] sm:$0xff]
        %v603 = vld [vmem:[%s237 + $0x528] sm:$0xff]
        %v604 = vld [vmem:[%s237 + $0x530] sm:$0xff]
        %v605 = vld [vmem:[%s237 + $0x538] sm:$0xff]
        %v606 = vld [vmem:[%s237 + $0x540] sm:$0xff]
        %v607 = vld [vmem:[%s237 + $0x548] sm:$0xff]
        %v608 = vld [vmem:[%s237 + $0x550] sm:$0xff]
        %v609 = vld [vmem:[%s237 + $0x558] sm:$0xff]
        %v610 = vld [vmem:[%s237 + $0x560] sm:$0xff]
        %v611 = vld [vmem:[%s237 + $0x568] sm:$0xff]
        %v612 = vld [vmem:[%s237 + $0x570] sm:$0xff]
        %v613 = vld [vmem:[%s237 + $0x578] sm:$0xff]
        %v614 = vld [vmem:[%s237 + $0x580] sm:$0xff]
        %v615 = vld [vmem:[%s237 + $0x588] sm:$0xff]
        %v616 = vld [vmem:[%s237 + $0x590] sm:$0xff]
        %v617 = vld [vmem:[%s237 + $0x598] sm:$0xff]
        %v618 = vld [vmem:[%s237 + $0x5a0] sm:$0xff]
        %v619 = vld [vmem:[%s237 + $0x5a8] sm:$0xff]
        %v620 = vld [vmem:[%s237 + $0x5b0] sm:$0xff]
        %v621 = vld [vmem:[%s237 + $0x5b8] sm:$0xff]
        %v622 = vld [vmem:[%s237 + $0x5c0] sm:$0xff]
        %v623 = vld [vmem:[%s237 + $0x5c8] sm:$0xff]
        %v624 = vld [vmem:[%s237 + $0x5d0] sm:$0xff]
        %v625 = vld [vmem:[%s237 + $0x5d8] sm:$0xff]
        %v626 = vld [vmem:[%s237 + $0x5e0] sm:$0xff]
        %v627 = vld [vmem:[%s237 + $0x5e8] sm:$0xff]
        %v628 = vld [vmem:[%s237 + $0x5f0] sm:$0xff]
        %v629 = vld [vmem:[%s237 + $0x5f8] sm:$0xff]
        %v630 = vld [vmem:[%s237 + $0x600] sm:$0xff]
        %v631 = vld [vmem:[%s237 + $0x608] sm:$0xff]
        %v632 = vld [vmem:[%s237 + $0x610] sm:$0xff]
        %v633 = vld [vmem:[%s237 + $0x618] sm:$0xff]
        %v634 = vld [vmem:[%s237 + $0x620] sm:$0xff]
        %v635 = vld [vmem:[%s237 + $0x628] sm:$0xff]
        %v636 = vld [vmem:[%s237 + $0x630] sm:$0xff]
        %v637 = vld [vmem:[%s237 + $0x638] sm:$0xff]
        %v638 = vld [vmem:[%s237 + $0x640] sm:$0xff]
        %v639 = vld [vmem:[%s237 + $0x648] sm:$0xff]
        %v640 = vld [vmem:[%s237 + $0x650] sm:$0xff]
        %v641 = vld [vmem:[%s237 + $0x658] sm:$0xff]
        %v642 = vld [vmem:[%s237 + $0x660] sm:$0xff]
        %v643 = vld [vmem:[%s237 + $0x668] sm:$0xff]
        %v644 = vld [vmem:[%s237 + $0x670] sm:$0xff]
        %v645 = vld [vmem:[%s237 + $0x678] sm:$0xff]
        %v646 = vld [vmem:[%s237 + $0x680] sm:$0xff]
        %v647 = vld [vmem:[%s237 + $0x688] sm:$0xff]
        %v648 = vld [vmem:[%s237 + $0x690] sm:$0xff]
        %v649 = vld [vmem:[%s237 + $0x698] sm:$0xff]
        %v650 = vld [vmem:[%s237 + $0x6a0] sm:$0xff]
        %v651 = vld [vmem:[%s237 + $0x6a8] sm:$0xff]
        %v652 = vld [vmem:[%s237 + $0x6b0] sm:$0xff]
        %v653 = vld [vmem:[%s237 + $0x6b8] sm:$0xff]
        %v654 = vld [vmem:[%s237 + $0x6c0] sm:$0xff]
        %v655 = vld [vmem:[%s237 + $0x6c8] sm:$0xff]
        %v656 = vld [vmem:[%s237 + $0x6d0] sm:$0xff]
        %v657 = vld [vmem:[%s237 + $0x6d8] sm:$0xff]
        %v658 = vld [vmem:[%s237 + $0x6e0] sm:$0xff]
        %v659 = vld [vmem:[%s237 + $0x6e8] sm:$0xff]
        %v660 = vld [vmem:[%s237 + $0x6f0] sm:$0xff]
        %v661 = vld [vmem:[%s237 + $0x6f8] sm:$0xff]
        %v662 = vld [vmem:[%s237 + $0x700] sm:$0xff]
        %v663 = vld [vmem:[%s237 + $0x708] sm:$0xff]
        %v664 = vld [vmem:[%s237 + $0x710] sm:$0xff]
        %v665 = vld [vmem:[%s237 + $0x718] sm:$0xff]
        %v666 = vld [vmem:[%s237 + $0x720] sm:$0xff]
        %v667 = vld [vmem:[%s237 + $0x728] sm:$0xff]
        %v668 = vld [vmem:[%s237 + $0x730] sm:$0xff]
        %v669 = vld [vmem:[%s237 + $0x738] sm:$0xff]
        %v670 = vld [vmem:[%s237 + $0x740] sm:$0xff]
        %v671 = vld [vmem:[%s237 + $0x748] sm:$0xff]
        %v672 = vld [vmem:[%s237 + $0x750] sm:$0xff]
        %v673 = vld [vmem:[%s237 + $0x758] sm:$0xff]
        %v674 = vld [vmem:[%s237 + $0x760] sm:$0xff]
        %v675 = vld [vmem:[%s237 + $0x768] sm:$0xff]
        %v676 = vld [vmem:[%s237 + $0x770] sm:$0xff]
        %v677 = vld [vmem:[%s237 + $0x778] sm:$0xff]
        %v678 = vld [vmem:[%s237 + $0x780] sm:$0xff]
        %v679 = vld [vmem:[%s237 + $0x788] sm:$0xff]
        %v680 = vld [vmem:[%s237 + $0x790] sm:$0xff]
        %v681 = vld [vmem:[%s237 + $0x798] sm:$0xff]
        %v682 = vld [vmem:[%s237 + $0x7a0] sm:$0xff]
        %v683 = vld [vmem:[%s237 + $0x7a8] sm:$0xff]
        %v684 = vld [vmem:[%s237 + $0x7b0] sm:$0xff]
        %v685 = vld [vmem:[%s237 + $0x7b8] sm:$0xff]
        %v686 = vld [vmem:[%s237 + $0x7c0] sm:$0xff]
        %v687 = vld [vmem:[%s237 + $0x7c8] sm:$0xff]
        %v688 = vld [vmem:[%s237 + $0x7d0] sm:$0xff]
        %v689 = vld [vmem:[%s237 + $0x7d8] sm:$0xff]
        %v690 = vld [vmem:[%s237 + $0x7e0] sm:$0xff]
        %v691 = vld [vmem:[%s237 + $0x7e8] sm:$0xff]
        %v692 = vld [vmem:[%s237 + $0x7f0] sm:$0xff]
        %v693 = vld [vmem:[%s237 + $0x7f8] sm:$0xff]
        %v694 = vld [vmem:[%s237 + $0x800] sm:$0xff]
        %v695 = vld [vmem:[%s237 + $0x808] sm:$0xff]
        %v696 = vld [vmem:[%s237 + $0x810] sm:$0xff]
        %v697 = vld [vmem:[%s237 + $0x818] sm:$0xff]
        %v698 = vld [vmem:[%s237 + $0x820] sm:$0xff]
        %v699 = vld [vmem:[%s237 + $0x828] sm:$0xff]
        %v700 = vld [vmem:[%s237 + $0x830] sm:$0xff]
        %v701 = vld [vmem:[%s237 + $0x838] sm:$0xff]
        %v702 = vld [vmem:[%s237 + $0x840] sm:$0xff]
        %v703 = vld [vmem:[%s237 + $0x848] sm:$0xff]
        %v704 = vld [vmem:[%s237 + $0x850] sm:$0xff]
        %v705 = vld [vmem:[%s237 + $0x858] sm:$0xff]
        %v706 = vld [vmem:[%s237 + $0x860] sm:$0xff]
        %v707 = vld [vmem:[%s237 + $0x868] sm:$0xff]
        %v708 = vld [vmem:[%s237 + $0x870] sm:$0xff]
        %v709 = vld [vmem:[%s237 + $0x878] sm:$0xff]
        %v710 = vld [vmem:[%s237 + $0x880] sm:$0xff]
        %v711 = vld [vmem:[%s237 + $0x888] sm:$0xff]
        %v712 = vld [vmem:[%s237 + $0x890] sm:$0xff]
        %v713 = vld [vmem:[%s237 + $0x898] sm:$0xff]
        %v714 = vld [vmem:[%s237 + $0x8a0] sm:$0xff]
        %v715 = vld [vmem:[%s237 + $0x8a8] sm:$0xff]
        %v716 = vld [vmem:[%s237 + $0x8b0] sm:$0xff]
        %v717 = vld [vmem:[%s237 + $0x8b8] sm:$0xff]
        %v718 = vld [vmem:[%s237 + $0x8c0] sm:$0xff]
        %v719 = vld [vmem:[%s237 + $0x8c8] sm:$0xff]
        %v720 = vld [vmem:[%s237 + $0x8d0] sm:$0xff]
        %v721 = vld [vmem:[%s237 + $0x8d8] sm:$0xff]
        %v722 = vld [vmem:[%s237 + $0x8e0] sm:$0xff]
        %v723 = vld [vmem:[%s237 + $0x8e8] sm:$0xff]
        %v724 = vld [vmem:[%s237 + $0x8f0] sm:$0xff]
        %v725 = vld [vmem:[%s237 + $0x8f8] sm:$0xff]
        %v726 = vld [vmem:[%s237 + $0x900] sm:$0xff]
        %v727 = vld [vmem:[%s237 + $0x908] sm:$0xff]
        %v728 = vld [vmem:[%s237 + $0x910] sm:$0xff]
        %v729 = vld [vmem:[%s237 + $0x918] sm:$0xff]
        %v730 = vld [vmem:[%s237 + $0x920] sm:$0xff]
        %v731 = vld [vmem:[%s237 + $0x928] sm:$0xff]
        %v732 = vld [vmem:[%s237 + $0x930] sm:$0xff]
        %v733 = vld [vmem:[%s237 + $0x938] sm:$0xff]
        %v734 = vld [vmem:[%s237 + $0x940] sm:$0xff]
        %v735 = vld [vmem:[%s237 + $0x948] sm:$0xff]
        %v736 = vld [vmem:[%s237 + $0x950] sm:$0xff]
        %v737 = vld [vmem:[%s237 + $0x958] sm:$0xff]
        %v738 = vld [vmem:[%s237 + $0x960] sm:$0xff]
        %v739 = vld [vmem:[%s237 + $0x968] sm:$0xff]
        %v740 = vld [vmem:[%s237 + $0x970] sm:$0xff]
        %v741 = vld [vmem:[%s237 + $0x978] sm:$0xff]
        %v742 = vld [vmem:[%s237 + $0x980] sm:$0xff]
        %v743 = vld [vmem:[%s237 + $0x988] sm:$0xff]
        %v744 = vld [vmem:[%s237 + $0x990] sm:$0xff]
        %v745 = vld [vmem:[%s237 + $0x998] sm:$0xff]
        %v746 = vld [vmem:[%s237 + $0x9a0] sm:$0xff]
        %v747 = vld [vmem:[%s237 + $0x9a8] sm:$0xff]
        %v748 = vld [vmem:[%s237 + $0x9b0] sm:$0xff]
        %v749 = vld [vmem:[%s237 + $0x9b8] sm:$0xff]
        %v750 = vld [vmem:[%s237 + $0x9c0] sm:$0xff]
        %v751 = vld [vmem:[%s237 + $0x9c8] sm:$0xff]
        %v752 = vld [vmem:[%s237 + $0x9d0] sm:$0xff]
        %v753 = vld [vmem:[%s237 + $0x9d8] sm:$0xff]
        %v754 = vld [vmem:[%s237 + $0x9e0] sm:$0xff]
        %v755 = vld [vmem:[%s237 + $0x9e8] sm:$0xff]
        %v756 = vld [vmem:[%s237 + $0x9f0] sm:$0xff]
        %v757 = vld [vmem:[%s237 + $0x9f8] sm:$0xff]
        %v758 = vld [vmem:[%s237 + $0xa00] sm:$0xff]
        %v759 = vld [vmem:[%s237 + $0xa08] sm:$0xff]
        %v760 = vld [vmem:[%s237 + $0xa10] sm:$0xff]
        %v761 = vld [vmem:[%s237 + $0xa18] sm:$0xff]
        %v762 = vld [vmem:[%s237 + $0xa20] sm:$0xff]
        %v763 = vld [vmem:[%s237 + $0xa28] sm:$0xff]
        %v764 = vld [vmem:[%s237 + $0xa30] sm:$0xff]
        %v765 = vld [vmem:[%s237 + $0xa38] sm:$0xff]
        %v766 = vld [vmem:[%s237 + $0xa40] sm:$0xff]
        %v767 = vld [vmem:[%s237 + $0xa48] sm:$0xff]
        %v768 = vld [vmem:[%s237 + $0xa50] sm:$0xff]
        %v769 = vld [vmem:[%s237 + $0xa58] sm:$0xff]
        %v770 = vld [vmem:[%s237 + $0xa60] sm:$0xff]
        %v771 = vld [vmem:[%s237 + $0xa68] sm:$0xff]
        %v772 = vld [vmem:[%s237 + $0xa70] sm:$0xff]
        %v773 = vld [vmem:[%s237 + $0xa78] sm:$0xff]
        %v774 = vld [vmem:[%s237 + $0xa80] sm:$0xff]
        %v775 = vld [vmem:[%s237 + $0xa88] sm:$0xff]
        %v776 = vld [vmem:[%s237 + $0xa90] sm:$0xff]
        %v777 = vld [vmem:[%s237 + $0xa98] sm:$0xff]
        %v778 = vld [vmem:[%s237 + $0xaa0] sm:$0xff]
        %v779 = vld [vmem:[%s237 + $0xaa8] sm:$0xff]
        %v780 = vld [vmem:[%s237 + $0xab0] sm:$0xff]
        %v781 = vld [vmem:[%s237 + $0xab8] sm:$0xff]
        %v782 = vld [vmem:[%s237 + $0xac0] sm:$0xff]
        %v783 = vld [vmem:[%s237 + $0xac8] sm:$0xff]
        %v784 = vld [vmem:[%s237 + $0xad0] sm:$0xff]
        %v785 = vld [vmem:[%s237 + $0xad8] sm:$0xff]
        %v786 = vld [vmem:[%s237 + $0xae0] sm:$0xff]
        %v787 = vld [vmem:[%s237 + $0xae8] sm:$0xff]
        %v788 = vld [vmem:[%s237 + $0xaf0] sm:$0xff]
        %v789 = vld [vmem:[%s237 + $0xaf8] sm:$0xff]
        %v790 = vld [vmem:[%s237 + $0xb00] sm:$0xff]
        %v791 = vld [vmem:[%s237 + $0xb08] sm:$0xff]
        %v792 = vld [vmem:[%s237 + $0xb10] sm:$0xff]
        %v793 = vld [vmem:[%s237 + $0xb18] sm:$0xff]
        %v794 = vld [vmem:[%s237 + $0xb20] sm:$0xff]
        %v795 = vld [vmem:[%s237 + $0xb28] sm:$0xff]
        %v796 = vld [vmem:[%s237 + $0xb30] sm:$0xff]
        %v797 = vld [vmem:[%s237 + $0xb38] sm:$0xff]
        %v798 = vld [vmem:[%s237 + $0xb40] sm:$0xff]
        %v799 = vld [vmem:[%s237 + $0xb48] sm:$0xff]
        %v800 = vld [vmem:[%s237 + $0xb50] sm:$0xff]
        %v801 = vld [vmem:[%s237 + $0xb58] sm:$0xff]
        %v802 = vld [vmem:[%s237 + $0xb60] sm:$0xff]
        %v803 = vld [vmem:[%s237 + $0xb68] sm:$0xff]
        %v804 = vld [vmem:[%s237 + $0xb70] sm:$0xff]
        %v805 = vld [vmem:[%s237 + $0xb78] sm:$0xff]
        %v806 = vld [vmem:[%s237 + $0xb80] sm:$0xff]
        %v807 = vld [vmem:[%s237 + $0xb88] sm:$0xff]
        %v808 = vld [vmem:[%s237 + $0xb90] sm:$0xff]
        %v809 = vld [vmem:[%s237 + $0xb98] sm:$0xff]
        %v810 = vld [vmem:[%s237 + $0xba0] sm:$0xff]
        %v811 = vld [vmem:[%s237 + $0xba8] sm:$0xff]
        %v812 = vld [vmem:[%s237 + $0xbb0] sm:$0xff]
        %v813 = vld [vmem:[%s237 + $0xbb8] sm:$0xff]
        %v814 = vld [vmem:[%s237 + $0xbc0] sm:$0xff]
        %v815 = vld [vmem:[%s237 + $0xbc8] sm:$0xff]
        %v816 = vld [vmem:[%s237 + $0xbd0] sm:$0xff]
        %v817 = vld [vmem:[%s237 + $0xbd8] sm:$0xff]
        %v818 = vld [vmem:[%s237 + $0xbe0] sm:$0xff]
        %v819 = vld [vmem:[%s237 + $0xbe8] sm:$0xff]
        %v820 = vld [vmem:[%s237 + $0xbf0] sm:$0xff]
        %v821 = vld [vmem:[%s237 + $0xbf8] sm:$0xff]
        %v822 = vld [vmem:[%s237 + $0xc00] sm:$0xff]
        %v823 = vld [vmem:[%s237 + $0xc08] sm:$0xff]
        %v824 = vld [vmem:[%s237 + $0xc10] sm:$0xff]
        %v825 = vld [vmem:[%s237 + $0xc18] sm:$0xff]
        %v826 = vld [vmem:[%s237 + $0xc20] sm:$0xff]
        %v827 = vld [vmem:[%s237 + $0xc28] sm:$0xff]
        %v828 = vld [vmem:[%s237 + $0xc30] sm:$0xff]
        %v829 = vld [vmem:[%s237 + $0xc38] sm:$0xff]
        %v830 = vld [vmem:[%s237 + $0xc40] sm:$0xff]
        %v831 = vld [vmem:[%s237 + $0xc48] sm:$0xff]
        %v832 = vld [vmem:[%s237 + $0xc50] sm:$0xff]
        %v833 = vld [vmem:[%s237 + $0xc58] sm:$0xff]
        %v834 = vld [vmem:[%s237 + $0xc60] sm:$0xff]
        %v835 = vld [vmem:[%s237 + $0xc68] sm:$0xff]
        %v836 = vld [vmem:[%s237 + $0xc70] sm:$0xff]
        %v837 = vld [vmem:[%s237 + $0xc78] sm:$0xff]
        %v838 = vld [vmem:[%s237 + $0xc80] sm:$0xff]
        %v839 = vld [vmem:[%s237 + $0xc88] sm:$0xff]
        %v840 = vld [vmem:[%s237 + $0xc90] sm:$0xff]
        %v841 = vld [vmem:[%s237 + $0xc98] sm:$0xff]
        %v842 = vld [vmem:[%s237 + $0xca0] sm:$0xff]
        %v843 = vld [vmem:[%s237 + $0xca8] sm:$0xff]
        %v844 = vld [vmem:[%s237 + $0xcb0] sm:$0xff]
        %v845 = vld [vmem:[%s237 + $0xcb8] sm:$0xff]
        %v846 = vld [vmem:[%s237 + $0xcc0] sm:$0xff]
        %v847 = vld [vmem:[%s237 + $0xcc8] sm:$0xff]
        %v848 = vld [vmem:[%s237 + $0xcd0] sm:$0xff]
        %v849 = vld [vmem:[%s237 + $0xcd8] sm:$0xff]
        %v850 = vld [vmem:[%s237 + $0xce0] sm:$0xff]
        %v851 = vld [vmem:[%s237 + $0xce8] sm:$0xff]
        %v852 = vld [vmem:[%s237 + $0xcf0] sm:$0xff]
        %v853 = vld [vmem:[%s237 + $0xcf8] sm:$0xff]
        %v854 = vld [vmem:[%s237 + $0xd00] sm:$0xff]
        %v855 = vld [vmem:[%s237 + $0xd08] sm:$0xff]
        %v856 = vld [vmem:[%s237 + $0xd10] sm:$0xff]
        %v857 = vld [vmem:[%s237 + $0xd18] sm:$0xff]
        %v858 = vld [vmem:[%s237 + $0xd20] sm:$0xff]
        %v859 = vld [vmem:[%s237 + $0xd28] sm:$0xff]
        %v860 = vld [vmem:[%s237 + $0xd30] sm:$0xff]
        %v861 = vld [vmem:[%s237 + $0xd38] sm:$0xff]
        %v862 = vld [vmem:[%s237 + $0xd40] sm:$0xff]
        %v863 = vld [vmem:[%s237 + $0xd48] sm:$0xff]
        %v864 = vld [vmem:[%s237 + $0xd50] sm:$0xff]
        %v865 = vld [vmem:[%s237 + $0xd58] sm:$0xff]
        %v866 = vld [vmem:[%s237 + $0xd60] sm:$0xff]
        %v867 = vld [vmem:[%s237 + $0xd68] sm:$0xff]
        %v868 = vld [vmem:[%s237 + $0xd70] sm:$0xff]
        %v869 = vld [vmem:[%s237 + $0xd78] sm:$0xff]
        %870 = vmatpush.msra.mxu0 %v405
        %871 = vmatpush.msra.mxu0 %v404
        %872 = vmatpush.msra.mxu0 %v403
        %873 = vmatpush.msra.mxu0 %v402
        %874 = vmatpush.msra.mxu0 %v401
        %875 = vmatpush.msra.mxu0 %v400
        %876 = vmatpush.msra.mxu0 %v399
        %877 = vmatpush.msra.mxu0 %v398
        %878 = vmatpush.msra.mxu0 %v397
        %879 = vmatpush.msra.mxu0 %v396
        %880 = vmatpush.msra.mxu0 %v395
        %881 = vmatpush.msra.mxu0 %v394
        %882 = vmatpush.msra.mxu0 %v393
        %883 = vmatpush.msra.mxu0 %v392
        %884 = vmatpush.msra.mxu0 %v391
        %885 = vmatpush.msra.mxu0 %v390
        %886 = vmatmul.f32.gmra.mxu0 %v438
        %v887 = vpop.f32.mrf.mxu0
        %v888 = vadd.f32 0.0, %v887
        %889 = vmatmul.f32.gmra.mxu0 %v441
        %v890 = vpop.f32.mrf.mxu0
        %v891 = vadd.f32 0.0, %v890
        %892 = vmatmul.f32.gmra.mxu0 %v444
        %v893 = vpop.f32.mrf.mxu0
        %v894 = vadd.f32 0.0, %v893
        %895 = vmatmul.f32.gmra.mxu0 %v447
        %v896 = vpop.f32.mrf.mxu0
        %v897 = vadd.f32 0.0, %v896
        %898 = vmatmul.f32.gmra.mxu0 %v450
        %v899 = vpop.f32.mrf.mxu0
        %v900 = vadd.f32 0.0, %v899
        %901 = vmatmul.f32.gmra.mxu0 %v453
        %v902 = vpop.f32.mrf.mxu0
        %v903 = vadd.f32 0.0, %v902
        %904 = vmatmul.f32.gmra.mxu0 %v456
        %v905 = vpop.f32.mrf.mxu0
        %v906 = vadd.f32 0.0, %v905
        %907 = vmatmul.f32.gmra.mxu0 %v459
        %v908 = vpop.f32.mrf.mxu0
        %v909 = vadd.f32 0.0, %v908
        %910 = vmatmul.f32.gmra.mxu0 %v462
        %v911 = vpop.f32.mrf.mxu0
        %v912 = vadd.f32 0.0, %v911
        %913 = vmatmul.f32.gmra.mxu0 %v465
        %v914 = vpop.f32.mrf.mxu0
        %v915 = vadd.f32 0.0, %v914
        %916 = vmatmul.f32.gmra.mxu0 %v468
        %v917 = vpop.f32.mrf.mxu0
        %v918 = vadd.f32 0.0, %v917
        %919 = vmatmul.f32.gmra.mxu0 %v471
        %v920 = vpop.f32.mrf.mxu0
        %v921 = vadd.f32 0.0, %v920
        %922 = vmatmul.f32.gmra.mxu0 %v474
        %v923 = vpop.f32.mrf.mxu0
        %v924 = vadd.f32 0.0, %v923
        %925 = vmatmul.f32.gmra.mxu0 %v477
        %v926 = vpop.f32.mrf.mxu0
        %v927 = vadd.f32 0.0, %v926
        %928 = vmatmul.f32.gmra.mxu0 %v480
        %v929 = vpop.f32.mrf.mxu0
        %v930 = vadd.f32 0.0, %v929
        %931 = vmatmul.f32.gmra.mxu0 %v483
        %v932 = vpop.f32.mrf.mxu0
        %v933 = vadd.f32 0.0, %v932
        %934 = vmatmul.f32.gmra.mxu0 %v486
        %v935 = vpop.f32.mrf.mxu0
        %v936 = vadd.f32 0.0, %v935
        %937 = vmatmul.f32.gmra.mxu0 %v489
        %v938 = vpop.f32.mrf.mxu0
        %v939 = vadd.f32 0.0, %v938
        %940 = vmatmul.f32.gmra.mxu0 %v492
        %v941 = vpop.f32.mrf.mxu0
        %v942 = vadd.f32 0.0, %v941
        %943 = vmatmul.f32.gmra.mxu0 %v495
        %v944 = vpop.f32.mrf.mxu0
        %v945 = vadd.f32 0.0, %v944
        %946 = vmatmul.f32.gmra.mxu0 %v498
        %v947 = vpop.f32.mrf.mxu0
        %v948 = vadd.f32 0.0, %v947
        %949 = vmatmul.f32.gmra.mxu0 %v501
        %v950 = vpop.f32.mrf.mxu0
        %v951 = vadd.f32 0.0, %v950
        %952 = vmatmul.f32.gmra.mxu0 %v504
        %v953 = vpop.f32.mrf.mxu0
        %v954 = vadd.f32 0.0, %v953
        %955 = vmatmul.f32.gmra.mxu0 %v507
        %v956 = vpop.f32.mrf.mxu0
        %v957 = vadd.f32 0.0, %v956
        %958 = vmatmul.f32.gmra.mxu0 %v510
        %v959 = vpop.f32.mrf.mxu0
        %v960 = vadd.f32 0.0, %v959
        %961 = vmatmul.f32.gmra.mxu0 %v513
        %v962 = vpop.f32.mrf.mxu0
        %v963 = vadd.f32 0.0, %v962
        %964 = vmatmul.f32.gmra.mxu0 %v516
        %v965 = vpop.f32.mrf.mxu0
        %v966 = vadd.f32 0.0, %v965
        %967 = vmatmul.f32.gmra.mxu0 %v519
        %v968 = vpop.f32.mrf.mxu0
        %v969 = vadd.f32 0.0, %v968
        %970 = vmatmul.f32.gmra.mxu0 %v522
        %v971 = vpop.f32.mrf.mxu0
        %v972 = vadd.f32 0.0, %v971
        %973 = vmatmul.f32.gmra.mxu0 %v525
        %v974 = vpop.f32.mrf.mxu0
        %v975 = vadd.f32 0.0, %v974
        %976 = vmatmul.f32.gmra.mxu0 %v528
        %v977 = vpop.f32.mrf.mxu0
        %v978 = vadd.f32 0.0, %v977
        %979 = vmatmul.f32.gmra.mxu0 %v531
        %v980 = vpop.f32.mrf.mxu0
        %v981 = vadd.f32 0.0, %v980
        %982 = vmatmul.f32.gmra.mxu0 %v534
        %v983 = vpop.f32.mrf.mxu0
        %v984 = vadd.f32 0.0, %v983
        %985 = vmatmul.f32.gmra.mxu0 %v537
        %v986 = vpop.f32.mrf.mxu0
        %v987 = vadd.f32 0.0, %v986
        %988 = vmatmul.f32.gmra.mxu0 %v540
        %v989 = vpop.f32.mrf.mxu0
        %v990 = vadd.f32 0.0, %v989
        %991 = vmatmul.f32.gmra.mxu0 %v543
        %v992 = vpop.f32.mrf.mxu0
        %v993 = vadd.f32 0.0, %v992
        %994 = vmatmul.f32.gmra.mxu0 %v546
        %v995 = vpop.f32.mrf.mxu0
        %v996 = vadd.f32 0.0, %v995
        %997 = vmatmul.f32.gmra.mxu0 %v549
        %v998 = vpop.f32.mrf.mxu0
        %v999 = vadd.f32 0.0, %v998
        %1000 = vmatmul.f32.gmra.mxu0 %v552
        %v1001 = vpop.f32.mrf.mxu0
        %v1002 = vadd.f32 0.0, %v1001
        %1003 = vmatmul.f32.gmra.mxu0 %v555
        %v1004 = vpop.f32.mrf.mxu0
        %v1005 = vadd.f32 0.0, %v1004
        %1006 = vmatmul.f32.gmra.mxu0 %v558
        %v1007 = vpop.f32.mrf.mxu0
        %v1008 = vadd.f32 0.0, %v1007
        %1009 = vmatmul.f32.gmra.mxu0 %v561
        %v1010 = vpop.f32.mrf.mxu0
        %v1011 = vadd.f32 0.0, %v1010
        %1012 = vmatmul.f32.gmra.mxu0 %v564
        %v1013 = vpop.f32.mrf.mxu0
        %v1014 = vadd.f32 0.0, %v1013
        %1015 = vmatmul.f32.gmra.mxu0 %v567
        %v1016 = vpop.f32.mrf.mxu0
        %v1017 = vadd.f32 0.0, %v1016
        %1018 = vmatmul.f32.gmra.mxu0 %v570
        %v1019 = vpop.f32.mrf.mxu0
        %v1020 = vadd.f32 0.0, %v1019
        %1021 = vmatmul.f32.gmra.mxu0 %v573
        %v1022 = vpop.f32.mrf.mxu0
        %v1023 = vadd.f32 0.0, %v1022
        %1024 = vmatmul.f32.gmra.mxu0 %v576
        %v1025 = vpop.f32.mrf.mxu0
        %v1026 = vadd.f32 0.0, %v1025
        %1027 = vmatmul.f32.gmra.mxu0 %v579
        %v1028 = vpop.f32.mrf.mxu0
        %v1029 = vadd.f32 0.0, %v1028
        %1030 = vmatmul.f32.gmra.mxu0 %v582
        %v1031 = vpop.f32.mrf.mxu0
        %v1032 = vadd.f32 0.0, %v1031
        %1033 = vmatmul.f32.gmra.mxu0 %v585
        %v1034 = vpop.f32.mrf.mxu0
        %v1035 = vadd.f32 0.0, %v1034
        %1036 = vmatmul.f32.gmra.mxu0 %v588
        %v1037 = vpop.f32.mrf.mxu0
        %v1038 = vadd.f32 0.0, %v1037
        %1039 = vmatmul.f32.gmra.mxu0 %v591
        %v1040 = vpop.f32.mrf.mxu0
        %v1041 = vadd.f32 0.0, %v1040
        %1042 = vmatmul.f32.gmra.mxu0 %v594
        %v1043 = vpop.f32.mrf.mxu0
        %v1044 = vadd.f32 0.0, %v1043
        %1045 = vmatmul.f32.gmra.mxu0 %v597
        %v1046 = vpop.f32.mrf.mxu0
        %v1047 = vadd.f32 0.0, %v1046
        %1048 = vmatmul.f32.gmra.mxu0 %v600
        %v1049 = vpop.f32.mrf.mxu0
        %v1050 = vadd.f32 0.0, %v1049
        %1051 = vmatmul.f32.gmra.mxu0 %v603
        %v1052 = vpop.f32.mrf.mxu0
        %v1053 = vadd.f32 0.0, %v1052
        %1054 = vmatmul.f32.gmra.mxu0 %v606
        %v1055 = vpop.f32.mrf.mxu0
        %v1056 = vadd.f32 0.0, %v1055
        %1057 = vmatmul.f32.gmra.mxu0 %v609
        %v1058 = vpop.f32.mrf.mxu0
        %v1059 = vadd.f32 0.0, %v1058
        %1060 = vmatmul.f32.gmra.mxu0 %v612
        %v1061 = vpop.f32.mrf.mxu0
        %v1062 = vadd.f32 0.0, %v1061
        %1063 = vmatmul.f32.gmra.mxu0 %v615
        %v1064 = vpop.f32.mrf.mxu0
        %v1065 = vadd.f32 0.0, %v1064
        %1066 = vmatmul.f32.gmra.mxu0 %v618
        %v1067 = vpop.f32.mrf.mxu0
        %v1068 = vadd.f32 0.0, %v1067
        %1069 = vmatmul.f32.gmra.mxu0 %v621
        %v1070 = vpop.f32.mrf.mxu0
        %v1071 = vadd.f32 0.0, %v1070
        %1072 = vmatmul.f32.gmra.mxu0 %v624
        %v1073 = vpop.f32.mrf.mxu0
        %v1074 = vadd.f32 0.0, %v1073
        %1075 = vmatmul.f32.gmra.mxu0 %v627
        %v1076 = vpop.f32.mrf.mxu0
        %v1077 = vadd.f32 0.0, %v1076
        %1078 = vmatmul.f32.gmra.mxu0 %v630
        %v1079 = vpop.f32.mrf.mxu0
        %v1080 = vadd.f32 0.0, %v1079
        %1081 = vmatmul.f32.gmra.mxu0 %v633
        %v1082 = vpop.f32.mrf.mxu0
        %v1083 = vadd.f32 0.0, %v1082
        %1084 = vmatmul.f32.gmra.mxu0 %v636
        %v1085 = vpop.f32.mrf.mxu0
        %v1086 = vadd.f32 0.0, %v1085
        %1087 = vmatmul.f32.gmra.mxu0 %v639
        %v1088 = vpop.f32.mrf.mxu0
        %v1089 = vadd.f32 0.0, %v1088
        %1090 = vmatmul.f32.gmra.mxu0 %v642
        %v1091 = vpop.f32.mrf.mxu0
        %v1092 = vadd.f32 0.0, %v1091
        %1093 = vmatmul.f32.gmra.mxu0 %v645
        %v1094 = vpop.f32.mrf.mxu0
        %v1095 = vadd.f32 0.0, %v1094
        %1096 = vmatmul.f32.gmra.mxu0 %v648
        %v1097 = vpop.f32.mrf.mxu0
        %v1098 = vadd.f32 0.0, %v1097
        %1099 = vmatmul.f32.gmra.mxu0 %v651
        %v1100 = vpop.f32.mrf.mxu0
        %v1101 = vadd.f32 0.0, %v1100
        %1102 = vmatmul.f32.gmra.mxu0 %v654
        %v1103 = vpop.f32.mrf.mxu0
        %v1104 = vadd.f32 0.0, %v1103
        %1105 = vmatmul.f32.gmra.mxu0 %v657
        %v1106 = vpop.f32.mrf.mxu0
        %v1107 = vadd.f32 0.0, %v1106
        %1108 = vmatmul.f32.gmra.mxu0 %v660
        %v1109 = vpop.f32.mrf.mxu0
        %v1110 = vadd.f32 0.0, %v1109
        %1111 = vmatmul.f32.gmra.mxu0 %v663
        %v1112 = vpop.f32.mrf.mxu0
        %v1113 = vadd.f32 0.0, %v1112
        %1114 = vmatmul.f32.gmra.mxu0 %v666
        %v1115 = vpop.f32.mrf.mxu0
        %v1116 = vadd.f32 0.0, %v1115
        %1117 = vmatmul.f32.gmra.mxu0 %v669
        %v1118 = vpop.f32.mrf.mxu0
        %v1119 = vadd.f32 0.0, %v1118
        %1120 = vmatmul.f32.gmra.mxu0 %v672
        %v1121 = vpop.f32.mrf.mxu0
        %v1122 = vadd.f32 0.0, %v1121
        %1123 = vmatmul.f32.gmra.mxu0 %v675
        %v1124 = vpop.f32.mrf.mxu0
        %v1125 = vadd.f32 0.0, %v1124
        %1126 = vmatmul.f32.gmra.mxu0 %v678
        %v1127 = vpop.f32.mrf.mxu0
        %v1128 = vadd.f32 0.0, %v1127
        %1129 = vmatmul.f32.gmra.mxu0 %v681
        %v1130 = vpop.f32.mrf.mxu0
        %v1131 = vadd.f32 0.0, %v1130
        %1132 = vmatmul.f32.gmra.mxu0 %v684
        %v1133 = vpop.f32.mrf.mxu0
        %v1134 = vadd.f32 0.0, %v1133
        %1135 = vmatmul.f32.gmra.mxu0 %v687
        %v1136 = vpop.f32.mrf.mxu0
        %v1137 = vadd.f32 0.0, %v1136
        %1138 = vmatmul.f32.gmra.mxu0 %v690
        %v1139 = vpop.f32.mrf.mxu0
        %v1140 = vadd.f32 0.0, %v1139
        %1141 = vmatmul.f32.gmra.mxu0 %v693
        %v1142 = vpop.f32.mrf.mxu0
        %v1143 = vadd.f32 0.0, %v1142
        %1144 = vmatmul.f32.gmra.mxu0 %v696
        %v1145 = vpop.f32.mrf.mxu0
        %v1146 = vadd.f32 0.0, %v1145
        %1147 = vmatmul.f32.gmra.mxu0 %v699
        %v1148 = vpop.f32.mrf.mxu0
        %v1149 = vadd.f32 0.0, %v1148
        %1150 = vmatmul.f32.gmra.mxu0 %v702
        %v1151 = vpop.f32.mrf.mxu0
        %v1152 = vadd.f32 0.0, %v1151
        %1153 = vmatmul.f32.gmra.mxu0 %v705
        %v1154 = vpop.f32.mrf.mxu0
        %v1155 = vadd.f32 0.0, %v1154
        %1156 = vmatmul.f32.gmra.mxu0 %v708
        %v1157 = vpop.f32.mrf.mxu0
        %v1158 = vadd.f32 0.0, %v1157
        %1159 = vmatmul.f32.gmra.mxu0 %v711
        %v1160 = vpop.f32.mrf.mxu0
        %v1161 = vadd.f32 0.0, %v1160
        %1162 = vmatmul.f32.gmra.mxu0 %v714
        %v1163 = vpop.f32.mrf.mxu0
        %v1164 = vadd.f32 0.0, %v1163
        %1165 = vmatmul.f32.gmra.mxu0 %v717
        %v1166 = vpop.f32.mrf.mxu0
        %v1167 = vadd.f32 0.0, %v1166
        %1168 = vmatmul.f32.gmra.mxu0 %v720
        %v1169 = vpop.f32.mrf.mxu0
        %v1170 = vadd.f32 0.0, %v1169
        %1171 = vmatmul.f32.gmra.mxu0 %v723
        %v1172 = vpop.f32.mrf.mxu0
        %v1173 = vadd.f32 0.0, %v1172
        %1174 = vmatmul.f32.gmra.mxu0 %v726
        %v1175 = vpop.f32.mrf.mxu0
        %v1176 = vadd.f32 0.0, %v1175
        %1177 = vmatmul.f32.gmra.mxu0 %v729
        %v1178 = vpop.f32.mrf.mxu0
        %v1179 = vadd.f32 0.0, %v1178
        %1180 = vmatmul.f32.gmra.mxu0 %v732
        %v1181 = vpop.f32.mrf.mxu0
        %v1182 = vadd.f32 0.0, %v1181
        %1183 = vmatmul.f32.gmra.mxu0 %v735
        %v1184 = vpop.f32.mrf.mxu0
        %v1185 = vadd.f32 0.0, %v1184
        %1186 = vmatmul.f32.gmra.mxu0 %v738
        %v1187 = vpop.f32.mrf.mxu0
        %v1188 = vadd.f32 0.0, %v1187
        %1189 = vmatmul.f32.gmra.mxu0 %v741
        %v1190 = vpop.f32.mrf.mxu0
        %v1191 = vadd.f32 0.0, %v1190
        %1192 = vmatmul.f32.gmra.mxu0 %v744
        %v1193 = vpop.f32.mrf.mxu0
        %v1194 = vadd.f32 0.0, %v1193
        %1195 = vmatmul.f32.gmra.mxu0 %v747
        %v1196 = vpop.f32.mrf.mxu0
        %v1197 = vadd.f32 0.0, %v1196
        %1198 = vmatmul.f32.gmra.mxu0 %v750
        %v1199 = vpop.f32.mrf.mxu0
        %v1200 = vadd.f32 0.0, %v1199
        %1201 = vmatmul.f32.gmra.mxu0 %v753
        %v1202 = vpop.f32.mrf.mxu0
        %v1203 = vadd.f32 0.0, %v1202
        %1204 = vmatmul.f32.gmra.mxu0 %v756
        %v1205 = vpop.f32.mrf.mxu0
        %v1206 = vadd.f32 0.0, %v1205
        %1207 = vmatmul.f32.gmra.mxu0 %v759
        %v1208 = vpop.f32.mrf.mxu0
        %v1209 = vadd.f32 0.0, %v1208
        %1210 = vmatmul.f32.gmra.mxu0 %v762
        %v1211 = vpop.f32.mrf.mxu0
        %v1212 = vadd.f32 0.0, %v1211
        %1213 = vmatmul.f32.gmra.mxu0 %v765
        %v1214 = vpop.f32.mrf.mxu0
        %v1215 = vadd.f32 0.0, %v1214
        %1216 = vmatmul.f32.gmra.mxu0 %v768
        %v1217 = vpop.f32.mrf.mxu0
        %v1218 = vadd.f32 0.0, %v1217
        %1219 = vmatmul.f32.gmra.mxu0 %v771
        %v1220 = vpop.f32.mrf.mxu0
        %v1221 = vadd.f32 0.0, %v1220
        %1222 = vmatmul.f32.gmra.mxu0 %v774
        %v1223 = vpop.f32.mrf.mxu0
        %v1224 = vadd.f32 0.0, %v1223
        %1225 = vmatmul.f32.gmra.mxu0 %v777
        %v1226 = vpop.f32.mrf.mxu0
        %v1227 = vadd.f32 0.0, %v1226
        %1228 = vmatmul.f32.gmra.mxu0 %v780
        %v1229 = vpop.f32.mrf.mxu0
        %v1230 = vadd.f32 0.0, %v1229
        %1231 = vmatmul.f32.gmra.mxu0 %v783
        %v1232 = vpop.f32.mrf.mxu0
        %v1233 = vadd.f32 0.0, %v1232
        %1234 = vmatmul.f32.gmra.mxu0 %v786
        %v1235 = vpop.f32.mrf.mxu0
        %v1236 = vadd.f32 0.0, %v1235
        %1237 = vmatmul.f32.gmra.mxu0 %v789
        %v1238 = vpop.f32.mrf.mxu0
        %v1239 = vadd.f32 0.0, %v1238
        %1240 = vmatmul.f32.gmra.mxu0 %v792
        %v1241 = vpop.f32.mrf.mxu0
        %v1242 = vadd.f32 0.0, %v1241
        %1243 = vmatmul.f32.gmra.mxu0 %v795
        %v1244 = vpop.f32.mrf.mxu0
        %v1245 = vadd.f32 0.0, %v1244
        %1246 = vmatmul.f32.gmra.mxu0 %v798
        %v1247 = vpop.f32.mrf.mxu0
        %v1248 = vadd.f32 0.0, %v1247
        %1249 = vmatmul.f32.gmra.mxu0 %v801
        %v1250 = vpop.f32.mrf.mxu0
        %v1251 = vadd.f32 0.0, %v1250
        %1252 = vmatmul.f32.gmra.mxu0 %v804
        %v1253 = vpop.f32.mrf.mxu0
        %v1254 = vadd.f32 0.0, %v1253
        %1255 = vmatmul.f32.gmra.mxu0 %v807
        %v1256 = vpop.f32.mrf.mxu0
        %v1257 = vadd.f32 0.0, %v1256
        %1258 = vmatmul.f32.gmra.mxu0 %v810
        %v1259 = vpop.f32.mrf.mxu0
        %v1260 = vadd.f32 0.0, %v1259
        %1261 = vmatmul.f32.gmra.mxu0 %v813
        %v1262 = vpop.f32.mrf.mxu0
        %v1263 = vadd.f32 0.0, %v1262
        %1264 = vmatmul.f32.gmra.mxu0 %v816
        %v1265 = vpop.f32.mrf.mxu0
        %v1266 = vadd.f32 0.0, %v1265
        %1267 = vmatmul.f32.gmra.mxu0 %v819
        %v1268 = vpop.f32.mrf.mxu0
        %v1269 = vadd.f32 0.0, %v1268
        %1270 = vmatmul.f32.gmra.mxu0 %v822
        %v1271 = vpop.f32.mrf.mxu0
        %v1272 = vadd.f32 0.0, %v1271
        %1273 = vmatmul.f32.gmra.mxu0 %v825
        %v1274 = vpop.f32.mrf.mxu0
        %v1275 = vadd.f32 0.0, %v1274
        %1276 = vmatmul.f32.gmra.mxu0 %v828
        %v1277 = vpop.f32.mrf.mxu0
        %v1278 = vadd.f32 0.0, %v1277
        %1279 = vmatmul.f32.gmra.mxu0 %v831
        %v1280 = vpop.f32.mrf.mxu0
        %v1281 = vadd.f32 0.0, %v1280
        %1282 = vmatmul.f32.gmra.mxu0 %v834
        %v1283 = vpop.f32.mrf.mxu0
        %v1284 = vadd.f32 0.0, %v1283
        %1285 = vmatmul.f32.gmra.mxu0 %v837
        %v1286 = vpop.f32.mrf.mxu0
        %v1287 = vadd.f32 0.0, %v1286
        %1288 = vmatmul.f32.gmra.mxu0 %v840
        %v1289 = vpop.f32.mrf.mxu0
        %v1290 = vadd.f32 0.0, %v1289
        %1291 = vmatmul.f32.gmra.mxu0 %v843
        %v1292 = vpop.f32.mrf.mxu0
        %v1293 = vadd.f32 0.0, %v1292
        %1294 = vmatmul.f32.gmra.mxu0 %v846
        %v1295 = vpop.f32.mrf.mxu0
        %v1296 = vadd.f32 0.0, %v1295
        %1297 = vmatmul.f32.gmra.mxu0 %v849
        %v1298 = vpop.f32.mrf.mxu0
        %v1299 = vadd.f32 0.0, %v1298
        %1300 = vmatmul.f32.gmra.mxu0 %v852
        %v1301 = vpop.f32.mrf.mxu0
        %v1302 = vadd.f32 0.0, %v1301
        %1303 = vmatmul.f32.gmra.mxu0 %v855
        %v1304 = vpop.f32.mrf.mxu0
        %v1305 = vadd.f32 0.0, %v1304
        %1306 = vmatmul.f32.gmra.mxu0 %v858
        %v1307 = vpop.f32.mrf.mxu0
        %v1308 = vadd.f32 0.0, %v1307
        %1309 = vmatmul.f32.gmra.mxu0 %v861
        %v1310 = vpop.f32.mrf.mxu0
        %v1311 = vadd.f32 0.0, %v1310
        %1312 = vmatmul.f32.gmra.mxu0 %v864
        %v1313 = vpop.f32.mrf.mxu0
        %v1314 = vadd.f32 0.0, %v1313
        %1315 = vmatmul.f32.gmra.mxu0 %v867
        %v1316 = vpop.f32.mrf.mxu0
        %v1317 = vadd.f32 0.0, %v1316
        %1318 = vdwg.mxu0
        %1319 = vmatpush.msra.mxu0 %v421
        %1320 = vmatpush.msra.mxu0 %v420
        %1321 = vmatpush.msra.mxu0 %v419
        %1322 = vmatpush.msra.mxu0 %v418
        %1323 = vmatpush.msra.mxu0 %v417
        %1324 = vmatpush.msra.mxu0 %v416
        %1325 = vmatpush.msra.mxu0 %v415
        %1326 = vmatpush.msra.mxu0 %v414
        %1327 = vmatpush.msra.mxu0 %v413
        %1328 = vmatpush.msra.mxu0 %v412
        %1329 = vmatpush.msra.mxu0 %v411
        %1330 = vmatpush.msra.mxu0 %v410
        %1331 = vmatpush.msra.mxu0 %v409
        %1332 = vmatpush.msra.mxu0 %v408
        %1333 = vmatpush.msra.mxu0 %v407
        %1334 = vmatpush.msra.mxu0 %v406
        %1335 = vmatmul.f32.gmra.mxu0 %v439
        %v1336 = vpop.f32.mrf.mxu0
        %v1337 = vadd.f32 %v888, %v1336
        %1338 = vmatmul.f32.gmra.mxu0 %v442
        %v1339 = vpop.f32.mrf.mxu0
        %v1340 = vadd.f32 %v891, %v1339
        %1341 = vmatmul.f32.gmra.mxu0 %v445
        %v1342 = vpop.f32.mrf.mxu0
        %v1343 = vadd.f32 %v894, %v1342
        %1344 = vmatmul.f32.gmra.mxu0 %v448
        %v1345 = vpop.f32.mrf.mxu0
        %v1346 = vadd.f32 %v897, %v1345
        %1347 = vmatmul.f32.gmra.mxu0 %v451
        %v1348 = vpop.f32.mrf.mxu0
        %v1349 = vadd.f32 %v900, %v1348
        %1350 = vmatmul.f32.gmra.mxu0 %v454
        %v1351 = vpop.f32.mrf.mxu0
        %v1352 = vadd.f32 %v903, %v1351
        %1353 = vmatmul.f32.gmra.mxu0 %v457
        %v1354 = vpop.f32.mrf.mxu0
        %v1355 = vadd.f32 %v906, %v1354
        %1356 = vmatmul.f32.gmra.mxu0 %v460
        %v1357 = vpop.f32.mrf.mxu0
        %v1358 = vadd.f32 %v909, %v1357
        %1359 = vmatmul.f32.gmra.mxu0 %v463
        %v1360 = vpop.f32.mrf.mxu0
        %v1361 = vadd.f32 %v912, %v1360
        %1362 = vmatmul.f32.gmra.mxu0 %v466
        %v1363 = vpop.f32.mrf.mxu0
        %v1364 = vadd.f32 %v915, %v1363
        %1365 = vmatmul.f32.gmra.mxu0 %v469
        %v1366 = vpop.f32.mrf.mxu0
        %v1367 = vadd.f32 %v918, %v1366
        %1368 = vmatmul.f32.gmra.mxu0 %v472
        %v1369 = vpop.f32.mrf.mxu0
        %v1370 = vadd.f32 %v921, %v1369
        %1371 = vmatmul.f32.gmra.mxu0 %v475
        %v1372 = vpop.f32.mrf.mxu0
        %v1373 = vadd.f32 %v924, %v1372
        %1374 = vmatmul.f32.gmra.mxu0 %v478
        %v1375 = vpop.f32.mrf.mxu0
        %v1376 = vadd.f32 %v927, %v1375
        %1377 = vmatmul.f32.gmra.mxu0 %v481
        %v1378 = vpop.f32.mrf.mxu0
        %v1379 = vadd.f32 %v930, %v1378
        %1380 = vmatmul.f32.gmra.mxu0 %v484
        %v1381 = vpop.f32.mrf.mxu0
        %v1382 = vadd.f32 %v933, %v1381
        %1383 = vmatmul.f32.gmra.mxu0 %v487
        %v1384 = vpop.f32.mrf.mxu0
        %v1385 = vadd.f32 %v936, %v1384
        %1386 = vmatmul.f32.gmra.mxu0 %v490
        %v1387 = vpop.f32.mrf.mxu0
        %v1388 = vadd.f32 %v939, %v1387
        %1389 = vmatmul.f32.gmra.mxu0 %v493
        %v1390 = vpop.f32.mrf.mxu0
        %v1391 = vadd.f32 %v942, %v1390
        %1392 = vmatmul.f32.gmra.mxu0 %v496
        %v1393 = vpop.f32.mrf.mxu0
        %v1394 = vadd.f32 %v945, %v1393
        %1395 = vmatmul.f32.gmra.mxu0 %v499
        %v1396 = vpop.f32.mrf.mxu0
        %v1397 = vadd.f32 %v948, %v1396
        %1398 = vmatmul.f32.gmra.mxu0 %v502
        %v1399 = vpop.f32.mrf.mxu0
        %v1400 = vadd.f32 %v951, %v1399
        %1401 = vmatmul.f32.gmra.mxu0 %v505
        %v1402 = vpop.f32.mrf.mxu0
        %v1403 = vadd.f32 %v954, %v1402
        %1404 = vmatmul.f32.gmra.mxu0 %v508
        %v1405 = vpop.f32.mrf.mxu0
        %v1406 = vadd.f32 %v957, %v1405
        %1407 = vmatmul.f32.gmra.mxu0 %v511
        %v1408 = vpop.f32.mrf.mxu0
        %v1409 = vadd.f32 %v960, %v1408
        %1410 = vmatmul.f32.gmra.mxu0 %v514
        %v1411 = vpop.f32.mrf.mxu0
        %v1412 = vadd.f32 %v963, %v1411
        %1413 = vmatmul.f32.gmra.mxu0 %v517
        %v1414 = vpop.f32.mrf.mxu0
        %v1415 = vadd.f32 %v966, %v1414
        %1416 = vmatmul.f32.gmra.mxu0 %v520
        %v1417 = vpop.f32.mrf.mxu0
        %v1418 = vadd.f32 %v969, %v1417
        %1419 = vmatmul.f32.gmra.mxu0 %v523
        %v1420 = vpop.f32.mrf.mxu0
        %v1421 = vadd.f32 %v972, %v1420
        %1422 = vmatmul.f32.gmra.mxu0 %v526
        %v1423 = vpop.f32.mrf.mxu0
        %v1424 = vadd.f32 %v975, %v1423
        %1425 = vmatmul.f32.gmra.mxu0 %v529
        %v1426 = vpop.f32.mrf.mxu0
        %v1427 = vadd.f32 %v978, %v1426
        %1428 = vmatmul.f32.gmra.mxu0 %v532
        %v1429 = vpop.f32.mrf.mxu0
        %v1430 = vadd.f32 %v981, %v1429
        %1431 = vmatmul.f32.gmra.mxu0 %v535
        %v1432 = vpop.f32.mrf.mxu0
        %v1433 = vadd.f32 %v984, %v1432
        %1434 = vmatmul.f32.gmra.mxu0 %v538
        %v1435 = vpop.f32.mrf.mxu0
        %v1436 = vadd.f32 %v987, %v1435
        %1437 = vmatmul.f32.gmra.mxu0 %v541
        %v1438 = vpop.f32.mrf.mxu0
        %v1439 = vadd.f32 %v990, %v1438
        %1440 = vmatmul.f32.gmra.mxu0 %v544
        %v1441 = vpop.f32.mrf.mxu0
        %v1442 = vadd.f32 %v993, %v1441
        %1443 = vmatmul.f32.gmra.mxu0 %v547
        %v1444 = vpop.f32.mrf.mxu0
        %v1445 = vadd.f32 %v996, %v1444
        %1446 = vmatmul.f32.gmra.mxu0 %v550
        %v1447 = vpop.f32.mrf.mxu0
        %v1448 = vadd.f32 %v999, %v1447
        %1449 = vmatmul.f32.gmra.mxu0 %v553
        %v1450 = vpop.f32.mrf.mxu0
        %v1451 = vadd.f32 %v1002, %v1450
        %1452 = vmatmul.f32.gmra.mxu0 %v556
        %v1453 = vpop.f32.mrf.mxu0
        %v1454 = vadd.f32 %v1005, %v1453
        %1455 = vmatmul.f32.gmra.mxu0 %v559
        %v1456 = vpop.f32.mrf.mxu0
        %v1457 = vadd.f32 %v1008, %v1456
        %1458 = vmatmul.f32.gmra.mxu0 %v562
        %v1459 = vpop.f32.mrf.mxu0
        %v1460 = vadd.f32 %v1011, %v1459
        %1461 = vmatmul.f32.gmra.mxu0 %v565
        %v1462 = vpop.f32.mrf.mxu0
        %v1463 = vadd.f32 %v1014, %v1462
        %1464 = vmatmul.f32.gmra.mxu0 %v568
        %v1465 = vpop.f32.mrf.mxu0
        %v1466 = vadd.f32 %v1017, %v1465
        %1467 = vmatmul.f32.gmra.mxu0 %v571
        %v1468 = vpop.f32.mrf.mxu0
        %v1469 = vadd.f32 %v1020, %v1468
        %1470 = vmatmul.f32.gmra.mxu0 %v574
        %v1471 = vpop.f32.mrf.mxu0
        %v1472 = vadd.f32 %v1023, %v1471
        %1473 = vmatmul.f32.gmra.mxu0 %v577
        %v1474 = vpop.f32.mrf.mxu0
        %v1475 = vadd.f32 %v1026, %v1474
        %1476 = vmatmul.f32.gmra.mxu0 %v580
        %v1477 = vpop.f32.mrf.mxu0
        %v1478 = vadd.f32 %v1029, %v1477
        %1479 = vmatmul.f32.gmra.mxu0 %v583
        %v1480 = vpop.f32.mrf.mxu0
        %v1481 = vadd.f32 %v1032, %v1480
        %1482 = vmatmul.f32.gmra.mxu0 %v586
        %v1483 = vpop.f32.mrf.mxu0
        %v1484 = vadd.f32 %v1035, %v1483
        %1485 = vmatmul.f32.gmra.mxu0 %v589
        %v1486 = vpop.f32.mrf.mxu0
        %v1487 = vadd.f32 %v1038, %v1486
        %1488 = vmatmul.f32.gmra.mxu0 %v592
        %v1489 = vpop.f32.mrf.mxu0
        %v1490 = vadd.f32 %v1041, %v1489
        %1491 = vmatmul.f32.gmra.mxu0 %v595
        %v1492 = vpop.f32.mrf.mxu0
        %v1493 = vadd.f32 %v1044, %v1492
        %1494 = vmatmul.f32.gmra.mxu0 %v598
        %v1495 = vpop.f32.mrf.mxu0
        %v1496 = vadd.f32 %v1047, %v1495
        %1497 = vmatmul.f32.gmra.mxu0 %v601
        %v1498 = vpop.f32.mrf.mxu0
        %v1499 = vadd.f32 %v1050, %v1498
        %1500 = vmatmul.f32.gmra.mxu0 %v604
        %v1501 = vpop.f32.mrf.mxu0
        %v1502 = vadd.f32 %v1053, %v1501
        %1503 = vmatmul.f32.gmra.mxu0 %v607
        %v1504 = vpop.f32.mrf.mxu0
        %v1505 = vadd.f32 %v1056, %v1504
        %1506 = vmatmul.f32.gmra.mxu0 %v610
        %v1507 = vpop.f32.mrf.mxu0
        %v1508 = vadd.f32 %v1059, %v1507
        %1509 = vmatmul.f32.gmra.mxu0 %v613
        %v1510 = vpop.f32.mrf.mxu0
        %v1511 = vadd.f32 %v1062, %v1510
        %1512 = vmatmul.f32.gmra.mxu0 %v616
        %v1513 = vpop.f32.mrf.mxu0
        %v1514 = vadd.f32 %v1065, %v1513
        %1515 = vmatmul.f32.gmra.mxu0 %v619
        %v1516 = vpop.f32.mrf.mxu0
        %v1517 = vadd.f32 %v1068, %v1516
        %1518 = vmatmul.f32.gmra.mxu0 %v622
        %v1519 = vpop.f32.mrf.mxu0
        %v1520 = vadd.f32 %v1071, %v1519
        %1521 = vmatmul.f32.gmra.mxu0 %v625
        %v1522 = vpop.f32.mrf.mxu0
        %v1523 = vadd.f32 %v1074, %v1522
        %1524 = vmatmul.f32.gmra.mxu0 %v628
        %v1525 = vpop.f32.mrf.mxu0
        %v1526 = vadd.f32 %v1077, %v1525
        %1527 = vmatmul.f32.gmra.mxu0 %v631
        %v1528 = vpop.f32.mrf.mxu0
        %v1529 = vadd.f32 %v1080, %v1528
        %1530 = vmatmul.f32.gmra.mxu0 %v634
        %v1531 = vpop.f32.mrf.mxu0
        %v1532 = vadd.f32 %v1083, %v1531
        %1533 = vmatmul.f32.gmra.mxu0 %v637
        %v1534 = vpop.f32.mrf.mxu0
        %v1535 = vadd.f32 %v1086, %v1534
        %1536 = vmatmul.f32.gmra.mxu0 %v640
        %v1537 = vpop.f32.mrf.mxu0
        %v1538 = vadd.f32 %v1089, %v1537
        %1539 = vmatmul.f32.gmra.mxu0 %v643
        %v1540 = vpop.f32.mrf.mxu0
        %v1541 = vadd.f32 %v1092, %v1540
        %1542 = vmatmul.f32.gmra.mxu0 %v646
        %v1543 = vpop.f32.mrf.mxu0
        %v1544 = vadd.f32 %v1095, %v1543
        %1545 = vmatmul.f32.gmra.mxu0 %v649
        %v1546 = vpop.f32.mrf.mxu0
        %v1547 = vadd.f32 %v1098, %v1546
        %1548 = vmatmul.f32.gmra.mxu0 %v652
        %v1549 = vpop.f32.mrf.mxu0
        %v1550 = vadd.f32 %v1101, %v1549
        %1551 = vmatmul.f32.gmra.mxu0 %v655
        %v1552 = vpop.f32.mrf.mxu0
        %v1553 = vadd.f32 %v1104, %v1552
        %1554 = vmatmul.f32.gmra.mxu0 %v658
        %v1555 = vpop.f32.mrf.mxu0
        %v1556 = vadd.f32 %v1107, %v1555
        %1557 = vmatmul.f32.gmra.mxu0 %v661
        %v1558 = vpop.f32.mrf.mxu0
        %v1559 = vadd.f32 %v1110, %v1558
        %1560 = vmatmul.f32.gmra.mxu0 %v664
        %v1561 = vpop.f32.mrf.mxu0
        %v1562 = vadd.f32 %v1113, %v1561
        %1563 = vmatmul.f32.gmra.mxu0 %v667
        %v1564 = vpop.f32.mrf.mxu0
        %v1565 = vadd.f32 %v1116, %v1564
        %1566 = vmatmul.f32.gmra.mxu0 %v670
        %v1567 = vpop.f32.mrf.mxu0
        %v1568 = vadd.f32 %v1119, %v1567
        %1569 = vmatmul.f32.gmra.mxu0 %v673
        %v1570 = vpop.f32.mrf.mxu0
        %v1571 = vadd.f32 %v1122, %v1570
        %1572 = vmatmul.f32.gmra.mxu0 %v676
        %v1573 = vpop.f32.mrf.mxu0
        %v1574 = vadd.f32 %v1125, %v1573
        %1575 = vmatmul.f32.gmra.mxu0 %v679
        %v1576 = vpop.f32.mrf.mxu0
        %v1577 = vadd.f32 %v1128, %v1576
        %1578 = vmatmul.f32.gmra.mxu0 %v682
        %v1579 = vpop.f32.mrf.mxu0
        %v1580 = vadd.f32 %v1131, %v1579
        %1581 = vmatmul.f32.gmra.mxu0 %v685
        %v1582 = vpop.f32.mrf.mxu0
        %v1583 = vadd.f32 %v1134, %v1582
        %1584 = vmatmul.f32.gmra.mxu0 %v688
        %v1585 = vpop.f32.mrf.mxu0
        %v1586 = vadd.f32 %v1137, %v1585
        %1587 = vmatmul.f32.gmra.mxu0 %v691
        %v1588 = vpop.f32.mrf.mxu0
        %v1589 = vadd.f32 %v1140, %v1588
        %1590 = vmatmul.f32.gmra.mxu0 %v694
        %v1591 = vpop.f32.mrf.mxu0
        %v1592 = vadd.f32 %v1143, %v1591
        %1593 = vmatmul.f32.gmra.mxu0 %v697
        %v1594 = vpop.f32.mrf.mxu0
        %v1595 = vadd.f32 %v1146, %v1594
        %1596 = vmatmul.f32.gmra.mxu0 %v700
        %v1597 = vpop.f32.mrf.mxu0
        %v1598 = vadd.f32 %v1149, %v1597
        %1599 = vmatmul.f32.gmra.mxu0 %v703
        %v1600 = vpop.f32.mrf.mxu0
        %v1601 = vadd.f32 %v1152, %v1600
        %1602 = vmatmul.f32.gmra.mxu0 %v706
        %v1603 = vpop.f32.mrf.mxu0
        %v1604 = vadd.f32 %v1155, %v1603
        %1605 = vmatmul.f32.gmra.mxu0 %v709
        %v1606 = vpop.f32.mrf.mxu0
        %v1607 = vadd.f32 %v1158, %v1606
        %1608 = vmatmul.f32.gmra.mxu0 %v712
        %v1609 = vpop.f32.mrf.mxu0
        %v1610 = vadd.f32 %v1161, %v1609
        %1611 = vmatmul.f32.gmra.mxu0 %v715
        %v1612 = vpop.f32.mrf.mxu0
        %v1613 = vadd.f32 %v1164, %v1612
        %1614 = vmatmul.f32.gmra.mxu0 %v718
        %v1615 = vpop.f32.mrf.mxu0
        %v1616 = vadd.f32 %v1167, %v1615
        %1617 = vmatmul.f32.gmra.mxu0 %v721
        %v1618 = vpop.f32.mrf.mxu0
        %v1619 = vadd.f32 %v1170, %v1618
        %1620 = vmatmul.f32.gmra.mxu0 %v724
        %v1621 = vpop.f32.mrf.mxu0
        %v1622 = vadd.f32 %v1173, %v1621
        %1623 = vmatmul.f32.gmra.mxu0 %v727
        %v1624 = vpop.f32.mrf.mxu0
        %v1625 = vadd.f32 %v1176, %v1624
        %1626 = vmatmul.f32.gmra.mxu0 %v730
        %v1627 = vpop.f32.mrf.mxu0
        %v1628 = vadd.f32 %v1179, %v1627
        %1629 = vmatmul.f32.gmra.mxu0 %v733
        %v1630 = vpop.f32.mrf.mxu0
        %v1631 = vadd.f32 %v1182, %v1630
        %1632 = vmatmul.f32.gmra.mxu0 %v736
        %v1633 = vpop.f32.mrf.mxu0
        %v1634 = vadd.f32 %v1185, %v1633
        %1635 = vmatmul.f32.gmra.mxu0 %v739
        %v1636 = vpop.f32.mrf.mxu0
        %v1637 = vadd.f32 %v1188, %v1636
        %1638 = vmatmul.f32.gmra.mxu0 %v742
        %v1639 = vpop.f32.mrf.mxu0
        %v1640 = vadd.f32 %v1191, %v1639
        %1641 = vmatmul.f32.gmra.mxu0 %v745
        %v1642 = vpop.f32.mrf.mxu0
        %v1643 = vadd.f32 %v1194, %v1642
        %1644 = vmatmul.f32.gmra.mxu0 %v748
        %v1645 = vpop.f32.mrf.mxu0
        %v1646 = vadd.f32 %v1197, %v1645
        %1647 = vmatmul.f32.gmra.mxu0 %v751
        %v1648 = vpop.f32.mrf.mxu0
        %v1649 = vadd.f32 %v1200, %v1648
        %1650 = vmatmul.f32.gmra.mxu0 %v754
        %v1651 = vpop.f32.mrf.mxu0
        %v1652 = vadd.f32 %v1203, %v1651
        %1653 = vmatmul.f32.gmra.mxu0 %v757
        %v1654 = vpop.f32.mrf.mxu0
        %v1655 = vadd.f32 %v1206, %v1654
        %1656 = vmatmul.f32.gmra.mxu0 %v760
        %v1657 = vpop.f32.mrf.mxu0
        %v1658 = vadd.f32 %v1209, %v1657
        %1659 = vmatmul.f32.gmra.mxu0 %v763
        %v1660 = vpop.f32.mrf.mxu0
        %v1661 = vadd.f32 %v1212, %v1660
        %1662 = vmatmul.f32.gmra.mxu0 %v766
        %v1663 = vpop.f32.mrf.mxu0
        %v1664 = vadd.f32 %v1215, %v1663
        %1665 = vmatmul.f32.gmra.mxu0 %v769
        %v1666 = vpop.f32.mrf.mxu0
        %v1667 = vadd.f32 %v1218, %v1666
        %1668 = vmatmul.f32.gmra.mxu0 %v772
        %v1669 = vpop.f32.mrf.mxu0
        %v1670 = vadd.f32 %v1221, %v1669
        %1671 = vmatmul.f32.gmra.mxu0 %v775
        %v1672 = vpop.f32.mrf.mxu0
        %v1673 = vadd.f32 %v1224, %v1672
        %1674 = vmatmul.f32.gmra.mxu0 %v778
        %v1675 = vpop.f32.mrf.mxu0
        %v1676 = vadd.f32 %v1227, %v1675
        %1677 = vmatmul.f32.gmra.mxu0 %v781
        %v1678 = vpop.f32.mrf.mxu0
        %v1679 = vadd.f32 %v1230, %v1678
        %1680 = vmatmul.f32.gmra.mxu0 %v784
        %v1681 = vpop.f32.mrf.mxu0
        %v1682 = vadd.f32 %v1233, %v1681
        %1683 = vmatmul.f32.gmra.mxu0 %v787
        %v1684 = vpop.f32.mrf.mxu0
        %v1685 = vadd.f32 %v1236, %v1684
        %1686 = vmatmul.f32.gmra.mxu0 %v790
        %v1687 = vpop.f32.mrf.mxu0
        %v1688 = vadd.f32 %v1239, %v1687
        %1689 = vmatmul.f32.gmra.mxu0 %v793
        %v1690 = vpop.f32.mrf.mxu0
        %v1691 = vadd.f32 %v1242, %v1690
        %1692 = vmatmul.f32.gmra.mxu0 %v796
        %v1693 = vpop.f32.mrf.mxu0
        %v1694 = vadd.f32 %v1245, %v1693
        %1695 = vmatmul.f32.gmra.mxu0 %v799
        %v1696 = vpop.f32.mrf.mxu0
        %v1697 = vadd.f32 %v1248, %v1696
        %1698 = vmatmul.f32.gmra.mxu0 %v802
        %v1699 = vpop.f32.mrf.mxu0
        %v1700 = vadd.f32 %v1251, %v1699
        %1701 = vmatmul.f32.gmra.mxu0 %v805
        %v1702 = vpop.f32.mrf.mxu0
        %v1703 = vadd.f32 %v1254, %v1702
        %1704 = vmatmul.f32.gmra.mxu0 %v808
        %v1705 = vpop.f32.mrf.mxu0
        %v1706 = vadd.f32 %v1257, %v1705
        %1707 = vmatmul.f32.gmra.mxu0 %v811
        %v1708 = vpop.f32.mrf.mxu0
        %v1709 = vadd.f32 %v1260, %v1708
        %1710 = vmatmul.f32.gmra.mxu0 %v814
        %v1711 = vpop.f32.mrf.mxu0
        %v1712 = vadd.f32 %v1263, %v1711
        %1713 = vmatmul.f32.gmra.mxu0 %v817
        %v1714 = vpop.f32.mrf.mxu0
        %v1715 = vadd.f32 %v1266, %v1714
        %1716 = vmatmul.f32.gmra.mxu0 %v820
        %v1717 = vpop.f32.mrf.mxu0
        %v1718 = vadd.f32 %v1269, %v1717
        %1719 = vmatmul.f32.gmra.mxu0 %v823
        %v1720 = vpop.f32.mrf.mxu0
        %v1721 = vadd.f32 %v1272, %v1720
        %1722 = vmatmul.f32.gmra.mxu0 %v826
        %v1723 = vpop.f32.mrf.mxu0
        %v1724 = vadd.f32 %v1275, %v1723
        %1725 = vmatmul.f32.gmra.mxu0 %v829
        %v1726 = vpop.f32.mrf.mxu0
        %v1727 = vadd.f32 %v1278, %v1726
        %1728 = vmatmul.f32.gmra.mxu0 %v832
        %v1729 = vpop.f32.mrf.mxu0
        %v1730 = vadd.f32 %v1281, %v1729
        %1731 = vmatmul.f32.gmra.mxu0 %v835
        %v1732 = vpop.f32.mrf.mxu0
        %v1733 = vadd.f32 %v1284, %v1732
        %1734 = vmatmul.f32.gmra.mxu0 %v838
        %v1735 = vpop.f32.mrf.mxu0
        %v1736 = vadd.f32 %v1287, %v1735
        %1737 = vmatmul.f32.gmra.mxu0 %v841
        %v1738 = vpop.f32.mrf.mxu0
        %v1739 = vadd.f32 %v1290, %v1738
        %1740 = vmatmul.f32.gmra.mxu0 %v844
        %v1741 = vpop.f32.mrf.mxu0
        %v1742 = vadd.f32 %v1293, %v1741
        %1743 = vmatmul.f32.gmra.mxu0 %v847
        %v1744 = vpop.f32.mrf.mxu0
        %v1745 = vadd.f32 %v1296, %v1744
        %1746 = vmatmul.f32.gmra.mxu0 %v850
        %v1747 = vpop.f32.mrf.mxu0
        %v1748 = vadd.f32 %v1299, %v1747
        %1749 = vmatmul.f32.gmra.mxu0 %v853
        %v1750 = vpop.f32.mrf.mxu0
        %v1751 = vadd.f32 %v1302, %v1750
        %1752 = vmatmul.f32.gmra.mxu0 %v856
        %v1753 = vpop.f32.mrf.mxu0
        %v1754 = vadd.f32 %v1305, %v1753
        %1755 = vmatmul.f32.gmra.mxu0 %v859
        %v1756 = vpop.f32.mrf.mxu0
        %v1757 = vadd.f32 %v1308, %v1756
        %1758 = vmatmul.f32.gmra.mxu0 %v862
        %v1759 = vpop.f32.mrf.mxu0
        %v1760 = vadd.f32 %v1311, %v1759
        %1761 = vmatmul.f32.gmra.mxu0 %v865
        %v1762 = vpop.f32.mrf.mxu0
        %v1763 = vadd.f32 %v1314, %v1762
        %1764 = vmatmul.f32.gmra.mxu0 %v868
        %v1765 = vpop.f32.mrf.mxu0
        %v1766 = vadd.f32 %v1317, %v1765
        %1767 = vdwg.mxu0
        %1768 = vmatpush.msra.mxu0 %v437
        %1769 = vmatpush.msra.mxu0 %v436
        %1770 = vmatpush.msra.mxu0 %v435
        %1771 = vmatpush.msra.mxu0 %v434
        %1772 = vmatpush.msra.mxu0 %v433
        %1773 = vmatpush.msra.mxu0 %v432
        %1774 = vmatpush.msra.mxu0 %v431
        %1775 = vmatpush.msra.mxu0 %v430
        %1776 = vmatpush.msra.mxu0 %v429
        %1777 = vmatpush.msra.mxu0 %v428
        %1778 = vmatpush.msra.mxu0 %v427
        %1779 = vmatpush.msra.mxu0 %v426
        %1780 = vmatpush.msra.mxu0 %v425
        %1781 = vmatpush.msra.mxu0 %v424
        %1782 = vmatpush.msra.mxu0 %v423
        %1783 = vmatpush.msra.mxu0 %v422
        %1784 = vmatmul.f32.gmra.mxu0 %v440
        %v1785 = vpop.f32.mrf.mxu0
        %v1786 = vadd.f32 %v1337, %v1785
        %1787 = vmatmul.f32.gmra.mxu0 %v443
        %v1788 = vpop.f32.mrf.mxu0
        %v1789 = vadd.f32 %v1340, %v1788
        %1790 = vmatmul.f32.gmra.mxu0 %v446
        %v1791 = vpop.f32.mrf.mxu0
        %v1792 = vadd.f32 %v1343, %v1791
        %1793 = vmatmul.f32.gmra.mxu0 %v449
        %v1794 = vpop.f32.mrf.mxu0
        %v1795 = vadd.f32 %v1346, %v1794
        %1796 = vmatmul.f32.gmra.mxu0 %v452
        %v1797 = vpop.f32.mrf.mxu0
        %v1798 = vadd.f32 %v1349, %v1797
        %1799 = vmatmul.f32.gmra.mxu0 %v455
        %v1800 = vpop.f32.mrf.mxu0
        %v1801 = vadd.f32 %v1352, %v1800
        %1802 = vmatmul.f32.gmra.mxu0 %v458
        %v1803 = vpop.f32.mrf.mxu0
        %v1804 = vadd.f32 %v1355, %v1803
        %1805 = vmatmul.f32.gmra.mxu0 %v461
        %v1806 = vpop.f32.mrf.mxu0
        %v1807 = vadd.f32 %v1358, %v1806
        %1808 = vmatmul.f32.gmra.mxu0 %v464
        %v1809 = vpop.f32.mrf.mxu0
        %v1810 = vadd.f32 %v1361, %v1809
        %1811 = vmatmul.f32.gmra.mxu0 %v467
        %v1812 = vpop.f32.mrf.mxu0
        %v1813 = vadd.f32 %v1364, %v1812
        %1814 = vmatmul.f32.gmra.mxu0 %v470
        %v1815 = vpop.f32.mrf.mxu0
        %v1816 = vadd.f32 %v1367, %v1815
        %1817 = vmatmul.f32.gmra.mxu0 %v473
        %v1818 = vpop.f32.mrf.mxu0
        %v1819 = vadd.f32 %v1370, %v1818
        %1820 = vmatmul.f32.gmra.mxu0 %v476
        %v1821 = vpop.f32.mrf.mxu0
        %v1822 = vadd.f32 %v1373, %v1821
        %1823 = vmatmul.f32.gmra.mxu0 %v479
        %v1824 = vpop.f32.mrf.mxu0
        %v1825 = vadd.f32 %v1376, %v1824
        %1826 = vmatmul.f32.gmra.mxu0 %v482
        %v1827 = vpop.f32.mrf.mxu0
        %v1828 = vadd.f32 %v1379, %v1827
        %1829 = vmatmul.f32.gmra.mxu0 %v485
        %v1830 = vpop.f32.mrf.mxu0
        %v1831 = vadd.f32 %v1382, %v1830
        %1832 = vmatmul.f32.gmra.mxu0 %v488
        %v1833 = vpop.f32.mrf.mxu0
        %v1834 = vadd.f32 %v1385, %v1833
        %1835 = vmatmul.f32.gmra.mxu0 %v491
        %v1836 = vpop.f32.mrf.mxu0
        %v1837 = vadd.f32 %v1388, %v1836
        %1838 = vmatmul.f32.gmra.mxu0 %v494
        %v1839 = vpop.f32.mrf.mxu0
        %v1840 = vadd.f32 %v1391, %v1839
        %1841 = vmatmul.f32.gmra.mxu0 %v497
        %v1842 = vpop.f32.mrf.mxu0
        %v1843 = vadd.f32 %v1394, %v1842
        %1844 = vmatmul.f32.gmra.mxu0 %v500
        %v1845 = vpop.f32.mrf.mxu0
        %v1846 = vadd.f32 %v1397, %v1845
        %1847 = vmatmul.f32.gmra.mxu0 %v503
        %v1848 = vpop.f32.mrf.mxu0
        %v1849 = vadd.f32 %v1400, %v1848
        %1850 = vmatmul.f32.gmra.mxu0 %v506
        %v1851 = vpop.f32.mrf.mxu0
        %v1852 = vadd.f32 %v1403, %v1851
        %1853 = vmatmul.f32.gmra.mxu0 %v509
        %v1854 = vpop.f32.mrf.mxu0
        %v1855 = vadd.f32 %v1406, %v1854
        %1856 = vmatmul.f32.gmra.mxu0 %v512
        %v1857 = vpop.f32.mrf.mxu0
        %v1858 = vadd.f32 %v1409, %v1857
        %1859 = vmatmul.f32.gmra.mxu0 %v515
        %v1860 = vpop.f32.mrf.mxu0
        %v1861 = vadd.f32 %v1412, %v1860
        %1862 = vmatmul.f32.gmra.mxu0 %v518
        %v1863 = vpop.f32.mrf.mxu0
        %v1864 = vadd.f32 %v1415, %v1863
        %1865 = vmatmul.f32.gmra.mxu0 %v521
        %v1866 = vpop.f32.mrf.mxu0
        %v1867 = vadd.f32 %v1418, %v1866
        %1868 = vmatmul.f32.gmra.mxu0 %v524
        %v1869 = vpop.f32.mrf.mxu0
        %v1870 = vadd.f32 %v1421, %v1869
        %1871 = vmatmul.f32.gmra.mxu0 %v527
        %v1872 = vpop.f32.mrf.mxu0
        %v1873 = vadd.f32 %v1424, %v1872
        %1874 = vmatmul.f32.gmra.mxu0 %v530
        %v1875 = vpop.f32.mrf.mxu0
        %v1876 = vadd.f32 %v1427, %v1875
        %1877 = vmatmul.f32.gmra.mxu0 %v533
        %v1878 = vpop.f32.mrf.mxu0
        %v1879 = vadd.f32 %v1430, %v1878
        %1880 = vmatmul.f32.gmra.mxu0 %v536
        %v1881 = vpop.f32.mrf.mxu0
        %v1882 = vadd.f32 %v1433, %v1881
        %1883 = vmatmul.f32.gmra.mxu0 %v539
        %v1884 = vpop.f32.mrf.mxu0
        %v1885 = vadd.f32 %v1436, %v1884
        %1886 = vmatmul.f32.gmra.mxu0 %v542
        %v1887 = vpop.f32.mrf.mxu0
        %v1888 = vadd.f32 %v1439, %v1887
        %1889 = vmatmul.f32.gmra.mxu0 %v545
        %v1890 = vpop.f32.mrf.mxu0
        %v1891 = vadd.f32 %v1442, %v1890
        %1892 = vmatmul.f32.gmra.mxu0 %v548
        %v1893 = vpop.f32.mrf.mxu0
        %v1894 = vadd.f32 %v1445, %v1893
        %1895 = vmatmul.f32.gmra.mxu0 %v551
        %v1896 = vpop.f32.mrf.mxu0
        %v1897 = vadd.f32 %v1448, %v1896
        %1898 = vmatmul.f32.gmra.mxu0 %v554
        %v1899 = vpop.f32.mrf.mxu0
        %v1900 = vadd.f32 %v1451, %v1899
        %1901 = vmatmul.f32.gmra.mxu0 %v557
        %v1902 = vpop.f32.mrf.mxu0
        %v1903 = vadd.f32 %v1454, %v1902
        %1904 = vmatmul.f32.gmra.mxu0 %v560
        %v1905 = vpop.f32.mrf.mxu0
        %v1906 = vadd.f32 %v1457, %v1905
        %1907 = vmatmul.f32.gmra.mxu0 %v563
        %v1908 = vpop.f32.mrf.mxu0
        %v1909 = vadd.f32 %v1460, %v1908
        %1910 = vmatmul.f32.gmra.mxu0 %v566
        %v1911 = vpop.f32.mrf.mxu0
        %v1912 = vadd.f32 %v1463, %v1911
        %1913 = vmatmul.f32.gmra.mxu0 %v569
        %v1914 = vpop.f32.mrf.mxu0
        %v1915 = vadd.f32 %v1466, %v1914
        %1916 = vmatmul.f32.gmra.mxu0 %v572
        %v1917 = vpop.f32.mrf.mxu0
        %v1918 = vadd.f32 %v1469, %v1917
        %1919 = vmatmul.f32.gmra.mxu0 %v575
        %v1920 = vpop.f32.mrf.mxu0
        %v1921 = vadd.f32 %v1472, %v1920
        %1922 = vmatmul.f32.gmra.mxu0 %v578
        %v1923 = vpop.f32.mrf.mxu0
        %v1924 = vadd.f32 %v1475, %v1923
        %1925 = vmatmul.f32.gmra.mxu0 %v581
        %v1926 = vpop.f32.mrf.mxu0
        %v1927 = vadd.f32 %v1478, %v1926
        %1928 = vmatmul.f32.gmra.mxu0 %v584
        %v1929 = vpop.f32.mrf.mxu0
        %v1930 = vadd.f32 %v1481, %v1929
        %1931 = vmatmul.f32.gmra.mxu0 %v587
        %v1932 = vpop.f32.mrf.mxu0
        %v1933 = vadd.f32 %v1484, %v1932
        %1934 = vmatmul.f32.gmra.mxu0 %v590
        %v1935 = vpop.f32.mrf.mxu0
        %v1936 = vadd.f32 %v1487, %v1935
        %1937 = vmatmul.f32.gmra.mxu0 %v593
        %v1938 = vpop.f32.mrf.mxu0
        %v1939 = vadd.f32 %v1490, %v1938
        %1940 = vmatmul.f32.gmra.mxu0 %v596
        %v1941 = vpop.f32.mrf.mxu0
        %v1942 = vadd.f32 %v1493, %v1941
        %1943 = vmatmul.f32.gmra.mxu0 %v599
        %v1944 = vpop.f32.mrf.mxu0
        %v1945 = vadd.f32 %v1496, %v1944
        %1946 = vmatmul.f32.gmra.mxu0 %v602
        %v1947 = vpop.f32.mrf.mxu0
        %v1948 = vadd.f32 %v1499, %v1947
        %1949 = vmatmul.f32.gmra.mxu0 %v605
        %v1950 = vpop.f32.mrf.mxu0
        %v1951 = vadd.f32 %v1502, %v1950
        %1952 = vmatmul.f32.gmra.mxu0 %v608
        %v1953 = vpop.f32.mrf.mxu0
        %v1954 = vadd.f32 %v1505, %v1953
        %1955 = vmatmul.f32.gmra.mxu0 %v611
        %v1956 = vpop.f32.mrf.mxu0
        %v1957 = vadd.f32 %v1508, %v1956
        %1958 = vmatmul.f32.gmra.mxu0 %v614
        %v1959 = vpop.f32.mrf.mxu0
        %v1960 = vadd.f32 %v1511, %v1959
        %1961 = vmatmul.f32.gmra.mxu0 %v617
        %v1962 = vpop.f32.mrf.mxu0
        %v1963 = vadd.f32 %v1514, %v1962
        %1964 = vmatmul.f32.gmra.mxu0 %v620
        %v1965 = vpop.f32.mrf.mxu0
        %v1966 = vadd.f32 %v1517, %v1965
        %1967 = vmatmul.f32.gmra.mxu0 %v623
        %v1968 = vpop.f32.mrf.mxu0
        %v1969 = vadd.f32 %v1520, %v1968
        %1970 = vmatmul.f32.gmra.mxu0 %v626
        %v1971 = vpop.f32.mrf.mxu0
        %v1972 = vadd.f32 %v1523, %v1971
        %1973 = vmatmul.f32.gmra.mxu0 %v629
        %v1974 = vpop.f32.mrf.mxu0
        %v1975 = vadd.f32 %v1526, %v1974
        %1976 = vmatmul.f32.gmra.mxu0 %v632
        %v1977 = vpop.f32.mrf.mxu0
        %v1978 = vadd.f32 %v1529, %v1977
        %1979 = vmatmul.f32.gmra.mxu0 %v635
        %v1980 = vpop.f32.mrf.mxu0
        %v1981 = vadd.f32 %v1532, %v1980
        %1982 = vmatmul.f32.gmra.mxu0 %v638
        %v1983 = vpop.f32.mrf.mxu0
        %v1984 = vadd.f32 %v1535, %v1983
        %1985 = vmatmul.f32.gmra.mxu0 %v641
        %v1986 = vpop.f32.mrf.mxu0
        %v1987 = vadd.f32 %v1538, %v1986
        %1988 = vmatmul.f32.gmra.mxu0 %v644
        %v1989 = vpop.f32.mrf.mxu0
        %v1990 = vadd.f32 %v1541, %v1989
        %1991 = vmatmul.f32.gmra.mxu0 %v647
        %v1992 = vpop.f32.mrf.mxu0
        %v1993 = vadd.f32 %v1544, %v1992
        %1994 = vmatmul.f32.gmra.mxu0 %v650
        %v1995 = vpop.f32.mrf.mxu0
        %v1996 = vadd.f32 %v1547, %v1995
        %1997 = vmatmul.f32.gmra.mxu0 %v653
        %v1998 = vpop.f32.mrf.mxu0
        %v1999 = vadd.f32 %v1550, %v1998
        %2000 = vmatmul.f32.gmra.mxu0 %v656
        %v2001 = vpop.f32.mrf.mxu0
        %v2002 = vadd.f32 %v1553, %v2001
        %2003 = vmatmul.f32.gmra.mxu0 %v659
        %v2004 = vpop.f32.mrf.mxu0
        %v2005 = vadd.f32 %v1556, %v2004
        %2006 = vmatmul.f32.gmra.mxu0 %v662
        %v2007 = vpop.f32.mrf.mxu0
        %v2008 = vadd.f32 %v1559, %v2007
        %2009 = vmatmul.f32.gmra.mxu0 %v665
        %v2010 = vpop.f32.mrf.mxu0
        %v2011 = vadd.f32 %v1562, %v2010
        %2012 = vmatmul.f32.gmra.mxu0 %v668
        %v2013 = vpop.f32.mrf.mxu0
        %v2014 = vadd.f32 %v1565, %v2013
        %2015 = vmatmul.f32.gmra.mxu0 %v671
        %v2016 = vpop.f32.mrf.mxu0
        %v2017 = vadd.f32 %v1568, %v2016
        %2018 = vmatmul.f32.gmra.mxu0 %v674
        %v2019 = vpop.f32.mrf.mxu0
        %v2020 = vadd.f32 %v1571, %v2019
        %2021 = vmatmul.f32.gmra.mxu0 %v677
        %v2022 = vpop.f32.mrf.mxu0
        %v2023 = vadd.f32 %v1574, %v2022
        %2024 = vmatmul.f32.gmra.mxu0 %v680
        %v2025 = vpop.f32.mrf.mxu0
        %v2026 = vadd.f32 %v1577, %v2025
        %2027 = vmatmul.f32.gmra.mxu0 %v683
        %v2028 = vpop.f32.mrf.mxu0
        %v2029 = vadd.f32 %v1580, %v2028
        %2030 = vmatmul.f32.gmra.mxu0 %v686
        %v2031 = vpop.f32.mrf.mxu0
        %v2032 = vadd.f32 %v1583, %v2031
        %2033 = vmatmul.f32.gmra.mxu0 %v689
        %v2034 = vpop.f32.mrf.mxu0
        %v2035 = vadd.f32 %v1586, %v2034
        %2036 = vmatmul.f32.gmra.mxu0 %v692
        %v2037 = vpop.f32.mrf.mxu0
        %v2038 = vadd.f32 %v1589, %v2037
        %2039 = vmatmul.f32.gmra.mxu0 %v695
        %v2040 = vpop.f32.mrf.mxu0
        %v2041 = vadd.f32 %v1592, %v2040
        %2042 = vmatmul.f32.gmra.mxu0 %v698
        %v2043 = vpop.f32.mrf.mxu0
        %v2044 = vadd.f32 %v1595, %v2043
        %2045 = vmatmul.f32.gmra.mxu0 %v701
        %v2046 = vpop.f32.mrf.mxu0
        %v2047 = vadd.f32 %v1598, %v2046
        %2048 = vmatmul.f32.gmra.mxu0 %v704
        %v2049 = vpop.f32.mrf.mxu0
        %v2050 = vadd.f32 %v1601, %v2049
        %2051 = vmatmul.f32.gmra.mxu0 %v707
        %v2052 = vpop.f32.mrf.mxu0
        %v2053 = vadd.f32 %v1604, %v2052
        %2054 = vmatmul.f32.gmra.mxu0 %v710
        %v2055 = vpop.f32.mrf.mxu0
        %v2056 = vadd.f32 %v1607, %v2055
        %2057 = vmatmul.f32.gmra.mxu0 %v713
        %v2058 = vpop.f32.mrf.mxu0
        %v2059 = vadd.f32 %v1610, %v2058
        %2060 = vmatmul.f32.gmra.mxu0 %v716
        %v2061 = vpop.f32.mrf.mxu0
        %v2062 = vadd.f32 %v1613, %v2061
        %2063 = vmatmul.f32.gmra.mxu0 %v719
        %v2064 = vpop.f32.mrf.mxu0
        %v2065 = vadd.f32 %v1616, %v2064
        %2066 = vmatmul.f32.gmra.mxu0 %v722
        %v2067 = vpop.f32.mrf.mxu0
        %v2068 = vadd.f32 %v1619, %v2067
        %2069 = vmatmul.f32.gmra.mxu0 %v725
        %v2070 = vpop.f32.mrf.mxu0
        %v2071 = vadd.f32 %v1622, %v2070
        %2072 = vmatmul.f32.gmra.mxu0 %v728
        %v2073 = vpop.f32.mrf.mxu0
        %v2074 = vadd.f32 %v1625, %v2073
        %2075 = vmatmul.f32.gmra.mxu0 %v731
        %v2076 = vpop.f32.mrf.mxu0
        %v2077 = vadd.f32 %v1628, %v2076
        %2078 = vmatmul.f32.gmra.mxu0 %v734
        %v2079 = vpop.f32.mrf.mxu0
        %v2080 = vadd.f32 %v1631, %v2079
        %2081 = vmatmul.f32.gmra.mxu0 %v737
        %v2082 = vpop.f32.mrf.mxu0
        %v2083 = vadd.f32 %v1634, %v2082
        %2084 = vmatmul.f32.gmra.mxu0 %v740
        %v2085 = vpop.f32.mrf.mxu0
        %v2086 = vadd.f32 %v1637, %v2085
        %2087 = vmatmul.f32.gmra.mxu0 %v743
        %v2088 = vpop.f32.mrf.mxu0
        %v2089 = vadd.f32 %v1640, %v2088
        %2090 = vmatmul.f32.gmra.mxu0 %v746
        %v2091 = vpop.f32.mrf.mxu0
        %v2092 = vadd.f32 %v1643, %v2091
        %2093 = vmatmul.f32.gmra.mxu0 %v749
        %v2094 = vpop.f32.mrf.mxu0
        %v2095 = vadd.f32 %v1646, %v2094
        %2096 = vmatmul.f32.gmra.mxu0 %v752
        %v2097 = vpop.f32.mrf.mxu0
        %v2098 = vadd.f32 %v1649, %v2097
        %2099 = vmatmul.f32.gmra.mxu0 %v755
        %v2100 = vpop.f32.mrf.mxu0
        %v2101 = vadd.f32 %v1652, %v2100
        %2102 = vmatmul.f32.gmra.mxu0 %v758
        %v2103 = vpop.f32.mrf.mxu0
        %v2104 = vadd.f32 %v1655, %v2103
        %2105 = vmatmul.f32.gmra.mxu0 %v761
        %v2106 = vpop.f32.mrf.mxu0
        %v2107 = vadd.f32 %v1658, %v2106
        %2108 = vmatmul.f32.gmra.mxu0 %v764
        %v2109 = vpop.f32.mrf.mxu0
        %v2110 = vadd.f32 %v1661, %v2109
        %2111 = vmatmul.f32.gmra.mxu0 %v767
        %v2112 = vpop.f32.mrf.mxu0
        %v2113 = vadd.f32 %v1664, %v2112
        %2114 = vmatmul.f32.gmra.mxu0 %v770
        %v2115 = vpop.f32.mrf.mxu0
        %v2116 = vadd.f32 %v1667, %v2115
        %2117 = vmatmul.f32.gmra.mxu0 %v773
        %v2118 = vpop.f32.mrf.mxu0
        %v2119 = vadd.f32 %v1670, %v2118
        %2120 = vmatmul.f32.gmra.mxu0 %v776
        %v2121 = vpop.f32.mrf.mxu0
        %v2122 = vadd.f32 %v1673, %v2121
        %2123 = vmatmul.f32.gmra.mxu0 %v779
        %v2124 = vpop.f32.mrf.mxu0
        %v2125 = vadd.f32 %v1676, %v2124
        %2126 = vmatmul.f32.gmra.mxu0 %v782
        %v2127 = vpop.f32.mrf.mxu0
        %v2128 = vadd.f32 %v1679, %v2127
        %2129 = vmatmul.f32.gmra.mxu0 %v785
        %v2130 = vpop.f32.mrf.mxu0
        %v2131 = vadd.f32 %v1682, %v2130
        %2132 = vmatmul.f32.gmra.mxu0 %v788
        %v2133 = vpop.f32.mrf.mxu0
        %v2134 = vadd.f32 %v1685, %v2133
        %2135 = vmatmul.f32.gmra.mxu0 %v791
        %v2136 = vpop.f32.mrf.mxu0
        %v2137 = vadd.f32 %v1688, %v2136
        %2138 = vmatmul.f32.gmra.mxu0 %v794
        %v2139 = vpop.f32.mrf.mxu0
        %v2140 = vadd.f32 %v1691, %v2139
        %2141 = vmatmul.f32.gmra.mxu0 %v797
        %v2142 = vpop.f32.mrf.mxu0
        %v2143 = vadd.f32 %v1694, %v2142
        %2144 = vmatmul.f32.gmra.mxu0 %v800
        %v2145 = vpop.f32.mrf.mxu0
        %v2146 = vadd.f32 %v1697, %v2145
        %2147 = vmatmul.f32.gmra.mxu0 %v803
        %v2148 = vpop.f32.mrf.mxu0
        %v2149 = vadd.f32 %v1700, %v2148
        %2150 = vmatmul.f32.gmra.mxu0 %v806
        %v2151 = vpop.f32.mrf.mxu0
        %v2152 = vadd.f32 %v1703, %v2151
        %2153 = vmatmul.f32.gmra.mxu0 %v809
        %v2154 = vpop.f32.mrf.mxu0
        %v2155 = vadd.f32 %v1706, %v2154
        %2156 = vmatmul.f32.gmra.mxu0 %v812
        %v2157 = vpop.f32.mrf.mxu0
        %v2158 = vadd.f32 %v1709, %v2157
        %2159 = vmatmul.f32.gmra.mxu0 %v815
        %v2160 = vpop.f32.mrf.mxu0
        %v2161 = vadd.f32 %v1712, %v2160
        %2162 = vmatmul.f32.gmra.mxu0 %v818
        %v2163 = vpop.f32.mrf.mxu0
        %v2164 = vadd.f32 %v1715, %v2163
        %2165 = vmatmul.f32.gmra.mxu0 %v821
        %v2166 = vpop.f32.mrf.mxu0
        %v2167 = vadd.f32 %v1718, %v2166
        %2168 = vmatmul.f32.gmra.mxu0 %v824
        %v2169 = vpop.f32.mrf.mxu0
        %v2170 = vadd.f32 %v1721, %v2169
        %2171 = vmatmul.f32.gmra.mxu0 %v827
        %v2172 = vpop.f32.mrf.mxu0
        %v2173 = vadd.f32 %v1724, %v2172
        %2174 = vmatmul.f32.gmra.mxu0 %v830
        %v2175 = vpop.f32.mrf.mxu0
        %v2176 = vadd.f32 %v1727, %v2175
        %2177 = vmatmul.f32.gmra.mxu0 %v833
        %v2178 = vpop.f32.mrf.mxu0
        %v2179 = vadd.f32 %v1730, %v2178
        %2180 = vmatmul.f32.gmra.mxu0 %v836
        %v2181 = vpop.f32.mrf.mxu0
        %v2182 = vadd.f32 %v1733, %v2181
        %2183 = vmatmul.f32.gmra.mxu0 %v839
        %v2184 = vpop.f32.mrf.mxu0
        %v2185 = vadd.f32 %v1736, %v2184
        %2186 = vmatmul.f32.gmra.mxu0 %v842
        %v2187 = vpop.f32.mrf.mxu0
        %v2188 = vadd.f32 %v1739, %v2187
        %2189 = vmatmul.f32.gmra.mxu0 %v845
        %v2190 = vpop.f32.mrf.mxu0
        %v2191 = vadd.f32 %v1742, %v2190
        %2192 = vmatmul.f32.gmra.mxu0 %v848
        %v2193 = vpop.f32.mrf.mxu0
        %v2194 = vadd.f32 %v1745, %v2193
        %2195 = vmatmul.f32.gmra.mxu0 %v851
        %v2196 = vpop.f32.mrf.mxu0
        %v2197 = vadd.f32 %v1748, %v2196
        %2198 = vmatmul.f32.gmra.mxu0 %v854
        %v2199 = vpop.f32.mrf.mxu0
        %v2200 = vadd.f32 %v1751, %v2199
        %2201 = vmatmul.f32.gmra.mxu0 %v857
        %v2202 = vpop.f32.mrf.mxu0
        %v2203 = vadd.f32 %v1754, %v2202
        %2204 = vmatmul.f32.gmra.mxu0 %v860
        %v2205 = vpop.f32.mrf.mxu0
        %v2206 = vadd.f32 %v1757, %v2205
        %2207 = vmatmul.f32.gmra.mxu0 %v863
        %v2208 = vpop.f32.mrf.mxu0
        %v2209 = vadd.f32 %v1760, %v2208
        %2210 = vmatmul.f32.gmra.mxu0 %v866
        %v2211 = vpop.f32.mrf.mxu0
        %v2212 = vadd.f32 %v1763, %v2211
        %2213 = vmatmul.f32.gmra.mxu0 %v869
        %v2214 = vpop.f32.mrf.mxu0
        %v2215 = vadd.f32 %v1766, %v2214
        %2216 = vdwg.mxu0
        %vm2217 = vcmask 400384
        %v2218 = vsel %vm2217, %v1786, 0.0
        %2219 = vadd.xlane.f32.xlu0 %v2218
        %v2220 = vpop.xlane.xlu0 %2219
        %v2221 = vsel %vm2217, %v1789, 0.0
        %2222 = vadd.xlane.f32.xlu0 %v2221
        %v2223 = vpop.xlane.xlu0 %2222
        %v2224 = vsel %vm2217, %v1792, 0.0
        %2225 = vadd.xlane.f32.xlu0 %v2224
        %v2226 = vpop.xlane.xlu0 %2225
        %v2227 = vsel %vm2217, %v1795, 0.0
        %2228 = vadd.xlane.f32.xlu0 %v2227
        %v2229 = vpop.xlane.xlu0 %2228
        %v2230 = vsel %vm2217, %v1798, 0.0
        %2231 = vadd.xlane.f32.xlu0 %v2230
        %v2232 = vpop.xlane.xlu0 %2231
        %v2233 = vsel %vm2217, %v1801, 0.0
        %2234 = vadd.xlane.f32.xlu0 %v2233
        %v2235 = vpop.xlane.xlu0 %2234
        %v2236 = vsel %vm2217, %v1804, 0.0
        %2237 = vadd.xlane.f32.xlu0 %v2236
        %v2238 = vpop.xlane.xlu0 %2237
        %v2239 = vsel %vm2217, %v1807, 0.0
        %2240 = vadd.xlane.f32.xlu0 %v2239
        %v2241 = vpop.xlane.xlu0 %2240
        %v2242 = vsel %vm2217, %v1810, 0.0
        %2243 = vadd.xlane.f32.xlu0 %v2242
        %v2244 = vpop.xlane.xlu0 %2243
        %v2245 = vsel %vm2217, %v1813, 0.0
        %2246 = vadd.xlane.f32.xlu0 %v2245
        %v2247 = vpop.xlane.xlu0 %2246
        %v2248 = vsel %vm2217, %v1816, 0.0
        %2249 = vadd.xlane.f32.xlu0 %v2248
        %v2250 = vpop.xlane.xlu0 %2249
        %v2251 = vsel %vm2217, %v1819, 0.0
        %2252 = vadd.xlane.f32.xlu0 %v2251
        %v2253 = vpop.xlane.xlu0 %2252
        %v2254 = vsel %vm2217, %v1822, 0.0
        %2255 = vadd.xlane.f32.xlu0 %v2254
        %v2256 = vpop.xlane.xlu0 %2255
        %v2257 = vsel %vm2217, %v1825, 0.0
        %2258 = vadd.xlane.f32.xlu0 %v2257
        %v2259 = vpop.xlane.xlu0 %2258
        %v2260 = vsel %vm2217, %v1828, 0.0
        %2261 = vadd.xlane.f32.xlu0 %v2260
        %v2262 = vpop.xlane.xlu0 %2261
        %v2263 = vsel %vm2217, %v1831, 0.0
        %2264 = vadd.xlane.f32.xlu0 %v2263
        %v2265 = vpop.xlane.xlu0 %2264
        %v2266 = vsel %vm2217, %v1834, 0.0
        %2267 = vadd.xlane.f32.xlu0 %v2266
        %v2268 = vpop.xlane.xlu0 %2267
        %v2269 = vsel %vm2217, %v1837, 0.0
        %2270 = vadd.xlane.f32.xlu0 %v2269
        %v2271 = vpop.xlane.xlu0 %2270
        %v2272 = vsel %vm2217, %v1840, 0.0
        %2273 = vadd.xlane.f32.xlu0 %v2272
        %v2274 = vpop.xlane.xlu0 %2273
        %v2275 = vsel %vm2217, %v1843, 0.0
        %2276 = vadd.xlane.f32.xlu0 %v2275
        %v2277 = vpop.xlane.xlu0 %2276
        %v2278 = vsel %vm2217, %v1846, 0.0
        %2279 = vadd.xlane.f32.xlu0 %v2278
        %v2280 = vpop.xlane.xlu0 %2279
        %v2281 = vsel %vm2217, %v1849, 0.0
        %2282 = vadd.xlane.f32.xlu0 %v2281
        %v2283 = vpop.xlane.xlu0 %2282
        %v2284 = vsel %vm2217, %v1852, 0.0
        %2285 = vadd.xlane.f32.xlu0 %v2284
        %v2286 = vpop.xlane.xlu0 %2285
        %v2287 = vsel %vm2217, %v1855, 0.0
        %2288 = vadd.xlane.f32.xlu0 %v2287
        %v2289 = vpop.xlane.xlu0 %2288
        %v2290 = vsel %vm2217, %v1858, 0.0
        %2291 = vadd.xlane.f32.xlu0 %v2290
        %v2292 = vpop.xlane.xlu0 %2291
        %v2293 = vsel %vm2217, %v1861, 0.0
        %2294 = vadd.xlane.f32.xlu0 %v2293
        %v2295 = vpop.xlane.xlu0 %2294
        %v2296 = vsel %vm2217, %v1864, 0.0
        %2297 = vadd.xlane.f32.xlu0 %v2296
        %v2298 = vpop.xlane.xlu0 %2297
        %v2299 = vsel %vm2217, %v1867, 0.0
        %2300 = vadd.xlane.f32.xlu0 %v2299
        %v2301 = vpop.xlane.xlu0 %2300
        %v2302 = vsel %vm2217, %v1870, 0.0
        %2303 = vadd.xlane.f32.xlu0 %v2302
        %v2304 = vpop.xlane.xlu0 %2303
        %v2305 = vsel %vm2217, %v1873, 0.0
        %2306 = vadd.xlane.f32.xlu0 %v2305
        %v2307 = vpop.xlane.xlu0 %2306
        %v2308 = vsel %vm2217, %v1876, 0.0
        %2309 = vadd.xlane.f32.xlu0 %v2308
        %v2310 = vpop.xlane.xlu0 %2309
        %v2311 = vsel %vm2217, %v1879, 0.0
        %2312 = vadd.xlane.f32.xlu0 %v2311
        %v2313 = vpop.xlane.xlu0 %2312
        %v2314 = vsel %vm2217, %v1882, 0.0
        %2315 = vadd.xlane.f32.xlu0 %v2314
        %v2316 = vpop.xlane.xlu0 %2315
        %v2317 = vsel %vm2217, %v1885, 0.0
        %2318 = vadd.xlane.f32.xlu0 %v2317
        %v2319 = vpop.xlane.xlu0 %2318
        %v2320 = vsel %vm2217, %v1888, 0.0
        %2321 = vadd.xlane.f32.xlu0 %v2320
        %v2322 = vpop.xlane.xlu0 %2321
        %v2323 = vsel %vm2217, %v1891, 0.0
        %2324 = vadd.xlane.f32.xlu0 %v2323
        %v2325 = vpop.xlane.xlu0 %2324
        %v2326 = vsel %vm2217, %v1894, 0.0
        %2327 = vadd.xlane.f32.xlu0 %v2326
        %v2328 = vpop.xlane.xlu0 %2327
        %v2329 = vsel %vm2217, %v1897, 0.0
        %2330 = vadd.xlane.f32.xlu0 %v2329
        %v2331 = vpop.xlane.xlu0 %2330
        %v2332 = vsel %vm2217, %v1900, 0.0
        %2333 = vadd.xlane.f32.xlu0 %v2332
        %v2334 = vpop.xlane.xlu0 %2333
        %v2335 = vsel %vm2217, %v1903, 0.0
        %2336 = vadd.xlane.f32.xlu0 %v2335
        %v2337 = vpop.xlane.xlu0 %2336
        %v2338 = vsel %vm2217, %v1906, 0.0
        %2339 = vadd.xlane.f32.xlu0 %v2338
        %v2340 = vpop.xlane.xlu0 %2339
        %v2341 = vsel %vm2217, %v1909, 0.0
        %2342 = vadd.xlane.f32.xlu0 %v2341
        %v2343 = vpop.xlane.xlu0 %2342
        %v2344 = vsel %vm2217, %v1912, 0.0
        %2345 = vadd.xlane.f32.xlu0 %v2344
        %v2346 = vpop.xlane.xlu0 %2345
        %v2347 = vsel %vm2217, %v1915, 0.0
        %2348 = vadd.xlane.f32.xlu0 %v2347
        %v2349 = vpop.xlane.xlu0 %2348
        %v2350 = vsel %vm2217, %v1918, 0.0
        %2351 = vadd.xlane.f32.xlu0 %v2350
        %v2352 = vpop.xlane.xlu0 %2351
        %v2353 = vsel %vm2217, %v1921, 0.0
        %2354 = vadd.xlane.f32.xlu0 %v2353
        %v2355 = vpop.xlane.xlu0 %2354
        %v2356 = vsel %vm2217, %v1924, 0.0
        %2357 = vadd.xlane.f32.xlu0 %v2356
        %v2358 = vpop.xlane.xlu0 %2357
        %v2359 = vsel %vm2217, %v1927, 0.0
        %2360 = vadd.xlane.f32.xlu0 %v2359
        %v2361 = vpop.xlane.xlu0 %2360
        %v2362 = vsel %vm2217, %v1930, 0.0
        %2363 = vadd.xlane.f32.xlu0 %v2362
        %v2364 = vpop.xlane.xlu0 %2363
        %v2365 = vsel %vm2217, %v1933, 0.0
        %2366 = vadd.xlane.f32.xlu0 %v2365
        %v2367 = vpop.xlane.xlu0 %2366
        %v2368 = vsel %vm2217, %v1936, 0.0
        %2369 = vadd.xlane.f32.xlu0 %v2368
        %v2370 = vpop.xlane.xlu0 %2369
        %v2371 = vsel %vm2217, %v1939, 0.0
        %2372 = vadd.xlane.f32.xlu0 %v2371
        %v2373 = vpop.xlane.xlu0 %2372
        %v2374 = vsel %vm2217, %v1942, 0.0
        %2375 = vadd.xlane.f32.xlu0 %v2374
        %v2376 = vpop.xlane.xlu0 %2375
        %v2377 = vsel %vm2217, %v1945, 0.0
        %2378 = vadd.xlane.f32.xlu0 %v2377
        %v2379 = vpop.xlane.xlu0 %2378
        %v2380 = vsel %vm2217, %v1948, 0.0
        %2381 = vadd.xlane.f32.xlu0 %v2380
        %v2382 = vpop.xlane.xlu0 %2381
        %v2383 = vsel %vm2217, %v1951, 0.0
        %2384 = vadd.xlane.f32.xlu0 %v2383
        %v2385 = vpop.xlane.xlu0 %2384
        %v2386 = vsel %vm2217, %v1954, 0.0
        %2387 = vadd.xlane.f32.xlu0 %v2386
        %v2388 = vpop.xlane.xlu0 %2387
        %v2389 = vsel %vm2217, %v1957, 0.0
        %2390 = vadd.xlane.f32.xlu0 %v2389
        %v2391 = vpop.xlane.xlu0 %2390
        %v2392 = vsel %vm2217, %v1960, 0.0
        %2393 = vadd.xlane.f32.xlu0 %v2392
        %v2394 = vpop.xlane.xlu0 %2393
        %v2395 = vsel %vm2217, %v1963, 0.0
        %2396 = vadd.xlane.f32.xlu0 %v2395
        %v2397 = vpop.xlane.xlu0 %2396
        %v2398 = vsel %vm2217, %v1966, 0.0
        %2399 = vadd.xlane.f32.xlu0 %v2398
        %v2400 = vpop.xlane.xlu0 %2399
        %v2401 = vsel %vm2217, %v1969, 0.0
        %2402 = vadd.xlane.f32.xlu0 %v2401
        %v2403 = vpop.xlane.xlu0 %2402
        %v2404 = vsel %vm2217, %v1972, 0.0
        %2405 = vadd.xlane.f32.xlu0 %v2404
        %v2406 = vpop.xlane.xlu0 %2405
        %v2407 = vsel %vm2217, %v1975, 0.0
        %2408 = vadd.xlane.f32.xlu0 %v2407
        %v2409 = vpop.xlane.xlu0 %2408
        %v2410 = vsel %vm2217, %v1978, 0.0
        %2411 = vadd.xlane.f32.xlu0 %v2410
        %v2412 = vpop.xlane.xlu0 %2411
        %v2413 = vsel %vm2217, %v1981, 0.0
        %2414 = vadd.xlane.f32.xlu0 %v2413
        %v2415 = vpop.xlane.xlu0 %2414
        %v2416 = vsel %vm2217, %v1984, 0.0
        %2417 = vadd.xlane.f32.xlu0 %v2416
        %v2418 = vpop.xlane.xlu0 %2417
        %v2419 = vsel %vm2217, %v1987, 0.0
        %2420 = vadd.xlane.f32.xlu0 %v2419
        %v2421 = vpop.xlane.xlu0 %2420
        %v2422 = vsel %vm2217, %v1990, 0.0
        %2423 = vadd.xlane.f32.xlu0 %v2422
        %v2424 = vpop.xlane.xlu0 %2423
        %v2425 = vsel %vm2217, %v1993, 0.0
        %2426 = vadd.xlane.f32.xlu0 %v2425
        %v2427 = vpop.xlane.xlu0 %2426
        %v2428 = vsel %vm2217, %v1996, 0.0
        %2429 = vadd.xlane.f32.xlu0 %v2428
        %v2430 = vpop.xlane.xlu0 %2429
        %v2431 = vsel %vm2217, %v1999, 0.0
        %2432 = vadd.xlane.f32.xlu0 %v2431
        %v2433 = vpop.xlane.xlu0 %2432
        %v2434 = vsel %vm2217, %v2002, 0.0
        %2435 = vadd.xlane.f32.xlu0 %v2434
        %v2436 = vpop.xlane.xlu0 %2435
        %v2437 = vsel %vm2217, %v2005, 0.0
        %2438 = vadd.xlane.f32.xlu0 %v2437
        %v2439 = vpop.xlane.xlu0 %2438
        %v2440 = vsel %vm2217, %v2008, 0.0
        %2441 = vadd.xlane.f32.xlu0 %v2440
        %v2442 = vpop.xlane.xlu0 %2441
        %v2443 = vsel %vm2217, %v2011, 0.0
        %2444 = vadd.xlane.f32.xlu0 %v2443
        %v2445 = vpop.xlane.xlu0 %2444
        %v2446 = vsel %vm2217, %v2014, 0.0
        %2447 = vadd.xlane.f32.xlu0 %v2446
        %v2448 = vpop.xlane.xlu0 %2447
        %v2449 = vsel %vm2217, %v2017, 0.0
        %2450 = vadd.xlane.f32.xlu0 %v2449
        %v2451 = vpop.xlane.xlu0 %2450
        %v2452 = vsel %vm2217, %v2020, 0.0
        %2453 = vadd.xlane.f32.xlu0 %v2452
        %v2454 = vpop.xlane.xlu0 %2453
        %v2455 = vsel %vm2217, %v2023, 0.0
        %2456 = vadd.xlane.f32.xlu0 %v2455
        %v2457 = vpop.xlane.xlu0 %2456
        %v2458 = vsel %vm2217, %v2026, 0.0
        %2459 = vadd.xlane.f32.xlu0 %v2458
        %v2460 = vpop.xlane.xlu0 %2459
        %v2461 = vsel %vm2217, %v2029, 0.0
        %2462 = vadd.xlane.f32.xlu0 %v2461
        %v2463 = vpop.xlane.xlu0 %2462
        %v2464 = vsel %vm2217, %v2032, 0.0
        %2465 = vadd.xlane.f32.xlu0 %v2464
        %v2466 = vpop.xlane.xlu0 %2465
        %v2467 = vsel %vm2217, %v2035, 0.0
        %2468 = vadd.xlane.f32.xlu0 %v2467
        %v2469 = vpop.xlane.xlu0 %2468
        %v2470 = vsel %vm2217, %v2038, 0.0
        %2471 = vadd.xlane.f32.xlu0 %v2470
        %v2472 = vpop.xlane.xlu0 %2471
        %v2473 = vsel %vm2217, %v2041, 0.0
        %2474 = vadd.xlane.f32.xlu0 %v2473
        %v2475 = vpop.xlane.xlu0 %2474
        %v2476 = vsel %vm2217, %v2044, 0.0
        %2477 = vadd.xlane.f32.xlu0 %v2476
        %v2478 = vpop.xlane.xlu0 %2477
        %v2479 = vsel %vm2217, %v2047, 0.0
        %2480 = vadd.xlane.f32.xlu0 %v2479
        %v2481 = vpop.xlane.xlu0 %2480
        %v2482 = vsel %vm2217, %v2050, 0.0
        %2483 = vadd.xlane.f32.xlu0 %v2482
        %v2484 = vpop.xlane.xlu0 %2483
        %v2485 = vsel %vm2217, %v2053, 0.0
        %2486 = vadd.xlane.f32.xlu0 %v2485
        %v2487 = vpop.xlane.xlu0 %2486
        %v2488 = vsel %vm2217, %v2056, 0.0
        %2489 = vadd.xlane.f32.xlu0 %v2488
        %v2490 = vpop.xlane.xlu0 %2489
        %v2491 = vsel %vm2217, %v2059, 0.0
        %2492 = vadd.xlane.f32.xlu0 %v2491
        %v2493 = vpop.xlane.xlu0 %2492
        %v2494 = vsel %vm2217, %v2062, 0.0
        %2495 = vadd.xlane.f32.xlu0 %v2494
        %v2496 = vpop.xlane.xlu0 %2495
        %v2497 = vsel %vm2217, %v2065, 0.0
        %2498 = vadd.xlane.f32.xlu0 %v2497
        %v2499 = vpop.xlane.xlu0 %2498
        %v2500 = vsel %vm2217, %v2068, 0.0
        %2501 = vadd.xlane.f32.xlu0 %v2500
        %v2502 = vpop.xlane.xlu0 %2501
        %v2503 = vsel %vm2217, %v2071, 0.0
        %2504 = vadd.xlane.f32.xlu0 %v2503
        %v2505 = vpop.xlane.xlu0 %2504
        %v2506 = vsel %vm2217, %v2074, 0.0
        %2507 = vadd.xlane.f32.xlu0 %v2506
        %v2508 = vpop.xlane.xlu0 %2507
        %v2509 = vsel %vm2217, %v2077, 0.0
        %2510 = vadd.xlane.f32.xlu0 %v2509
        %v2511 = vpop.xlane.xlu0 %2510
        %v2512 = vsel %vm2217, %v2080, 0.0
        %2513 = vadd.xlane.f32.xlu0 %v2512
        %v2514 = vpop.xlane.xlu0 %2513
        %v2515 = vsel %vm2217, %v2083, 0.0
        %2516 = vadd.xlane.f32.xlu0 %v2515
        %v2517 = vpop.xlane.xlu0 %2516
        %v2518 = vsel %vm2217, %v2086, 0.0
        %2519 = vadd.xlane.f32.xlu0 %v2518
        %v2520 = vpop.xlane.xlu0 %2519
        %v2521 = vsel %vm2217, %v2089, 0.0
        %2522 = vadd.xlane.f32.xlu0 %v2521
        %v2523 = vpop.xlane.xlu0 %2522
        %v2524 = vsel %vm2217, %v2092, 0.0
        %2525 = vadd.xlane.f32.xlu0 %v2524
        %v2526 = vpop.xlane.xlu0 %2525
        %v2527 = vsel %vm2217, %v2095, 0.0
        %2528 = vadd.xlane.f32.xlu0 %v2527
        %v2529 = vpop.xlane.xlu0 %2528
        %v2530 = vsel %vm2217, %v2098, 0.0
        %2531 = vadd.xlane.f32.xlu0 %v2530
        %v2532 = vpop.xlane.xlu0 %2531
        %v2533 = vsel %vm2217, %v2101, 0.0
        %2534 = vadd.xlane.f32.xlu0 %v2533
        %v2535 = vpop.xlane.xlu0 %2534
        %v2536 = vsel %vm2217, %v2104, 0.0
        %2537 = vadd.xlane.f32.xlu0 %v2536
        %v2538 = vpop.xlane.xlu0 %2537
        %v2539 = vsel %vm2217, %v2107, 0.0
        %2540 = vadd.xlane.f32.xlu0 %v2539
        %v2541 = vpop.xlane.xlu0 %2540
        %v2542 = vsel %vm2217, %v2110, 0.0
        %2543 = vadd.xlane.f32.xlu0 %v2542
        %v2544 = vpop.xlane.xlu0 %2543
        %v2545 = vsel %vm2217, %v2113, 0.0
        %2546 = vadd.xlane.f32.xlu0 %v2545
        %v2547 = vpop.xlane.xlu0 %2546
        %v2548 = vsel %vm2217, %v2116, 0.0
        %2549 = vadd.xlane.f32.xlu0 %v2548
        %v2550 = vpop.xlane.xlu0 %2549
        %v2551 = vsel %vm2217, %v2119, 0.0
        %2552 = vadd.xlane.f32.xlu0 %v2551
        %v2553 = vpop.xlane.xlu0 %2552
        %v2554 = vsel %vm2217, %v2122, 0.0
        %2555 = vadd.xlane.f32.xlu0 %v2554
        %v2556 = vpop.xlane.xlu0 %2555
        %v2557 = vsel %vm2217, %v2125, 0.0
        %2558 = vadd.xlane.f32.xlu0 %v2557
        %v2559 = vpop.xlane.xlu0 %2558
        %v2560 = vsel %vm2217, %v2128, 0.0
        %2561 = vadd.xlane.f32.xlu0 %v2560
        %v2562 = vpop.xlane.xlu0 %2561
        %v2563 = vsel %vm2217, %v2131, 0.0
        %2564 = vadd.xlane.f32.xlu0 %v2563
        %v2565 = vpop.xlane.xlu0 %2564
        %v2566 = vsel %vm2217, %v2134, 0.0
        %2567 = vadd.xlane.f32.xlu0 %v2566
        %v2568 = vpop.xlane.xlu0 %2567
        %v2569 = vsel %vm2217, %v2137, 0.0
        %2570 = vadd.xlane.f32.xlu0 %v2569
        %v2571 = vpop.xlane.xlu0 %2570
        %v2572 = vsel %vm2217, %v2140, 0.0
        %2573 = vadd.xlane.f32.xlu0 %v2572
        %v2574 = vpop.xlane.xlu0 %2573
        %v2575 = vsel %vm2217, %v2143, 0.0
        %2576 = vadd.xlane.f32.xlu0 %v2575
        %v2577 = vpop.xlane.xlu0 %2576
        %v2578 = vsel %vm2217, %v2146, 0.0
        %2579 = vadd.xlane.f32.xlu0 %v2578
        %v2580 = vpop.xlane.xlu0 %2579
        %v2581 = vsel %vm2217, %v2149, 0.0
        %2582 = vadd.xlane.f32.xlu0 %v2581
        %v2583 = vpop.xlane.xlu0 %2582
        %v2584 = vsel %vm2217, %v2152, 0.0
        %2585 = vadd.xlane.f32.xlu0 %v2584
        %v2586 = vpop.xlane.xlu0 %2585
        %v2587 = vsel %vm2217, %v2155, 0.0
        %2588 = vadd.xlane.f32.xlu0 %v2587
        %v2589 = vpop.xlane.xlu0 %2588
        %v2590 = vsel %vm2217, %v2158, 0.0
        %2591 = vadd.xlane.f32.xlu0 %v2590
        %v2592 = vpop.xlane.xlu0 %2591
        %v2593 = vsel %vm2217, %v2161, 0.0
        %2594 = vadd.xlane.f32.xlu0 %v2593
        %v2595 = vpop.xlane.xlu0 %2594
        %v2596 = vsel %vm2217, %v2164, 0.0
        %2597 = vadd.xlane.f32.xlu0 %v2596
        %v2598 = vpop.xlane.xlu0 %2597
        %v2599 = vsel %vm2217, %v2167, 0.0
        %2600 = vadd.xlane.f32.xlu0 %v2599
        %v2601 = vpop.xlane.xlu0 %2600
        %v2602 = vsel %vm2217, %v2170, 0.0
        %2603 = vadd.xlane.f32.xlu0 %v2602
        %v2604 = vpop.xlane.xlu0 %2603
        %v2605 = vsel %vm2217, %v2173, 0.0
        %2606 = vadd.xlane.f32.xlu0 %v2605
        %v2607 = vpop.xlane.xlu0 %2606
        %v2608 = vsel %vm2217, %v2176, 0.0
        %2609 = vadd.xlane.f32.xlu0 %v2608
        %v2610 = vpop.xlane.xlu0 %2609
        %v2611 = vsel %vm2217, %v2179, 0.0
        %2612 = vadd.xlane.f32.xlu0 %v2611
        %v2613 = vpop.xlane.xlu0 %2612
        %v2614 = vsel %vm2217, %v2182, 0.0
        %2615 = vadd.xlane.f32.xlu0 %v2614
        %v2616 = vpop.xlane.xlu0 %2615
        %v2617 = vsel %vm2217, %v2185, 0.0
        %2618 = vadd.xlane.f32.xlu0 %v2617
        %v2619 = vpop.xlane.xlu0 %2618
        %v2620 = vsel %vm2217, %v2188, 0.0
        %2621 = vadd.xlane.f32.xlu0 %v2620
        %v2622 = vpop.xlane.xlu0 %2621
        %v2623 = vsel %vm2217, %v2191, 0.0
        %2624 = vadd.xlane.f32.xlu0 %v2623
        %v2625 = vpop.xlane.xlu0 %2624
        %v2626 = vsel %vm2217, %v2194, 0.0
        %2627 = vadd.xlane.f32.xlu0 %v2626
        %v2628 = vpop.xlane.xlu0 %2627
        %v2629 = vsel %vm2217, %v2197, 0.0
        %2630 = vadd.xlane.f32.xlu0 %v2629
        %v2631 = vpop.xlane.xlu0 %2630
        %v2632 = vsel %vm2217, %v2200, 0.0
        %2633 = vadd.xlane.f32.xlu0 %v2632
        %v2634 = vpop.xlane.xlu0 %2633
        %v2635 = vsel %vm2217, %v2203, 0.0
        %2636 = vadd.xlane.f32.xlu0 %v2635
        %v2637 = vpop.xlane.xlu0 %2636
        %v2638 = vsel %vm2217, %v2206, 0.0
        %2639 = vadd.xlane.f32.xlu0 %v2638
        %v2640 = vpop.xlane.xlu0 %2639
        %v2641 = vsel %vm2217, %v2209, 0.0
        %2642 = vadd.xlane.f32.xlu0 %v2641
        %v2643 = vpop.xlane.xlu0 %2642
        %v2644 = vsel %vm2217, %v2212, 0.0
        %2645 = vadd.xlane.f32.xlu0 %v2644
        %v2646 = vpop.xlane.xlu0 %2645
        %v2647 = vsel %vm2217, %v2215, 0.0
        %2648 = vadd.xlane.f32.xlu0 %v2647
        %v2649 = vpop.xlane.xlu0 %2648
        %v2650 = vmul.f32 %v2220, 0.020408163
        %v2651 = vmul.f32 %v2223, 0.020408163
        %v2652 = vmul.f32 %v2226, 0.020408163
        %v2653 = vmul.f32 %v2229, 0.020408163
        %v2654 = vmul.f32 %v2232, 0.020408163
        %v2655 = vmul.f32 %v2235, 0.020408163
        %v2656 = vmul.f32 %v2238, 0.020408163
        %v2657 = vmul.f32 %v2241, 0.020408163
        %v2658 = vmul.f32 %v2244, 0.020408163
        %v2659 = vmul.f32 %v2247, 0.020408163
        %v2660 = vmul.f32 %v2250, 0.020408163
        %v2661 = vmul.f32 %v2253, 0.020408163
        %v2662 = vmul.f32 %v2256, 0.020408163
        %v2663 = vmul.f32 %v2259, 0.020408163
        %v2664 = vmul.f32 %v2262, 0.020408163
        %v2665 = vmul.f32 %v2265, 0.020408163
        %v2666 = vmul.f32 %v2268, 0.020408163
        %v2667 = vmul.f32 %v2271, 0.020408163
        %v2668 = vmul.f32 %v2274, 0.020408163
        %v2669 = vmul.f32 %v2277, 0.020408163
        %v2670 = vmul.f32 %v2280, 0.020408163
        %v2671 = vmul.f32 %v2283, 0.020408163
        %v2672 = vmul.f32 %v2286, 0.020408163
        %v2673 = vmul.f32 %v2289, 0.020408163
        %v2674 = vmul.f32 %v2292, 0.020408163
        %v2675 = vmul.f32 %v2295, 0.020408163
        %v2676 = vmul.f32 %v2298, 0.020408163
        %v2677 = vmul.f32 %v2301, 0.020408163
        %v2678 = vmul.f32 %v2304, 0.020408163
        %v2679 = vmul.f32 %v2307, 0.020408163
        %v2680 = vmul.f32 %v2310, 0.020408163
        %v2681 = vmul.f32 %v2313, 0.020408163
        %v2682 = vmul.f32 %v2316, 0.020408163
        %v2683 = vmul.f32 %v2319, 0.020408163
        %v2684 = vmul.f32 %v2322, 0.020408163
        %v2685 = vmul.f32 %v2325, 0.020408163
        %v2686 = vmul.f32 %v2328, 0.020408163
        %v2687 = vmul.f32 %v2331, 0.020408163
        %v2688 = vmul.f32 %v2334, 0.020408163
        %v2689 = vmul.f32 %v2337, 0.020408163
        %v2690 = vmul.f32 %v2340, 0.020408163
        %v2691 = vmul.f32 %v2343, 0.020408163
        %v2692 = vmul.f32 %v2346, 0.020408163
        %v2693 = vmul.f32 %v2349, 0.020408163
        %v2694 = vmul.f32 %v2352, 0.020408163
        %v2695 = vmul.f32 %v2355, 0.020408163
        %v2696 = vmul.f32 %v2358, 0.020408163
        %v2697 = vmul.f32 %v2361, 0.020408163
        %v2698 = vmul.f32 %v2364, 0.020408163
        %v2699 = vmul.f32 %v2367, 0.020408163
        %v2700 = vmul.f32 %v2370, 0.020408163
        %v2701 = vmul.f32 %v2373, 0.020408163
        %v2702 = vmul.f32 %v2376, 0.020408163
        %v2703 = vmul.f32 %v2379, 0.020408163
        %v2704 = vmul.f32 %v2382, 0.020408163
        %v2705 = vmul.f32 %v2385, 0.020408163
        %v2706 = vmul.f32 %v2388, 0.020408163
        %v2707 = vmul.f32 %v2391, 0.020408163
        %v2708 = vmul.f32 %v2394, 0.020408163
        %v2709 = vmul.f32 %v2397, 0.020408163
        %v2710 = vmul.f32 %v2400, 0.020408163
        %v2711 = vmul.f32 %v2403, 0.020408163
        %v2712 = vmul.f32 %v2406, 0.020408163
        %v2713 = vmul.f32 %v2409, 0.020408163
        %v2714 = vmul.f32 %v2412, 0.020408163
        %v2715 = vmul.f32 %v2415, 0.020408163
        %v2716 = vmul.f32 %v2418, 0.020408163
        %v2717 = vmul.f32 %v2421, 0.020408163
        %v2718 = vmul.f32 %v2424, 0.020408163
        %v2719 = vmul.f32 %v2427, 0.020408163
        %v2720 = vmul.f32 %v2430, 0.020408163
        %v2721 = vmul.f32 %v2433, 0.020408163
        %v2722 = vmul.f32 %v2436, 0.020408163
        %v2723 = vmul.f32 %v2439, 0.020408163
        %v2724 = vmul.f32 %v2442, 0.020408163
        %v2725 = vmul.f32 %v2445, 0.020408163
        %v2726 = vmul.f32 %v2448, 0.020408163
        %v2727 = vmul.f32 %v2451, 0.020408163
        %v2728 = vmul.f32 %v2454, 0.020408163
        %v2729 = vmul.f32 %v2457, 0.020408163
        %v2730 = vmul.f32 %v2460, 0.020408163
        %v2731 = vmul.f32 %v2463, 0.020408163
        %v2732 = vmul.f32 %v2466, 0.020408163
        %v2733 = vmul.f32 %v2469, 0.020408163
        %v2734 = vmul.f32 %v2472, 0.020408163
        %v2735 = vmul.f32 %v2475, 0.020408163
        %v2736 = vmul.f32 %v2478, 0.020408163
        %v2737 = vmul.f32 %v2481, 0.020408163
        %v2738 = vmul.f32 %v2484, 0.020408163
        %v2739 = vmul.f32 %v2487, 0.020408163
        %v2740 = vmul.f32 %v2490, 0.020408163
        %v2741 = vmul.f32 %v2493, 0.020408163
        %v2742 = vmul.f32 %v2496, 0.020408163
        %v2743 = vmul.f32 %v2499, 0.020408163
        %v2744 = vmul.f32 %v2502, 0.020408163
        %v2745 = vmul.f32 %v2505, 0.020408163
        %v2746 = vmul.f32 %v2508, 0.020408163
        %v2747 = vmul.f32 %v2511, 0.020408163
        %v2748 = vmul.f32 %v2514, 0.020408163
        %v2749 = vmul.f32 %v2517, 0.020408163
        %v2750 = vmul.f32 %v2520, 0.020408163
        %v2751 = vmul.f32 %v2523, 0.020408163
        %v2752 = vmul.f32 %v2526, 0.020408163
        %v2753 = vmul.f32 %v2529, 0.020408163
        %v2754 = vmul.f32 %v2532, 0.020408163
        %v2755 = vmul.f32 %v2535, 0.020408163
        %v2756 = vmul.f32 %v2538, 0.020408163
        %v2757 = vmul.f32 %v2541, 0.020408163
        %v2758 = vmul.f32 %v2544, 0.020408163
        %v2759 = vmul.f32 %v2547, 0.020408163
        %v2760 = vmul.f32 %v2550, 0.020408163
        %v2761 = vmul.f32 %v2553, 0.020408163
        %v2762 = vmul.f32 %v2556, 0.020408163
        %v2763 = vmul.f32 %v2559, 0.020408163
        %v2764 = vmul.f32 %v2562, 0.020408163
        %v2765 = vmul.f32 %v2565, 0.020408163
        %v2766 = vmul.f32 %v2568, 0.020408163
        %v2767 = vmul.f32 %v2571, 0.020408163
        %v2768 = vmul.f32 %v2574, 0.020408163
        %v2769 = vmul.f32 %v2577, 0.020408163
        %v2770 = vmul.f32 %v2580, 0.020408163
        %v2771 = vmul.f32 %v2583, 0.020408163
        %v2772 = vmul.f32 %v2586, 0.020408163
        %v2773 = vmul.f32 %v2589, 0.020408163
        %v2774 = vmul.f32 %v2592, 0.020408163
        %v2775 = vmul.f32 %v2595, 0.020408163
        %v2776 = vmul.f32 %v2598, 0.020408163
        %v2777 = vmul.f32 %v2601, 0.020408163
        %v2778 = vmul.f32 %v2604, 0.020408163
        %v2779 = vmul.f32 %v2607, 0.020408163
        %v2780 = vmul.f32 %v2610, 0.020408163
        %v2781 = vmul.f32 %v2613, 0.020408163
        %v2782 = vmul.f32 %v2616, 0.020408163
        %v2783 = vmul.f32 %v2619, 0.020408163
        %v2784 = vmul.f32 %v2622, 0.020408163
        %v2785 = vmul.f32 %v2625, 0.020408163
        %v2786 = vmul.f32 %v2628, 0.020408163
        %v2787 = vmul.f32 %v2631, 0.020408163
        %v2788 = vmul.f32 %v2634, 0.020408163
        %v2789 = vmul.f32 %v2637, 0.020408163
        %v2790 = vmul.f32 %v2640, 0.020408163
        %v2791 = vmul.f32 %v2643, 0.020408163
        %v2792 = vmul.f32 %v2646, 0.020408163
        %v2793 = vmul.f32 %v2649, 0.020408163
        %v2794 = vsub.f32 %v1786, %v2650
        %v2795 = vsub.f32 %v1789, %v2651
        %v2796 = vsub.f32 %v1792, %v2652
        %v2797 = vsub.f32 %v1795, %v2653
        %v2798 = vsub.f32 %v1798, %v2654
        %v2799 = vsub.f32 %v1801, %v2655
        %v2800 = vsub.f32 %v1804, %v2656
        %v2801 = vsub.f32 %v1807, %v2657
        %v2802 = vsub.f32 %v1810, %v2658
        %v2803 = vsub.f32 %v1813, %v2659
        %v2804 = vsub.f32 %v1816, %v2660
        %v2805 = vsub.f32 %v1819, %v2661
        %v2806 = vsub.f32 %v1822, %v2662
        %v2807 = vsub.f32 %v1825, %v2663
        %v2808 = vsub.f32 %v1828, %v2664
        %v2809 = vsub.f32 %v1831, %v2665
        %v2810 = vsub.f32 %v1834, %v2666
        %v2811 = vsub.f32 %v1837, %v2667
        %v2812 = vsub.f32 %v1840, %v2668
        %v2813 = vsub.f32 %v1843, %v2669
        %v2814 = vsub.f32 %v1846, %v2670
        %v2815 = vsub.f32 %v1849, %v2671
        %v2816 = vsub.f32 %v1852, %v2672
        %v2817 = vsub.f32 %v1855, %v2673
        %v2818 = vsub.f32 %v1858, %v2674
        %v2819 = vsub.f32 %v1861, %v2675
        %v2820 = vsub.f32 %v1864, %v2676
        %v2821 = vsub.f32 %v1867, %v2677
        %v2822 = vsub.f32 %v1870, %v2678
        %v2823 = vsub.f32 %v1873, %v2679
        %v2824 = vsub.f32 %v1876, %v2680
        %v2825 = vsub.f32 %v1879, %v2681
        %v2826 = vsub.f32 %v1882, %v2682
        %v2827 = vsub.f32 %v1885, %v2683
        %v2828 = vsub.f32 %v1888, %v2684
        %v2829 = vsub.f32 %v1891, %v2685
        %v2830 = vsub.f32 %v1894, %v2686
        %v2831 = vsub.f32 %v1897, %v2687
        %v2832 = vsub.f32 %v1900, %v2688
        %v2833 = vsub.f32 %v1903, %v2689
        %v2834 = vsub.f32 %v1906, %v2690
        %v2835 = vsub.f32 %v1909, %v2691
        %v2836 = vsub.f32 %v1912, %v2692
        %v2837 = vsub.f32 %v1915, %v2693
        %v2838 = vsub.f32 %v1918, %v2694
        %v2839 = vsub.f32 %v1921, %v2695
        %v2840 = vsub.f32 %v1924, %v2696
        %v2841 = vsub.f32 %v1927, %v2697
        %v2842 = vsub.f32 %v1930, %v2698
        %v2843 = vsub.f32 %v1933, %v2699
        %v2844 = vsub.f32 %v1936, %v2700
        %v2845 = vsub.f32 %v1939, %v2701
        %v2846 = vsub.f32 %v1942, %v2702
        %v2847 = vsub.f32 %v1945, %v2703
        %v2848 = vsub.f32 %v1948, %v2704
        %v2849 = vsub.f32 %v1951, %v2705
        %v2850 = vsub.f32 %v1954, %v2706
        %v2851 = vsub.f32 %v1957, %v2707
        %v2852 = vsub.f32 %v1960, %v2708
        %v2853 = vsub.f32 %v1963, %v2709
        %v2854 = vsub.f32 %v1966, %v2710
        %v2855 = vsub.f32 %v1969, %v2711
        %v2856 = vsub.f32 %v1972, %v2712
        %v2857 = vsub.f32 %v1975, %v2713
        %v2858 = vsub.f32 %v1978, %v2714
        %v2859 = vsub.f32 %v1981, %v2715
        %v2860 = vsub.f32 %v1984, %v2716
        %v2861 = vsub.f32 %v1987, %v2717
        %v2862 = vsub.f32 %v1990, %v2718
        %v2863 = vsub.f32 %v1993, %v2719
        %v2864 = vsub.f32 %v1996, %v2720
        %v2865 = vsub.f32 %v1999, %v2721
        %v2866 = vsub.f32 %v2002, %v2722
        %v2867 = vsub.f32 %v2005, %v2723
        %v2868 = vsub.f32 %v2008, %v2724
        %v2869 = vsub.f32 %v2011, %v2725
        %v2870 = vsub.f32 %v2014, %v2726
        %v2871 = vsub.f32 %v2017, %v2727
        %v2872 = vsub.f32 %v2020, %v2728
        %v2873 = vsub.f32 %v2023, %v2729
        %v2874 = vsub.f32 %v2026, %v2730
        %v2875 = vsub.f32 %v2029, %v2731
        %v2876 = vsub.f32 %v2032, %v2732
        %v2877 = vsub.f32 %v2035, %v2733
        %v2878 = vsub.f32 %v2038, %v2734
        %v2879 = vsub.f32 %v2041, %v2735
        %v2880 = vsub.f32 %v2044, %v2736
        %v2881 = vsub.f32 %v2047, %v2737
        %v2882 = vsub.f32 %v2050, %v2738
        %v2883 = vsub.f32 %v2053, %v2739
        %v2884 = vsub.f32 %v2056, %v2740
        %v2885 = vsub.f32 %v2059, %v2741
        %v2886 = vsub.f32 %v2062, %v2742
        %v2887 = vsub.f32 %v2065, %v2743
        %v2888 = vsub.f32 %v2068, %v2744
        %v2889 = vsub.f32 %v2071, %v2745
        %v2890 = vsub.f32 %v2074, %v2746
        %v2891 = vsub.f32 %v2077, %v2747
        %v2892 = vsub.f32 %v2080, %v2748
        %v2893 = vsub.f32 %v2083, %v2749
        %v2894 = vsub.f32 %v2086, %v2750
        %v2895 = vsub.f32 %v2089, %v2751
        %v2896 = vsub.f32 %v2092, %v2752
        %v2897 = vsub.f32 %v2095, %v2753
        %v2898 = vsub.f32 %v2098, %v2754
        %v2899 = vsub.f32 %v2101, %v2755
        %v2900 = vsub.f32 %v2104, %v2756
        %v2901 = vsub.f32 %v2107, %v2757
        %v2902 = vsub.f32 %v2110, %v2758
        %v2903 = vsub.f32 %v2113, %v2759
        %v2904 = vsub.f32 %v2116, %v2760
        %v2905 = vsub.f32 %v2119, %v2761
        %v2906 = vsub.f32 %v2122, %v2762
        %v2907 = vsub.f32 %v2125, %v2763
        %v2908 = vsub.f32 %v2128, %v2764
        %v2909 = vsub.f32 %v2131, %v2765
        %v2910 = vsub.f32 %v2134, %v2766
        %v2911 = vsub.f32 %v2137, %v2767
        %v2912 = vsub.f32 %v2140, %v2768
        %v2913 = vsub.f32 %v2143, %v2769
        %v2914 = vsub.f32 %v2146, %v2770
        %v2915 = vsub.f32 %v2149, %v2771
        %v2916 = vsub.f32 %v2152, %v2772
        %v2917 = vsub.f32 %v2155, %v2773
        %v2918 = vsub.f32 %v2158, %v2774
        %v2919 = vsub.f32 %v2161, %v2775
        %v2920 = vsub.f32 %v2164, %v2776
        %v2921 = vsub.f32 %v2167, %v2777
        %v2922 = vsub.f32 %v2170, %v2778
        %v2923 = vsub.f32 %v2173, %v2779
        %v2924 = vsub.f32 %v2176, %v2780
        %v2925 = vsub.f32 %v2179, %v2781
        %v2926 = vsub.f32 %v2182, %v2782
        %v2927 = vsub.f32 %v2185, %v2783
        %v2928 = vsub.f32 %v2188, %v2784
        %v2929 = vsub.f32 %v2191, %v2785
        %v2930 = vsub.f32 %v2194, %v2786
        %v2931 = vsub.f32 %v2197, %v2787
        %v2932 = vsub.f32 %v2200, %v2788
        %v2933 = vsub.f32 %v2203, %v2789
        %v2934 = vsub.f32 %v2206, %v2790
        %v2935 = vsub.f32 %v2209, %v2791
        %v2936 = vsub.f32 %v2212, %v2792
        %v2937 = vsub.f32 %v2215, %v2793
        %v2938 = vmul.f32 %v2794, %v2794
        %v2939 = vmul.f32 %v2795, %v2795
        %v2940 = vmul.f32 %v2796, %v2796
        %v2941 = vmul.f32 %v2797, %v2797
        %v2942 = vmul.f32 %v2798, %v2798
        %v2943 = vmul.f32 %v2799, %v2799
        %v2944 = vmul.f32 %v2800, %v2800
        %v2945 = vmul.f32 %v2801, %v2801
        %v2946 = vmul.f32 %v2802, %v2802
        %v2947 = vmul.f32 %v2803, %v2803
        %v2948 = vmul.f32 %v2804, %v2804
        %v2949 = vmul.f32 %v2805, %v2805
        %v2950 = vmul.f32 %v2806, %v2806
        %v2951 = vmul.f32 %v2807, %v2807
        %v2952 = vmul.f32 %v2808, %v2808
        %v2953 = vmul.f32 %v2809, %v2809
        %v2954 = vmul.f32 %v2810, %v2810
        %v2955 = vmul.f32 %v2811, %v2811
        %v2956 = vmul.f32 %v2812, %v2812
        %v2957 = vmul.f32 %v2813, %v2813
        %v2958 = vmul.f32 %v2814, %v2814
        %v2959 = vmul.f32 %v2815, %v2815
        %v2960 = vmul.f32 %v2816, %v2816
        %v2961 = vmul.f32 %v2817, %v2817
        %v2962 = vmul.f32 %v2818, %v2818
        %v2963 = vmul.f32 %v2819, %v2819
        %v2964 = vmul.f32 %v2820, %v2820
        %v2965 = vmul.f32 %v2821, %v2821
        %v2966 = vmul.f32 %v2822, %v2822
        %v2967 = vmul.f32 %v2823, %v2823
        %v2968 = vmul.f32 %v2824, %v2824
        %v2969 = vmul.f32 %v2825, %v2825
        %v2970 = vmul.f32 %v2826, %v2826
        %v2971 = vmul.f32 %v2827, %v2827
        %v2972 = vmul.f32 %v2828, %v2828
        %v2973 = vmul.f32 %v2829, %v2829
        %v2974 = vmul.f32 %v2830, %v2830
        %v2975 = vmul.f32 %v2831, %v2831
        %v2976 = vmul.f32 %v2832, %v2832
        %v2977 = vmul.f32 %v2833, %v2833
        %v2978 = vmul.f32 %v2834, %v2834
        %v2979 = vmul.f32 %v2835, %v2835
        %v2980 = vmul.f32 %v2836, %v2836
        %v2981 = vmul.f32 %v2837, %v2837
        %v2982 = vmul.f32 %v2838, %v2838
        %v2983 = vmul.f32 %v2839, %v2839
        %v2984 = vmul.f32 %v2840, %v2840
        %v2985 = vmul.f32 %v2841, %v2841
        %v2986 = vmul.f32 %v2842, %v2842
        %v2987 = vmul.f32 %v2843, %v2843
        %v2988 = vmul.f32 %v2844, %v2844
        %v2989 = vmul.f32 %v2845, %v2845
        %v2990 = vmul.f32 %v2846, %v2846
        %v2991 = vmul.f32 %v2847, %v2847
        %v2992 = vmul.f32 %v2848, %v2848
        %v2993 = vmul.f32 %v2849, %v2849
        %v2994 = vmul.f32 %v2850, %v2850
        %v2995 = vmul.f32 %v2851, %v2851
        %v2996 = vmul.f32 %v2852, %v2852
        %v2997 = vmul.f32 %v2853, %v2853
        %v2998 = vmul.f32 %v2854, %v2854
        %v2999 = vmul.f32 %v2855, %v2855
        %v3000 = vmul.f32 %v2856, %v2856
        %v3001 = vmul.f32 %v2857, %v2857
        %v3002 = vmul.f32 %v2858, %v2858
        %v3003 = vmul.f32 %v2859, %v2859
        %v3004 = vmul.f32 %v2860, %v2860
        %v3005 = vmul.f32 %v2861, %v2861
        %v3006 = vmul.f32 %v2862, %v2862
        %v3007 = vmul.f32 %v2863, %v2863
        %v3008 = vmul.f32 %v2864, %v2864
        %v3009 = vmul.f32 %v2865, %v2865
        %v3010 = vmul.f32 %v2866, %v2866
        %v3011 = vmul.f32 %v2867, %v2867
        %v3012 = vmul.f32 %v2868, %v2868
        %v3013 = vmul.f32 %v2869, %v2869
        %v3014 = vmul.f32 %v2870, %v2870
        %v3015 = vmul.f32 %v2871, %v2871
        %v3016 = vmul.f32 %v2872, %v2872
        %v3017 = vmul.f32 %v2873, %v2873
        %v3018 = vmul.f32 %v2874, %v2874
        %v3019 = vmul.f32 %v2875, %v2875
        %v3020 = vmul.f32 %v2876, %v2876
        %v3021 = vmul.f32 %v2877, %v2877
        %v3022 = vmul.f32 %v2878, %v2878
        %v3023 = vmul.f32 %v2879, %v2879
        %v3024 = vmul.f32 %v2880, %v2880
        %v3025 = vmul.f32 %v2881, %v2881
        %v3026 = vmul.f32 %v2882, %v2882
        %v3027 = vmul.f32 %v2883, %v2883
        %v3028 = vmul.f32 %v2884, %v2884
        %v3029 = vmul.f32 %v2885, %v2885
        %v3030 = vmul.f32 %v2886, %v2886
        %v3031 = vmul.f32 %v2887, %v2887
        %v3032 = vmul.f32 %v2888, %v2888
        %v3033 = vmul.f32 %v2889, %v2889
        %v3034 = vmul.f32 %v2890, %v2890
        %v3035 = vmul.f32 %v2891, %v2891
        %v3036 = vmul.f32 %v2892, %v2892
        %v3037 = vmul.f32 %v2893, %v2893
        %v3038 = vmul.f32 %v2894, %v2894
        %v3039 = vmul.f32 %v2895, %v2895
        %v3040 = vmul.f32 %v2896, %v2896
        %v3041 = vmul.f32 %v2897, %v2897
        %v3042 = vmul.f32 %v2898, %v2898
        %v3043 = vmul.f32 %v2899, %v2899
        %v3044 = vmul.f32 %v2900, %v2900
        %v3045 = vmul.f32 %v2901, %v2901
        %v3046 = vmul.f32 %v2902, %v2902
        %v3047 = vmul.f32 %v2903, %v2903
        %v3048 = vmul.f32 %v2904, %v2904
        %v3049 = vmul.f32 %v2905, %v2905
        %v3050 = vmul.f32 %v2906, %v2906
        %v3051 = vmul.f32 %v2907, %v2907
        %v3052 = vmul.f32 %v2908, %v2908
        %v3053 = vmul.f32 %v2909, %v2909
        %v3054 = vmul.f32 %v2910, %v2910
        %v3055 = vmul.f32 %v2911, %v2911
        %v3056 = vmul.f32 %v2912, %v2912
        %v3057 = vmul.f32 %v2913, %v2913
        %v3058 = vmul.f32 %v2914, %v2914
        %v3059 = vmul.f32 %v2915, %v2915
        %v3060 = vmul.f32 %v2916, %v2916
        %v3061 = vmul.f32 %v2917, %v2917
        %v3062 = vmul.f32 %v2918, %v2918
        %v3063 = vmul.f32 %v2919, %v2919
        %v3064 = vmul.f32 %v2920, %v2920
        %v3065 = vmul.f32 %v2921, %v2921
        %v3066 = vmul.f32 %v2922, %v2922
        %v3067 = vmul.f32 %v2923, %v2923
        %v3068 = vmul.f32 %v2924, %v2924
        %v3069 = vmul.f32 %v2925, %v2925
        %v3070 = vmul.f32 %v2926, %v2926
        %v3071 = vmul.f32 %v2927, %v2927
        %v3072 = vmul.f32 %v2928, %v2928
        %v3073 = vmul.f32 %v2929, %v2929
        %v3074 = vmul.f32 %v2930, %v2930
        %v3075 = vmul.f32 %v2931, %v2931
        %v3076 = vmul.f32 %v2932, %v2932
        %v3077 = vmul.f32 %v2933, %v2933
        %v3078 = vmul.f32 %v2934, %v2934
        %v3079 = vmul.f32 %v2935, %v2935
        %v3080 = vmul.f32 %v2936, %v2936
        %v3081 = vmul.f32 %v2937, %v2937
        %v3082 = vsel %vm2217, %v2938, 0.0
        %3083 = vadd.xlane.f32.xlu0 %v3082
        %v3084 = vpop.xlane.xlu0 %3083
        %v3085 = vsel %vm2217, %v2939, 0.0
        %3086 = vadd.xlane.f32.xlu0 %v3085
        %v3087 = vpop.xlane.xlu0 %3086
        %v3088 = vsel %vm2217, %v2940, 0.0
        %3089 = vadd.xlane.f32.xlu0 %v3088
        %v3090 = vpop.xlane.xlu0 %3089
        %v3091 = vsel %vm2217, %v2941, 0.0
        %3092 = vadd.xlane.f32.xlu0 %v3091
        %v3093 = vpop.xlane.xlu0 %3092
        %v3094 = vsel %vm2217, %v2942, 0.0
        %3095 = vadd.xlane.f32.xlu0 %v3094
        %v3096 = vpop.xlane.xlu0 %3095
        %v3097 = vsel %vm2217, %v2943, 0.0
        %3098 = vadd.xlane.f32.xlu0 %v3097
        %v3099 = vpop.xlane.xlu0 %3098
        %v3100 = vsel %vm2217, %v2944, 0.0
        %3101 = vadd.xlane.f32.xlu0 %v3100
        %v3102 = vpop.xlane.xlu0 %3101
        %v3103 = vsel %vm2217, %v2945, 0.0
        %3104 = vadd.xlane.f32.xlu0 %v3103
        %v3105 = vpop.xlane.xlu0 %3104
        %v3106 = vsel %vm2217, %v2946, 0.0
        %3107 = vadd.xlane.f32.xlu0 %v3106
        %v3108 = vpop.xlane.xlu0 %3107
        %v3109 = vsel %vm2217, %v2947, 0.0
        %3110 = vadd.xlane.f32.xlu0 %v3109
        %v3111 = vpop.xlane.xlu0 %3110
        %v3112 = vsel %vm2217, %v2948, 0.0
        %3113 = vadd.xlane.f32.xlu0 %v3112
        %v3114 = vpop.xlane.xlu0 %3113
        %v3115 = vsel %vm2217, %v2949, 0.0
        %3116 = vadd.xlane.f32.xlu0 %v3115
        %v3117 = vpop.xlane.xlu0 %3116
        %v3118 = vsel %vm2217, %v2950, 0.0
        %3119 = vadd.xlane.f32.xlu0 %v3118
        %v3120 = vpop.xlane.xlu0 %3119
        %v3121 = vsel %vm2217, %v2951, 0.0
        %3122 = vadd.xlane.f32.xlu0 %v3121
        %v3123 = vpop.xlane.xlu0 %3122
        %v3124 = vsel %vm2217, %v2952, 0.0
        %3125 = vadd.xlane.f32.xlu0 %v3124
        %v3126 = vpop.xlane.xlu0 %3125
        %v3127 = vsel %vm2217, %v2953, 0.0
        %3128 = vadd.xlane.f32.xlu0 %v3127
        %v3129 = vpop.xlane.xlu0 %3128
        %v3130 = vsel %vm2217, %v2954, 0.0
        %3131 = vadd.xlane.f32.xlu0 %v3130
        %v3132 = vpop.xlane.xlu0 %3131
        %v3133 = vsel %vm2217, %v2955, 0.0
        %3134 = vadd.xlane.f32.xlu0 %v3133
        %v3135 = vpop.xlane.xlu0 %3134
        %v3136 = vsel %vm2217, %v2956, 0.0
        %3137 = vadd.xlane.f32.xlu0 %v3136
        %v3138 = vpop.xlane.xlu0 %3137
        %v3139 = vsel %vm2217, %v2957, 0.0
        %3140 = vadd.xlane.f32.xlu0 %v3139
        %v3141 = vpop.xlane.xlu0 %3140
        %v3142 = vsel %vm2217, %v2958, 0.0
        %3143 = vadd.xlane.f32.xlu0 %v3142
        %v3144 = vpop.xlane.xlu0 %3143
        %v3145 = vsel %vm2217, %v2959, 0.0
        %3146 = vadd.xlane.f32.xlu0 %v3145
        %v3147 = vpop.xlane.xlu0 %3146
        %v3148 = vsel %vm2217, %v2960, 0.0
        %3149 = vadd.xlane.f32.xlu0 %v3148
        %v3150 = vpop.xlane.xlu0 %3149
        %v3151 = vsel %vm2217, %v2961, 0.0
        %3152 = vadd.xlane.f32.xlu0 %v3151
        %v3153 = vpop.xlane.xlu0 %3152
        %v3154 = vsel %vm2217, %v2962, 0.0
        %3155 = vadd.xlane.f32.xlu0 %v3154
        %v3156 = vpop.xlane.xlu0 %3155
        %v3157 = vsel %vm2217, %v2963, 0.0
        %3158 = vadd.xlane.f32.xlu0 %v3157
        %v3159 = vpop.xlane.xlu0 %3158
        %v3160 = vsel %vm2217, %v2964, 0.0
        %3161 = vadd.xlane.f32.xlu0 %v3160
        %v3162 = vpop.xlane.xlu0 %3161
        %v3163 = vsel %vm2217, %v2965, 0.0
        %3164 = vadd.xlane.f32.xlu0 %v3163
        %v3165 = vpop.xlane.xlu0 %3164
        %v3166 = vsel %vm2217, %v2966, 0.0
        %3167 = vadd.xlane.f32.xlu0 %v3166
        %v3168 = vpop.xlane.xlu0 %3167
        %v3169 = vsel %vm2217, %v2967, 0.0
        %3170 = vadd.xlane.f32.xlu0 %v3169
        %v3171 = vpop.xlane.xlu0 %3170
        %v3172 = vsel %vm2217, %v2968, 0.0
        %3173 = vadd.xlane.f32.xlu0 %v3172
        %v3174 = vpop.xlane.xlu0 %3173
        %v3175 = vsel %vm2217, %v2969, 0.0
        %3176 = vadd.xlane.f32.xlu0 %v3175
        %v3177 = vpop.xlane.xlu0 %3176
        %v3178 = vsel %vm2217, %v2970, 0.0
        %3179 = vadd.xlane.f32.xlu0 %v3178
        %v3180 = vpop.xlane.xlu0 %3179
        %v3181 = vsel %vm2217, %v2971, 0.0
        %3182 = vadd.xlane.f32.xlu0 %v3181
        %v3183 = vpop.xlane.xlu0 %3182
        %v3184 = vsel %vm2217, %v2972, 0.0
        %3185 = vadd.xlane.f32.xlu0 %v3184
        %v3186 = vpop.xlane.xlu0 %3185
        %v3187 = vsel %vm2217, %v2973, 0.0
        %3188 = vadd.xlane.f32.xlu0 %v3187
        %v3189 = vpop.xlane.xlu0 %3188
        %v3190 = vsel %vm2217, %v2974, 0.0
        %3191 = vadd.xlane.f32.xlu0 %v3190
        %v3192 = vpop.xlane.xlu0 %3191
        %v3193 = vsel %vm2217, %v2975, 0.0
        %3194 = vadd.xlane.f32.xlu0 %v3193
        %v3195 = vpop.xlane.xlu0 %3194
        %v3196 = vsel %vm2217, %v2976, 0.0
        %3197 = vadd.xlane.f32.xlu0 %v3196
        %v3198 = vpop.xlane.xlu0 %3197
        %v3199 = vsel %vm2217, %v2977, 0.0
        %3200 = vadd.xlane.f32.xlu0 %v3199
        %v3201 = vpop.xlane.xlu0 %3200
        %v3202 = vsel %vm2217, %v2978, 0.0
        %3203 = vadd.xlane.f32.xlu0 %v3202
        %v3204 = vpop.xlane.xlu0 %3203
        %v3205 = vsel %vm2217, %v2979, 0.0
        %3206 = vadd.xlane.f32.xlu0 %v3205
        %v3207 = vpop.xlane.xlu0 %3206
        %v3208 = vsel %vm2217, %v2980, 0.0
        %3209 = vadd.xlane.f32.xlu0 %v3208
        %v3210 = vpop.xlane.xlu0 %3209
        %v3211 = vsel %vm2217, %v2981, 0.0
        %3212 = vadd.xlane.f32.xlu0 %v3211
        %v3213 = vpop.xlane.xlu0 %3212
        %v3214 = vsel %vm2217, %v2982, 0.0
        %3215 = vadd.xlane.f32.xlu0 %v3214
        %v3216 = vpop.xlane.xlu0 %3215
        %v3217 = vsel %vm2217, %v2983, 0.0
        %3218 = vadd.xlane.f32.xlu0 %v3217
        %v3219 = vpop.xlane.xlu0 %3218
        %v3220 = vsel %vm2217, %v2984, 0.0
        %3221 = vadd.xlane.f32.xlu0 %v3220
        %v3222 = vpop.xlane.xlu0 %3221
        %v3223 = vsel %vm2217, %v2985, 0.0
        %3224 = vadd.xlane.f32.xlu0 %v3223
        %v3225 = vpop.xlane.xlu0 %3224
        %v3226 = vsel %vm2217, %v2986, 0.0
        %3227 = vadd.xlane.f32.xlu0 %v3226
        %v3228 = vpop.xlane.xlu0 %3227
        %v3229 = vsel %vm2217, %v2987, 0.0
        %3230 = vadd.xlane.f32.xlu0 %v3229
        %v3231 = vpop.xlane.xlu0 %3230
        %v3232 = vsel %vm2217, %v2988, 0.0
        %3233 = vadd.xlane.f32.xlu0 %v3232
        %v3234 = vpop.xlane.xlu0 %3233
        %v3235 = vsel %vm2217, %v2989, 0.0
        %3236 = vadd.xlane.f32.xlu0 %v3235
        %v3237 = vpop.xlane.xlu0 %3236
        %v3238 = vsel %vm2217, %v2990, 0.0
        %3239 = vadd.xlane.f32.xlu0 %v3238
        %v3240 = vpop.xlane.xlu0 %3239
        %v3241 = vsel %vm2217, %v2991, 0.0
        %3242 = vadd.xlane.f32.xlu0 %v3241
        %v3243 = vpop.xlane.xlu0 %3242
        %v3244 = vsel %vm2217, %v2992, 0.0
        %3245 = vadd.xlane.f32.xlu0 %v3244
        %v3246 = vpop.xlane.xlu0 %3245
        %v3247 = vsel %vm2217, %v2993, 0.0
        %3248 = vadd.xlane.f32.xlu0 %v3247
        %v3249 = vpop.xlane.xlu0 %3248
        %v3250 = vsel %vm2217, %v2994, 0.0
        %3251 = vadd.xlane.f32.xlu0 %v3250
        %v3252 = vpop.xlane.xlu0 %3251
        %v3253 = vsel %vm2217, %v2995, 0.0
        %3254 = vadd.xlane.f32.xlu0 %v3253
        %v3255 = vpop.xlane.xlu0 %3254
        %v3256 = vsel %vm2217, %v2996, 0.0
        %3257 = vadd.xlane.f32.xlu0 %v3256
        %v3258 = vpop.xlane.xlu0 %3257
        %v3259 = vsel %vm2217, %v2997, 0.0
        %3260 = vadd.xlane.f32.xlu0 %v3259
        %v3261 = vpop.xlane.xlu0 %3260
        %v3262 = vsel %vm2217, %v2998, 0.0
        %3263 = vadd.xlane.f32.xlu0 %v3262
        %v3264 = vpop.xlane.xlu0 %3263
        %v3265 = vsel %vm2217, %v2999, 0.0
        %3266 = vadd.xlane.f32.xlu0 %v3265
        %v3267 = vpop.xlane.xlu0 %3266
        %v3268 = vsel %vm2217, %v3000, 0.0
        %3269 = vadd.xlane.f32.xlu0 %v3268
        %v3270 = vpop.xlane.xlu0 %3269
        %v3271 = vsel %vm2217, %v3001, 0.0
        %3272 = vadd.xlane.f32.xlu0 %v3271
        %v3273 = vpop.xlane.xlu0 %3272
        %v3274 = vsel %vm2217, %v3002, 0.0
        %3275 = vadd.xlane.f32.xlu0 %v3274
        %v3276 = vpop.xlane.xlu0 %3275
        %v3277 = vsel %vm2217, %v3003, 0.0
        %3278 = vadd.xlane.f32.xlu0 %v3277
        %v3279 = vpop.xlane.xlu0 %3278
        %v3280 = vsel %vm2217, %v3004, 0.0
        %3281 = vadd.xlane.f32.xlu0 %v3280
        %v3282 = vpop.xlane.xlu0 %3281
        %v3283 = vsel %vm2217, %v3005, 0.0
        %3284 = vadd.xlane.f32.xlu0 %v3283
        %v3285 = vpop.xlane.xlu0 %3284
        %v3286 = vsel %vm2217, %v3006, 0.0
        %3287 = vadd.xlane.f32.xlu0 %v3286
        %v3288 = vpop.xlane.xlu0 %3287
        %v3289 = vsel %vm2217, %v3007, 0.0
        %3290 = vadd.xlane.f32.xlu0 %v3289
        %v3291 = vpop.xlane.xlu0 %3290
        %v3292 = vsel %vm2217, %v3008, 0.0
        %3293 = vadd.xlane.f32.xlu0 %v3292
        %v3294 = vpop.xlane.xlu0 %3293
        %v3295 = vsel %vm2217, %v3009, 0.0
        %3296 = vadd.xlane.f32.xlu0 %v3295
        %v3297 = vpop.xlane.xlu0 %3296
        %v3298 = vsel %vm2217, %v3010, 0.0
        %3299 = vadd.xlane.f32.xlu0 %v3298
        %v3300 = vpop.xlane.xlu0 %3299
        %v3301 = vsel %vm2217, %v3011, 0.0
        %3302 = vadd.xlane.f32.xlu0 %v3301
        %v3303 = vpop.xlane.xlu0 %3302
        %v3304 = vsel %vm2217, %v3012, 0.0
        %3305 = vadd.xlane.f32.xlu0 %v3304
        %v3306 = vpop.xlane.xlu0 %3305
        %v3307 = vsel %vm2217, %v3013, 0.0
        %3308 = vadd.xlane.f32.xlu0 %v3307
        %v3309 = vpop.xlane.xlu0 %3308
        %v3310 = vsel %vm2217, %v3014, 0.0
        %3311 = vadd.xlane.f32.xlu0 %v3310
        %v3312 = vpop.xlane.xlu0 %3311
        %v3313 = vsel %vm2217, %v3015, 0.0
        %3314 = vadd.xlane.f32.xlu0 %v3313
        %v3315 = vpop.xlane.xlu0 %3314
        %v3316 = vsel %vm2217, %v3016, 0.0
        %3317 = vadd.xlane.f32.xlu0 %v3316
        %v3318 = vpop.xlane.xlu0 %3317
        %v3319 = vsel %vm2217, %v3017, 0.0
        %3320 = vadd.xlane.f32.xlu0 %v3319
        %v3321 = vpop.xlane.xlu0 %3320
        %v3322 = vsel %vm2217, %v3018, 0.0
        %3323 = vadd.xlane.f32.xlu0 %v3322
        %v3324 = vpop.xlane.xlu0 %3323
        %v3325 = vsel %vm2217, %v3019, 0.0
        %3326 = vadd.xlane.f32.xlu0 %v3325
        %v3327 = vpop.xlane.xlu0 %3326
        %v3328 = vsel %vm2217, %v3020, 0.0
        %3329 = vadd.xlane.f32.xlu0 %v3328
        %v3330 = vpop.xlane.xlu0 %3329
        %v3331 = vsel %vm2217, %v3021, 0.0
        %3332 = vadd.xlane.f32.xlu0 %v3331
        %v3333 = vpop.xlane.xlu0 %3332
        %v3334 = vsel %vm2217, %v3022, 0.0
        %3335 = vadd.xlane.f32.xlu0 %v3334
        %v3336 = vpop.xlane.xlu0 %3335
        %v3337 = vsel %vm2217, %v3023, 0.0
        %3338 = vadd.xlane.f32.xlu0 %v3337
        %v3339 = vpop.xlane.xlu0 %3338
        %v3340 = vsel %vm2217, %v3024, 0.0
        %3341 = vadd.xlane.f32.xlu0 %v3340
        %v3342 = vpop.xlane.xlu0 %3341
        %v3343 = vsel %vm2217, %v3025, 0.0
        %3344 = vadd.xlane.f32.xlu0 %v3343
        %v3345 = vpop.xlane.xlu0 %3344
        %v3346 = vsel %vm2217, %v3026, 0.0
        %3347 = vadd.xlane.f32.xlu0 %v3346
        %v3348 = vpop.xlane.xlu0 %3347
        %v3349 = vsel %vm2217, %v3027, 0.0
        %3350 = vadd.xlane.f32.xlu0 %v3349
        %v3351 = vpop.xlane.xlu0 %3350
        %v3352 = vsel %vm2217, %v3028, 0.0
        %3353 = vadd.xlane.f32.xlu0 %v3352
        %v3354 = vpop.xlane.xlu0 %3353
        %v3355 = vsel %vm2217, %v3029, 0.0
        %3356 = vadd.xlane.f32.xlu0 %v3355
        %v3357 = vpop.xlane.xlu0 %3356
        %v3358 = vsel %vm2217, %v3030, 0.0
        %3359 = vadd.xlane.f32.xlu0 %v3358
        %v3360 = vpop.xlane.xlu0 %3359
        %v3361 = vsel %vm2217, %v3031, 0.0
        %3362 = vadd.xlane.f32.xlu0 %v3361
        %v3363 = vpop.xlane.xlu0 %3362
        %v3364 = vsel %vm2217, %v3032, 0.0
        %3365 = vadd.xlane.f32.xlu0 %v3364
        %v3366 = vpop.xlane.xlu0 %3365
        %v3367 = vsel %vm2217, %v3033, 0.0
        %3368 = vadd.xlane.f32.xlu0 %v3367
        %v3369 = vpop.xlane.xlu0 %3368
        %v3370 = vsel %vm2217, %v3034, 0.0
        %3371 = vadd.xlane.f32.xlu0 %v3370
        %v3372 = vpop.xlane.xlu0 %3371
        %v3373 = vsel %vm2217, %v3035, 0.0
        %3374 = vadd.xlane.f32.xlu0 %v3373
        %v3375 = vpop.xlane.xlu0 %3374
        %v3376 = vsel %vm2217, %v3036, 0.0
        %3377 = vadd.xlane.f32.xlu0 %v3376
        %v3378 = vpop.xlane.xlu0 %3377
        %v3379 = vsel %vm2217, %v3037, 0.0
        %3380 = vadd.xlane.f32.xlu0 %v3379
        %v3381 = vpop.xlane.xlu0 %3380
        %v3382 = vsel %vm2217, %v3038, 0.0
        %3383 = vadd.xlane.f32.xlu0 %v3382
        %v3384 = vpop.xlane.xlu0 %3383
        %v3385 = vsel %vm2217, %v3039, 0.0
        %3386 = vadd.xlane.f32.xlu0 %v3385
        %v3387 = vpop.xlane.xlu0 %3386
        %v3388 = vsel %vm2217, %v3040, 0.0
        %3389 = vadd.xlane.f32.xlu0 %v3388
        %v3390 = vpop.xlane.xlu0 %3389
        %v3391 = vsel %vm2217, %v3041, 0.0
        %3392 = vadd.xlane.f32.xlu0 %v3391
        %v3393 = vpop.xlane.xlu0 %3392
        %v3394 = vsel %vm2217, %v3042, 0.0
        %3395 = vadd.xlane.f32.xlu0 %v3394
        %v3396 = vpop.xlane.xlu0 %3395
        %v3397 = vsel %vm2217, %v3043, 0.0
        %3398 = vadd.xlane.f32.xlu0 %v3397
        %v3399 = vpop.xlane.xlu0 %3398
        %v3400 = vsel %vm2217, %v3044, 0.0
        %3401 = vadd.xlane.f32.xlu0 %v3400
        %v3402 = vpop.xlane.xlu0 %3401
        %v3403 = vsel %vm2217, %v3045, 0.0
        %3404 = vadd.xlane.f32.xlu0 %v3403
        %v3405 = vpop.xlane.xlu0 %3404
        %v3406 = vsel %vm2217, %v3046, 0.0
        %3407 = vadd.xlane.f32.xlu0 %v3406
        %v3408 = vpop.xlane.xlu0 %3407
        %v3409 = vsel %vm2217, %v3047, 0.0
        %3410 = vadd.xlane.f32.xlu0 %v3409
        %v3411 = vpop.xlane.xlu0 %3410
        %v3412 = vsel %vm2217, %v3048, 0.0
        %3413 = vadd.xlane.f32.xlu0 %v3412
        %v3414 = vpop.xlane.xlu0 %3413
        %v3415 = vsel %vm2217, %v3049, 0.0
        %3416 = vadd.xlane.f32.xlu0 %v3415
        %v3417 = vpop.xlane.xlu0 %3416
        %v3418 = vsel %vm2217, %v3050, 0.0
        %3419 = vadd.xlane.f32.xlu0 %v3418
        %v3420 = vpop.xlane.xlu0 %3419
        %v3421 = vsel %vm2217, %v3051, 0.0
        %3422 = vadd.xlane.f32.xlu0 %v3421
        %v3423 = vpop.xlane.xlu0 %3422
        %v3424 = vsel %vm2217, %v3052, 0.0
        %3425 = vadd.xlane.f32.xlu0 %v3424
        %v3426 = vpop.xlane.xlu0 %3425
        %v3427 = vsel %vm2217, %v3053, 0.0
        %3428 = vadd.xlane.f32.xlu0 %v3427
        %v3429 = vpop.xlane.xlu0 %3428
        %v3430 = vsel %vm2217, %v3054, 0.0
        %3431 = vadd.xlane.f32.xlu0 %v3430
        %v3432 = vpop.xlane.xlu0 %3431
        %v3433 = vsel %vm2217, %v3055, 0.0
        %3434 = vadd.xlane.f32.xlu0 %v3433
        %v3435 = vpop.xlane.xlu0 %3434
        %v3436 = vsel %vm2217, %v3056, 0.0
        %3437 = vadd.xlane.f32.xlu0 %v3436
        %v3438 = vpop.xlane.xlu0 %3437
        %v3439 = vsel %vm2217, %v3057, 0.0
        %3440 = vadd.xlane.f32.xlu0 %v3439
        %v3441 = vpop.xlane.xlu0 %3440
        %v3442 = vsel %vm2217, %v3058, 0.0
        %3443 = vadd.xlane.f32.xlu0 %v3442
        %v3444 = vpop.xlane.xlu0 %3443
        %v3445 = vsel %vm2217, %v3059, 0.0
        %3446 = vadd.xlane.f32.xlu0 %v3445
        %v3447 = vpop.xlane.xlu0 %3446
        %v3448 = vsel %vm2217, %v3060, 0.0
        %3449 = vadd.xlane.f32.xlu0 %v3448
        %v3450 = vpop.xlane.xlu0 %3449
        %v3451 = vsel %vm2217, %v3061, 0.0
        %3452 = vadd.xlane.f32.xlu0 %v3451
        %v3453 = vpop.xlane.xlu0 %3452
        %v3454 = vsel %vm2217, %v3062, 0.0
        %3455 = vadd.xlane.f32.xlu0 %v3454
        %v3456 = vpop.xlane.xlu0 %3455
        %v3457 = vsel %vm2217, %v3063, 0.0
        %3458 = vadd.xlane.f32.xlu0 %v3457
        %v3459 = vpop.xlane.xlu0 %3458
        %v3460 = vsel %vm2217, %v3064, 0.0
        %3461 = vadd.xlane.f32.xlu0 %v3460
        %v3462 = vpop.xlane.xlu0 %3461
        %v3463 = vsel %vm2217, %v3065, 0.0
        %3464 = vadd.xlane.f32.xlu0 %v3463
        %v3465 = vpop.xlane.xlu0 %3464
        %v3466 = vsel %vm2217, %v3066, 0.0
        %3467 = vadd.xlane.f32.xlu0 %v3466
        %v3468 = vpop.xlane.xlu0 %3467
        %v3469 = vsel %vm2217, %v3067, 0.0
        %3470 = vadd.xlane.f32.xlu0 %v3469
        %v3471 = vpop.xlane.xlu0 %3470
        %v3472 = vsel %vm2217, %v3068, 0.0
        %3473 = vadd.xlane.f32.xlu0 %v3472
        %v3474 = vpop.xlane.xlu0 %3473
        %v3475 = vsel %vm2217, %v3069, 0.0
        %3476 = vadd.xlane.f32.xlu0 %v3475
        %v3477 = vpop.xlane.xlu0 %3476
        %v3478 = vsel %vm2217, %v3070, 0.0
        %3479 = vadd.xlane.f32.xlu0 %v3478
        %v3480 = vpop.xlane.xlu0 %3479
        %v3481 = vsel %vm2217, %v3071, 0.0
        %3482 = vadd.xlane.f32.xlu0 %v3481
        %v3483 = vpop.xlane.xlu0 %3482
        %v3484 = vsel %vm2217, %v3072, 0.0
        %3485 = vadd.xlane.f32.xlu0 %v3484
        %v3486 = vpop.xlane.xlu0 %3485
        %v3487 = vsel %vm2217, %v3073, 0.0
        %3488 = vadd.xlane.f32.xlu0 %v3487
        %v3489 = vpop.xlane.xlu0 %3488
        %v3490 = vsel %vm2217, %v3074, 0.0
        %3491 = vadd.xlane.f32.xlu0 %v3490
        %v3492 = vpop.xlane.xlu0 %3491
        %v3493 = vsel %vm2217, %v3075, 0.0
        %3494 = vadd.xlane.f32.xlu0 %v3493
        %v3495 = vpop.xlane.xlu0 %3494
        %v3496 = vsel %vm2217, %v3076, 0.0
        %3497 = vadd.xlane.f32.xlu0 %v3496
        %v3498 = vpop.xlane.xlu0 %3497
        %v3499 = vsel %vm2217, %v3077, 0.0
        %3500 = vadd.xlane.f32.xlu0 %v3499
        %v3501 = vpop.xlane.xlu0 %3500
        %v3502 = vsel %vm2217, %v3078, 0.0
        %3503 = vadd.xlane.f32.xlu0 %v3502
        %v3504 = vpop.xlane.xlu0 %3503
        %v3505 = vsel %vm2217, %v3079, 0.0
        %3506 = vadd.xlane.f32.xlu0 %v3505
        %v3507 = vpop.xlane.xlu0 %3506
        %v3508 = vsel %vm2217, %v3080, 0.0
        %3509 = vadd.xlane.f32.xlu0 %v3508
        %v3510 = vpop.xlane.xlu0 %3509
        %v3511 = vsel %vm2217, %v3081, 0.0
        %3512 = vadd.xlane.f32.xlu0 %v3511
        %v3513 = vpop.xlane.xlu0 %3512
        %v3514 = vmul.f32 %v3084, 0.020408163
        %v3515 = vmul.f32 %v3087, 0.020408163
        %v3516 = vmul.f32 %v3090, 0.020408163
        %v3517 = vmul.f32 %v3093, 0.020408163
        %v3518 = vmul.f32 %v3096, 0.020408163
        %v3519 = vmul.f32 %v3099, 0.020408163
        %v3520 = vmul.f32 %v3102, 0.020408163
        %v3521 = vmul.f32 %v3105, 0.020408163
        %v3522 = vmul.f32 %v3108, 0.020408163
        %v3523 = vmul.f32 %v3111, 0.020408163
        %v3524 = vmul.f32 %v3114, 0.020408163
        %v3525 = vmul.f32 %v3117, 0.020408163
        %v3526 = vmul.f32 %v3120, 0.020408163
        %v3527 = vmul.f32 %v3123, 0.020408163
        %v3528 = vmul.f32 %v3126, 0.020408163
        %v3529 = vmul.f32 %v3129, 0.020408163
        %v3530 = vmul.f32 %v3132, 0.020408163
        %v3531 = vmul.f32 %v3135, 0.020408163
        %v3532 = vmul.f32 %v3138, 0.020408163
        %v3533 = vmul.f32 %v3141, 0.020408163
        %v3534 = vmul.f32 %v3144, 0.020408163
        %v3535 = vmul.f32 %v3147, 0.020408163
        %v3536 = vmul.f32 %v3150, 0.020408163
        %v3537 = vmul.f32 %v3153, 0.020408163
        %v3538 = vmul.f32 %v3156, 0.020408163
        %v3539 = vmul.f32 %v3159, 0.020408163
        %v3540 = vmul.f32 %v3162, 0.020408163
        %v3541 = vmul.f32 %v3165, 0.020408163
        %v3542 = vmul.f32 %v3168, 0.020408163
        %v3543 = vmul.f32 %v3171, 0.020408163
        %v3544 = vmul.f32 %v3174, 0.020408163
        %v3545 = vmul.f32 %v3177, 0.020408163
        %v3546 = vmul.f32 %v3180, 0.020408163
        %v3547 = vmul.f32 %v3183, 0.020408163
        %v3548 = vmul.f32 %v3186, 0.020408163
        %v3549 = vmul.f32 %v3189, 0.020408163
        %v3550 = vmul.f32 %v3192, 0.020408163
        %v3551 = vmul.f32 %v3195, 0.020408163
        %v3552 = vmul.f32 %v3198, 0.020408163
        %v3553 = vmul.f32 %v3201, 0.020408163
        %v3554 = vmul.f32 %v3204, 0.020408163
        %v3555 = vmul.f32 %v3207, 0.020408163
        %v3556 = vmul.f32 %v3210, 0.020408163
        %v3557 = vmul.f32 %v3213, 0.020408163
        %v3558 = vmul.f32 %v3216, 0.020408163
        %v3559 = vmul.f32 %v3219, 0.020408163
        %v3560 = vmul.f32 %v3222, 0.020408163
        %v3561 = vmul.f32 %v3225, 0.020408163
        %v3562 = vmul.f32 %v3228, 0.020408163
        %v3563 = vmul.f32 %v3231, 0.020408163
        %v3564 = vmul.f32 %v3234, 0.020408163
        %v3565 = vmul.f32 %v3237, 0.020408163
        %v3566 = vmul.f32 %v3240, 0.020408163
        %v3567 = vmul.f32 %v3243, 0.020408163
        %v3568 = vmul.f32 %v3246, 0.020408163
        %v3569 = vmul.f32 %v3249, 0.020408163
        %v3570 = vmul.f32 %v3252, 0.020408163
        %v3571 = vmul.f32 %v3255, 0.020408163
        %v3572 = vmul.f32 %v3258, 0.020408163
        %v3573 = vmul.f32 %v3261, 0.020408163
        %v3574 = vmul.f32 %v3264, 0.020408163
        %v3575 = vmul.f32 %v3267, 0.020408163
        %v3576 = vmul.f32 %v3270, 0.020408163
        %v3577 = vmul.f32 %v3273, 0.020408163
        %v3578 = vmul.f32 %v3276, 0.020408163
        %v3579 = vmul.f32 %v3279, 0.020408163
        %v3580 = vmul.f32 %v3282, 0.020408163
        %v3581 = vmul.f32 %v3285, 0.020408163
        %v3582 = vmul.f32 %v3288, 0.020408163
        %v3583 = vmul.f32 %v3291, 0.020408163
        %v3584 = vmul.f32 %v3294, 0.020408163
        %v3585 = vmul.f32 %v3297, 0.020408163
        %v3586 = vmul.f32 %v3300, 0.020408163
        %v3587 = vmul.f32 %v3303, 0.020408163
        %v3588 = vmul.f32 %v3306, 0.020408163
        %v3589 = vmul.f32 %v3309, 0.020408163
        %v3590 = vmul.f32 %v3312, 0.020408163
        %v3591 = vmul.f32 %v3315, 0.020408163
        %v3592 = vmul.f32 %v3318, 0.020408163
        %v3593 = vmul.f32 %v3321, 0.020408163
        %v3594 = vmul.f32 %v3324, 0.020408163
        %v3595 = vmul.f32 %v3327, 0.020408163
        %v3596 = vmul.f32 %v3330, 0.020408163
        %v3597 = vmul.f32 %v3333, 0.020408163
        %v3598 = vmul.f32 %v3336, 0.020408163
        %v3599 = vmul.f32 %v3339, 0.020408163
        %v3600 = vmul.f32 %v3342, 0.020408163
        %v3601 = vmul.f32 %v3345, 0.020408163
        %v3602 = vmul.f32 %v3348, 0.020408163
        %v3603 = vmul.f32 %v3351, 0.020408163
        %v3604 = vmul.f32 %v3354, 0.020408163
        %v3605 = vmul.f32 %v3357, 0.020408163
        %v3606 = vmul.f32 %v3360, 0.020408163
        %v3607 = vmul.f32 %v3363, 0.020408163
        %v3608 = vmul.f32 %v3366, 0.020408163
        %v3609 = vmul.f32 %v3369, 0.020408163
        %v3610 = vmul.f32 %v3372, 0.020408163
        %v3611 = vmul.f32 %v3375, 0.020408163
        %v3612 = vmul.f32 %v3378, 0.020408163
        %v3613 = vmul.f32 %v3381, 0.020408163
        %v3614 = vmul.f32 %v3384, 0.020408163
        %v3615 = vmul.f32 %v3387, 0.020408163
        %v3616 = vmul.f32 %v3390, 0.020408163
        %v3617 = vmul.f32 %v3393, 0.020408163
        %v3618 = vmul.f32 %v3396, 0.020408163
        %v3619 = vmul.f32 %v3399, 0.020408163
        %v3620 = vmul.f32 %v3402, 0.020408163
        %v3621 = vmul.f32 %v3405, 0.020408163
        %v3622 = vmul.f32 %v3408, 0.020408163
        %v3623 = vmul.f32 %v3411, 0.020408163
        %v3624 = vmul.f32 %v3414, 0.020408163
        %v3625 = vmul.f32 %v3417, 0.020408163
        %v3626 = vmul.f32 %v3420, 0.020408163
        %v3627 = vmul.f32 %v3423, 0.020408163
        %v3628 = vmul.f32 %v3426, 0.020408163
        %v3629 = vmul.f32 %v3429, 0.020408163
        %v3630 = vmul.f32 %v3432, 0.020408163
        %v3631 = vmul.f32 %v3435, 0.020408163
        %v3632 = vmul.f32 %v3438, 0.020408163
        %v3633 = vmul.f32 %v3441, 0.020408163
        %v3634 = vmul.f32 %v3444, 0.020408163
        %v3635 = vmul.f32 %v3447, 0.020408163
        %v3636 = vmul.f32 %v3450, 0.020408163
        %v3637 = vmul.f32 %v3453, 0.020408163
        %v3638 = vmul.f32 %v3456, 0.020408163
        %v3639 = vmul.f32 %v3459, 0.020408163
        %v3640 = vmul.f32 %v3462, 0.020408163
        %v3641 = vmul.f32 %v3465, 0.020408163
        %v3642 = vmul.f32 %v3468, 0.020408163
        %v3643 = vmul.f32 %v3471, 0.020408163
        %v3644 = vmul.f32 %v3474, 0.020408163
        %v3645 = vmul.f32 %v3477, 0.020408163
        %v3646 = vmul.f32 %v3480, 0.020408163
        %v3647 = vmul.f32 %v3483, 0.020408163
        %v3648 = vmul.f32 %v3486, 0.020408163
        %v3649 = vmul.f32 %v3489, 0.020408163
        %v3650 = vmul.f32 %v3492, 0.020408163
        %v3651 = vmul.f32 %v3495, 0.020408163
        %v3652 = vmul.f32 %v3498, 0.020408163
        %v3653 = vmul.f32 %v3501, 0.020408163
        %v3654 = vmul.f32 %v3504, 0.020408163
        %v3655 = vmul.f32 %v3507, 0.020408163
        %v3656 = vmul.f32 %v3510, 0.020408163
        %v3657 = vmul.f32 %v3513, 0.020408163
        %v3658 = vadd.f32 %v3514, 0.001
        %v3659 = vadd.f32 %v3515, 0.001
        %v3660 = vadd.f32 %v3516, 0.001
        %v3661 = vadd.f32 %v3517, 0.001
        %v3662 = vadd.f32 %v3518, 0.001
        %v3663 = vadd.f32 %v3519, 0.001
        %v3664 = vadd.f32 %v3520, 0.001
        %v3665 = vadd.f32 %v3521, 0.001
        %v3666 = vadd.f32 %v3522, 0.001
        %v3667 = vadd.f32 %v3523, 0.001
        %v3668 = vadd.f32 %v3524, 0.001
        %v3669 = vadd.f32 %v3525, 0.001
        %v3670 = vadd.f32 %v3526, 0.001
        %v3671 = vadd.f32 %v3527, 0.001
        %v3672 = vadd.f32 %v3528, 0.001
        %v3673 = vadd.f32 %v3529, 0.001
        %v3674 = vadd.f32 %v3530, 0.001
        %v3675 = vadd.f32 %v3531, 0.001
        %v3676 = vadd.f32 %v3532, 0.001
        %v3677 = vadd.f32 %v3533, 0.001
        %v3678 = vadd.f32 %v3534, 0.001
        %v3679 = vadd.f32 %v3535, 0.001
        %v3680 = vadd.f32 %v3536, 0.001
        %v3681 = vadd.f32 %v3537, 0.001
        %v3682 = vadd.f32 %v3538, 0.001
        %v3683 = vadd.f32 %v3539, 0.001
        %v3684 = vadd.f32 %v3540, 0.001
        %v3685 = vadd.f32 %v3541, 0.001
        %v3686 = vadd.f32 %v3542, 0.001
        %v3687 = vadd.f32 %v3543, 0.001
        %v3688 = vadd.f32 %v3544, 0.001
        %v3689 = vadd.f32 %v3545, 0.001
        %v3690 = vadd.f32 %v3546, 0.001
        %v3691 = vadd.f32 %v3547, 0.001
        %v3692 = vadd.f32 %v3548, 0.001
        %v3693 = vadd.f32 %v3549, 0.001
        %v3694 = vadd.f32 %v3550, 0.001
        %v3695 = vadd.f32 %v3551, 0.001
        %v3696 = vadd.f32 %v3552, 0.001
        %v3697 = vadd.f32 %v3553, 0.001
        %v3698 = vadd.f32 %v3554, 0.001
        %v3699 = vadd.f32 %v3555, 0.001
        %v3700 = vadd.f32 %v3556, 0.001
        %v3701 = vadd.f32 %v3557, 0.001
        %v3702 = vadd.f32 %v3558, 0.001
        %v3703 = vadd.f32 %v3559, 0.001
        %v3704 = vadd.f32 %v3560, 0.001
        %v3705 = vadd.f32 %v3561, 0.001
        %v3706 = vadd.f32 %v3562, 0.001
        %v3707 = vadd.f32 %v3563, 0.001
        %v3708 = vadd.f32 %v3564, 0.001
        %v3709 = vadd.f32 %v3565, 0.001
        %v3710 = vadd.f32 %v3566, 0.001
        %v3711 = vadd.f32 %v3567, 0.001
        %v3712 = vadd.f32 %v3568, 0.001
        %v3713 = vadd.f32 %v3569, 0.001
        %v3714 = vadd.f32 %v3570, 0.001
        %v3715 = vadd.f32 %v3571, 0.001
        %v3716 = vadd.f32 %v3572, 0.001
        %v3717 = vadd.f32 %v3573, 0.001
        %v3718 = vadd.f32 %v3574, 0.001
        %v3719 = vadd.f32 %v3575, 0.001
        %v3720 = vadd.f32 %v3576, 0.001
        %v3721 = vadd.f32 %v3577, 0.001
        %v3722 = vadd.f32 %v3578, 0.001
        %v3723 = vadd.f32 %v3579, 0.001
        %v3724 = vadd.f32 %v3580, 0.001
        %v3725 = vadd.f32 %v3581, 0.001
        %v3726 = vadd.f32 %v3582, 0.001
        %v3727 = vadd.f32 %v3583, 0.001
        %v3728 = vadd.f32 %v3584, 0.001
        %v3729 = vadd.f32 %v3585, 0.001
        %v3730 = vadd.f32 %v3586, 0.001
        %v3731 = vadd.f32 %v3587, 0.001
        %v3732 = vadd.f32 %v3588, 0.001
        %v3733 = vadd.f32 %v3589, 0.001
        %v3734 = vadd.f32 %v3590, 0.001
        %v3735 = vadd.f32 %v3591, 0.001
        %v3736 = vadd.f32 %v3592, 0.001
        %v3737 = vadd.f32 %v3593, 0.001
        %v3738 = vadd.f32 %v3594, 0.001
        %v3739 = vadd.f32 %v3595, 0.001
        %v3740 = vadd.f32 %v3596, 0.001
        %v3741 = vadd.f32 %v3597, 0.001
        %v3742 = vadd.f32 %v3598, 0.001
        %v3743 = vadd.f32 %v3599, 0.001
        %v3744 = vadd.f32 %v3600, 0.001
        %v3745 = vadd.f32 %v3601, 0.001
        %v3746 = vadd.f32 %v3602, 0.001
        %v3747 = vadd.f32 %v3603, 0.001
        %v3748 = vadd.f32 %v3604, 0.001
        %v3749 = vadd.f32 %v3605, 0.001
        %v3750 = vadd.f32 %v3606, 0.001
        %v3751 = vadd.f32 %v3607, 0.001
        %v3752 = vadd.f32 %v3608, 0.001
        %v3753 = vadd.f32 %v3609, 0.001
        %v3754 = vadd.f32 %v3610, 0.001
        %v3755 = vadd.f32 %v3611, 0.001
        %v3756 = vadd.f32 %v3612, 0.001
        %v3757 = vadd.f32 %v3613, 0.001
        %v3758 = vadd.f32 %v3614, 0.001
        %v3759 = vadd.f32 %v3615, 0.001
        %v3760 = vadd.f32 %v3616, 0.001
        %v3761 = vadd.f32 %v3617, 0.001
        %v3762 = vadd.f32 %v3618, 0.001
        %v3763 = vadd.f32 %v3619, 0.001
        %v3764 = vadd.f32 %v3620, 0.001
        %v3765 = vadd.f32 %v3621, 0.001
        %v3766 = vadd.f32 %v3622, 0.001
        %v3767 = vadd.f32 %v3623, 0.001
        %v3768 = vadd.f32 %v3624, 0.001
        %v3769 = vadd.f32 %v3625, 0.001
        %v3770 = vadd.f32 %v3626, 0.001
        %v3771 = vadd.f32 %v3627, 0.001
        %v3772 = vadd.f32 %v3628, 0.001
        %v3773 = vadd.f32 %v3629, 0.001
        %v3774 = vadd.f32 %v3630, 0.001
        %v3775 = vadd.f32 %v3631, 0.001
        %v3776 = vadd.f32 %v3632, 0.001
        %v3777 = vadd.f32 %v3633, 0.001
        %v3778 = vadd.f32 %v3634, 0.001
        %v3779 = vadd.f32 %v3635, 0.001
        %v3780 = vadd.f32 %v3636, 0.001
        %v3781 = vadd.f32 %v3637, 0.001
        %v3782 = vadd.f32 %v3638, 0.001
        %v3783 = vadd.f32 %v3639, 0.001
        %v3784 = vadd.f32 %v3640, 0.001
        %v3785 = vadd.f32 %v3641, 0.001
        %v3786 = vadd.f32 %v3642, 0.001
        %v3787 = vadd.f32 %v3643, 0.001
        %v3788 = vadd.f32 %v3644, 0.001
        %v3789 = vadd.f32 %v3645, 0.001
        %v3790 = vadd.f32 %v3646, 0.001
        %v3791 = vadd.f32 %v3647, 0.001
        %v3792 = vadd.f32 %v3648, 0.001
        %v3793 = vadd.f32 %v3649, 0.001
        %v3794 = vadd.f32 %v3650, 0.001
        %v3795 = vadd.f32 %v3651, 0.001
        %v3796 = vadd.f32 %v3652, 0.001
        %v3797 = vadd.f32 %v3653, 0.001
        %v3798 = vadd.f32 %v3654, 0.001
        %v3799 = vadd.f32 %v3655, 0.001
        %v3800 = vadd.f32 %v3656, 0.001
        %v3801 = vadd.f32 %v3657, 0.001
        %v3802 = vrsqrt.pop %v3658
        %v3803 = vmul.f32 %v3802, %v3658
        %v3804 = vmul.f32 %v3803, %v3802
        %v3805 = vmul.f32 0.5, %v3804
        %v3806 = vsub.f32 1.5, %v3805
        %v3807 = vmul.f32 %v3802, %v3806
        %vm3808 = vweird.f32 %v3658
        %vm3809 = vweird.f32 %v3802
        %vm3810 = vmor %vm3808, %vm3809
        %v3811 = vsel %vm3810, %v3802, %v3807
        %v3812 = vrsqrt.pop %v3659
        %v3813 = vmul.f32 %v3812, %v3659
        %v3814 = vmul.f32 %v3813, %v3812
        %v3815 = vmul.f32 0.5, %v3814
        %v3816 = vsub.f32 1.5, %v3815
        %v3817 = vmul.f32 %v3812, %v3816
        %vm3818 = vweird.f32 %v3659
        %vm3819 = vweird.f32 %v3812
        %vm3820 = vmor %vm3818, %vm3819
        %v3821 = vsel %vm3820, %v3812, %v3817
        %v3822 = vrsqrt.pop %v3660
        %v3823 = vmul.f32 %v3822, %v3660
        %v3824 = vmul.f32 %v3823, %v3822
        %v3825 = vmul.f32 0.5, %v3824
        %v3826 = vsub.f32 1.5, %v3825
        %v3827 = vmul.f32 %v3822, %v3826
        %vm3828 = vweird.f32 %v3660
        %vm3829 = vweird.f32 %v3822
        %vm3830 = vmor %vm3828, %vm3829
        %v3831 = vsel %vm3830, %v3822, %v3827
        %v3832 = vrsqrt.pop %v3661
        %v3833 = vmul.f32 %v3832, %v3661
        %v3834 = vmul.f32 %v3833, %v3832
        %v3835 = vmul.f32 0.5, %v3834
        %v3836 = vsub.f32 1.5, %v3835
        %v3837 = vmul.f32 %v3832, %v3836
        %vm3838 = vweird.f32 %v3661
        %vm3839 = vweird.f32 %v3832
        %vm3840 = vmor %vm3838, %vm3839
        %v3841 = vsel %vm3840, %v3832, %v3837
        %v3842 = vrsqrt.pop %v3662
        %v3843 = vmul.f32 %v3842, %v3662
        %v3844 = vmul.f32 %v3843, %v3842
        %v3845 = vmul.f32 0.5, %v3844
        %v3846 = vsub.f32 1.5, %v3845
        %v3847 = vmul.f32 %v3842, %v3846
        %vm3848 = vweird.f32 %v3662
        %vm3849 = vweird.f32 %v3842
        %vm3850 = vmor %vm3848, %vm3849
        %v3851 = vsel %vm3850, %v3842, %v3847
        %v3852 = vrsqrt.pop %v3663
        %v3853 = vmul.f32 %v3852, %v3663
        %v3854 = vmul.f32 %v3853, %v3852
        %v3855 = vmul.f32 0.5, %v3854
        %v3856 = vsub.f32 1.5, %v3855
        %v3857 = vmul.f32 %v3852, %v3856
        %vm3858 = vweird.f32 %v3663
        %vm3859 = vweird.f32 %v3852
        %vm3860 = vmor %vm3858, %vm3859
        %v3861 = vsel %vm3860, %v3852, %v3857
        %v3862 = vrsqrt.pop %v3664
        %v3863 = vmul.f32 %v3862, %v3664
        %v3864 = vmul.f32 %v3863, %v3862
        %v3865 = vmul.f32 0.5, %v3864
        %v3866 = vsub.f32 1.5, %v3865
        %v3867 = vmul.f32 %v3862, %v3866
        %vm3868 = vweird.f32 %v3664
        %vm3869 = vweird.f32 %v3862
        %vm3870 = vmor %vm3868, %vm3869
        %v3871 = vsel %vm3870, %v3862, %v3867
        %v3872 = vrsqrt.pop %v3665
        %v3873 = vmul.f32 %v3872, %v3665
        %v3874 = vmul.f32 %v3873, %v3872
        %v3875 = vmul.f32 0.5, %v3874
        %v3876 = vsub.f32 1.5, %v3875
        %v3877 = vmul.f32 %v3872, %v3876
        %vm3878 = vweird.f32 %v3665
        %vm3879 = vweird.f32 %v3872
        %vm3880 = vmor %vm3878, %vm3879
        %v3881 = vsel %vm3880, %v3872, %v3877
        %v3882 = vrsqrt.pop %v3666
        %v3883 = vmul.f32 %v3882, %v3666
        %v3884 = vmul.f32 %v3883, %v3882
        %v3885 = vmul.f32 0.5, %v3884
        %v3886 = vsub.f32 1.5, %v3885
        %v3887 = vmul.f32 %v3882, %v3886
        %vm3888 = vweird.f32 %v3666
        %vm3889 = vweird.f32 %v3882
        %vm3890 = vmor %vm3888, %vm3889
        %v3891 = vsel %vm3890, %v3882, %v3887
        %v3892 = vrsqrt.pop %v3667
        %v3893 = vmul.f32 %v3892, %v3667
        %v3894 = vmul.f32 %v3893, %v3892
        %v3895 = vmul.f32 0.5, %v3894
        %v3896 = vsub.f32 1.5, %v3895
        %v3897 = vmul.f32 %v3892, %v3896
        %vm3898 = vweird.f32 %v3667
        %vm3899 = vweird.f32 %v3892
        %vm3900 = vmor %vm3898, %vm3899
        %v3901 = vsel %vm3900, %v3892, %v3897
        %v3902 = vrsqrt.pop %v3668
        %v3903 = vmul.f32 %v3902, %v3668
        %v3904 = vmul.f32 %v3903, %v3902
        %v3905 = vmul.f32 0.5, %v3904
        %v3906 = vsub.f32 1.5, %v3905
        %v3907 = vmul.f32 %v3902, %v3906
        %vm3908 = vweird.f32 %v3668
        %vm3909 = vweird.f32 %v3902
        %vm3910 = vmor %vm3908, %vm3909
        %v3911 = vsel %vm3910, %v3902, %v3907
        %v3912 = vrsqrt.pop %v3669
        %v3913 = vmul.f32 %v3912, %v3669
        %v3914 = vmul.f32 %v3913, %v3912
        %v3915 = vmul.f32 0.5, %v3914
        %v3916 = vsub.f32 1.5, %v3915
        %v3917 = vmul.f32 %v3912, %v3916
        %vm3918 = vweird.f32 %v3669
        %vm3919 = vweird.f32 %v3912
        %vm3920 = vmor %vm3918, %vm3919
        %v3921 = vsel %vm3920, %v3912, %v3917
        %v3922 = vrsqrt.pop %v3670
        %v3923 = vmul.f32 %v3922, %v3670
        %v3924 = vmul.f32 %v3923, %v3922
        %v3925 = vmul.f32 0.5, %v3924
        %v3926 = vsub.f32 1.5, %v3925
        %v3927 = vmul.f32 %v3922, %v3926
        %vm3928 = vweird.f32 %v3670
        %vm3929 = vweird.f32 %v3922
        %vm3930 = vmor %vm3928, %vm3929
        %v3931 = vsel %vm3930, %v3922, %v3927
        %v3932 = vrsqrt.pop %v3671
        %v3933 = vmul.f32 %v3932, %v3671
        %v3934 = vmul.f32 %v3933, %v3932
        %v3935 = vmul.f32 0.5, %v3934
        %v3936 = vsub.f32 1.5, %v3935
        %v3937 = vmul.f32 %v3932, %v3936
        %vm3938 = vweird.f32 %v3671
        %vm3939 = vweird.f32 %v3932
        %vm3940 = vmor %vm3938, %vm3939
        %v3941 = vsel %vm3940, %v3932, %v3937
        %v3942 = vrsqrt.pop %v3672
        %v3943 = vmul.f32 %v3942, %v3672
        %v3944 = vmul.f32 %v3943, %v3942
        %v3945 = vmul.f32 0.5, %v3944
        %v3946 = vsub.f32 1.5, %v3945
        %v3947 = vmul.f32 %v3942, %v3946
        %vm3948 = vweird.f32 %v3672
        %vm3949 = vweird.f32 %v3942
        %vm3950 = vmor %vm3948, %vm3949
        %v3951 = vsel %vm3950, %v3942, %v3947
        %v3952 = vrsqrt.pop %v3673
        %v3953 = vmul.f32 %v3952, %v3673
        %v3954 = vmul.f32 %v3953, %v3952
        %v3955 = vmul.f32 0.5, %v3954
        %v3956 = vsub.f32 1.5, %v3955
        %v3957 = vmul.f32 %v3952, %v3956
        %vm3958 = vweird.f32 %v3673
        %vm3959 = vweird.f32 %v3952
        %vm3960 = vmor %vm3958, %vm3959
        %v3961 = vsel %vm3960, %v3952, %v3957
        %v3962 = vrsqrt.pop %v3674
        %v3963 = vmul.f32 %v3962, %v3674
        %v3964 = vmul.f32 %v3963, %v3962
        %v3965 = vmul.f32 0.5, %v3964
        %v3966 = vsub.f32 1.5, %v3965
        %v3967 = vmul.f32 %v3962, %v3966
        %vm3968 = vweird.f32 %v3674
        %vm3969 = vweird.f32 %v3962
        %vm3970 = vmor %vm3968, %vm3969
        %v3971 = vsel %vm3970, %v3962, %v3967
        %v3972 = vrsqrt.pop %v3675
        %v3973 = vmul.f32 %v3972, %v3675
        %v3974 = vmul.f32 %v3973, %v3972
        %v3975 = vmul.f32 0.5, %v3974
        %v3976 = vsub.f32 1.5, %v3975
        %v3977 = vmul.f32 %v3972, %v3976
        %vm3978 = vweird.f32 %v3675
        %vm3979 = vweird.f32 %v3972
        %vm3980 = vmor %vm3978, %vm3979
        %v3981 = vsel %vm3980, %v3972, %v3977
        %v3982 = vrsqrt.pop %v3676
        %v3983 = vmul.f32 %v3982, %v3676
        %v3984 = vmul.f32 %v3983, %v3982
        %v3985 = vmul.f32 0.5, %v3984
        %v3986 = vsub.f32 1.5, %v3985
        %v3987 = vmul.f32 %v3982, %v3986
        %vm3988 = vweird.f32 %v3676
        %vm3989 = vweird.f32 %v3982
        %vm3990 = vmor %vm3988, %vm3989
        %v3991 = vsel %vm3990, %v3982, %v3987
        %v3992 = vrsqrt.pop %v3677
        %v3993 = vmul.f32 %v3992, %v3677
        %v3994 = vmul.f32 %v3993, %v3992
        %v3995 = vmul.f32 0.5, %v3994
        %v3996 = vsub.f32 1.5, %v3995
        %v3997 = vmul.f32 %v3992, %v3996
        %vm3998 = vweird.f32 %v3677
        %vm3999 = vweird.f32 %v3992
        %vm4000 = vmor %vm3998, %vm3999
        %v4001 = vsel %vm4000, %v3992, %v3997
        %v4002 = vrsqrt.pop %v3678
        %v4003 = vmul.f32 %v4002, %v3678
        %v4004 = vmul.f32 %v4003, %v4002
        %v4005 = vmul.f32 0.5, %v4004
        %v4006 = vsub.f32 1.5, %v4005
        %v4007 = vmul.f32 %v4002, %v4006
        %vm4008 = vweird.f32 %v3678
        %vm4009 = vweird.f32 %v4002
        %vm4010 = vmor %vm4008, %vm4009
        %v4011 = vsel %vm4010, %v4002, %v4007
        %v4012 = vrsqrt.pop %v3679
        %v4013 = vmul.f32 %v4012, %v3679
        %v4014 = vmul.f32 %v4013, %v4012
        %v4015 = vmul.f32 0.5, %v4014
        %v4016 = vsub.f32 1.5, %v4015
        %v4017 = vmul.f32 %v4012, %v4016
        %vm4018 = vweird.f32 %v3679
        %vm4019 = vweird.f32 %v4012
        %vm4020 = vmor %vm4018, %vm4019
        %v4021 = vsel %vm4020, %v4012, %v4017
        %v4022 = vrsqrt.pop %v3680
        %v4023 = vmul.f32 %v4022, %v3680
        %v4024 = vmul.f32 %v4023, %v4022
        %v4025 = vmul.f32 0.5, %v4024
        %v4026 = vsub.f32 1.5, %v4025
        %v4027 = vmul.f32 %v4022, %v4026
        %vm4028 = vweird.f32 %v3680
        %vm4029 = vweird.f32 %v4022
        %vm4030 = vmor %vm4028, %vm4029
        %v4031 = vsel %vm4030, %v4022, %v4027
        %v4032 = vrsqrt.pop %v3681
        %v4033 = vmul.f32 %v4032, %v3681
        %v4034 = vmul.f32 %v4033, %v4032
        %v4035 = vmul.f32 0.5, %v4034
        %v4036 = vsub.f32 1.5, %v4035
        %v4037 = vmul.f32 %v4032, %v4036
        %vm4038 = vweird.f32 %v3681
        %vm4039 = vweird.f32 %v4032
        %vm4040 = vmor %vm4038, %vm4039
        %v4041 = vsel %vm4040, %v4032, %v4037
        %v4042 = vrsqrt.pop %v3682
        %v4043 = vmul.f32 %v4042, %v3682
        %v4044 = vmul.f32 %v4043, %v4042
        %v4045 = vmul.f32 0.5, %v4044
        %v4046 = vsub.f32 1.5, %v4045
        %v4047 = vmul.f32 %v4042, %v4046
        %vm4048 = vweird.f32 %v3682
        %vm4049 = vweird.f32 %v4042
        %vm4050 = vmor %vm4048, %vm4049
        %v4051 = vsel %vm4050, %v4042, %v4047
        %v4052 = vrsqrt.pop %v3683
        %v4053 = vmul.f32 %v4052, %v3683
        %v4054 = vmul.f32 %v4053, %v4052
        %v4055 = vmul.f32 0.5, %v4054
        %v4056 = vsub.f32 1.5, %v4055
        %v4057 = vmul.f32 %v4052, %v4056
        %vm4058 = vweird.f32 %v3683
        %vm4059 = vweird.f32 %v4052
        %vm4060 = vmor %vm4058, %vm4059
        %v4061 = vsel %vm4060, %v4052, %v4057
        %v4062 = vrsqrt.pop %v3684
        %v4063 = vmul.f32 %v4062, %v3684
        %v4064 = vmul.f32 %v4063, %v4062
        %v4065 = vmul.f32 0.5, %v4064
        %v4066 = vsub.f32 1.5, %v4065
        %v4067 = vmul.f32 %v4062, %v4066
        %vm4068 = vweird.f32 %v3684
        %vm4069 = vweird.f32 %v4062
        %vm4070 = vmor %vm4068, %vm4069
        %v4071 = vsel %vm4070, %v4062, %v4067
        %v4072 = vrsqrt.pop %v3685
        %v4073 = vmul.f32 %v4072, %v3685
        %v4074 = vmul.f32 %v4073, %v4072
        %v4075 = vmul.f32 0.5, %v4074
        %v4076 = vsub.f32 1.5, %v4075
        %v4077 = vmul.f32 %v4072, %v4076
        %vm4078 = vweird.f32 %v3685
        %vm4079 = vweird.f32 %v4072
        %vm4080 = vmor %vm4078, %vm4079
        %v4081 = vsel %vm4080, %v4072, %v4077
        %v4082 = vrsqrt.pop %v3686
        %v4083 = vmul.f32 %v4082, %v3686
        %v4084 = vmul.f32 %v4083, %v4082
        %v4085 = vmul.f32 0.5, %v4084
        %v4086 = vsub.f32 1.5, %v4085
        %v4087 = vmul.f32 %v4082, %v4086
        %vm4088 = vweird.f32 %v3686
        %vm4089 = vweird.f32 %v4082
        %vm4090 = vmor %vm4088, %vm4089
        %v4091 = vsel %vm4090, %v4082, %v4087
        %v4092 = vrsqrt.pop %v3687
        %v4093 = vmul.f32 %v4092, %v3687
        %v4094 = vmul.f32 %v4093, %v4092
        %v4095 = vmul.f32 0.5, %v4094
        %v4096 = vsub.f32 1.5, %v4095
        %v4097 = vmul.f32 %v4092, %v4096
        %vm4098 = vweird.f32 %v3687
        %vm4099 = vweird.f32 %v4092
        %vm4100 = vmor %vm4098, %vm4099
        %v4101 = vsel %vm4100, %v4092, %v4097
        %v4102 = vrsqrt.pop %v3688
        %v4103 = vmul.f32 %v4102, %v3688
        %v4104 = vmul.f32 %v4103, %v4102
        %v4105 = vmul.f32 0.5, %v4104
        %v4106 = vsub.f32 1.5, %v4105
        %v4107 = vmul.f32 %v4102, %v4106
        %vm4108 = vweird.f32 %v3688
        %vm4109 = vweird.f32 %v4102
        %vm4110 = vmor %vm4108, %vm4109
        %v4111 = vsel %vm4110, %v4102, %v4107
        %v4112 = vrsqrt.pop %v3689
        %v4113 = vmul.f32 %v4112, %v3689
        %v4114 = vmul.f32 %v4113, %v4112
        %v4115 = vmul.f32 0.5, %v4114
        %v4116 = vsub.f32 1.5, %v4115
        %v4117 = vmul.f32 %v4112, %v4116
        %vm4118 = vweird.f32 %v3689
        %vm4119 = vweird.f32 %v4112
        %vm4120 = vmor %vm4118, %vm4119
        %v4121 = vsel %vm4120, %v4112, %v4117
        %v4122 = vrsqrt.pop %v3690
        %v4123 = vmul.f32 %v4122, %v3690
        %v4124 = vmul.f32 %v4123, %v4122
        %v4125 = vmul.f32 0.5, %v4124
        %v4126 = vsub.f32 1.5, %v4125
        %v4127 = vmul.f32 %v4122, %v4126
        %vm4128 = vweird.f32 %v3690
        %vm4129 = vweird.f32 %v4122
        %vm4130 = vmor %vm4128, %vm4129
        %v4131 = vsel %vm4130, %v4122, %v4127
        %v4132 = vrsqrt.pop %v3691
        %v4133 = vmul.f32 %v4132, %v3691
        %v4134 = vmul.f32 %v4133, %v4132
        %v4135 = vmul.f32 0.5, %v4134
        %v4136 = vsub.f32 1.5, %v4135
        %v4137 = vmul.f32 %v4132, %v4136
        %vm4138 = vweird.f32 %v3691
        %vm4139 = vweird.f32 %v4132
        %vm4140 = vmor %vm4138, %vm4139
        %v4141 = vsel %vm4140, %v4132, %v4137
        %v4142 = vrsqrt.pop %v3692
        %v4143 = vmul.f32 %v4142, %v3692
        %v4144 = vmul.f32 %v4143, %v4142
        %v4145 = vmul.f32 0.5, %v4144
        %v4146 = vsub.f32 1.5, %v4145
        %v4147 = vmul.f32 %v4142, %v4146
        %vm4148 = vweird.f32 %v3692
        %vm4149 = vweird.f32 %v4142
        %vm4150 = vmor %vm4148, %vm4149
        %v4151 = vsel %vm4150, %v4142, %v4147
        %v4152 = vrsqrt.pop %v3693
        %v4153 = vmul.f32 %v4152, %v3693
        %v4154 = vmul.f32 %v4153, %v4152
        %v4155 = vmul.f32 0.5, %v4154
        %v4156 = vsub.f32 1.5, %v4155
        %v4157 = vmul.f32 %v4152, %v4156
        %vm4158 = vweird.f32 %v3693
        %vm4159 = vweird.f32 %v4152
        %vm4160 = vmor %vm4158, %vm4159
        %v4161 = vsel %vm4160, %v4152, %v4157
        %v4162 = vrsqrt.pop %v3694
        %v4163 = vmul.f32 %v4162, %v3694
        %v4164 = vmul.f32 %v4163, %v4162
        %v4165 = vmul.f32 0.5, %v4164
        %v4166 = vsub.f32 1.5, %v4165
        %v4167 = vmul.f32 %v4162, %v4166
        %vm4168 = vweird.f32 %v3694
        %vm4169 = vweird.f32 %v4162
        %vm4170 = vmor %vm4168, %vm4169
        %v4171 = vsel %vm4170, %v4162, %v4167
        %v4172 = vrsqrt.pop %v3695
        %v4173 = vmul.f32 %v4172, %v3695
        %v4174 = vmul.f32 %v4173, %v4172
        %v4175 = vmul.f32 0.5, %v4174
        %v4176 = vsub.f32 1.5, %v4175
        %v4177 = vmul.f32 %v4172, %v4176
        %vm4178 = vweird.f32 %v3695
        %vm4179 = vweird.f32 %v4172
        %vm4180 = vmor %vm4178, %vm4179
        %v4181 = vsel %vm4180, %v4172, %v4177
        %v4182 = vrsqrt.pop %v3696
        %v4183 = vmul.f32 %v4182, %v3696
        %v4184 = vmul.f32 %v4183, %v4182
        %v4185 = vmul.f32 0.5, %v4184
        %v4186 = vsub.f32 1.5, %v4185
        %v4187 = vmul.f32 %v4182, %v4186
        %vm4188 = vweird.f32 %v3696
        %vm4189 = vweird.f32 %v4182
        %vm4190 = vmor %vm4188, %vm4189
        %v4191 = vsel %vm4190, %v4182, %v4187
        %v4192 = vrsqrt.pop %v3697
        %v4193 = vmul.f32 %v4192, %v3697
        %v4194 = vmul.f32 %v4193, %v4192
        %v4195 = vmul.f32 0.5, %v4194
        %v4196 = vsub.f32 1.5, %v4195
        %v4197 = vmul.f32 %v4192, %v4196
        %vm4198 = vweird.f32 %v3697
        %vm4199 = vweird.f32 %v4192
        %vm4200 = vmor %vm4198, %vm4199
        %v4201 = vsel %vm4200, %v4192, %v4197
        %v4202 = vrsqrt.pop %v3698
        %v4203 = vmul.f32 %v4202, %v3698
        %v4204 = vmul.f32 %v4203, %v4202
        %v4205 = vmul.f32 0.5, %v4204
        %v4206 = vsub.f32 1.5, %v4205
        %v4207 = vmul.f32 %v4202, %v4206
        %vm4208 = vweird.f32 %v3698
        %vm4209 = vweird.f32 %v4202
        %vm4210 = vmor %vm4208, %vm4209
        %v4211 = vsel %vm4210, %v4202, %v4207
        %v4212 = vrsqrt.pop %v3699
        %v4213 = vmul.f32 %v4212, %v3699
        %v4214 = vmul.f32 %v4213, %v4212
        %v4215 = vmul.f32 0.5, %v4214
        %v4216 = vsub.f32 1.5, %v4215
        %v4217 = vmul.f32 %v4212, %v4216
        %vm4218 = vweird.f32 %v3699
        %vm4219 = vweird.f32 %v4212
        %vm4220 = vmor %vm4218, %vm4219
        %v4221 = vsel %vm4220, %v4212, %v4217
        %v4222 = vrsqrt.pop %v3700
        %v4223 = vmul.f32 %v4222, %v3700
        %v4224 = vmul.f32 %v4223, %v4222
        %v4225 = vmul.f32 0.5, %v4224
        %v4226 = vsub.f32 1.5, %v4225
        %v4227 = vmul.f32 %v4222, %v4226
        %vm4228 = vweird.f32 %v3700
        %vm4229 = vweird.f32 %v4222
        %vm4230 = vmor %vm4228, %vm4229
        %v4231 = vsel %vm4230, %v4222, %v4227
        %v4232 = vrsqrt.pop %v3701
        %v4233 = vmul.f32 %v4232, %v3701
        %v4234 = vmul.f32 %v4233, %v4232
        %v4235 = vmul.f32 0.5, %v4234
        %v4236 = vsub.f32 1.5, %v4235
        %v4237 = vmul.f32 %v4232, %v4236
        %vm4238 = vweird.f32 %v3701
        %vm4239 = vweird.f32 %v4232
        %vm4240 = vmor %vm4238, %vm4239
        %v4241 = vsel %vm4240, %v4232, %v4237
        %v4242 = vrsqrt.pop %v3702
        %v4243 = vmul.f32 %v4242, %v3702
        %v4244 = vmul.f32 %v4243, %v4242
        %v4245 = vmul.f32 0.5, %v4244
        %v4246 = vsub.f32 1.5, %v4245
        %v4247 = vmul.f32 %v4242, %v4246
        %vm4248 = vweird.f32 %v3702
        %vm4249 = vweird.f32 %v4242
        %vm4250 = vmor %vm4248, %vm4249
        %v4251 = vsel %vm4250, %v4242, %v4247
        %v4252 = vrsqrt.pop %v3703
        %v4253 = vmul.f32 %v4252, %v3703
        %v4254 = vmul.f32 %v4253, %v4252
        %v4255 = vmul.f32 0.5, %v4254
        %v4256 = vsub.f32 1.5, %v4255
        %v4257 = vmul.f32 %v4252, %v4256
        %vm4258 = vweird.f32 %v3703
        %vm4259 = vweird.f32 %v4252
        %vm4260 = vmor %vm4258, %vm4259
        %v4261 = vsel %vm4260, %v4252, %v4257
        %v4262 = vrsqrt.pop %v3704
        %v4263 = vmul.f32 %v4262, %v3704
        %v4264 = vmul.f32 %v4263, %v4262
        %v4265 = vmul.f32 0.5, %v4264
        %v4266 = vsub.f32 1.5, %v4265
        %v4267 = vmul.f32 %v4262, %v4266
        %vm4268 = vweird.f32 %v3704
        %vm4269 = vweird.f32 %v4262
        %vm4270 = vmor %vm4268, %vm4269
        %v4271 = vsel %vm4270, %v4262, %v4267
        %v4272 = vrsqrt.pop %v3705
        %v4273 = vmul.f32 %v4272, %v3705
        %v4274 = vmul.f32 %v4273, %v4272
        %v4275 = vmul.f32 0.5, %v4274
        %v4276 = vsub.f32 1.5, %v4275
        %v4277 = vmul.f32 %v4272, %v4276
        %vm4278 = vweird.f32 %v3705
        %vm4279 = vweird.f32 %v4272
        %vm4280 = vmor %vm4278, %vm4279
        %v4281 = vsel %vm4280, %v4272, %v4277
        %v4282 = vrsqrt.pop %v3706
        %v4283 = vmul.f32 %v4282, %v3706
        %v4284 = vmul.f32 %v4283, %v4282
        %v4285 = vmul.f32 0.5, %v4284
        %v4286 = vsub.f32 1.5, %v4285
        %v4287 = vmul.f32 %v4282, %v4286
        %vm4288 = vweird.f32 %v3706
        %vm4289 = vweird.f32 %v4282
        %vm4290 = vmor %vm4288, %vm4289
        %v4291 = vsel %vm4290, %v4282, %v4287
        %v4292 = vrsqrt.pop %v3707
        %v4293 = vmul.f32 %v4292, %v3707
        %v4294 = vmul.f32 %v4293, %v4292
        %v4295 = vmul.f32 0.5, %v4294
        %v4296 = vsub.f32 1.5, %v4295
        %v4297 = vmul.f32 %v4292, %v4296
        %vm4298 = vweird.f32 %v3707
        %vm4299 = vweird.f32 %v4292
        %vm4300 = vmor %vm4298, %vm4299
        %v4301 = vsel %vm4300, %v4292, %v4297
        %v4302 = vrsqrt.pop %v3708
        %v4303 = vmul.f32 %v4302, %v3708
        %v4304 = vmul.f32 %v4303, %v4302
        %v4305 = vmul.f32 0.5, %v4304
        %v4306 = vsub.f32 1.5, %v4305
        %v4307 = vmul.f32 %v4302, %v4306
        %vm4308 = vweird.f32 %v3708
        %vm4309 = vweird.f32 %v4302
        %vm4310 = vmor %vm4308, %vm4309
        %v4311 = vsel %vm4310, %v4302, %v4307
        %v4312 = vrsqrt.pop %v3709
        %v4313 = vmul.f32 %v4312, %v3709
        %v4314 = vmul.f32 %v4313, %v4312
        %v4315 = vmul.f32 0.5, %v4314
        %v4316 = vsub.f32 1.5, %v4315
        %v4317 = vmul.f32 %v4312, %v4316
        %vm4318 = vweird.f32 %v3709
        %vm4319 = vweird.f32 %v4312
        %vm4320 = vmor %vm4318, %vm4319
        %v4321 = vsel %vm4320, %v4312, %v4317
        %v4322 = vrsqrt.pop %v3710
        %v4323 = vmul.f32 %v4322, %v3710
        %v4324 = vmul.f32 %v4323, %v4322
        %v4325 = vmul.f32 0.5, %v4324
        %v4326 = vsub.f32 1.5, %v4325
        %v4327 = vmul.f32 %v4322, %v4326
        %vm4328 = vweird.f32 %v3710
        %vm4329 = vweird.f32 %v4322
        %vm4330 = vmor %vm4328, %vm4329
        %v4331 = vsel %vm4330, %v4322, %v4327
        %v4332 = vrsqrt.pop %v3711
        %v4333 = vmul.f32 %v4332, %v3711
        %v4334 = vmul.f32 %v4333, %v4332
        %v4335 = vmul.f32 0.5, %v4334
        %v4336 = vsub.f32 1.5, %v4335
        %v4337 = vmul.f32 %v4332, %v4336
        %vm4338 = vweird.f32 %v3711
        %vm4339 = vweird.f32 %v4332
        %vm4340 = vmor %vm4338, %vm4339
        %v4341 = vsel %vm4340, %v4332, %v4337
        %v4342 = vrsqrt.pop %v3712
        %v4343 = vmul.f32 %v4342, %v3712
        %v4344 = vmul.f32 %v4343, %v4342
        %v4345 = vmul.f32 0.5, %v4344
        %v4346 = vsub.f32 1.5, %v4345
        %v4347 = vmul.f32 %v4342, %v4346
        %vm4348 = vweird.f32 %v3712
        %vm4349 = vweird.f32 %v4342
        %vm4350 = vmor %vm4348, %vm4349
        %v4351 = vsel %vm4350, %v4342, %v4347
        %v4352 = vrsqrt.pop %v3713
        %v4353 = vmul.f32 %v4352, %v3713
        %v4354 = vmul.f32 %v4353, %v4352
        %v4355 = vmul.f32 0.5, %v4354
        %v4356 = vsub.f32 1.5, %v4355
        %v4357 = vmul.f32 %v4352, %v4356
        %vm4358 = vweird.f32 %v3713
        %vm4359 = vweird.f32 %v4352
        %vm4360 = vmor %vm4358, %vm4359
        %v4361 = vsel %vm4360, %v4352, %v4357
        %v4362 = vrsqrt.pop %v3714
        %v4363 = vmul.f32 %v4362, %v3714
        %v4364 = vmul.f32 %v4363, %v4362
        %v4365 = vmul.f32 0.5, %v4364
        %v4366 = vsub.f32 1.5, %v4365
        %v4367 = vmul.f32 %v4362, %v4366
        %vm4368 = vweird.f32 %v3714
        %vm4369 = vweird.f32 %v4362
        %vm4370 = vmor %vm4368, %vm4369
        %v4371 = vsel %vm4370, %v4362, %v4367
        %v4372 = vrsqrt.pop %v3715
        %v4373 = vmul.f32 %v4372, %v3715
        %v4374 = vmul.f32 %v4373, %v4372
        %v4375 = vmul.f32 0.5, %v4374
        %v4376 = vsub.f32 1.5, %v4375
        %v4377 = vmul.f32 %v4372, %v4376
        %vm4378 = vweird.f32 %v3715
        %vm4379 = vweird.f32 %v4372
        %vm4380 = vmor %vm4378, %vm4379
        %v4381 = vsel %vm4380, %v4372, %v4377
        %v4382 = vrsqrt.pop %v3716
        %v4383 = vmul.f32 %v4382, %v3716
        %v4384 = vmul.f32 %v4383, %v4382
        %v4385 = vmul.f32 0.5, %v4384
        %v4386 = vsub.f32 1.5, %v4385
        %v4387 = vmul.f32 %v4382, %v4386
        %vm4388 = vweird.f32 %v3716
        %vm4389 = vweird.f32 %v4382
        %vm4390 = vmor %vm4388, %vm4389
        %v4391 = vsel %vm4390, %v4382, %v4387
        %v4392 = vrsqrt.pop %v3717
        %v4393 = vmul.f32 %v4392, %v3717
        %v4394 = vmul.f32 %v4393, %v4392
        %v4395 = vmul.f32 0.5, %v4394
        %v4396 = vsub.f32 1.5, %v4395
        %v4397 = vmul.f32 %v4392, %v4396
        %vm4398 = vweird.f32 %v3717
        %vm4399 = vweird.f32 %v4392
        %vm4400 = vmor %vm4398, %vm4399
        %v4401 = vsel %vm4400, %v4392, %v4397
        %v4402 = vrsqrt.pop %v3718
        %v4403 = vmul.f32 %v4402, %v3718
        %v4404 = vmul.f32 %v4403, %v4402
        %v4405 = vmul.f32 0.5, %v4404
        %v4406 = vsub.f32 1.5, %v4405
        %v4407 = vmul.f32 %v4402, %v4406
        %vm4408 = vweird.f32 %v3718
        %vm4409 = vweird.f32 %v4402
        %vm4410 = vmor %vm4408, %vm4409
        %v4411 = vsel %vm4410, %v4402, %v4407
        %v4412 = vrsqrt.pop %v3719
        %v4413 = vmul.f32 %v4412, %v3719
        %v4414 = vmul.f32 %v4413, %v4412
        %v4415 = vmul.f32 0.5, %v4414
        %v4416 = vsub.f32 1.5, %v4415
        %v4417 = vmul.f32 %v4412, %v4416
        %vm4418 = vweird.f32 %v3719
        %vm4419 = vweird.f32 %v4412
        %vm4420 = vmor %vm4418, %vm4419
        %v4421 = vsel %vm4420, %v4412, %v4417
        %v4422 = vrsqrt.pop %v3720
        %v4423 = vmul.f32 %v4422, %v3720
        %v4424 = vmul.f32 %v4423, %v4422
        %v4425 = vmul.f32 0.5, %v4424
        %v4426 = vsub.f32 1.5, %v4425
        %v4427 = vmul.f32 %v4422, %v4426
        %vm4428 = vweird.f32 %v3720
        %vm4429 = vweird.f32 %v4422
        %vm4430 = vmor %vm4428, %vm4429
        %v4431 = vsel %vm4430, %v4422, %v4427
        %v4432 = vrsqrt.pop %v3721
        %v4433 = vmul.f32 %v4432, %v3721
        %v4434 = vmul.f32 %v4433, %v4432
        %v4435 = vmul.f32 0.5, %v4434
        %v4436 = vsub.f32 1.5, %v4435
        %v4437 = vmul.f32 %v4432, %v4436
        %vm4438 = vweird.f32 %v3721
        %vm4439 = vweird.f32 %v4432
        %vm4440 = vmor %vm4438, %vm4439
        %v4441 = vsel %vm4440, %v4432, %v4437
        %v4442 = vrsqrt.pop %v3722
        %v4443 = vmul.f32 %v4442, %v3722
        %v4444 = vmul.f32 %v4443, %v4442
        %v4445 = vmul.f32 0.5, %v4444
        %v4446 = vsub.f32 1.5, %v4445
        %v4447 = vmul.f32 %v4442, %v4446
        %vm4448 = vweird.f32 %v3722
        %vm4449 = vweird.f32 %v4442
        %vm4450 = vmor %vm4448, %vm4449
        %v4451 = vsel %vm4450, %v4442, %v4447
        %v4452 = vrsqrt.pop %v3723
        %v4453 = vmul.f32 %v4452, %v3723
        %v4454 = vmul.f32 %v4453, %v4452
        %v4455 = vmul.f32 0.5, %v4454
        %v4456 = vsub.f32 1.5, %v4455
        %v4457 = vmul.f32 %v4452, %v4456
        %vm4458 = vweird.f32 %v3723
        %vm4459 = vweird.f32 %v4452
        %vm4460 = vmor %vm4458, %vm4459
        %v4461 = vsel %vm4460, %v4452, %v4457
        %v4462 = vrsqrt.pop %v3724
        %v4463 = vmul.f32 %v4462, %v3724
        %v4464 = vmul.f32 %v4463, %v4462
        %v4465 = vmul.f32 0.5, %v4464
        %v4466 = vsub.f32 1.5, %v4465
        %v4467 = vmul.f32 %v4462, %v4466
        %vm4468 = vweird.f32 %v3724
        %vm4469 = vweird.f32 %v4462
        %vm4470 = vmor %vm4468, %vm4469
        %v4471 = vsel %vm4470, %v4462, %v4467
        %v4472 = vrsqrt.pop %v3725
        %v4473 = vmul.f32 %v4472, %v3725
        %v4474 = vmul.f32 %v4473, %v4472
        %v4475 = vmul.f32 0.5, %v4474
        %v4476 = vsub.f32 1.5, %v4475
        %v4477 = vmul.f32 %v4472, %v4476
        %vm4478 = vweird.f32 %v3725
        %vm4479 = vweird.f32 %v4472
        %vm4480 = vmor %vm4478, %vm4479
        %v4481 = vsel %vm4480, %v4472, %v4477
        %v4482 = vrsqrt.pop %v3726
        %v4483 = vmul.f32 %v4482, %v3726
        %v4484 = vmul.f32 %v4483, %v4482
        %v4485 = vmul.f32 0.5, %v4484
        %v4486 = vsub.f32 1.5, %v4485
        %v4487 = vmul.f32 %v4482, %v4486
        %vm4488 = vweird.f32 %v3726
        %vm4489 = vweird.f32 %v4482
        %vm4490 = vmor %vm4488, %vm4489
        %v4491 = vsel %vm4490, %v4482, %v4487
        %v4492 = vrsqrt.pop %v3727
        %v4493 = vmul.f32 %v4492, %v3727
        %v4494 = vmul.f32 %v4493, %v4492
        %v4495 = vmul.f32 0.5, %v4494
        %v4496 = vsub.f32 1.5, %v4495
        %v4497 = vmul.f32 %v4492, %v4496
        %vm4498 = vweird.f32 %v3727
        %vm4499 = vweird.f32 %v4492
        %vm4500 = vmor %vm4498, %vm4499
        %v4501 = vsel %vm4500, %v4492, %v4497
        %v4502 = vrsqrt.pop %v3728
        %v4503 = vmul.f32 %v4502, %v3728
        %v4504 = vmul.f32 %v4503, %v4502
        %v4505 = vmul.f32 0.5, %v4504
        %v4506 = vsub.f32 1.5, %v4505
        %v4507 = vmul.f32 %v4502, %v4506
        %vm4508 = vweird.f32 %v3728
        %vm4509 = vweird.f32 %v4502
        %vm4510 = vmor %vm4508, %vm4509
        %v4511 = vsel %vm4510, %v4502, %v4507
        %v4512 = vrsqrt.pop %v3729
        %v4513 = vmul.f32 %v4512, %v3729
        %v4514 = vmul.f32 %v4513, %v4512
        %v4515 = vmul.f32 0.5, %v4514
        %v4516 = vsub.f32 1.5, %v4515
        %v4517 = vmul.f32 %v4512, %v4516
        %vm4518 = vweird.f32 %v3729
        %vm4519 = vweird.f32 %v4512
        %vm4520 = vmor %vm4518, %vm4519
        %v4521 = vsel %vm4520, %v4512, %v4517
        %v4522 = vrsqrt.pop %v3730
        %v4523 = vmul.f32 %v4522, %v3730
        %v4524 = vmul.f32 %v4523, %v4522
        %v4525 = vmul.f32 0.5, %v4524
        %v4526 = vsub.f32 1.5, %v4525
        %v4527 = vmul.f32 %v4522, %v4526
        %vm4528 = vweird.f32 %v3730
        %vm4529 = vweird.f32 %v4522
        %vm4530 = vmor %vm4528, %vm4529
        %v4531 = vsel %vm4530, %v4522, %v4527
        %v4532 = vrsqrt.pop %v3731
        %v4533 = vmul.f32 %v4532, %v3731
        %v4534 = vmul.f32 %v4533, %v4532
        %v4535 = vmul.f32 0.5, %v4534
        %v4536 = vsub.f32 1.5, %v4535
        %v4537 = vmul.f32 %v4532, %v4536
        %vm4538 = vweird.f32 %v3731
        %vm4539 = vweird.f32 %v4532
        %vm4540 = vmor %vm4538, %vm4539
        %v4541 = vsel %vm4540, %v4532, %v4537
        %v4542 = vrsqrt.pop %v3732
        %v4543 = vmul.f32 %v4542, %v3732
        %v4544 = vmul.f32 %v4543, %v4542
        %v4545 = vmul.f32 0.5, %v4544
        %v4546 = vsub.f32 1.5, %v4545
        %v4547 = vmul.f32 %v4542, %v4546
        %vm4548 = vweird.f32 %v3732
        %vm4549 = vweird.f32 %v4542
        %vm4550 = vmor %vm4548, %vm4549
        %v4551 = vsel %vm4550, %v4542, %v4547
        %v4552 = vrsqrt.pop %v3733
        %v4553 = vmul.f32 %v4552, %v3733
        %v4554 = vmul.f32 %v4553, %v4552
        %v4555 = vmul.f32 0.5, %v4554
        %v4556 = vsub.f32 1.5, %v4555
        %v4557 = vmul.f32 %v4552, %v4556
        %vm4558 = vweird.f32 %v3733
        %vm4559 = vweird.f32 %v4552
        %vm4560 = vmor %vm4558, %vm4559
        %v4561 = vsel %vm4560, %v4552, %v4557
        %v4562 = vrsqrt.pop %v3734
        %v4563 = vmul.f32 %v4562, %v3734
        %v4564 = vmul.f32 %v4563, %v4562
        %v4565 = vmul.f32 0.5, %v4564
        %v4566 = vsub.f32 1.5, %v4565
        %v4567 = vmul.f32 %v4562, %v4566
        %vm4568 = vweird.f32 %v3734
        %vm4569 = vweird.f32 %v4562
        %vm4570 = vmor %vm4568, %vm4569
        %v4571 = vsel %vm4570, %v4562, %v4567
        %v4572 = vrsqrt.pop %v3735
        %v4573 = vmul.f32 %v4572, %v3735
        %v4574 = vmul.f32 %v4573, %v4572
        %v4575 = vmul.f32 0.5, %v4574
        %v4576 = vsub.f32 1.5, %v4575
        %v4577 = vmul.f32 %v4572, %v4576
        %vm4578 = vweird.f32 %v3735
        %vm4579 = vweird.f32 %v4572
        %vm4580 = vmor %vm4578, %vm4579
        %v4581 = vsel %vm4580, %v4572, %v4577
        %v4582 = vrsqrt.pop %v3736
        %v4583 = vmul.f32 %v4582, %v3736
        %v4584 = vmul.f32 %v4583, %v4582
        %v4585 = vmul.f32 0.5, %v4584
        %v4586 = vsub.f32 1.5, %v4585
        %v4587 = vmul.f32 %v4582, %v4586
        %vm4588 = vweird.f32 %v3736
        %vm4589 = vweird.f32 %v4582
        %vm4590 = vmor %vm4588, %vm4589
        %v4591 = vsel %vm4590, %v4582, %v4587
        %v4592 = vrsqrt.pop %v3737
        %v4593 = vmul.f32 %v4592, %v3737
        %v4594 = vmul.f32 %v4593, %v4592
        %v4595 = vmul.f32 0.5, %v4594
        %v4596 = vsub.f32 1.5, %v4595
        %v4597 = vmul.f32 %v4592, %v4596
        %vm4598 = vweird.f32 %v3737
        %vm4599 = vweird.f32 %v4592
        %vm4600 = vmor %vm4598, %vm4599
        %v4601 = vsel %vm4600, %v4592, %v4597
        %v4602 = vrsqrt.pop %v3738
        %v4603 = vmul.f32 %v4602, %v3738
        %v4604 = vmul.f32 %v4603, %v4602
        %v4605 = vmul.f32 0.5, %v4604
        %v4606 = vsub.f32 1.5, %v4605
        %v4607 = vmul.f32 %v4602, %v4606
        %vm4608 = vweird.f32 %v3738
        %vm4609 = vweird.f32 %v4602
        %vm4610 = vmor %vm4608, %vm4609
        %v4611 = vsel %vm4610, %v4602, %v4607
        %v4612 = vrsqrt.pop %v3739
        %v4613 = vmul.f32 %v4612, %v3739
        %v4614 = vmul.f32 %v4613, %v4612
        %v4615 = vmul.f32 0.5, %v4614
        %v4616 = vsub.f32 1.5, %v4615
        %v4617 = vmul.f32 %v4612, %v4616
        %vm4618 = vweird.f32 %v3739
        %vm4619 = vweird.f32 %v4612
        %vm4620 = vmor %vm4618, %vm4619
        %v4621 = vsel %vm4620, %v4612, %v4617
        %v4622 = vrsqrt.pop %v3740
        %v4623 = vmul.f32 %v4622, %v3740
        %v4624 = vmul.f32 %v4623, %v4622
        %v4625 = vmul.f32 0.5, %v4624
        %v4626 = vsub.f32 1.5, %v4625
        %v4627 = vmul.f32 %v4622, %v4626
        %vm4628 = vweird.f32 %v3740
        %vm4629 = vweird.f32 %v4622
        %vm4630 = vmor %vm4628, %vm4629
        %v4631 = vsel %vm4630, %v4622, %v4627
        %v4632 = vrsqrt.pop %v3741
        %v4633 = vmul.f32 %v4632, %v3741
        %v4634 = vmul.f32 %v4633, %v4632
        %v4635 = vmul.f32 0.5, %v4634
        %v4636 = vsub.f32 1.5, %v4635
        %v4637 = vmul.f32 %v4632, %v4636
        %vm4638 = vweird.f32 %v3741
        %vm4639 = vweird.f32 %v4632
        %vm4640 = vmor %vm4638, %vm4639
        %v4641 = vsel %vm4640, %v4632, %v4637
        %v4642 = vrsqrt.pop %v3742
        %v4643 = vmul.f32 %v4642, %v3742
        %v4644 = vmul.f32 %v4643, %v4642
        %v4645 = vmul.f32 0.5, %v4644
        %v4646 = vsub.f32 1.5, %v4645
        %v4647 = vmul.f32 %v4642, %v4646
        %vm4648 = vweird.f32 %v3742
        %vm4649 = vweird.f32 %v4642
        %vm4650 = vmor %vm4648, %vm4649
        %v4651 = vsel %vm4650, %v4642, %v4647
        %v4652 = vrsqrt.pop %v3743
        %v4653 = vmul.f32 %v4652, %v3743
        %v4654 = vmul.f32 %v4653, %v4652
        %v4655 = vmul.f32 0.5, %v4654
        %v4656 = vsub.f32 1.5, %v4655
        %v4657 = vmul.f32 %v4652, %v4656
        %vm4658 = vweird.f32 %v3743
        %vm4659 = vweird.f32 %v4652
        %vm4660 = vmor %vm4658, %vm4659
        %v4661 = vsel %vm4660, %v4652, %v4657
        %v4662 = vrsqrt.pop %v3744
        %v4663 = vmul.f32 %v4662, %v3744
        %v4664 = vmul.f32 %v4663, %v4662
        %v4665 = vmul.f32 0.5, %v4664
        %v4666 = vsub.f32 1.5, %v4665
        %v4667 = vmul.f32 %v4662, %v4666
        %vm4668 = vweird.f32 %v3744
        %vm4669 = vweird.f32 %v4662
        %vm4670 = vmor %vm4668, %vm4669
        %v4671 = vsel %vm4670, %v4662, %v4667
        %v4672 = vrsqrt.pop %v3745
        %v4673 = vmul.f32 %v4672, %v3745
        %v4674 = vmul.f32 %v4673, %v4672
        %v4675 = vmul.f32 0.5, %v4674
        %v4676 = vsub.f32 1.5, %v4675
        %v4677 = vmul.f32 %v4672, %v4676
        %vm4678 = vweird.f32 %v3745
        %vm4679 = vweird.f32 %v4672
        %vm4680 = vmor %vm4678, %vm4679
        %v4681 = vsel %vm4680, %v4672, %v4677
        %v4682 = vrsqrt.pop %v3746
        %v4683 = vmul.f32 %v4682, %v3746
        %v4684 = vmul.f32 %v4683, %v4682
        %v4685 = vmul.f32 0.5, %v4684
        %v4686 = vsub.f32 1.5, %v4685
        %v4687 = vmul.f32 %v4682, %v4686
        %vm4688 = vweird.f32 %v3746
        %vm4689 = vweird.f32 %v4682
        %vm4690 = vmor %vm4688, %vm4689
        %v4691 = vsel %vm4690, %v4682, %v4687
        %v4692 = vrsqrt.pop %v3747
        %v4693 = vmul.f32 %v4692, %v3747
        %v4694 = vmul.f32 %v4693, %v4692
        %v4695 = vmul.f32 0.5, %v4694
        %v4696 = vsub.f32 1.5, %v4695
        %v4697 = vmul.f32 %v4692, %v4696
        %vm4698 = vweird.f32 %v3747
        %vm4699 = vweird.f32 %v4692
        %vm4700 = vmor %vm4698, %vm4699
        %v4701 = vsel %vm4700, %v4692, %v4697
        %v4702 = vrsqrt.pop %v3748
        %v4703 = vmul.f32 %v4702, %v3748
        %v4704 = vmul.f32 %v4703, %v4702
        %v4705 = vmul.f32 0.5, %v4704
        %v4706 = vsub.f32 1.5, %v4705
        %v4707 = vmul.f32 %v4702, %v4706
        %vm4708 = vweird.f32 %v3748
        %vm4709 = vweird.f32 %v4702
        %vm4710 = vmor %vm4708, %vm4709
        %v4711 = vsel %vm4710, %v4702, %v4707
        %v4712 = vrsqrt.pop %v3749
        %v4713 = vmul.f32 %v4712, %v3749
        %v4714 = vmul.f32 %v4713, %v4712
        %v4715 = vmul.f32 0.5, %v4714
        %v4716 = vsub.f32 1.5, %v4715
        %v4717 = vmul.f32 %v4712, %v4716
        %vm4718 = vweird.f32 %v3749
        %vm4719 = vweird.f32 %v4712
        %vm4720 = vmor %vm4718, %vm4719
        %v4721 = vsel %vm4720, %v4712, %v4717
        %v4722 = vrsqrt.pop %v3750
        %v4723 = vmul.f32 %v4722, %v3750
        %v4724 = vmul.f32 %v4723, %v4722
        %v4725 = vmul.f32 0.5, %v4724
        %v4726 = vsub.f32 1.5, %v4725
        %v4727 = vmul.f32 %v4722, %v4726
        %vm4728 = vweird.f32 %v3750
        %vm4729 = vweird.f32 %v4722
        %vm4730 = vmor %vm4728, %vm4729
        %v4731 = vsel %vm4730, %v4722, %v4727
        %v4732 = vrsqrt.pop %v3751
        %v4733 = vmul.f32 %v4732, %v3751
        %v4734 = vmul.f32 %v4733, %v4732
        %v4735 = vmul.f32 0.5, %v4734
        %v4736 = vsub.f32 1.5, %v4735
        %v4737 = vmul.f32 %v4732, %v4736
        %vm4738 = vweird.f32 %v3751
        %vm4739 = vweird.f32 %v4732
        %vm4740 = vmor %vm4738, %vm4739
        %v4741 = vsel %vm4740, %v4732, %v4737
        %v4742 = vrsqrt.pop %v3752
        %v4743 = vmul.f32 %v4742, %v3752
        %v4744 = vmul.f32 %v4743, %v4742
        %v4745 = vmul.f32 0.5, %v4744
        %v4746 = vsub.f32 1.5, %v4745
        %v4747 = vmul.f32 %v4742, %v4746
        %vm4748 = vweird.f32 %v3752
        %vm4749 = vweird.f32 %v4742
        %vm4750 = vmor %vm4748, %vm4749
        %v4751 = vsel %vm4750, %v4742, %v4747
        %v4752 = vrsqrt.pop %v3753
        %v4753 = vmul.f32 %v4752, %v3753
        %v4754 = vmul.f32 %v4753, %v4752
        %v4755 = vmul.f32 0.5, %v4754
        %v4756 = vsub.f32 1.5, %v4755
        %v4757 = vmul.f32 %v4752, %v4756
        %vm4758 = vweird.f32 %v3753
        %vm4759 = vweird.f32 %v4752
        %vm4760 = vmor %vm4758, %vm4759
        %v4761 = vsel %vm4760, %v4752, %v4757
        %v4762 = vrsqrt.pop %v3754
        %v4763 = vmul.f32 %v4762, %v3754
        %v4764 = vmul.f32 %v4763, %v4762
        %v4765 = vmul.f32 0.5, %v4764
        %v4766 = vsub.f32 1.5, %v4765
        %v4767 = vmul.f32 %v4762, %v4766
        %vm4768 = vweird.f32 %v3754
        %vm4769 = vweird.f32 %v4762
        %vm4770 = vmor %vm4768, %vm4769
        %v4771 = vsel %vm4770, %v4762, %v4767
        %v4772 = vrsqrt.pop %v3755
        %v4773 = vmul.f32 %v4772, %v3755
        %v4774 = vmul.f32 %v4773, %v4772
        %v4775 = vmul.f32 0.5, %v4774
        %v4776 = vsub.f32 1.5, %v4775
        %v4777 = vmul.f32 %v4772, %v4776
        %vm4778 = vweird.f32 %v3755
        %vm4779 = vweird.f32 %v4772
        %vm4780 = vmor %vm4778, %vm4779
        %v4781 = vsel %vm4780, %v4772, %v4777
        %v4782 = vrsqrt.pop %v3756
        %v4783 = vmul.f32 %v4782, %v3756
        %v4784 = vmul.f32 %v4783, %v4782
        %v4785 = vmul.f32 0.5, %v4784
        %v4786 = vsub.f32 1.5, %v4785
        %v4787 = vmul.f32 %v4782, %v4786
        %vm4788 = vweird.f32 %v3756
        %vm4789 = vweird.f32 %v4782
        %vm4790 = vmor %vm4788, %vm4789
        %v4791 = vsel %vm4790, %v4782, %v4787
        %v4792 = vrsqrt.pop %v3757
        %v4793 = vmul.f32 %v4792, %v3757
        %v4794 = vmul.f32 %v4793, %v4792
        %v4795 = vmul.f32 0.5, %v4794
        %v4796 = vsub.f32 1.5, %v4795
        %v4797 = vmul.f32 %v4792, %v4796
        %vm4798 = vweird.f32 %v3757
        %vm4799 = vweird.f32 %v4792
        %vm4800 = vmor %vm4798, %vm4799
        %v4801 = vsel %vm4800, %v4792, %v4797
        %v4802 = vrsqrt.pop %v3758
        %v4803 = vmul.f32 %v4802, %v3758
        %v4804 = vmul.f32 %v4803, %v4802
        %v4805 = vmul.f32 0.5, %v4804
        %v4806 = vsub.f32 1.5, %v4805
        %v4807 = vmul.f32 %v4802, %v4806
        %vm4808 = vweird.f32 %v3758
        %vm4809 = vweird.f32 %v4802
        %vm4810 = vmor %vm4808, %vm4809
        %v4811 = vsel %vm4810, %v4802, %v4807
        %v4812 = vrsqrt.pop %v3759
        %v4813 = vmul.f32 %v4812, %v3759
        %v4814 = vmul.f32 %v4813, %v4812
        %v4815 = vmul.f32 0.5, %v4814
        %v4816 = vsub.f32 1.5, %v4815
        %v4817 = vmul.f32 %v4812, %v4816
        %vm4818 = vweird.f32 %v3759
        %vm4819 = vweird.f32 %v4812
        %vm4820 = vmor %vm4818, %vm4819
        %v4821 = vsel %vm4820, %v4812, %v4817
        %v4822 = vrsqrt.pop %v3760
        %v4823 = vmul.f32 %v4822, %v3760
        %v4824 = vmul.f32 %v4823, %v4822
        %v4825 = vmul.f32 0.5, %v4824
        %v4826 = vsub.f32 1.5, %v4825
        %v4827 = vmul.f32 %v4822, %v4826
        %vm4828 = vweird.f32 %v3760
        %vm4829 = vweird.f32 %v4822
        %vm4830 = vmor %vm4828, %vm4829
        %v4831 = vsel %vm4830, %v4822, %v4827
        %v4832 = vrsqrt.pop %v3761
        %v4833 = vmul.f32 %v4832, %v3761
        %v4834 = vmul.f32 %v4833, %v4832
        %v4835 = vmul.f32 0.5, %v4834
        %v4836 = vsub.f32 1.5, %v4835
        %v4837 = vmul.f32 %v4832, %v4836
        %vm4838 = vweird.f32 %v3761
        %vm4839 = vweird.f32 %v4832
        %vm4840 = vmor %vm4838, %vm4839
        %v4841 = vsel %vm4840, %v4832, %v4837
        %v4842 = vrsqrt.pop %v3762
        %v4843 = vmul.f32 %v4842, %v3762
        %v4844 = vmul.f32 %v4843, %v4842
        %v4845 = vmul.f32 0.5, %v4844
        %v4846 = vsub.f32 1.5, %v4845
        %v4847 = vmul.f32 %v4842, %v4846
        %vm4848 = vweird.f32 %v3762
        %vm4849 = vweird.f32 %v4842
        %vm4850 = vmor %vm4848, %vm4849
        %v4851 = vsel %vm4850, %v4842, %v4847
        %v4852 = vrsqrt.pop %v3763
        %v4853 = vmul.f32 %v4852, %v3763
        %v4854 = vmul.f32 %v4853, %v4852
        %v4855 = vmul.f32 0.5, %v4854
        %v4856 = vsub.f32 1.5, %v4855
        %v4857 = vmul.f32 %v4852, %v4856
        %vm4858 = vweird.f32 %v3763
        %vm4859 = vweird.f32 %v4852
        %vm4860 = vmor %vm4858, %vm4859
        %v4861 = vsel %vm4860, %v4852, %v4857
        %v4862 = vrsqrt.pop %v3764
        %v4863 = vmul.f32 %v4862, %v3764
        %v4864 = vmul.f32 %v4863, %v4862
        %v4865 = vmul.f32 0.5, %v4864
        %v4866 = vsub.f32 1.5, %v4865
        %v4867 = vmul.f32 %v4862, %v4866
        %vm4868 = vweird.f32 %v3764
        %vm4869 = vweird.f32 %v4862
        %vm4870 = vmor %vm4868, %vm4869
        %v4871 = vsel %vm4870, %v4862, %v4867
        %v4872 = vrsqrt.pop %v3765
        %v4873 = vmul.f32 %v4872, %v3765
        %v4874 = vmul.f32 %v4873, %v4872
        %v4875 = vmul.f32 0.5, %v4874
        %v4876 = vsub.f32 1.5, %v4875
        %v4877 = vmul.f32 %v4872, %v4876
        %vm4878 = vweird.f32 %v3765
        %vm4879 = vweird.f32 %v4872
        %vm4880 = vmor %vm4878, %vm4879
        %v4881 = vsel %vm4880, %v4872, %v4877
        %v4882 = vrsqrt.pop %v3766
        %v4883 = vmul.f32 %v4882, %v3766
        %v4884 = vmul.f32 %v4883, %v4882
        %v4885 = vmul.f32 0.5, %v4884
        %v4886 = vsub.f32 1.5, %v4885
        %v4887 = vmul.f32 %v4882, %v4886
        %vm4888 = vweird.f32 %v3766
        %vm4889 = vweird.f32 %v4882
        %vm4890 = vmor %vm4888, %vm4889
        %v4891 = vsel %vm4890, %v4882, %v4887
        %v4892 = vrsqrt.pop %v3767
        %v4893 = vmul.f32 %v4892, %v3767
        %v4894 = vmul.f32 %v4893, %v4892
        %v4895 = vmul.f32 0.5, %v4894
        %v4896 = vsub.f32 1.5, %v4895
        %v4897 = vmul.f32 %v4892, %v4896
        %vm4898 = vweird.f32 %v3767
        %vm4899 = vweird.f32 %v4892
        %vm4900 = vmor %vm4898, %vm4899
        %v4901 = vsel %vm4900, %v4892, %v4897
        %v4902 = vrsqrt.pop %v3768
        %v4903 = vmul.f32 %v4902, %v3768
        %v4904 = vmul.f32 %v4903, %v4902
        %v4905 = vmul.f32 0.5, %v4904
        %v4906 = vsub.f32 1.5, %v4905
        %v4907 = vmul.f32 %v4902, %v4906
        %vm4908 = vweird.f32 %v3768
        %vm4909 = vweird.f32 %v4902
        %vm4910 = vmor %vm4908, %vm4909
        %v4911 = vsel %vm4910, %v4902, %v4907
        %v4912 = vrsqrt.pop %v3769
        %v4913 = vmul.f32 %v4912, %v3769
        %v4914 = vmul.f32 %v4913, %v4912
        %v4915 = vmul.f32 0.5, %v4914
        %v4916 = vsub.f32 1.5, %v4915
        %v4917 = vmul.f32 %v4912, %v4916
        %vm4918 = vweird.f32 %v3769
        %vm4919 = vweird.f32 %v4912
        %vm4920 = vmor %vm4918, %vm4919
        %v4921 = vsel %vm4920, %v4912, %v4917
        %v4922 = vrsqrt.pop %v3770
        %v4923 = vmul.f32 %v4922, %v3770
        %v4924 = vmul.f32 %v4923, %v4922
        %v4925 = vmul.f32 0.5, %v4924
        %v4926 = vsub.f32 1.5, %v4925
        %v4927 = vmul.f32 %v4922, %v4926
        %vm4928 = vweird.f32 %v3770
        %vm4929 = vweird.f32 %v4922
        %vm4930 = vmor %vm4928, %vm4929
        %v4931 = vsel %vm4930, %v4922, %v4927
        %v4932 = vrsqrt.pop %v3771
        %v4933 = vmul.f32 %v4932, %v3771
        %v4934 = vmul.f32 %v4933, %v4932
        %v4935 = vmul.f32 0.5, %v4934
        %v4936 = vsub.f32 1.5, %v4935
        %v4937 = vmul.f32 %v4932, %v4936
        %vm4938 = vweird.f32 %v3771
        %vm4939 = vweird.f32 %v4932
        %vm4940 = vmor %vm4938, %vm4939
        %v4941 = vsel %vm4940, %v4932, %v4937
        %v4942 = vrsqrt.pop %v3772
        %v4943 = vmul.f32 %v4942, %v3772
        %v4944 = vmul.f32 %v4943, %v4942
        %v4945 = vmul.f32 0.5, %v4944
        %v4946 = vsub.f32 1.5, %v4945
        %v4947 = vmul.f32 %v4942, %v4946
        %vm4948 = vweird.f32 %v3772
        %vm4949 = vweird.f32 %v4942
        %vm4950 = vmor %vm4948, %vm4949
        %v4951 = vsel %vm4950, %v4942, %v4947
        %v4952 = vrsqrt.pop %v3773
        %v4953 = vmul.f32 %v4952, %v3773
        %v4954 = vmul.f32 %v4953, %v4952
        %v4955 = vmul.f32 0.5, %v4954
        %v4956 = vsub.f32 1.5, %v4955
        %v4957 = vmul.f32 %v4952, %v4956
        %vm4958 = vweird.f32 %v3773
        %vm4959 = vweird.f32 %v4952
        %vm4960 = vmor %vm4958, %vm4959
        %v4961 = vsel %vm4960, %v4952, %v4957
        %v4962 = vrsqrt.pop %v3774
        %v4963 = vmul.f32 %v4962, %v3774
        %v4964 = vmul.f32 %v4963, %v4962
        %v4965 = vmul.f32 0.5, %v4964
        %v4966 = vsub.f32 1.5, %v4965
        %v4967 = vmul.f32 %v4962, %v4966
        %vm4968 = vweird.f32 %v3774
        %vm4969 = vweird.f32 %v4962
        %vm4970 = vmor %vm4968, %vm4969
        %v4971 = vsel %vm4970, %v4962, %v4967
        %v4972 = vrsqrt.pop %v3775
        %v4973 = vmul.f32 %v4972, %v3775
        %v4974 = vmul.f32 %v4973, %v4972
        %v4975 = vmul.f32 0.5, %v4974
        %v4976 = vsub.f32 1.5, %v4975
        %v4977 = vmul.f32 %v4972, %v4976
        %vm4978 = vweird.f32 %v3775
        %vm4979 = vweird.f32 %v4972
        %vm4980 = vmor %vm4978, %vm4979
        %v4981 = vsel %vm4980, %v4972, %v4977
        %v4982 = vrsqrt.pop %v3776
        %v4983 = vmul.f32 %v4982, %v3776
        %v4984 = vmul.f32 %v4983, %v4982
        %v4985 = vmul.f32 0.5, %v4984
        %v4986 = vsub.f32 1.5, %v4985
        %v4987 = vmul.f32 %v4982, %v4986
        %vm4988 = vweird.f32 %v3776
        %vm4989 = vweird.f32 %v4982
        %vm4990 = vmor %vm4988, %vm4989
        %v4991 = vsel %vm4990, %v4982, %v4987
        %v4992 = vrsqrt.pop %v3777
        %v4993 = vmul.f32 %v4992, %v3777
        %v4994 = vmul.f32 %v4993, %v4992
        %v4995 = vmul.f32 0.5, %v4994
        %v4996 = vsub.f32 1.5, %v4995
        %v4997 = vmul.f32 %v4992, %v4996
        %vm4998 = vweird.f32 %v3777
        %vm4999 = vweird.f32 %v4992
        %vm5000 = vmor %vm4998, %vm4999
        %v5001 = vsel %vm5000, %v4992, %v4997
        %v5002 = vrsqrt.pop %v3778
        %v5003 = vmul.f32 %v5002, %v3778
        %v5004 = vmul.f32 %v5003, %v5002
        %v5005 = vmul.f32 0.5, %v5004
        %v5006 = vsub.f32 1.5, %v5005
        %v5007 = vmul.f32 %v5002, %v5006
        %vm5008 = vweird.f32 %v3778
        %vm5009 = vweird.f32 %v5002
        %vm5010 = vmor %vm5008, %vm5009
        %v5011 = vsel %vm5010, %v5002, %v5007
        %v5012 = vrsqrt.pop %v3779
        %v5013 = vmul.f32 %v5012, %v3779
        %v5014 = vmul.f32 %v5013, %v5012
        %v5015 = vmul.f32 0.5, %v5014
        %v5016 = vsub.f32 1.5, %v5015
        %v5017 = vmul.f32 %v5012, %v5016
        %vm5018 = vweird.f32 %v3779
        %vm5019 = vweird.f32 %v5012
        %vm5020 = vmor %vm5018, %vm5019
        %v5021 = vsel %vm5020, %v5012, %v5017
        %v5022 = vrsqrt.pop %v3780
        %v5023 = vmul.f32 %v5022, %v3780
        %v5024 = vmul.f32 %v5023, %v5022
        %v5025 = vmul.f32 0.5, %v5024
        %v5026 = vsub.f32 1.5, %v5025
        %v5027 = vmul.f32 %v5022, %v5026
        %vm5028 = vweird.f32 %v3780
        %vm5029 = vweird.f32 %v5022
        %vm5030 = vmor %vm5028, %vm5029
        %v5031 = vsel %vm5030, %v5022, %v5027
        %v5032 = vrsqrt.pop %v3781
        %v5033 = vmul.f32 %v5032, %v3781
        %v5034 = vmul.f32 %v5033, %v5032
        %v5035 = vmul.f32 0.5, %v5034
        %v5036 = vsub.f32 1.5, %v5035
        %v5037 = vmul.f32 %v5032, %v5036
        %vm5038 = vweird.f32 %v3781
        %vm5039 = vweird.f32 %v5032
        %vm5040 = vmor %vm5038, %vm5039
        %v5041 = vsel %vm5040, %v5032, %v5037
        %v5042 = vrsqrt.pop %v3782
        %v5043 = vmul.f32 %v5042, %v3782
        %v5044 = vmul.f32 %v5043, %v5042
        %v5045 = vmul.f32 0.5, %v5044
        %v5046 = vsub.f32 1.5, %v5045
        %v5047 = vmul.f32 %v5042, %v5046
        %vm5048 = vweird.f32 %v3782
        %vm5049 = vweird.f32 %v5042
        %vm5050 = vmor %vm5048, %vm5049
        %v5051 = vsel %vm5050, %v5042, %v5047
        %v5052 = vrsqrt.pop %v3783
        %v5053 = vmul.f32 %v5052, %v3783
        %v5054 = vmul.f32 %v5053, %v5052
        %v5055 = vmul.f32 0.5, %v5054
        %v5056 = vsub.f32 1.5, %v5055
        %v5057 = vmul.f32 %v5052, %v5056
        %vm5058 = vweird.f32 %v3783
        %vm5059 = vweird.f32 %v5052
        %vm5060 = vmor %vm5058, %vm5059
        %v5061 = vsel %vm5060, %v5052, %v5057
        %v5062 = vrsqrt.pop %v3784
        %v5063 = vmul.f32 %v5062, %v3784
        %v5064 = vmul.f32 %v5063, %v5062
        %v5065 = vmul.f32 0.5, %v5064
        %v5066 = vsub.f32 1.5, %v5065
        %v5067 = vmul.f32 %v5062, %v5066
        %vm5068 = vweird.f32 %v3784
        %vm5069 = vweird.f32 %v5062
        %vm5070 = vmor %vm5068, %vm5069
        %v5071 = vsel %vm5070, %v5062, %v5067
        %v5072 = vrsqrt.pop %v3785
        %v5073 = vmul.f32 %v5072, %v3785
        %v5074 = vmul.f32 %v5073, %v5072
        %v5075 = vmul.f32 0.5, %v5074
        %v5076 = vsub.f32 1.5, %v5075
        %v5077 = vmul.f32 %v5072, %v5076
        %vm5078 = vweird.f32 %v3785
        %vm5079 = vweird.f32 %v5072
        %vm5080 = vmor %vm5078, %vm5079
        %v5081 = vsel %vm5080, %v5072, %v5077
        %v5082 = vrsqrt.pop %v3786
        %v5083 = vmul.f32 %v5082, %v3786
        %v5084 = vmul.f32 %v5083, %v5082
        %v5085 = vmul.f32 0.5, %v5084
        %v5086 = vsub.f32 1.5, %v5085
        %v5087 = vmul.f32 %v5082, %v5086
        %vm5088 = vweird.f32 %v3786
        %vm5089 = vweird.f32 %v5082
        %vm5090 = vmor %vm5088, %vm5089
        %v5091 = vsel %vm5090, %v5082, %v5087
        %v5092 = vrsqrt.pop %v3787
        %v5093 = vmul.f32 %v5092, %v3787
        %v5094 = vmul.f32 %v5093, %v5092
        %v5095 = vmul.f32 0.5, %v5094
        %v5096 = vsub.f32 1.5, %v5095
        %v5097 = vmul.f32 %v5092, %v5096
        %vm5098 = vweird.f32 %v3787
        %vm5099 = vweird.f32 %v5092
        %vm5100 = vmor %vm5098, %vm5099
        %v5101 = vsel %vm5100, %v5092, %v5097
        %v5102 = vrsqrt.pop %v3788
        %v5103 = vmul.f32 %v5102, %v3788
        %v5104 = vmul.f32 %v5103, %v5102
        %v5105 = vmul.f32 0.5, %v5104
        %v5106 = vsub.f32 1.5, %v5105
        %v5107 = vmul.f32 %v5102, %v5106
        %vm5108 = vweird.f32 %v3788
        %vm5109 = vweird.f32 %v5102
        %vm5110 = vmor %vm5108, %vm5109
        %v5111 = vsel %vm5110, %v5102, %v5107
        %v5112 = vrsqrt.pop %v3789
        %v5113 = vmul.f32 %v5112, %v3789
        %v5114 = vmul.f32 %v5113, %v5112
        %v5115 = vmul.f32 0.5, %v5114
        %v5116 = vsub.f32 1.5, %v5115
        %v5117 = vmul.f32 %v5112, %v5116
        %vm5118 = vweird.f32 %v3789
        %vm5119 = vweird.f32 %v5112
        %vm5120 = vmor %vm5118, %vm5119
        %v5121 = vsel %vm5120, %v5112, %v5117
        %v5122 = vrsqrt.pop %v3790
        %v5123 = vmul.f32 %v5122, %v3790
        %v5124 = vmul.f32 %v5123, %v5122
        %v5125 = vmul.f32 0.5, %v5124
        %v5126 = vsub.f32 1.5, %v5125
        %v5127 = vmul.f32 %v5122, %v5126
        %vm5128 = vweird.f32 %v3790
        %vm5129 = vweird.f32 %v5122
        %vm5130 = vmor %vm5128, %vm5129
        %v5131 = vsel %vm5130, %v5122, %v5127
        %v5132 = vrsqrt.pop %v3791
        %v5133 = vmul.f32 %v5132, %v3791
        %v5134 = vmul.f32 %v5133, %v5132
        %v5135 = vmul.f32 0.5, %v5134
        %v5136 = vsub.f32 1.5, %v5135
        %v5137 = vmul.f32 %v5132, %v5136
        %vm5138 = vweird.f32 %v3791
        %vm5139 = vweird.f32 %v5132
        %vm5140 = vmor %vm5138, %vm5139
        %v5141 = vsel %vm5140, %v5132, %v5137
        %v5142 = vrsqrt.pop %v3792
        %v5143 = vmul.f32 %v5142, %v3792
        %v5144 = vmul.f32 %v5143, %v5142
        %v5145 = vmul.f32 0.5, %v5144
        %v5146 = vsub.f32 1.5, %v5145
        %v5147 = vmul.f32 %v5142, %v5146
        %vm5148 = vweird.f32 %v3792
        %vm5149 = vweird.f32 %v5142
        %vm5150 = vmor %vm5148, %vm5149
        %v5151 = vsel %vm5150, %v5142, %v5147
        %v5152 = vrsqrt.pop %v3793
        %v5153 = vmul.f32 %v5152, %v3793
        %v5154 = vmul.f32 %v5153, %v5152
        %v5155 = vmul.f32 0.5, %v5154
        %v5156 = vsub.f32 1.5, %v5155
        %v5157 = vmul.f32 %v5152, %v5156
        %vm5158 = vweird.f32 %v3793
        %vm5159 = vweird.f32 %v5152
        %vm5160 = vmor %vm5158, %vm5159
        %v5161 = vsel %vm5160, %v5152, %v5157
        %v5162 = vrsqrt.pop %v3794
        %v5163 = vmul.f32 %v5162, %v3794
        %v5164 = vmul.f32 %v5163, %v5162
        %v5165 = vmul.f32 0.5, %v5164
        %v5166 = vsub.f32 1.5, %v5165
        %v5167 = vmul.f32 %v5162, %v5166
        %vm5168 = vweird.f32 %v3794
        %vm5169 = vweird.f32 %v5162
        %vm5170 = vmor %vm5168, %vm5169
        %v5171 = vsel %vm5170, %v5162, %v5167
        %v5172 = vrsqrt.pop %v3795
        %v5173 = vmul.f32 %v5172, %v3795
        %v5174 = vmul.f32 %v5173, %v5172
        %v5175 = vmul.f32 0.5, %v5174
        %v5176 = vsub.f32 1.5, %v5175
        %v5177 = vmul.f32 %v5172, %v5176
        %vm5178 = vweird.f32 %v3795
        %vm5179 = vweird.f32 %v5172
        %vm5180 = vmor %vm5178, %vm5179
        %v5181 = vsel %vm5180, %v5172, %v5177
        %v5182 = vrsqrt.pop %v3796
        %v5183 = vmul.f32 %v5182, %v3796
        %v5184 = vmul.f32 %v5183, %v5182
        %v5185 = vmul.f32 0.5, %v5184
        %v5186 = vsub.f32 1.5, %v5185
        %v5187 = vmul.f32 %v5182, %v5186
        %vm5188 = vweird.f32 %v3796
        %vm5189 = vweird.f32 %v5182
        %vm5190 = vmor %vm5188, %vm5189
        %v5191 = vsel %vm5190, %v5182, %v5187
        %v5192 = vrsqrt.pop %v3797
        %v5193 = vmul.f32 %v5192, %v3797
        %v5194 = vmul.f32 %v5193, %v5192
        %v5195 = vmul.f32 0.5, %v5194
        %v5196 = vsub.f32 1.5, %v5195
        %v5197 = vmul.f32 %v5192, %v5196
        %vm5198 = vweird.f32 %v3797
        %vm5199 = vweird.f32 %v5192
        %vm5200 = vmor %vm5198, %vm5199
        %v5201 = vsel %vm5200, %v5192, %v5197
        %v5202 = vrsqrt.pop %v3798
        %v5203 = vmul.f32 %v5202, %v3798
        %v5204 = vmul.f32 %v5203, %v5202
        %v5205 = vmul.f32 0.5, %v5204
        %v5206 = vsub.f32 1.5, %v5205
        %v5207 = vmul.f32 %v5202, %v5206
        %vm5208 = vweird.f32 %v3798
        %vm5209 = vweird.f32 %v5202
        %vm5210 = vmor %vm5208, %vm5209
        %v5211 = vsel %vm5210, %v5202, %v5207
        %v5212 = vrsqrt.pop %v3799
        %v5213 = vmul.f32 %v5212, %v3799
        %v5214 = vmul.f32 %v5213, %v5212
        %v5215 = vmul.f32 0.5, %v5214
        %v5216 = vsub.f32 1.5, %v5215
        %v5217 = vmul.f32 %v5212, %v5216
        %vm5218 = vweird.f32 %v3799
        %vm5219 = vweird.f32 %v5212
        %vm5220 = vmor %vm5218, %vm5219
        %v5221 = vsel %vm5220, %v5212, %v5217
        %v5222 = vrsqrt.pop %v3800
        %v5223 = vmul.f32 %v5222, %v3800
        %v5224 = vmul.f32 %v5223, %v5222
        %v5225 = vmul.f32 0.5, %v5224
        %v5226 = vsub.f32 1.5, %v5225
        %v5227 = vmul.f32 %v5222, %v5226
        %vm5228 = vweird.f32 %v3800
        %vm5229 = vweird.f32 %v5222
        %vm5230 = vmor %vm5228, %vm5229
        %v5231 = vsel %vm5230, %v5222, %v5227
        %v5232 = vrsqrt.pop %v3801
        %v5233 = vmul.f32 %v5232, %v3801
        %v5234 = vmul.f32 %v5233, %v5232
        %v5235 = vmul.f32 0.5, %v5234
        %v5236 = vsub.f32 1.5, %v5235
        %v5237 = vmul.f32 %v5232, %v5236
        %vm5238 = vweird.f32 %v3801
        %vm5239 = vweird.f32 %v5232
        %vm5240 = vmor %vm5238, %vm5239
        %v5241 = vsel %vm5240, %v5232, %v5237
        %v5242 = vld [vmem:[%s280] sm:$0xff]
        %v5243 = vld [vmem:[%s280 + $0x8] sm:$0xff]
        %v5244 = vld [vmem:[%s280 + $0x10] sm:$0xff]
        %v5245 = vld [vmem:[%s280 + $0x18] sm:$0xff]
        %v5246 = vld [vmem:[%s280 + $0x20] sm:$0xff]
        %v5247 = vld [vmem:[%s280 + $0x28] sm:$0xff]
        %v5248 = vld [vmem:[%s280 + $0x30] sm:$0xff]
        %v5249 = vld [vmem:[%s280 + $0x38] sm:$0xff]
        %v5250 = vld [vmem:[%s280 + $0x40] sm:$0xff]
        %v5251 = vld [vmem:[%s280 + $0x48] sm:$0xff]
        %v5252 = vld [vmem:[%s280 + $0x50] sm:$0xff]
        %v5253 = vld [vmem:[%s280 + $0x58] sm:$0xff]
        %v5254 = vld [vmem:[%s280 + $0x60] sm:$0xff]
        %v5255 = vld [vmem:[%s280 + $0x68] sm:$0xff]
        %v5256 = vld [vmem:[%s280 + $0x70] sm:$0xff]
        %v5257 = vld [vmem:[%s280 + $0x78] sm:$0xff]
        %v5258 = vld [vmem:[%s280 + $0x80] sm:$0xff]
        %v5259 = vld [vmem:[%s280 + $0x88] sm:$0xff]
        %v5260 = vld [vmem:[%s280 + $0x90] sm:$0xff]
        %v5261 = vld [vmem:[%s280 + $0x98] sm:$0xff]
        %v5262 = vld [vmem:[%s280 + $0xa0] sm:$0xff]
        %v5263 = vld [vmem:[%s280 + $0xa8] sm:$0xff]
        %v5264 = vld [vmem:[%s280 + $0xb0] sm:$0xff]
        %v5265 = vld [vmem:[%s280 + $0xb8] sm:$0xff]
        %v5266 = vld [vmem:[%s280 + $0xc0] sm:$0xff]
        %v5267 = vld [vmem:[%s280 + $0xc8] sm:$0xff]
        %v5268 = vld [vmem:[%s280 + $0xd0] sm:$0xff]
        %v5269 = vld [vmem:[%s280 + $0xd8] sm:$0xff]
        %v5270 = vld [vmem:[%s280 + $0xe0] sm:$0xff]
        %v5271 = vld [vmem:[%s280 + $0xe8] sm:$0xff]
        %v5272 = vld [vmem:[%s280 + $0xf0] sm:$0xff]
        %v5273 = vld [vmem:[%s280 + $0xf8] sm:$0xff]
        %v5274 = vld [vmem:[%s280 + $0x100] sm:$0xff]
        %v5275 = vld [vmem:[%s280 + $0x108] sm:$0xff]
        %v5276 = vld [vmem:[%s280 + $0x110] sm:$0xff]
        %v5277 = vld [vmem:[%s280 + $0x118] sm:$0xff]
        %v5278 = vld [vmem:[%s280 + $0x120] sm:$0xff]
        %v5279 = vld [vmem:[%s280 + $0x128] sm:$0xff]
        %v5280 = vld [vmem:[%s280 + $0x130] sm:$0xff]
        %v5281 = vld [vmem:[%s280 + $0x138] sm:$0xff]
        %v5282 = vld [vmem:[%s280 + $0x140] sm:$0xff]
        %v5283 = vld [vmem:[%s280 + $0x148] sm:$0xff]
        %v5284 = vld [vmem:[%s280 + $0x150] sm:$0xff]
        %v5285 = vld [vmem:[%s280 + $0x158] sm:$0xff]
        %v5286 = vld [vmem:[%s280 + $0x160] sm:$0xff]
        %v5287 = vld [vmem:[%s280 + $0x168] sm:$0xff]
        %v5288 = vld [vmem:[%s280 + $0x170] sm:$0xff]
        %v5289 = vld [vmem:[%s280 + $0x178] sm:$0xff]
        %v5290 = vld [vmem:[%s280 + $0x180] sm:$0xff]
        %v5291 = vld [vmem:[%s280 + $0x188] sm:$0xff]
        %v5292 = vld [vmem:[%s280 + $0x190] sm:$0xff]
        %v5293 = vld [vmem:[%s280 + $0x198] sm:$0xff]
        %v5294 = vld [vmem:[%s280 + $0x1a0] sm:$0xff]
        %v5295 = vld [vmem:[%s280 + $0x1a8] sm:$0xff]
        %v5296 = vld [vmem:[%s280 + $0x1b0] sm:$0xff]
        %v5297 = vld [vmem:[%s280 + $0x1b8] sm:$0xff]
        %v5298 = vld [vmem:[%s280 + $0x1c0] sm:$0xff]
        %v5299 = vld [vmem:[%s280 + $0x1c8] sm:$0xff]
        %v5300 = vld [vmem:[%s280 + $0x1d0] sm:$0xff]
        %v5301 = vld [vmem:[%s280 + $0x1d8] sm:$0xff]
        %v5302 = vld [vmem:[%s280 + $0x1e0] sm:$0xff]
        %v5303 = vld [vmem:[%s280 + $0x1e8] sm:$0xff]
        %v5304 = vld [vmem:[%s280 + $0x1f0] sm:$0xff]
        %v5305 = vld [vmem:[%s280 + $0x1f8] sm:$0xff]
        %v5306 = vld [vmem:[%s280 + $0x200] sm:$0xff]
        %v5307 = vld [vmem:[%s280 + $0x208] sm:$0xff]
        %v5308 = vld [vmem:[%s280 + $0x210] sm:$0xff]
        %v5309 = vld [vmem:[%s280 + $0x218] sm:$0xff]
        %v5310 = vld [vmem:[%s280 + $0x220] sm:$0xff]
        %v5311 = vld [vmem:[%s280 + $0x228] sm:$0xff]
        %v5312 = vld [vmem:[%s280 + $0x230] sm:$0xff]
        %v5313 = vld [vmem:[%s280 + $0x238] sm:$0xff]
        %v5314 = vld [vmem:[%s280 + $0x240] sm:$0xff]
        %v5315 = vld [vmem:[%s280 + $0x248] sm:$0xff]
        %v5316 = vld [vmem:[%s280 + $0x250] sm:$0xff]
        %v5317 = vld [vmem:[%s280 + $0x258] sm:$0xff]
        %v5318 = vld [vmem:[%s280 + $0x260] sm:$0xff]
        %v5319 = vld [vmem:[%s280 + $0x268] sm:$0xff]
        %v5320 = vld [vmem:[%s280 + $0x270] sm:$0xff]
        %v5321 = vld [vmem:[%s280 + $0x278] sm:$0xff]
        %v5322 = vld [vmem:[%s280 + $0x280] sm:$0xff]
        %v5323 = vld [vmem:[%s280 + $0x288] sm:$0xff]
        %v5324 = vld [vmem:[%s280 + $0x290] sm:$0xff]
        %v5325 = vld [vmem:[%s280 + $0x298] sm:$0xff]
        %v5326 = vld [vmem:[%s280 + $0x2a0] sm:$0xff]
        %v5327 = vld [vmem:[%s280 + $0x2a8] sm:$0xff]
        %v5328 = vld [vmem:[%s280 + $0x2b0] sm:$0xff]
        %v5329 = vld [vmem:[%s280 + $0x2b8] sm:$0xff]
        %v5330 = vld [vmem:[%s280 + $0x2c0] sm:$0xff]
        %v5331 = vld [vmem:[%s280 + $0x2c8] sm:$0xff]
        %v5332 = vld [vmem:[%s280 + $0x2d0] sm:$0xff]
        %v5333 = vld [vmem:[%s280 + $0x2d8] sm:$0xff]
        %v5334 = vld [vmem:[%s280 + $0x2e0] sm:$0xff]
        %v5335 = vld [vmem:[%s280 + $0x2e8] sm:$0xff]
        %v5336 = vld [vmem:[%s280 + $0x2f0] sm:$0xff]
        %v5337 = vld [vmem:[%s280 + $0x2f8] sm:$0xff]
        %v5338 = vld [vmem:[%s280 + $0x300] sm:$0xff]
        %v5339 = vld [vmem:[%s280 + $0x308] sm:$0xff]
        %v5340 = vld [vmem:[%s280 + $0x310] sm:$0xff]
        %v5341 = vld [vmem:[%s280 + $0x318] sm:$0xff]
        %v5342 = vld [vmem:[%s280 + $0x320] sm:$0xff]
        %v5343 = vld [vmem:[%s280 + $0x328] sm:$0xff]
        %v5344 = vld [vmem:[%s280 + $0x330] sm:$0xff]
        %v5345 = vld [vmem:[%s280 + $0x338] sm:$0xff]
        %v5346 = vld [vmem:[%s280 + $0x340] sm:$0xff]
        %v5347 = vld [vmem:[%s280 + $0x348] sm:$0xff]
        %v5348 = vld [vmem:[%s280 + $0x350] sm:$0xff]
        %v5349 = vld [vmem:[%s280 + $0x358] sm:$0xff]
        %v5350 = vld [vmem:[%s280 + $0x360] sm:$0xff]
        %v5351 = vld [vmem:[%s280 + $0x368] sm:$0xff]
        %v5352 = vld [vmem:[%s280 + $0x370] sm:$0xff]
        %v5353 = vld [vmem:[%s280 + $0x378] sm:$0xff]
        %v5354 = vld [vmem:[%s280 + $0x380] sm:$0xff]
        %v5355 = vld [vmem:[%s280 + $0x388] sm:$0xff]
        %v5356 = vld [vmem:[%s280 + $0x390] sm:$0xff]
        %v5357 = vld [vmem:[%s280 + $0x398] sm:$0xff]
        %v5358 = vld [vmem:[%s280 + $0x3a0] sm:$0xff]
        %v5359 = vld [vmem:[%s280 + $0x3a8] sm:$0xff]
        %v5360 = vld [vmem:[%s280 + $0x3b0] sm:$0xff]
        %v5361 = vld [vmem:[%s280 + $0x3b8] sm:$0xff]
        %v5362 = vld [vmem:[%s280 + $0x3c0] sm:$0xff]
        %v5363 = vld [vmem:[%s280 + $0x3c8] sm:$0xff]
        %v5364 = vld [vmem:[%s280 + $0x3d0] sm:$0xff]
        %v5365 = vld [vmem:[%s280 + $0x3d8] sm:$0xff]
        %v5366 = vld [vmem:[%s280 + $0x3e0] sm:$0xff]
        %v5367 = vld [vmem:[%s280 + $0x3e8] sm:$0xff]
        %v5368 = vld [vmem:[%s280 + $0x3f0] sm:$0xff]
        %v5369 = vld [vmem:[%s280 + $0x3f8] sm:$0xff]
        %v5370 = vld [vmem:[%s280 + $0x400] sm:$0xff]
        %v5371 = vld [vmem:[%s280 + $0x408] sm:$0xff]
        %v5372 = vld [vmem:[%s280 + $0x410] sm:$0xff]
        %v5373 = vld [vmem:[%s280 + $0x418] sm:$0xff]
        %v5374 = vld [vmem:[%s280 + $0x420] sm:$0xff]
        %v5375 = vld [vmem:[%s280 + $0x428] sm:$0xff]
        %v5376 = vld [vmem:[%s280 + $0x430] sm:$0xff]
        %v5377 = vld [vmem:[%s280 + $0x438] sm:$0xff]
        %v5378 = vld [vmem:[%s280 + $0x440] sm:$0xff]
        %v5379 = vld [vmem:[%s280 + $0x448] sm:$0xff]
        %v5380 = vld [vmem:[%s280 + $0x450] sm:$0xff]
        %v5381 = vld [vmem:[%s280 + $0x458] sm:$0xff]
        %v5382 = vld [vmem:[%s280 + $0x460] sm:$0xff]
        %v5383 = vld [vmem:[%s280 + $0x468] sm:$0xff]
        %v5384 = vld [vmem:[%s280 + $0x470] sm:$0xff]
        %v5385 = vld [vmem:[%s280 + $0x478] sm:$0xff]
        %v5386 = vmul.f32 %v5242, %v3811
        %v5387 = vmul.f32 %v5243, %v3821
        %v5388 = vmul.f32 %v5244, %v3831
        %v5389 = vmul.f32 %v5245, %v3841
        %v5390 = vmul.f32 %v5246, %v3851
        %v5391 = vmul.f32 %v5247, %v3861
        %v5392 = vmul.f32 %v5248, %v3871
        %v5393 = vmul.f32 %v5249, %v3881
        %v5394 = vmul.f32 %v5250, %v3891
        %v5395 = vmul.f32 %v5251, %v3901
        %v5396 = vmul.f32 %v5252, %v3911
        %v5397 = vmul.f32 %v5253, %v3921
        %v5398 = vmul.f32 %v5254, %v3931
        %v5399 = vmul.f32 %v5255, %v3941
        %v5400 = vmul.f32 %v5256, %v3951
        %v5401 = vmul.f32 %v5257, %v3961
        %v5402 = vmul.f32 %v5258, %v3971
        %v5403 = vmul.f32 %v5259, %v3981
        %v5404 = vmul.f32 %v5260, %v3991
        %v5405 = vmul.f32 %v5261, %v4001
        %v5406 = vmul.f32 %v5262, %v4011
        %v5407 = vmul.f32 %v5263, %v4021
        %v5408 = vmul.f32 %v5264, %v4031
        %v5409 = vmul.f32 %v5265, %v4041
        %v5410 = vmul.f32 %v5266, %v4051
        %v5411 = vmul.f32 %v5267, %v4061
        %v5412 = vmul.f32 %v5268, %v4071
        %v5413 = vmul.f32 %v5269, %v4081
        %v5414 = vmul.f32 %v5270, %v4091
        %v5415 = vmul.f32 %v5271, %v4101
        %v5416 = vmul.f32 %v5272, %v4111
        %v5417 = vmul.f32 %v5273, %v4121
        %v5418 = vmul.f32 %v5274, %v4131
        %v5419 = vmul.f32 %v5275, %v4141
        %v5420 = vmul.f32 %v5276, %v4151
        %v5421 = vmul.f32 %v5277, %v4161
        %v5422 = vmul.f32 %v5278, %v4171
        %v5423 = vmul.f32 %v5279, %v4181
        %v5424 = vmul.f32 %v5280, %v4191
        %v5425 = vmul.f32 %v5281, %v4201
        %v5426 = vmul.f32 %v5282, %v4211
        %v5427 = vmul.f32 %v5283, %v4221
        %v5428 = vmul.f32 %v5284, %v4231
        %v5429 = vmul.f32 %v5285, %v4241
        %v5430 = vmul.f32 %v5286, %v4251
        %v5431 = vmul.f32 %v5287, %v4261
        %v5432 = vmul.f32 %v5288, %v4271
        %v5433 = vmul.f32 %v5289, %v4281
        %v5434 = vmul.f32 %v5290, %v4291
        %v5435 = vmul.f32 %v5291, %v4301
        %v5436 = vmul.f32 %v5292, %v4311
        %v5437 = vmul.f32 %v5293, %v4321
        %v5438 = vmul.f32 %v5294, %v4331
        %v5439 = vmul.f32 %v5295, %v4341
        %v5440 = vmul.f32 %v5296, %v4351
        %v5441 = vmul.f32 %v5297, %v4361
        %v5442 = vmul.f32 %v5298, %v4371
        %v5443 = vmul.f32 %v5299, %v4381
        %v5444 = vmul.f32 %v5300, %v4391
        %v5445 = vmul.f32 %v5301, %v4401
        %v5446 = vmul.f32 %v5302, %v4411
        %v5447 = vmul.f32 %v5303, %v4421
        %v5448 = vmul.f32 %v5304, %v4431
        %v5449 = vmul.f32 %v5305, %v4441
        %v5450 = vmul.f32 %v5306, %v4451
        %v5451 = vmul.f32 %v5307, %v4461
        %v5452 = vmul.f32 %v5308, %v4471
        %v5453 = vmul.f32 %v5309, %v4481
        %v5454 = vmul.f32 %v5310, %v4491
        %v5455 = vmul.f32 %v5311, %v4501
        %v5456 = vmul.f32 %v5312, %v4511
        %v5457 = vmul.f32 %v5313, %v4521
        %v5458 = vmul.f32 %v5314, %v4531
        %v5459 = vmul.f32 %v5315, %v4541
        %v5460 = vmul.f32 %v5316, %v4551
        %v5461 = vmul.f32 %v5317, %v4561
        %v5462 = vmul.f32 %v5318, %v4571
        %v5463 = vmul.f32 %v5319, %v4581
        %v5464 = vmul.f32 %v5320, %v4591
        %v5465 = vmul.f32 %v5321, %v4601
        %v5466 = vmul.f32 %v5322, %v4611
        %v5467 = vmul.f32 %v5323, %v4621
        %v5468 = vmul.f32 %v5324, %v4631
        %v5469 = vmul.f32 %v5325, %v4641
        %v5470 = vmul.f32 %v5326, %v4651
        %v5471 = vmul.f32 %v5327, %v4661
        %v5472 = vmul.f32 %v5328, %v4671
        %v5473 = vmul.f32 %v5329, %v4681
        %v5474 = vmul.f32 %v5330, %v4691
        %v5475 = vmul.f32 %v5331, %v4701
        %v5476 = vmul.f32 %v5332, %v4711
        %v5477 = vmul.f32 %v5333, %v4721
        %v5478 = vmul.f32 %v5334, %v4731
        %v5479 = vmul.f32 %v5335, %v4741
        %v5480 = vmul.f32 %v5336, %v4751
        %v5481 = vmul.f32 %v5337, %v4761
        %v5482 = vmul.f32 %v5338, %v4771
        %v5483 = vmul.f32 %v5339, %v4781
        %v5484 = vmul.f32 %v5340, %v4791
        %v5485 = vmul.f32 %v5341, %v4801
        %v5486 = vmul.f32 %v5342, %v4811
        %v5487 = vmul.f32 %v5343, %v4821
        %v5488 = vmul.f32 %v5344, %v4831
        %v5489 = vmul.f32 %v5345, %v4841
        %v5490 = vmul.f32 %v5346, %v4851
        %v5491 = vmul.f32 %v5347, %v4861
        %v5492 = vmul.f32 %v5348, %v4871
        %v5493 = vmul.f32 %v5349, %v4881
        %v5494 = vmul.f32 %v5350, %v4891
        %v5495 = vmul.f32 %v5351, %v4901
        %v5496 = vmul.f32 %v5352, %v4911
        %v5497 = vmul.f32 %v5353, %v4921
        %v5498 = vmul.f32 %v5354, %v4931
        %v5499 = vmul.f32 %v5355, %v4941
        %v5500 = vmul.f32 %v5356, %v4951
        %v5501 = vmul.f32 %v5357, %v4961
        %v5502 = vmul.f32 %v5358, %v4971
        %v5503 = vmul.f32 %v5359, %v4981
        %v5504 = vmul.f32 %v5360, %v4991
        %v5505 = vmul.f32 %v5361, %v5001
        %v5506 = vmul.f32 %v5362, %v5011
        %v5507 = vmul.f32 %v5363, %v5021
        %v5508 = vmul.f32 %v5364, %v5031
        %v5509 = vmul.f32 %v5365, %v5041
        %v5510 = vmul.f32 %v5366, %v5051
        %v5511 = vmul.f32 %v5367, %v5061
        %v5512 = vmul.f32 %v5368, %v5071
        %v5513 = vmul.f32 %v5369, %v5081
        %v5514 = vmul.f32 %v5370, %v5091
        %v5515 = vmul.f32 %v5371, %v5101
        %v5516 = vmul.f32 %v5372, %v5111
        %v5517 = vmul.f32 %v5373, %v5121
        %v5518 = vmul.f32 %v5374, %v5131
        %v5519 = vmul.f32 %v5375, %v5141
        %v5520 = vmul.f32 %v5376, %v5151
        %v5521 = vmul.f32 %v5377, %v5161
        %v5522 = vmul.f32 %v5378, %v5171
        %v5523 = vmul.f32 %v5379, %v5181
        %v5524 = vmul.f32 %v5380, %v5191
        %v5525 = vmul.f32 %v5381, %v5201
        %v5526 = vmul.f32 %v5382, %v5211
        %v5527 = vmul.f32 %v5383, %v5221
        %v5528 = vmul.f32 %v5384, %v5231
        %v5529 = vmul.f32 %v5385, %v5241
        %5531 = vset.pattern.permute.xlu0 0
        %5532 = vperm.xlu0 %5531, %v5386
        %v5533 = vpop.permute.xlu0 %5532
        %5536 = vset.pattern.permute.xlu0 0
        %5537 = vperm.xlu0 %5536, %v5387
        %v5538 = vpop.permute.xlu0 %5537
        %5541 = vset.pattern.permute.xlu0 0
        %5542 = vperm.xlu0 %5541, %v5388
        %v5543 = vpop.permute.xlu0 %5542
        %5546 = vset.pattern.permute.xlu0 0
        %5547 = vperm.xlu0 %5546, %v5389
        %v5548 = vpop.permute.xlu0 %5547
        %5551 = vset.pattern.permute.xlu0 0
        %5552 = vperm.xlu0 %5551, %v5390
        %v5553 = vpop.permute.xlu0 %5552
        %5556 = vset.pattern.permute.xlu0 0
        %5557 = vperm.xlu0 %5556, %v5391
        %v5558 = vpop.permute.xlu0 %5557
        %5561 = vset.pattern.permute.xlu0 0
        %5562 = vperm.xlu0 %5561, %v5392
        %v5563 = vpop.permute.xlu0 %5562
        %5566 = vset.pattern.permute.xlu0 0
        %5567 = vperm.xlu0 %5566, %v5393
        %v5568 = vpop.permute.xlu0 %5567
        %5571 = vset.pattern.permute.xlu0 0
        %5572 = vperm.xlu0 %5571, %v5394
        %v5573 = vpop.permute.xlu0 %5572
        %5576 = vset.pattern.permute.xlu0 0
        %5577 = vperm.xlu0 %5576, %v5395
        %v5578 = vpop.permute.xlu0 %5577
        %5581 = vset.pattern.permute.xlu0 0
        %5582 = vperm.xlu0 %5581, %v5396
        %v5583 = vpop.permute.xlu0 %5582
        %5586 = vset.pattern.permute.xlu0 0
        %5587 = vperm.xlu0 %5586, %v5397
        %v5588 = vpop.permute.xlu0 %5587
        %5591 = vset.pattern.permute.xlu0 0
        %5592 = vperm.xlu0 %5591, %v5398
        %v5593 = vpop.permute.xlu0 %5592
        %5596 = vset.pattern.permute.xlu0 0
        %5597 = vperm.xlu0 %5596, %v5399
        %v5598 = vpop.permute.xlu0 %5597
        %5601 = vset.pattern.permute.xlu0 0
        %5602 = vperm.xlu0 %5601, %v5400
        %v5603 = vpop.permute.xlu0 %5602
        %5606 = vset.pattern.permute.xlu0 0
        %5607 = vperm.xlu0 %5606, %v5401
        %v5608 = vpop.permute.xlu0 %5607
        %5611 = vset.pattern.permute.xlu0 0
        %5612 = vperm.xlu0 %5611, %v5402
        %v5613 = vpop.permute.xlu0 %5612
        %5616 = vset.pattern.permute.xlu0 0
        %5617 = vperm.xlu0 %5616, %v5403
        %v5618 = vpop.permute.xlu0 %5617
        %5621 = vset.pattern.permute.xlu0 0
        %5622 = vperm.xlu0 %5621, %v5404
        %v5623 = vpop.permute.xlu0 %5622
        %5626 = vset.pattern.permute.xlu0 0
        %5627 = vperm.xlu0 %5626, %v5405
        %v5628 = vpop.permute.xlu0 %5627
        %5631 = vset.pattern.permute.xlu0 0
        %5632 = vperm.xlu0 %5631, %v5406
        %v5633 = vpop.permute.xlu0 %5632
        %5636 = vset.pattern.permute.xlu0 0
        %5637 = vperm.xlu0 %5636, %v5407
        %v5638 = vpop.permute.xlu0 %5637
        %5641 = vset.pattern.permute.xlu0 0
        %5642 = vperm.xlu0 %5641, %v5408
        %v5643 = vpop.permute.xlu0 %5642
        %5646 = vset.pattern.permute.xlu0 0
        %5647 = vperm.xlu0 %5646, %v5409
        %v5648 = vpop.permute.xlu0 %5647
        %5651 = vset.pattern.permute.xlu0 0
        %5652 = vperm.xlu0 %5651, %v5410
        %v5653 = vpop.permute.xlu0 %5652
        %5656 = vset.pattern.permute.xlu0 0
        %5657 = vperm.xlu0 %5656, %v5411
        %v5658 = vpop.permute.xlu0 %5657
        %5661 = vset.pattern.permute.xlu0 0
        %5662 = vperm.xlu0 %5661, %v5412
        %v5663 = vpop.permute.xlu0 %5662
        %5666 = vset.pattern.permute.xlu0 0
        %5667 = vperm.xlu0 %5666, %v5413
        %v5668 = vpop.permute.xlu0 %5667
        %5671 = vset.pattern.permute.xlu0 0
        %5672 = vperm.xlu0 %5671, %v5414
        %v5673 = vpop.permute.xlu0 %5672
        %5676 = vset.pattern.permute.xlu0 0
        %5677 = vperm.xlu0 %5676, %v5415
        %v5678 = vpop.permute.xlu0 %5677
        %5681 = vset.pattern.permute.xlu0 0
        %5682 = vperm.xlu0 %5681, %v5416
        %v5683 = vpop.permute.xlu0 %5682
        %5686 = vset.pattern.permute.xlu0 0
        %5687 = vperm.xlu0 %5686, %v5417
        %v5688 = vpop.permute.xlu0 %5687
        %5691 = vset.pattern.permute.xlu0 0
        %5692 = vperm.xlu0 %5691, %v5418
        %v5693 = vpop.permute.xlu0 %5692
        %5696 = vset.pattern.permute.xlu0 0
        %5697 = vperm.xlu0 %5696, %v5419
        %v5698 = vpop.permute.xlu0 %5697
        %5701 = vset.pattern.permute.xlu0 0
        %5702 = vperm.xlu0 %5701, %v5420
        %v5703 = vpop.permute.xlu0 %5702
        %5706 = vset.pattern.permute.xlu0 0
        %5707 = vperm.xlu0 %5706, %v5421
        %v5708 = vpop.permute.xlu0 %5707
        %5711 = vset.pattern.permute.xlu0 0
        %5712 = vperm.xlu0 %5711, %v5422
        %v5713 = vpop.permute.xlu0 %5712
        %5716 = vset.pattern.permute.xlu0 0
        %5717 = vperm.xlu0 %5716, %v5423
        %v5718 = vpop.permute.xlu0 %5717
        %5721 = vset.pattern.permute.xlu0 0
        %5722 = vperm.xlu0 %5721, %v5424
        %v5723 = vpop.permute.xlu0 %5722
        %5726 = vset.pattern.permute.xlu0 0
        %5727 = vperm.xlu0 %5726, %v5425
        %v5728 = vpop.permute.xlu0 %5727
        %5731 = vset.pattern.permute.xlu0 0
        %5732 = vperm.xlu0 %5731, %v5426
        %v5733 = vpop.permute.xlu0 %5732
        %5736 = vset.pattern.permute.xlu0 0
        %5737 = vperm.xlu0 %5736, %v5427
        %v5738 = vpop.permute.xlu0 %5737
        %5741 = vset.pattern.permute.xlu0 0
        %5742 = vperm.xlu0 %5741, %v5428
        %v5743 = vpop.permute.xlu0 %5742
        %5746 = vset.pattern.permute.xlu0 0
        %5747 = vperm.xlu0 %5746, %v5429
        %v5748 = vpop.permute.xlu0 %5747
        %5751 = vset.pattern.permute.xlu0 0
        %5752 = vperm.xlu0 %5751, %v5430
        %v5753 = vpop.permute.xlu0 %5752
        %5756 = vset.pattern.permute.xlu0 0
        %5757 = vperm.xlu0 %5756, %v5431
        %v5758 = vpop.permute.xlu0 %5757
        %5761 = vset.pattern.permute.xlu0 0
        %5762 = vperm.xlu0 %5761, %v5432
        %v5763 = vpop.permute.xlu0 %5762
        %5766 = vset.pattern.permute.xlu0 0
        %5767 = vperm.xlu0 %5766, %v5433
        %v5768 = vpop.permute.xlu0 %5767
        %5771 = vset.pattern.permute.xlu0 0
        %5772 = vperm.xlu0 %5771, %v5434
        %v5773 = vpop.permute.xlu0 %5772
        %5776 = vset.pattern.permute.xlu0 0
        %5777 = vperm.xlu0 %5776, %v5435
        %v5778 = vpop.permute.xlu0 %5777
        %5781 = vset.pattern.permute.xlu0 0
        %5782 = vperm.xlu0 %5781, %v5436
        %v5783 = vpop.permute.xlu0 %5782
        %5786 = vset.pattern.permute.xlu0 0
        %5787 = vperm.xlu0 %5786, %v5437
        %v5788 = vpop.permute.xlu0 %5787
        %5791 = vset.pattern.permute.xlu0 0
        %5792 = vperm.xlu0 %5791, %v5438
        %v5793 = vpop.permute.xlu0 %5792
        %5796 = vset.pattern.permute.xlu0 0
        %5797 = vperm.xlu0 %5796, %v5439
        %v5798 = vpop.permute.xlu0 %5797
        %5801 = vset.pattern.permute.xlu0 0
        %5802 = vperm.xlu0 %5801, %v5440
        %v5803 = vpop.permute.xlu0 %5802
        %5806 = vset.pattern.permute.xlu0 0
        %5807 = vperm.xlu0 %5806, %v5441
        %v5808 = vpop.permute.xlu0 %5807
        %5811 = vset.pattern.permute.xlu0 0
        %5812 = vperm.xlu0 %5811, %v5442
        %v5813 = vpop.permute.xlu0 %5812
        %5816 = vset.pattern.permute.xlu0 0
        %5817 = vperm.xlu0 %5816, %v5443
        %v5818 = vpop.permute.xlu0 %5817
        %5821 = vset.pattern.permute.xlu0 0
        %5822 = vperm.xlu0 %5821, %v5444
        %v5823 = vpop.permute.xlu0 %5822
        %5826 = vset.pattern.permute.xlu0 0
        %5827 = vperm.xlu0 %5826, %v5445
        %v5828 = vpop.permute.xlu0 %5827
        %5831 = vset.pattern.permute.xlu0 0
        %5832 = vperm.xlu0 %5831, %v5446
        %v5833 = vpop.permute.xlu0 %5832
        %5836 = vset.pattern.permute.xlu0 0
        %5837 = vperm.xlu0 %5836, %v5447
        %v5838 = vpop.permute.xlu0 %5837
        %5841 = vset.pattern.permute.xlu0 0
        %5842 = vperm.xlu0 %5841, %v5448
        %v5843 = vpop.permute.xlu0 %5842
        %5846 = vset.pattern.permute.xlu0 0
        %5847 = vperm.xlu0 %5846, %v5449
        %v5848 = vpop.permute.xlu0 %5847
        %5851 = vset.pattern.permute.xlu0 0
        %5852 = vperm.xlu0 %5851, %v5450
        %v5853 = vpop.permute.xlu0 %5852
        %5856 = vset.pattern.permute.xlu0 0
        %5857 = vperm.xlu0 %5856, %v5451
        %v5858 = vpop.permute.xlu0 %5857
        %5861 = vset.pattern.permute.xlu0 0
        %5862 = vperm.xlu0 %5861, %v5452
        %v5863 = vpop.permute.xlu0 %5862
        %5866 = vset.pattern.permute.xlu0 0
        %5867 = vperm.xlu0 %5866, %v5453
        %v5868 = vpop.permute.xlu0 %5867
        %5871 = vset.pattern.permute.xlu0 0
        %5872 = vperm.xlu0 %5871, %v5454
        %v5873 = vpop.permute.xlu0 %5872
        %5876 = vset.pattern.permute.xlu0 0
        %5877 = vperm.xlu0 %5876, %v5455
        %v5878 = vpop.permute.xlu0 %5877
        %5881 = vset.pattern.permute.xlu0 0
        %5882 = vperm.xlu0 %5881, %v5456
        %v5883 = vpop.permute.xlu0 %5882
        %5886 = vset.pattern.permute.xlu0 0
        %5887 = vperm.xlu0 %5886, %v5457
        %v5888 = vpop.permute.xlu0 %5887
        %5891 = vset.pattern.permute.xlu0 0
        %5892 = vperm.xlu0 %5891, %v5458
        %v5893 = vpop.permute.xlu0 %5892
        %5896 = vset.pattern.permute.xlu0 0
        %5897 = vperm.xlu0 %5896, %v5459
        %v5898 = vpop.permute.xlu0 %5897
        %5901 = vset.pattern.permute.xlu0 0
        %5902 = vperm.xlu0 %5901, %v5460
        %v5903 = vpop.permute.xlu0 %5902
        %5906 = vset.pattern.permute.xlu0 0
        %5907 = vperm.xlu0 %5906, %v5461
        %v5908 = vpop.permute.xlu0 %5907
        %5911 = vset.pattern.permute.xlu0 0
        %5912 = vperm.xlu0 %5911, %v5462
        %v5913 = vpop.permute.xlu0 %5912
        %5916 = vset.pattern.permute.xlu0 0
        %5917 = vperm.xlu0 %5916, %v5463
        %v5918 = vpop.permute.xlu0 %5917
        %5921 = vset.pattern.permute.xlu0 0
        %5922 = vperm.xlu0 %5921, %v5464
        %v5923 = vpop.permute.xlu0 %5922
        %5926 = vset.pattern.permute.xlu0 0
        %5927 = vperm.xlu0 %5926, %v5465
        %v5928 = vpop.permute.xlu0 %5927
        %5931 = vset.pattern.permute.xlu0 0
        %5932 = vperm.xlu0 %5931, %v5466
        %v5933 = vpop.permute.xlu0 %5932
        %5936 = vset.pattern.permute.xlu0 0
        %5937 = vperm.xlu0 %5936, %v5467
        %v5938 = vpop.permute.xlu0 %5937
        %5941 = vset.pattern.permute.xlu0 0
        %5942 = vperm.xlu0 %5941, %v5468
        %v5943 = vpop.permute.xlu0 %5942
        %5946 = vset.pattern.permute.xlu0 0
        %5947 = vperm.xlu0 %5946, %v5469
        %v5948 = vpop.permute.xlu0 %5947
        %5951 = vset.pattern.permute.xlu0 0
        %5952 = vperm.xlu0 %5951, %v5470
        %v5953 = vpop.permute.xlu0 %5952
        %5956 = vset.pattern.permute.xlu0 0
        %5957 = vperm.xlu0 %5956, %v5471
        %v5958 = vpop.permute.xlu0 %5957
        %5961 = vset.pattern.permute.xlu0 0
        %5962 = vperm.xlu0 %5961, %v5472
        %v5963 = vpop.permute.xlu0 %5962
        %5966 = vset.pattern.permute.xlu0 0
        %5967 = vperm.xlu0 %5966, %v5473
        %v5968 = vpop.permute.xlu0 %5967
        %5971 = vset.pattern.permute.xlu0 0
        %5972 = vperm.xlu0 %5971, %v5474
        %v5973 = vpop.permute.xlu0 %5972
        %5976 = vset.pattern.permute.xlu0 0
        %5977 = vperm.xlu0 %5976, %v5475
        %v5978 = vpop.permute.xlu0 %5977
        %5981 = vset.pattern.permute.xlu0 0
        %5982 = vperm.xlu0 %5981, %v5476
        %v5983 = vpop.permute.xlu0 %5982
        %5986 = vset.pattern.permute.xlu0 0
        %5987 = vperm.xlu0 %5986, %v5477
        %v5988 = vpop.permute.xlu0 %5987
        %5991 = vset.pattern.permute.xlu0 0
        %5992 = vperm.xlu0 %5991, %v5478
        %v5993 = vpop.permute.xlu0 %5992
        %5996 = vset.pattern.permute.xlu0 0
        %5997 = vperm.xlu0 %5996, %v5479
        %v5998 = vpop.permute.xlu0 %5997
        %6001 = vset.pattern.permute.xlu0 0
        %6002 = vperm.xlu0 %6001, %v5480
        %v6003 = vpop.permute.xlu0 %6002
        %6006 = vset.pattern.permute.xlu0 0
        %6007 = vperm.xlu0 %6006, %v5481
        %v6008 = vpop.permute.xlu0 %6007
        %6011 = vset.pattern.permute.xlu0 0
        %6012 = vperm.xlu0 %6011, %v5482
        %v6013 = vpop.permute.xlu0 %6012
        %6016 = vset.pattern.permute.xlu0 0
        %6017 = vperm.xlu0 %6016, %v5483
        %v6018 = vpop.permute.xlu0 %6017
        %6021 = vset.pattern.permute.xlu0 0
        %6022 = vperm.xlu0 %6021, %v5484
        %v6023 = vpop.permute.xlu0 %6022
        %6026 = vset.pattern.permute.xlu0 0
        %6027 = vperm.xlu0 %6026, %v5485
        %v6028 = vpop.permute.xlu0 %6027
        %6031 = vset.pattern.permute.xlu0 0
        %6032 = vperm.xlu0 %6031, %v5486
        %v6033 = vpop.permute.xlu0 %6032
        %6036 = vset.pattern.permute.xlu0 0
        %6037 = vperm.xlu0 %6036, %v5487
        %v6038 = vpop.permute.xlu0 %6037
        %6041 = vset.pattern.permute.xlu0 0
        %6042 = vperm.xlu0 %6041, %v5488
        %v6043 = vpop.permute.xlu0 %6042
        %6046 = vset.pattern.permute.xlu0 0
        %6047 = vperm.xlu0 %6046, %v5489
        %v6048 = vpop.permute.xlu0 %6047
        %6051 = vset.pattern.permute.xlu0 0
        %6052 = vperm.xlu0 %6051, %v5490
        %v6053 = vpop.permute.xlu0 %6052
        %6056 = vset.pattern.permute.xlu0 0
        %6057 = vperm.xlu0 %6056, %v5491
        %v6058 = vpop.permute.xlu0 %6057
        %6061 = vset.pattern.permute.xlu0 0
        %6062 = vperm.xlu0 %6061, %v5492
        %v6063 = vpop.permute.xlu0 %6062
        %6066 = vset.pattern.permute.xlu0 0
        %6067 = vperm.xlu0 %6066, %v5493
        %v6068 = vpop.permute.xlu0 %6067
        %6071 = vset.pattern.permute.xlu0 0
        %6072 = vperm.xlu0 %6071, %v5494
        %v6073 = vpop.permute.xlu0 %6072
        %6076 = vset.pattern.permute.xlu0 0
        %6077 = vperm.xlu0 %6076, %v5495
        %v6078 = vpop.permute.xlu0 %6077
        %6081 = vset.pattern.permute.xlu0 0
        %6082 = vperm.xlu0 %6081, %v5496
        %v6083 = vpop.permute.xlu0 %6082
        %6086 = vset.pattern.permute.xlu0 0
        %6087 = vperm.xlu0 %6086, %v5497
        %v6088 = vpop.permute.xlu0 %6087
        %6091 = vset.pattern.permute.xlu0 0
        %6092 = vperm.xlu0 %6091, %v5498
        %v6093 = vpop.permute.xlu0 %6092
        %6096 = vset.pattern.permute.xlu0 0
        %6097 = vperm.xlu0 %6096, %v5499
        %v6098 = vpop.permute.xlu0 %6097
        %6101 = vset.pattern.permute.xlu0 0
        %6102 = vperm.xlu0 %6101, %v5500
        %v6103 = vpop.permute.xlu0 %6102
        %6106 = vset.pattern.permute.xlu0 0
        %6107 = vperm.xlu0 %6106, %v5501
        %v6108 = vpop.permute.xlu0 %6107
        %6111 = vset.pattern.permute.xlu0 0
        %6112 = vperm.xlu0 %6111, %v5502
        %v6113 = vpop.permute.xlu0 %6112
        %6116 = vset.pattern.permute.xlu0 0
        %6117 = vperm.xlu0 %6116, %v5503
        %v6118 = vpop.permute.xlu0 %6117
        %6121 = vset.pattern.permute.xlu0 0
        %6122 = vperm.xlu0 %6121, %v5504
        %v6123 = vpop.permute.xlu0 %6122
        %6126 = vset.pattern.permute.xlu0 0
        %6127 = vperm.xlu0 %6126, %v5505
        %v6128 = vpop.permute.xlu0 %6127
        %6131 = vset.pattern.permute.xlu0 0
        %6132 = vperm.xlu0 %6131, %v5506
        %v6133 = vpop.permute.xlu0 %6132
        %6136 = vset.pattern.permute.xlu0 0
        %6137 = vperm.xlu0 %6136, %v5507
        %v6138 = vpop.permute.xlu0 %6137
        %6141 = vset.pattern.permute.xlu0 0
        %6142 = vperm.xlu0 %6141, %v5508
        %v6143 = vpop.permute.xlu0 %6142
        %6146 = vset.pattern.permute.xlu0 0
        %6147 = vperm.xlu0 %6146, %v5509
        %v6148 = vpop.permute.xlu0 %6147
        %6151 = vset.pattern.permute.xlu0 0
        %6152 = vperm.xlu0 %6151, %v5510
        %v6153 = vpop.permute.xlu0 %6152
        %6156 = vset.pattern.permute.xlu0 0
        %6157 = vperm.xlu0 %6156, %v5511
        %v6158 = vpop.permute.xlu0 %6157
        %6161 = vset.pattern.permute.xlu0 0
        %6162 = vperm.xlu0 %6161, %v5512
        %v6163 = vpop.permute.xlu0 %6162
        %6166 = vset.pattern.permute.xlu0 0
        %6167 = vperm.xlu0 %6166, %v5513
        %v6168 = vpop.permute.xlu0 %6167
        %6171 = vset.pattern.permute.xlu0 0
        %6172 = vperm.xlu0 %6171, %v5514
        %v6173 = vpop.permute.xlu0 %6172
        %6176 = vset.pattern.permute.xlu0 0
        %6177 = vperm.xlu0 %6176, %v5515
        %v6178 = vpop.permute.xlu0 %6177
        %6181 = vset.pattern.permute.xlu0 0
        %6182 = vperm.xlu0 %6181, %v5516
        %v6183 = vpop.permute.xlu0 %6182
        %6186 = vset.pattern.permute.xlu0 0
        %6187 = vperm.xlu0 %6186, %v5517
        %v6188 = vpop.permute.xlu0 %6187
        %6191 = vset.pattern.permute.xlu0 0
        %6192 = vperm.xlu0 %6191, %v5518
        %v6193 = vpop.permute.xlu0 %6192
        %6196 = vset.pattern.permute.xlu0 0
        %6197 = vperm.xlu0 %6196, %v5519
        %v6198 = vpop.permute.xlu0 %6197
        %6201 = vset.pattern.permute.xlu0 0
        %6202 = vperm.xlu0 %6201, %v5520
        %v6203 = vpop.permute.xlu0 %6202
        %6206 = vset.pattern.permute.xlu0 0
        %6207 = vperm.xlu0 %6206, %v5521
        %v6208 = vpop.permute.xlu0 %6207
        %6211 = vset.pattern.permute.xlu0 0
        %6212 = vperm.xlu0 %6211, %v5522
        %v6213 = vpop.permute.xlu0 %6212
        %6216 = vset.pattern.permute.xlu0 0
        %6217 = vperm.xlu0 %6216, %v5523
        %v6218 = vpop.permute.xlu0 %6217
        %6221 = vset.pattern.permute.xlu0 0
        %6222 = vperm.xlu0 %6221, %v5524
        %v6223 = vpop.permute.xlu0 %6222
        %6226 = vset.pattern.permute.xlu0 0
        %6227 = vperm.xlu0 %6226, %v5525
        %v6228 = vpop.permute.xlu0 %6227
        %6231 = vset.pattern.permute.xlu0 0
        %6232 = vperm.xlu0 %6231, %v5526
        %v6233 = vpop.permute.xlu0 %6232
        %6236 = vset.pattern.permute.xlu0 0
        %6237 = vperm.xlu0 %6236, %v5527
        %v6238 = vpop.permute.xlu0 %6237
        %6241 = vset.pattern.permute.xlu0 0
        %6242 = vperm.xlu0 %6241, %v5528
        %v6243 = vpop.permute.xlu0 %6242
        %6246 = vset.pattern.permute.xlu0 0
        %6247 = vperm.xlu0 %6246, %v5529
        %v6248 = vpop.permute.xlu0 %6247
        %v6250 = vmul.f32 %v2794, %v5533
        %v6251 = vmul.f32 %v2795, %v5538
        %v6252 = vmul.f32 %v2796, %v5543
        %v6253 = vmul.f32 %v2797, %v5548
        %v6254 = vmul.f32 %v2798, %v5553
        %v6255 = vmul.f32 %v2799, %v5558
        %v6256 = vmul.f32 %v2800, %v5563
        %v6257 = vmul.f32 %v2801, %v5568
        %v6258 = vmul.f32 %v2802, %v5573
        %v6259 = vmul.f32 %v2803, %v5578
        %v6260 = vmul.f32 %v2804, %v5583
        %v6261 = vmul.f32 %v2805, %v5588
        %v6262 = vmul.f32 %v2806, %v5593
        %v6263 = vmul.f32 %v2807, %v5598
        %v6264 = vmul.f32 %v2808, %v5603
        %v6265 = vmul.f32 %v2809, %v5608
        %v6266 = vmul.f32 %v2810, %v5613
        %v6267 = vmul.f32 %v2811, %v5618
        %v6268 = vmul.f32 %v2812, %v5623
        %v6269 = vmul.f32 %v2813, %v5628
        %v6270 = vmul.f32 %v2814, %v5633
        %v6271 = vmul.f32 %v2815, %v5638
        %v6272 = vmul.f32 %v2816, %v5643
        %v6273 = vmul.f32 %v2817, %v5648
        %v6274 = vmul.f32 %v2818, %v5653
        %v6275 = vmul.f32 %v2819, %v5658
        %v6276 = vmul.f32 %v2820, %v5663
        %v6277 = vmul.f32 %v2821, %v5668
        %v6278 = vmul.f32 %v2822, %v5673
        %v6279 = vmul.f32 %v2823, %v5678
        %v6280 = vmul.f32 %v2824, %v5683
        %v6281 = vmul.f32 %v2825, %v5688
        %v6282 = vmul.f32 %v2826, %v5693
        %v6283 = vmul.f32 %v2827, %v5698
        %v6284 = vmul.f32 %v2828, %v5703
        %v6285 = vmul.f32 %v2829, %v5708
        %v6286 = vmul.f32 %v2830, %v5713
        %v6287 = vmul.f32 %v2831, %v5718
        %v6288 = vmul.f32 %v2832, %v5723
        %v6289 = vmul.f32 %v2833, %v5728
        %v6290 = vmul.f32 %v2834, %v5733
        %v6291 = vmul.f32 %v2835, %v5738
        %v6292 = vmul.f32 %v2836, %v5743
        %v6293 = vmul.f32 %v2837, %v5748
        %v6294 = vmul.f32 %v2838, %v5753
        %v6295 = vmul.f32 %v2839, %v5758
        %v6296 = vmul.f32 %v2840, %v5763
        %v6297 = vmul.f32 %v2841, %v5768
        %v6298 = vmul.f32 %v2842, %v5773
        %v6299 = vmul.f32 %v2843, %v5778
        %v6300 = vmul.f32 %v2844, %v5783
        %v6301 = vmul.f32 %v2845, %v5788
        %v6302 = vmul.f32 %v2846, %v5793
        %v6303 = vmul.f32 %v2847, %v5798
        %v6304 = vmul.f32 %v2848, %v5803
        %v6305 = vmul.f32 %v2849, %v5808
        %v6306 = vmul.f32 %v2850, %v5813
        %v6307 = vmul.f32 %v2851, %v5818
        %v6308 = vmul.f32 %v2852, %v5823
        %v6309 = vmul.f32 %v2853, %v5828
        %v6310 = vmul.f32 %v2854, %v5833
        %v6311 = vmul.f32 %v2855, %v5838
        %v6312 = vmul.f32 %v2856, %v5843
        %v6313 = vmul.f32 %v2857, %v5848
        %v6314 = vmul.f32 %v2858, %v5853
        %v6315 = vmul.f32 %v2859, %v5858
        %v6316 = vmul.f32 %v2860, %v5863
        %v6317 = vmul.f32 %v2861, %v5868
        %v6318 = vmul.f32 %v2862, %v5873
        %v6319 = vmul.f32 %v2863, %v5878
        %v6320 = vmul.f32 %v2864, %v5883
        %v6321 = vmul.f32 %v2865, %v5888
        %v6322 = vmul.f32 %v2866, %v5893
        %v6323 = vmul.f32 %v2867, %v5898
        %v6324 = vmul.f32 %v2868, %v5903
        %v6325 = vmul.f32 %v2869, %v5908
        %v6326 = vmul.f32 %v2870, %v5913
        %v6327 = vmul.f32 %v2871, %v5918
        %v6328 = vmul.f32 %v2872, %v5923
        %v6329 = vmul.f32 %v2873, %v5928
        %v6330 = vmul.f32 %v2874, %v5933
        %v6331 = vmul.f32 %v2875, %v5938
        %v6332 = vmul.f32 %v2876, %v5943
        %v6333 = vmul.f32 %v2877, %v5948
        %v6334 = vmul.f32 %v2878, %v5953
        %v6335 = vmul.f32 %v2879, %v5958
        %v6336 = vmul.f32 %v2880, %v5963
        %v6337 = vmul.f32 %v2881, %v5968
        %v6338 = vmul.f32 %v2882, %v5973
        %v6339 = vmul.f32 %v2883, %v5978
        %v6340 = vmul.f32 %v2884, %v5983
        %v6341 = vmul.f32 %v2885, %v5988
        %v6342 = vmul.f32 %v2886, %v5993
        %v6343 = vmul.f32 %v2887, %v5998
        %v6344 = vmul.f32 %v2888, %v6003
        %v6345 = vmul.f32 %v2889, %v6008
        %v6346 = vmul.f32 %v2890, %v6013
        %v6347 = vmul.f32 %v2891, %v6018
        %v6348 = vmul.f32 %v2892, %v6023
        %v6349 = vmul.f32 %v2893, %v6028
        %v6350 = vmul.f32 %v2894, %v6033
        %v6351 = vmul.f32 %v2895, %v6038
        %v6352 = vmul.f32 %v2896, %v6043
        %v6353 = vmul.f32 %v2897, %v6048
        %v6354 = vmul.f32 %v2898, %v6053
        %v6355 = vmul.f32 %v2899, %v6058
        %v6356 = vmul.f32 %v2900, %v6063
        %v6357 = vmul.f32 %v2901, %v6068
        %v6358 = vmul.f32 %v2902, %v6073
        %v6359 = vmul.f32 %v2903, %v6078
        %v6360 = vmul.f32 %v2904, %v6083
        %v6361 = vmul.f32 %v2905, %v6088
        %v6362 = vmul.f32 %v2906, %v6093
        %v6363 = vmul.f32 %v2907, %v6098
        %v6364 = vmul.f32 %v2908, %v6103
        %v6365 = vmul.f32 %v2909, %v6108
        %v6366 = vmul.f32 %v2910, %v6113
        %v6367 = vmul.f32 %v2911, %v6118
        %v6368 = vmul.f32 %v2912, %v6123
        %v6369 = vmul.f32 %v2913, %v6128
        %v6370 = vmul.f32 %v2914, %v6133
        %v6371 = vmul.f32 %v2915, %v6138
        %v6372 = vmul.f32 %v2916, %v6143
        %v6373 = vmul.f32 %v2917, %v6148
        %v6374 = vmul.f32 %v2918, %v6153
        %v6375 = vmul.f32 %v2919, %v6158
        %v6376 = vmul.f32 %v2920, %v6163
        %v6377 = vmul.f32 %v2921, %v6168
        %v6378 = vmul.f32 %v2922, %v6173
        %v6379 = vmul.f32 %v2923, %v6178
        %v6380 = vmul.f32 %v2924, %v6183
        %v6381 = vmul.f32 %v2925, %v6188
        %v6382 = vmul.f32 %v2926, %v6193
        %v6383 = vmul.f32 %v2927, %v6198
        %v6384 = vmul.f32 %v2928, %v6203
        %v6385 = vmul.f32 %v2929, %v6208
        %v6386 = vmul.f32 %v2930, %v6213
        %v6387 = vmul.f32 %v2931, %v6218
        %v6388 = vmul.f32 %v2932, %v6223
        %v6389 = vmul.f32 %v2933, %v6228
        %v6390 = vmul.f32 %v2934, %v6233
        %v6391 = vmul.f32 %v2935, %v6238
        %v6392 = vmul.f32 %v2936, %v6243
        %v6393 = vmul.f32 %v2937, %v6248
        %v6394 = vld [vmem:[%s286] sm:$0xff]
        %v6395 = vld [vmem:[%s286 + $0x8] sm:$0xff]
        %v6396 = vld [vmem:[%s286 + $0x10] sm:$0xff]
        %v6397 = vld [vmem:[%s286 + $0x18] sm:$0xff]
        %v6398 = vld [vmem:[%s286 + $0x20] sm:$0xff]
        %v6399 = vld [vmem:[%s286 + $0x28] sm:$0xff]
        %v6400 = vld [vmem:[%s286 + $0x30] sm:$0xff]
        %v6401 = vld [vmem:[%s286 + $0x38] sm:$0xff]
        %v6402 = vld [vmem:[%s286 + $0x40] sm:$0xff]
        %v6403 = vld [vmem:[%s286 + $0x48] sm:$0xff]
        %v6404 = vld [vmem:[%s286 + $0x50] sm:$0xff]
        %v6405 = vld [vmem:[%s286 + $0x58] sm:$0xff]
        %v6406 = vld [vmem:[%s286 + $0x60] sm:$0xff]
        %v6407 = vld [vmem:[%s286 + $0x68] sm:$0xff]
        %v6408 = vld [vmem:[%s286 + $0x70] sm:$0xff]
        %v6409 = vld [vmem:[%s286 + $0x78] sm:$0xff]
        %v6410 = vld [vmem:[%s286 + $0x80] sm:$0xff]
        %v6411 = vld [vmem:[%s286 + $0x88] sm:$0xff]
        %v6412 = vld [vmem:[%s286 + $0x90] sm:$0xff]
        %v6413 = vld [vmem:[%s286 + $0x98] sm:$0xff]
        %v6414 = vld [vmem:[%s286 + $0xa0] sm:$0xff]
        %v6415 = vld [vmem:[%s286 + $0xa8] sm:$0xff]
        %v6416 = vld [vmem:[%s286 + $0xb0] sm:$0xff]
        %v6417 = vld [vmem:[%s286 + $0xb8] sm:$0xff]
        %v6418 = vld [vmem:[%s286 + $0xc0] sm:$0xff]
        %v6419 = vld [vmem:[%s286 + $0xc8] sm:$0xff]
        %v6420 = vld [vmem:[%s286 + $0xd0] sm:$0xff]
        %v6421 = vld [vmem:[%s286 + $0xd8] sm:$0xff]
        %v6422 = vld [vmem:[%s286 + $0xe0] sm:$0xff]
        %v6423 = vld [vmem:[%s286 + $0xe8] sm:$0xff]
        %v6424 = vld [vmem:[%s286 + $0xf0] sm:$0xff]
        %v6425 = vld [vmem:[%s286 + $0xf8] sm:$0xff]
        %v6426 = vld [vmem:[%s286 + $0x100] sm:$0xff]
        %v6427 = vld [vmem:[%s286 + $0x108] sm:$0xff]
        %v6428 = vld [vmem:[%s286 + $0x110] sm:$0xff]
        %v6429 = vld [vmem:[%s286 + $0x118] sm:$0xff]
        %v6430 = vld [vmem:[%s286 + $0x120] sm:$0xff]
        %v6431 = vld [vmem:[%s286 + $0x128] sm:$0xff]
        %v6432 = vld [vmem:[%s286 + $0x130] sm:$0xff]
        %v6433 = vld [vmem:[%s286 + $0x138] sm:$0xff]
        %v6434 = vld [vmem:[%s286 + $0x140] sm:$0xff]
        %v6435 = vld [vmem:[%s286 + $0x148] sm:$0xff]
        %v6436 = vld [vmem:[%s286 + $0x150] sm:$0xff]
        %v6437 = vld [vmem:[%s286 + $0x158] sm:$0xff]
        %v6438 = vld [vmem:[%s286 + $0x160] sm:$0xff]
        %v6439 = vld [vmem:[%s286 + $0x168] sm:$0xff]
        %v6440 = vld [vmem:[%s286 + $0x170] sm:$0xff]
        %v6441 = vld [vmem:[%s286 + $0x178] sm:$0xff]
        %v6442 = vld [vmem:[%s286 + $0x180] sm:$0xff]
        %v6443 = vld [vmem:[%s286 + $0x188] sm:$0xff]
        %v6444 = vld [vmem:[%s286 + $0x190] sm:$0xff]
        %v6445 = vld [vmem:[%s286 + $0x198] sm:$0xff]
        %v6446 = vld [vmem:[%s286 + $0x1a0] sm:$0xff]
        %v6447 = vld [vmem:[%s286 + $0x1a8] sm:$0xff]
        %v6448 = vld [vmem:[%s286 + $0x1b0] sm:$0xff]
        %v6449 = vld [vmem:[%s286 + $0x1b8] sm:$0xff]
        %v6450 = vld [vmem:[%s286 + $0x1c0] sm:$0xff]
        %v6451 = vld [vmem:[%s286 + $0x1c8] sm:$0xff]
        %v6452 = vld [vmem:[%s286 + $0x1d0] sm:$0xff]
        %v6453 = vld [vmem:[%s286 + $0x1d8] sm:$0xff]
        %v6454 = vld [vmem:[%s286 + $0x1e0] sm:$0xff]
        %v6455 = vld [vmem:[%s286 + $0x1e8] sm:$0xff]
        %v6456 = vld [vmem:[%s286 + $0x1f0] sm:$0xff]
        %v6457 = vld [vmem:[%s286 + $0x1f8] sm:$0xff]
        %v6458 = vld [vmem:[%s286 + $0x200] sm:$0xff]
        %v6459 = vld [vmem:[%s286 + $0x208] sm:$0xff]
        %v6460 = vld [vmem:[%s286 + $0x210] sm:$0xff]
        %v6461 = vld [vmem:[%s286 + $0x218] sm:$0xff]
        %v6462 = vld [vmem:[%s286 + $0x220] sm:$0xff]
        %v6463 = vld [vmem:[%s286 + $0x228] sm:$0xff]
        %v6464 = vld [vmem:[%s286 + $0x230] sm:$0xff]
        %v6465 = vld [vmem:[%s286 + $0x238] sm:$0xff]
        %v6466 = vld [vmem:[%s286 + $0x240] sm:$0xff]
        %v6467 = vld [vmem:[%s286 + $0x248] sm:$0xff]
        %v6468 = vld [vmem:[%s286 + $0x250] sm:$0xff]
        %v6469 = vld [vmem:[%s286 + $0x258] sm:$0xff]
        %v6470 = vld [vmem:[%s286 + $0x260] sm:$0xff]
        %v6471 = vld [vmem:[%s286 + $0x268] sm:$0xff]
        %v6472 = vld [vmem:[%s286 + $0x270] sm:$0xff]
        %v6473 = vld [vmem:[%s286 + $0x278] sm:$0xff]
        %v6474 = vld [vmem:[%s286 + $0x280] sm:$0xff]
        %v6475 = vld [vmem:[%s286 + $0x288] sm:$0xff]
        %v6476 = vld [vmem:[%s286 + $0x290] sm:$0xff]
        %v6477 = vld [vmem:[%s286 + $0x298] sm:$0xff]
        %v6478 = vld [vmem:[%s286 + $0x2a0] sm:$0xff]
        %v6479 = vld [vmem:[%s286 + $0x2a8] sm:$0xff]
        %v6480 = vld [vmem:[%s286 + $0x2b0] sm:$0xff]
        %v6481 = vld [vmem:[%s286 + $0x2b8] sm:$0xff]
        %v6482 = vld [vmem:[%s286 + $0x2c0] sm:$0xff]
        %v6483 = vld [vmem:[%s286 + $0x2c8] sm:$0xff]
        %v6484 = vld [vmem:[%s286 + $0x2d0] sm:$0xff]
        %v6485 = vld [vmem:[%s286 + $0x2d8] sm:$0xff]
        %v6486 = vld [vmem:[%s286 + $0x2e0] sm:$0xff]
        %v6487 = vld [vmem:[%s286 + $0x2e8] sm:$0xff]
        %v6488 = vld [vmem:[%s286 + $0x2f0] sm:$0xff]
        %v6489 = vld [vmem:[%s286 + $0x2f8] sm:$0xff]
        %v6490 = vld [vmem:[%s286 + $0x300] sm:$0xff]
        %v6491 = vld [vmem:[%s286 + $0x308] sm:$0xff]
        %v6492 = vld [vmem:[%s286 + $0x310] sm:$0xff]
        %v6493 = vld [vmem:[%s286 + $0x318] sm:$0xff]
        %v6494 = vld [vmem:[%s286 + $0x320] sm:$0xff]
        %v6495 = vld [vmem:[%s286 + $0x328] sm:$0xff]
        %v6496 = vld [vmem:[%s286 + $0x330] sm:$0xff]
        %v6497 = vld [vmem:[%s286 + $0x338] sm:$0xff]
        %v6498 = vld [vmem:[%s286 + $0x340] sm:$0xff]
        %v6499 = vld [vmem:[%s286 + $0x348] sm:$0xff]
        %v6500 = vld [vmem:[%s286 + $0x350] sm:$0xff]
        %v6501 = vld [vmem:[%s286 + $0x358] sm:$0xff]
        %v6502 = vld [vmem:[%s286 + $0x360] sm:$0xff]
        %v6503 = vld [vmem:[%s286 + $0x368] sm:$0xff]
        %v6504 = vld [vmem:[%s286 + $0x370] sm:$0xff]
        %v6505 = vld [vmem:[%s286 + $0x378] sm:$0xff]
        %v6506 = vld [vmem:[%s286 + $0x380] sm:$0xff]
        %v6507 = vld [vmem:[%s286 + $0x388] sm:$0xff]
        %v6508 = vld [vmem:[%s286 + $0x390] sm:$0xff]
        %v6509 = vld [vmem:[%s286 + $0x398] sm:$0xff]
        %v6510 = vld [vmem:[%s286 + $0x3a0] sm:$0xff]
        %v6511 = vld [vmem:[%s286 + $0x3a8] sm:$0xff]
        %v6512 = vld [vmem:[%s286 + $0x3b0] sm:$0xff]
        %v6513 = vld [vmem:[%s286 + $0x3b8] sm:$0xff]
        %v6514 = vld [vmem:[%s286 + $0x3c0] sm:$0xff]
        %v6515 = vld [vmem:[%s286 + $0x3c8] sm:$0xff]
        %v6516 = vld [vmem:[%s286 + $0x3d0] sm:$0xff]
        %v6517 = vld [vmem:[%s286 + $0x3d8] sm:$0xff]
        %v6518 = vld [vmem:[%s286 + $0x3e0] sm:$0xff]
        %v6519 = vld [vmem:[%s286 + $0x3e8] sm:$0xff]
        %v6520 = vld [vmem:[%s286 + $0x3f0] sm:$0xff]
        %v6521 = vld [vmem:[%s286 + $0x3f8] sm:$0xff]
        %v6522 = vld [vmem:[%s286 + $0x400] sm:$0xff]
        %v6523 = vld [vmem:[%s286 + $0x408] sm:$0xff]
        %v6524 = vld [vmem:[%s286 + $0x410] sm:$0xff]
        %v6525 = vld [vmem:[%s286 + $0x418] sm:$0xff]
        %v6526 = vld [vmem:[%s286 + $0x420] sm:$0xff]
        %v6527 = vld [vmem:[%s286 + $0x428] sm:$0xff]
        %v6528 = vld [vmem:[%s286 + $0x430] sm:$0xff]
        %v6529 = vld [vmem:[%s286 + $0x438] sm:$0xff]
        %v6530 = vld [vmem:[%s286 + $0x440] sm:$0xff]
        %v6531 = vld [vmem:[%s286 + $0x448] sm:$0xff]
        %v6532 = vld [vmem:[%s286 + $0x450] sm:$0xff]
        %v6533 = vld [vmem:[%s286 + $0x458] sm:$0xff]
        %v6534 = vld [vmem:[%s286 + $0x460] sm:$0xff]
        %v6535 = vld [vmem:[%s286 + $0x468] sm:$0xff]
        %v6536 = vld [vmem:[%s286 + $0x470] sm:$0xff]
        %v6537 = vld [vmem:[%s286 + $0x478] sm:$0xff]
        %6539 = vset.pattern.permute.xlu0 0
        %6540 = vperm.xlu0 %6539, %v6394
        %v6541 = vpop.permute.xlu0 %6540
        %6544 = vset.pattern.permute.xlu0 0
        %6545 = vperm.xlu0 %6544, %v6395
        %v6546 = vpop.permute.xlu0 %6545
        %6549 = vset.pattern.permute.xlu0 0
        %6550 = vperm.xlu0 %6549, %v6396
        %v6551 = vpop.permute.xlu0 %6550
        %6554 = vset.pattern.permute.xlu0 0
        %6555 = vperm.xlu0 %6554, %v6397
        %v6556 = vpop.permute.xlu0 %6555
        %6559 = vset.pattern.permute.xlu0 0
        %6560 = vperm.xlu0 %6559, %v6398
        %v6561 = vpop.permute.xlu0 %6560
        %6564 = vset.pattern.permute.xlu0 0
        %6565 = vperm.xlu0 %6564, %v6399
        %v6566 = vpop.permute.xlu0 %6565
        %6569 = vset.pattern.permute.xlu0 0
        %6570 = vperm.xlu0 %6569, %v6400
        %v6571 = vpop.permute.xlu0 %6570
        %6574 = vset.pattern.permute.xlu0 0
        %6575 = vperm.xlu0 %6574, %v6401
        %v6576 = vpop.permute.xlu0 %6575
        %6579 = vset.pattern.permute.xlu0 0
        %6580 = vperm.xlu0 %6579, %v6402
        %v6581 = vpop.permute.xlu0 %6580
        %6584 = vset.pattern.permute.xlu0 0
        %6585 = vperm.xlu0 %6584, %v6403
        %v6586 = vpop.permute.xlu0 %6585
        %6589 = vset.pattern.permute.xlu0 0
        %6590 = vperm.xlu0 %6589, %v6404
        %v6591 = vpop.permute.xlu0 %6590
        %6594 = vset.pattern.permute.xlu0 0
        %6595 = vperm.xlu0 %6594, %v6405
        %v6596 = vpop.permute.xlu0 %6595
        %6599 = vset.pattern.permute.xlu0 0
        %6600 = vperm.xlu0 %6599, %v6406
        %v6601 = vpop.permute.xlu0 %6600
        %6604 = vset.pattern.permute.xlu0 0
        %6605 = vperm.xlu0 %6604, %v6407
        %v6606 = vpop.permute.xlu0 %6605
        %6609 = vset.pattern.permute.xlu0 0
        %6610 = vperm.xlu0 %6609, %v6408
        %v6611 = vpop.permute.xlu0 %6610
        %6614 = vset.pattern.permute.xlu0 0
        %6615 = vperm.xlu0 %6614, %v6409
        %v6616 = vpop.permute.xlu0 %6615
        %6619 = vset.pattern.permute.xlu0 0
        %6620 = vperm.xlu0 %6619, %v6410
        %v6621 = vpop.permute.xlu0 %6620
        %6624 = vset.pattern.permute.xlu0 0
        %6625 = vperm.xlu0 %6624, %v6411
        %v6626 = vpop.permute.xlu0 %6625
        %6629 = vset.pattern.permute.xlu0 0
        %6630 = vperm.xlu0 %6629, %v6412
        %v6631 = vpop.permute.xlu0 %6630
        %6634 = vset.pattern.permute.xlu0 0
        %6635 = vperm.xlu0 %6634, %v6413
        %v6636 = vpop.permute.xlu0 %6635
        %6639 = vset.pattern.permute.xlu0 0
        %6640 = vperm.xlu0 %6639, %v6414
        %v6641 = vpop.permute.xlu0 %6640
        %6644 = vset.pattern.permute.xlu0 0
        %6645 = vperm.xlu0 %6644, %v6415
        %v6646 = vpop.permute.xlu0 %6645
        %6649 = vset.pattern.permute.xlu0 0
        %6650 = vperm.xlu0 %6649, %v6416
        %v6651 = vpop.permute.xlu0 %6650
        %6654 = vset.pattern.permute.xlu0 0
        %6655 = vperm.xlu0 %6654, %v6417
        %v6656 = vpop.permute.xlu0 %6655
        %6659 = vset.pattern.permute.xlu0 0
        %6660 = vperm.xlu0 %6659, %v6418
        %v6661 = vpop.permute.xlu0 %6660
        %6664 = vset.pattern.permute.xlu0 0
        %6665 = vperm.xlu0 %6664, %v6419
        %v6666 = vpop.permute.xlu0 %6665
        %6669 = vset.pattern.permute.xlu0 0
        %6670 = vperm.xlu0 %6669, %v6420
        %v6671 = vpop.permute.xlu0 %6670
        %6674 = vset.pattern.permute.xlu0 0
        %6675 = vperm.xlu0 %6674, %v6421
        %v6676 = vpop.permute.xlu0 %6675
        %6679 = vset.pattern.permute.xlu0 0
        %6680 = vperm.xlu0 %6679, %v6422
        %v6681 = vpop.permute.xlu0 %6680
        %6684 = vset.pattern.permute.xlu0 0
        %6685 = vperm.xlu0 %6684, %v6423
        %v6686 = vpop.permute.xlu0 %6685
        %6689 = vset.pattern.permute.xlu0 0
        %6690 = vperm.xlu0 %6689, %v6424
        %v6691 = vpop.permute.xlu0 %6690
        %6694 = vset.pattern.permute.xlu0 0
        %6695 = vperm.xlu0 %6694, %v6425
        %v6696 = vpop.permute.xlu0 %6695
        %6699 = vset.pattern.permute.xlu0 0
        %6700 = vperm.xlu0 %6699, %v6426
        %v6701 = vpop.permute.xlu0 %6700
        %6704 = vset.pattern.permute.xlu0 0
        %6705 = vperm.xlu0 %6704, %v6427
        %v6706 = vpop.permute.xlu0 %6705
        %6709 = vset.pattern.permute.xlu0 0
        %6710 = vperm.xlu0 %6709, %v6428
        %v6711 = vpop.permute.xlu0 %6710
        %6714 = vset.pattern.permute.xlu0 0
        %6715 = vperm.xlu0 %6714, %v6429
        %v6716 = vpop.permute.xlu0 %6715
        %6719 = vset.pattern.permute.xlu0 0
        %6720 = vperm.xlu0 %6719, %v6430
        %v6721 = vpop.permute.xlu0 %6720
        %6724 = vset.pattern.permute.xlu0 0
        %6725 = vperm.xlu0 %6724, %v6431
        %v6726 = vpop.permute.xlu0 %6725
        %6729 = vset.pattern.permute.xlu0 0
        %6730 = vperm.xlu0 %6729, %v6432
        %v6731 = vpop.permute.xlu0 %6730
        %6734 = vset.pattern.permute.xlu0 0
        %6735 = vperm.xlu0 %6734, %v6433
        %v6736 = vpop.permute.xlu0 %6735
        %6739 = vset.pattern.permute.xlu0 0
        %6740 = vperm.xlu0 %6739, %v6434
        %v6741 = vpop.permute.xlu0 %6740
        %6744 = vset.pattern.permute.xlu0 0
        %6745 = vperm.xlu0 %6744, %v6435
        %v6746 = vpop.permute.xlu0 %6745
        %6749 = vset.pattern.permute.xlu0 0
        %6750 = vperm.xlu0 %6749, %v6436
        %v6751 = vpop.permute.xlu0 %6750
        %6754 = vset.pattern.permute.xlu0 0
        %6755 = vperm.xlu0 %6754, %v6437
        %v6756 = vpop.permute.xlu0 %6755
        %6759 = vset.pattern.permute.xlu0 0
        %6760 = vperm.xlu0 %6759, %v6438
        %v6761 = vpop.permute.xlu0 %6760
        %6764 = vset.pattern.permute.xlu0 0
        %6765 = vperm.xlu0 %6764, %v6439
        %v6766 = vpop.permute.xlu0 %6765
        %6769 = vset.pattern.permute.xlu0 0
        %6770 = vperm.xlu0 %6769, %v6440
        %v6771 = vpop.permute.xlu0 %6770
        %6774 = vset.pattern.permute.xlu0 0
        %6775 = vperm.xlu0 %6774, %v6441
        %v6776 = vpop.permute.xlu0 %6775
        %6779 = vset.pattern.permute.xlu0 0
        %6780 = vperm.xlu0 %6779, %v6442
        %v6781 = vpop.permute.xlu0 %6780
        %6784 = vset.pattern.permute.xlu0 0
        %6785 = vperm.xlu0 %6784, %v6443
        %v6786 = vpop.permute.xlu0 %6785
        %6789 = vset.pattern.permute.xlu0 0
        %6790 = vperm.xlu0 %6789, %v6444
        %v6791 = vpop.permute.xlu0 %6790
        %6794 = vset.pattern.permute.xlu0 0
        %6795 = vperm.xlu0 %6794, %v6445
        %v6796 = vpop.permute.xlu0 %6795
        %6799 = vset.pattern.permute.xlu0 0
        %6800 = vperm.xlu0 %6799, %v6446
        %v6801 = vpop.permute.xlu0 %6800
        %6804 = vset.pattern.permute.xlu0 0
        %6805 = vperm.xlu0 %6804, %v6447
        %v6806 = vpop.permute.xlu0 %6805
        %6809 = vset.pattern.permute.xlu0 0
        %6810 = vperm.xlu0 %6809, %v6448
        %v6811 = vpop.permute.xlu0 %6810
        %6814 = vset.pattern.permute.xlu0 0
        %6815 = vperm.xlu0 %6814, %v6449
        %v6816 = vpop.permute.xlu0 %6815
        %6819 = vset.pattern.permute.xlu0 0
        %6820 = vperm.xlu0 %6819, %v6450
        %v6821 = vpop.permute.xlu0 %6820
        %6824 = vset.pattern.permute.xlu0 0
        %6825 = vperm.xlu0 %6824, %v6451
        %v6826 = vpop.permute.xlu0 %6825
        %6829 = vset.pattern.permute.xlu0 0
        %6830 = vperm.xlu0 %6829, %v6452
        %v6831 = vpop.permute.xlu0 %6830
        %6834 = vset.pattern.permute.xlu0 0
        %6835 = vperm.xlu0 %6834, %v6453
        %v6836 = vpop.permute.xlu0 %6835
        %6839 = vset.pattern.permute.xlu0 0
        %6840 = vperm.xlu0 %6839, %v6454
        %v6841 = vpop.permute.xlu0 %6840
        %6844 = vset.pattern.permute.xlu0 0
        %6845 = vperm.xlu0 %6844, %v6455
        %v6846 = vpop.permute.xlu0 %6845
        %6849 = vset.pattern.permute.xlu0 0
        %6850 = vperm.xlu0 %6849, %v6456
        %v6851 = vpop.permute.xlu0 %6850
        %6854 = vset.pattern.permute.xlu0 0
        %6855 = vperm.xlu0 %6854, %v6457
        %v6856 = vpop.permute.xlu0 %6855
        %6859 = vset.pattern.permute.xlu0 0
        %6860 = vperm.xlu0 %6859, %v6458
        %v6861 = vpop.permute.xlu0 %6860
        %6864 = vset.pattern.permute.xlu0 0
        %6865 = vperm.xlu0 %6864, %v6459
        %v6866 = vpop.permute.xlu0 %6865
        %6869 = vset.pattern.permute.xlu0 0
        %6870 = vperm.xlu0 %6869, %v6460
        %v6871 = vpop.permute.xlu0 %6870
        %6874 = vset.pattern.permute.xlu0 0
        %6875 = vperm.xlu0 %6874, %v6461
        %v6876 = vpop.permute.xlu0 %6875
        %6879 = vset.pattern.permute.xlu0 0
        %6880 = vperm.xlu0 %6879, %v6462
        %v6881 = vpop.permute.xlu0 %6880
        %6884 = vset.pattern.permute.xlu0 0
        %6885 = vperm.xlu0 %6884, %v6463
        %v6886 = vpop.permute.xlu0 %6885
        %6889 = vset.pattern.permute.xlu0 0
        %6890 = vperm.xlu0 %6889, %v6464
        %v6891 = vpop.permute.xlu0 %6890
        %6894 = vset.pattern.permute.xlu0 0
        %6895 = vperm.xlu0 %6894, %v6465
        %v6896 = vpop.permute.xlu0 %6895
        %6899 = vset.pattern.permute.xlu0 0
        %6900 = vperm.xlu0 %6899, %v6466
        %v6901 = vpop.permute.xlu0 %6900
        %6904 = vset.pattern.permute.xlu0 0
        %6905 = vperm.xlu0 %6904, %v6467
        %v6906 = vpop.permute.xlu0 %6905
        %6909 = vset.pattern.permute.xlu0 0
        %6910 = vperm.xlu0 %6909, %v6468
        %v6911 = vpop.permute.xlu0 %6910
        %6914 = vset.pattern.permute.xlu0 0
        %6915 = vperm.xlu0 %6914, %v6469
        %v6916 = vpop.permute.xlu0 %6915
        %6919 = vset.pattern.permute.xlu0 0
        %6920 = vperm.xlu0 %6919, %v6470
        %v6921 = vpop.permute.xlu0 %6920
        %6924 = vset.pattern.permute.xlu0 0
        %6925 = vperm.xlu0 %6924, %v6471
        %v6926 = vpop.permute.xlu0 %6925
        %6929 = vset.pattern.permute.xlu0 0
        %6930 = vperm.xlu0 %6929, %v6472
        %v6931 = vpop.permute.xlu0 %6930
        %6934 = vset.pattern.permute.xlu0 0
        %6935 = vperm.xlu0 %6934, %v6473
        %v6936 = vpop.permute.xlu0 %6935
        %6939 = vset.pattern.permute.xlu0 0
        %6940 = vperm.xlu0 %6939, %v6474
        %v6941 = vpop.permute.xlu0 %6940
        %6944 = vset.pattern.permute.xlu0 0
        %6945 = vperm.xlu0 %6944, %v6475
        %v6946 = vpop.permute.xlu0 %6945
        %6949 = vset.pattern.permute.xlu0 0
        %6950 = vperm.xlu0 %6949, %v6476
        %v6951 = vpop.permute.xlu0 %6950
        %6954 = vset.pattern.permute.xlu0 0
        %6955 = vperm.xlu0 %6954, %v6477
        %v6956 = vpop.permute.xlu0 %6955
        %6959 = vset.pattern.permute.xlu0 0
        %6960 = vperm.xlu0 %6959, %v6478
        %v6961 = vpop.permute.xlu0 %6960
        %6964 = vset.pattern.permute.xlu0 0
        %6965 = vperm.xlu0 %6964, %v6479
        %v6966 = vpop.permute.xlu0 %6965
        %6969 = vset.pattern.permute.xlu0 0
        %6970 = vperm.xlu0 %6969, %v6480
        %v6971 = vpop.permute.xlu0 %6970
        %6974 = vset.pattern.permute.xlu0 0
        %6975 = vperm.xlu0 %6974, %v6481
        %v6976 = vpop.permute.xlu0 %6975
        %6979 = vset.pattern.permute.xlu0 0
        %6980 = vperm.xlu0 %6979, %v6482
        %v6981 = vpop.permute.xlu0 %6980
        %6984 = vset.pattern.permute.xlu0 0
        %6985 = vperm.xlu0 %6984, %v6483
        %v6986 = vpop.permute.xlu0 %6985
        %6989 = vset.pattern.permute.xlu0 0
        %6990 = vperm.xlu0 %6989, %v6484
        %v6991 = vpop.permute.xlu0 %6990
        %6994 = vset.pattern.permute.xlu0 0
        %6995 = vperm.xlu0 %6994, %v6485
        %v6996 = vpop.permute.xlu0 %6995
        %6999 = vset.pattern.permute.xlu0 0
        %7000 = vperm.xlu0 %6999, %v6486
        %v7001 = vpop.permute.xlu0 %7000
        %7004 = vset.pattern.permute.xlu0 0
        %7005 = vperm.xlu0 %7004, %v6487
        %v7006 = vpop.permute.xlu0 %7005
        %7009 = vset.pattern.permute.xlu0 0
        %7010 = vperm.xlu0 %7009, %v6488
        %v7011 = vpop.permute.xlu0 %7010
        %7014 = vset.pattern.permute.xlu0 0
        %7015 = vperm.xlu0 %7014, %v6489
        %v7016 = vpop.permute.xlu0 %7015
        %7019 = vset.pattern.permute.xlu0 0
        %7020 = vperm.xlu0 %7019, %v6490
        %v7021 = vpop.permute.xlu0 %7020
        %7024 = vset.pattern.permute.xlu0 0
        %7025 = vperm.xlu0 %7024, %v6491
        %v7026 = vpop.permute.xlu0 %7025
        %7029 = vset.pattern.permute.xlu0 0
        %7030 = vperm.xlu0 %7029, %v6492
        %v7031 = vpop.permute.xlu0 %7030
        %7034 = vset.pattern.permute.xlu0 0
        %7035 = vperm.xlu0 %7034, %v6493
        %v7036 = vpop.permute.xlu0 %7035
        %7039 = vset.pattern.permute.xlu0 0
        %7040 = vperm.xlu0 %7039, %v6494
        %v7041 = vpop.permute.xlu0 %7040
        %7044 = vset.pattern.permute.xlu0 0
        %7045 = vperm.xlu0 %7044, %v6495
        %v7046 = vpop.permute.xlu0 %7045
        %7049 = vset.pattern.permute.xlu0 0
        %7050 = vperm.xlu0 %7049, %v6496
        %v7051 = vpop.permute.xlu0 %7050
        %7054 = vset.pattern.permute.xlu0 0
        %7055 = vperm.xlu0 %7054, %v6497
        %v7056 = vpop.permute.xlu0 %7055
        %7059 = vset.pattern.permute.xlu0 0
        %7060 = vperm.xlu0 %7059, %v6498
        %v7061 = vpop.permute.xlu0 %7060
        %7064 = vset.pattern.permute.xlu0 0
        %7065 = vperm.xlu0 %7064, %v6499
        %v7066 = vpop.permute.xlu0 %7065
        %7069 = vset.pattern.permute.xlu0 0
        %7070 = vperm.xlu0 %7069, %v6500
        %v7071 = vpop.permute.xlu0 %7070
        %7074 = vset.pattern.permute.xlu0 0
        %7075 = vperm.xlu0 %7074, %v6501
        %v7076 = vpop.permute.xlu0 %7075
        %7079 = vset.pattern.permute.xlu0 0
        %7080 = vperm.xlu0 %7079, %v6502
        %v7081 = vpop.permute.xlu0 %7080
        %7084 = vset.pattern.permute.xlu0 0
        %7085 = vperm.xlu0 %7084, %v6503
        %v7086 = vpop.permute.xlu0 %7085
        %7089 = vset.pattern.permute.xlu0 0
        %7090 = vperm.xlu0 %7089, %v6504
        %v7091 = vpop.permute.xlu0 %7090
        %7094 = vset.pattern.permute.xlu0 0
        %7095 = vperm.xlu0 %7094, %v6505
        %v7096 = vpop.permute.xlu0 %7095
        %7099 = vset.pattern.permute.xlu0 0
        %7100 = vperm.xlu0 %7099, %v6506
        %v7101 = vpop.permute.xlu0 %7100
        %7104 = vset.pattern.permute.xlu0 0
        %7105 = vperm.xlu0 %7104, %v6507
        %v7106 = vpop.permute.xlu0 %7105
        %7109 = vset.pattern.permute.xlu0 0
        %7110 = vperm.xlu0 %7109, %v6508
        %v7111 = vpop.permute.xlu0 %7110
        %7114 = vset.pattern.permute.xlu0 0
        %7115 = vperm.xlu0 %7114, %v6509
        %v7116 = vpop.permute.xlu0 %7115
        %7119 = vset.pattern.permute.xlu0 0
        %7120 = vperm.xlu0 %7119, %v6510
        %v7121 = vpop.permute.xlu0 %7120
        %7124 = vset.pattern.permute.xlu0 0
        %7125 = vperm.xlu0 %7124, %v6511
        %v7126 = vpop.permute.xlu0 %7125
        %7129 = vset.pattern.permute.xlu0 0
        %7130 = vperm.xlu0 %7129, %v6512
        %v7131 = vpop.permute.xlu0 %7130
        %7134 = vset.pattern.permute.xlu0 0
        %7135 = vperm.xlu0 %7134, %v6513
        %v7136 = vpop.permute.xlu0 %7135
        %7139 = vset.pattern.permute.xlu0 0
        %7140 = vperm.xlu0 %7139, %v6514
        %v7141 = vpop.permute.xlu0 %7140
        %7144 = vset.pattern.permute.xlu0 0
        %7145 = vperm.xlu0 %7144, %v6515
        %v7146 = vpop.permute.xlu0 %7145
        %7149 = vset.pattern.permute.xlu0 0
        %7150 = vperm.xlu0 %7149, %v6516
        %v7151 = vpop.permute.xlu0 %7150
        %7154 = vset.pattern.permute.xlu0 0
        %7155 = vperm.xlu0 %7154, %v6517
        %v7156 = vpop.permute.xlu0 %7155
        %7159 = vset.pattern.permute.xlu0 0
        %7160 = vperm.xlu0 %7159, %v6518
        %v7161 = vpop.permute.xlu0 %7160
        %7164 = vset.pattern.permute.xlu0 0
        %7165 = vperm.xlu0 %7164, %v6519
        %v7166 = vpop.permute.xlu0 %7165
        %7169 = vset.pattern.permute.xlu0 0
        %7170 = vperm.xlu0 %7169, %v6520
        %v7171 = vpop.permute.xlu0 %7170
        %7174 = vset.pattern.permute.xlu0 0
        %7175 = vperm.xlu0 %7174, %v6521
        %v7176 = vpop.permute.xlu0 %7175
        %7179 = vset.pattern.permute.xlu0 0
        %7180 = vperm.xlu0 %7179, %v6522
        %v7181 = vpop.permute.xlu0 %7180
        %7184 = vset.pattern.permute.xlu0 0
        %7185 = vperm.xlu0 %7184, %v6523
        %v7186 = vpop.permute.xlu0 %7185
        %7189 = vset.pattern.permute.xlu0 0
        %7190 = vperm.xlu0 %7189, %v6524
        %v7191 = vpop.permute.xlu0 %7190
        %7194 = vset.pattern.permute.xlu0 0
        %7195 = vperm.xlu0 %7194, %v6525
        %v7196 = vpop.permute.xlu0 %7195
        %7199 = vset.pattern.permute.xlu0 0
        %7200 = vperm.xlu0 %7199, %v6526
        %v7201 = vpop.permute.xlu0 %7200
        %7204 = vset.pattern.permute.xlu0 0
        %7205 = vperm.xlu0 %7204, %v6527
        %v7206 = vpop.permute.xlu0 %7205
        %7209 = vset.pattern.permute.xlu0 0
        %7210 = vperm.xlu0 %7209, %v6528
        %v7211 = vpop.permute.xlu0 %7210
        %7214 = vset.pattern.permute.xlu0 0
        %7215 = vperm.xlu0 %7214, %v6529
        %v7216 = vpop.permute.xlu0 %7215
        %7219 = vset.pattern.permute.xlu0 0
        %7220 = vperm.xlu0 %7219, %v6530
        %v7221 = vpop.permute.xlu0 %7220
        %7224 = vset.pattern.permute.xlu0 0
        %7225 = vperm.xlu0 %7224, %v6531
        %v7226 = vpop.permute.xlu0 %7225
        %7229 = vset.pattern.permute.xlu0 0
        %7230 = vperm.xlu0 %7229, %v6532
        %v7231 = vpop.permute.xlu0 %7230
        %7234 = vset.pattern.permute.xlu0 0
        %7235 = vperm.xlu0 %7234, %v6533
        %v7236 = vpop.permute.xlu0 %7235
        %7239 = vset.pattern.permute.xlu0 0
        %7240 = vperm.xlu0 %7239, %v6534
        %v7241 = vpop.permute.xlu0 %7240
        %7244 = vset.pattern.permute.xlu0 0
        %7245 = vperm.xlu0 %7244, %v6535
        %v7246 = vpop.permute.xlu0 %7245
        %7249 = vset.pattern.permute.xlu0 0
        %7250 = vperm.xlu0 %7249, %v6536
        %v7251 = vpop.permute.xlu0 %7250
        %7254 = vset.pattern.permute.xlu0 0
        %7255 = vperm.xlu0 %7254, %v6537
        %v7256 = vpop.permute.xlu0 %7255
        %v7258 = vadd.f32 %v6250, %v6541
        %v7259 = vadd.f32 %v6251, %v6546
        %v7260 = vadd.f32 %v6252, %v6551
        %v7261 = vadd.f32 %v6253, %v6556
        %v7262 = vadd.f32 %v6254, %v6561
        %v7263 = vadd.f32 %v6255, %v6566
        %v7264 = vadd.f32 %v6256, %v6571
        %v7265 = vadd.f32 %v6257, %v6576
        %v7266 = vadd.f32 %v6258, %v6581
        %v7267 = vadd.f32 %v6259, %v6586
        %v7268 = vadd.f32 %v6260, %v6591
        %v7269 = vadd.f32 %v6261, %v6596
        %v7270 = vadd.f32 %v6262, %v6601
        %v7271 = vadd.f32 %v6263, %v6606
        %v7272 = vadd.f32 %v6264, %v6611
        %v7273 = vadd.f32 %v6265, %v6616
        %v7274 = vadd.f32 %v6266, %v6621
        %v7275 = vadd.f32 %v6267, %v6626
        %v7276 = vadd.f32 %v6268, %v6631
        %v7277 = vadd.f32 %v6269, %v6636
        %v7278 = vadd.f32 %v6270, %v6641
        %v7279 = vadd.f32 %v6271, %v6646
        %v7280 = vadd.f32 %v6272, %v6651
        %v7281 = vadd.f32 %v6273, %v6656
        %v7282 = vadd.f32 %v6274, %v6661
        %v7283 = vadd.f32 %v6275, %v6666
        %v7284 = vadd.f32 %v6276, %v6671
        %v7285 = vadd.f32 %v6277, %v6676
        %v7286 = vadd.f32 %v6278, %v6681
        %v7287 = vadd.f32 %v6279, %v6686
        %v7288 = vadd.f32 %v6280, %v6691
        %v7289 = vadd.f32 %v6281, %v6696
        %v7290 = vadd.f32 %v6282, %v6701
        %v7291 = vadd.f32 %v6283, %v6706
        %v7292 = vadd.f32 %v6284, %v6711
        %v7293 = vadd.f32 %v6285, %v6716
        %v7294 = vadd.f32 %v6286, %v6721
        %v7295 = vadd.f32 %v6287, %v6726
        %v7296 = vadd.f32 %v6288, %v6731
        %v7297 = vadd.f32 %v6289, %v6736
        %v7298 = vadd.f32 %v6290, %v6741
        %v7299 = vadd.f32 %v6291, %v6746
        %v7300 = vadd.f32 %v6292, %v6751
        %v7301 = vadd.f32 %v6293, %v6756
        %v7302 = vadd.f32 %v6294, %v6761
        %v7303 = vadd.f32 %v6295, %v6766
        %v7304 = vadd.f32 %v6296, %v6771
        %v7305 = vadd.f32 %v6297, %v6776
        %v7306 = vadd.f32 %v6298, %v6781
        %v7307 = vadd.f32 %v6299, %v6786
        %v7308 = vadd.f32 %v6300, %v6791
        %v7309 = vadd.f32 %v6301, %v6796
        %v7310 = vadd.f32 %v6302, %v6801
        %v7311 = vadd.f32 %v6303, %v6806
        %v7312 = vadd.f32 %v6304, %v6811
        %v7313 = vadd.f32 %v6305, %v6816
        %v7314 = vadd.f32 %v6306, %v6821
        %v7315 = vadd.f32 %v6307, %v6826
        %v7316 = vadd.f32 %v6308, %v6831
        %v7317 = vadd.f32 %v6309, %v6836
        %v7318 = vadd.f32 %v6310, %v6841
        %v7319 = vadd.f32 %v6311, %v6846
        %v7320 = vadd.f32 %v6312, %v6851
        %v7321 = vadd.f32 %v6313, %v6856
        %v7322 = vadd.f32 %v6314, %v6861
        %v7323 = vadd.f32 %v6315, %v6866
        %v7324 = vadd.f32 %v6316, %v6871
        %v7325 = vadd.f32 %v6317, %v6876
        %v7326 = vadd.f32 %v6318, %v6881
        %v7327 = vadd.f32 %v6319, %v6886
        %v7328 = vadd.f32 %v6320, %v6891
        %v7329 = vadd.f32 %v6321, %v6896
        %v7330 = vadd.f32 %v6322, %v6901
        %v7331 = vadd.f32 %v6323, %v6906
        %v7332 = vadd.f32 %v6324, %v6911
        %v7333 = vadd.f32 %v6325, %v6916
        %v7334 = vadd.f32 %v6326, %v6921
        %v7335 = vadd.f32 %v6327, %v6926
        %v7336 = vadd.f32 %v6328, %v6931
        %v7337 = vadd.f32 %v6329, %v6936
        %v7338 = vadd.f32 %v6330, %v6941
        %v7339 = vadd.f32 %v6331, %v6946
        %v7340 = vadd.f32 %v6332, %v6951
        %v7341 = vadd.f32 %v6333, %v6956
        %v7342 = vadd.f32 %v6334, %v6961
        %v7343 = vadd.f32 %v6335, %v6966
        %v7344 = vadd.f32 %v6336, %v6971
        %v7345 = vadd.f32 %v6337, %v6976
        %v7346 = vadd.f32 %v6338, %v6981
        %v7347 = vadd.f32 %v6339, %v6986
        %v7348 = vadd.f32 %v6340, %v6991
        %v7349 = vadd.f32 %v6341, %v6996
        %v7350 = vadd.f32 %v6342, %v7001
        %v7351 = vadd.f32 %v6343, %v7006
        %v7352 = vadd.f32 %v6344, %v7011
        %v7353 = vadd.f32 %v6345, %v7016
        %v7354 = vadd.f32 %v6346, %v7021
        %v7355 = vadd.f32 %v6347, %v7026
        %v7356 = vadd.f32 %v6348, %v7031
        %v7357 = vadd.f32 %v6349, %v7036
        %v7358 = vadd.f32 %v6350, %v7041
        %v7359 = vadd.f32 %v6351, %v7046
        %v7360 = vadd.f32 %v6352, %v7051
        %v7361 = vadd.f32 %v6353, %v7056
        %v7362 = vadd.f32 %v6354, %v7061
        %v7363 = vadd.f32 %v6355, %v7066
        %v7364 = vadd.f32 %v6356, %v7071
        %v7365 = vadd.f32 %v6357, %v7076
        %v7366 = vadd.f32 %v6358, %v7081
        %v7367 = vadd.f32 %v6359, %v7086
        %v7368 = vadd.f32 %v6360, %v7091
        %v7369 = vadd.f32 %v6361, %v7096
        %v7370 = vadd.f32 %v6362, %v7101
        %v7371 = vadd.f32 %v6363, %v7106
        %v7372 = vadd.f32 %v6364, %v7111
        %v7373 = vadd.f32 %v6365, %v7116
        %v7374 = vadd.f32 %v6366, %v7121
        %v7375 = vadd.f32 %v6367, %v7126
        %v7376 = vadd.f32 %v6368, %v7131
        %v7377 = vadd.f32 %v6369, %v7136
        %v7378 = vadd.f32 %v6370, %v7141
        %v7379 = vadd.f32 %v6371, %v7146
        %v7380 = vadd.f32 %v6372, %v7151
        %v7381 = vadd.f32 %v6373, %v7156
        %v7382 = vadd.f32 %v6374, %v7161
        %v7383 = vadd.f32 %v6375, %v7166
        %v7384 = vadd.f32 %v6376, %v7171
        %v7385 = vadd.f32 %v6377, %v7176
        %v7386 = vadd.f32 %v6378, %v7181
        %v7387 = vadd.f32 %v6379, %v7186
        %v7388 = vadd.f32 %v6380, %v7191
        %v7389 = vadd.f32 %v6381, %v7196
        %v7390 = vadd.f32 %v6382, %v7201
        %v7391 = vadd.f32 %v6383, %v7206
        %v7392 = vadd.f32 %v6384, %v7211
        %v7393 = vadd.f32 %v6385, %v7216
        %v7394 = vadd.f32 %v6386, %v7221
        %v7395 = vadd.f32 %v6387, %v7226
        %v7396 = vadd.f32 %v6388, %v7231
        %v7397 = vadd.f32 %v6389, %v7236
        %v7398 = vadd.f32 %v6390, %v7241
        %v7399 = vadd.f32 %v6391, %v7246
        %v7400 = vadd.f32 %v6392, %v7251
        %v7401 = vadd.f32 %v6393, %v7256
        %7402 = vst.msk [vmem:[%s292] sm:$0xff] %vm2217, %v7258
        %7403 = vst.msk [vmem:[%s292 + $0x8] sm:$0xff] %vm2217, %v7259
        %7404 = vst.msk [vmem:[%s292 + $0x10] sm:$0xff] %vm2217, %v7260
        %7405 = vst.msk [vmem:[%s292 + $0x18] sm:$0xff] %vm2217, %v7261
        %7406 = vst.msk [vmem:[%s292 + $0x20] sm:$0xff] %vm2217, %v7262
        %7407 = vst.msk [vmem:[%s292 + $0x28] sm:$0xff] %vm2217, %v7263
        %7408 = vst.msk [vmem:[%s292 + $0x30] sm:$0xff] %vm2217, %v7264
        %7409 = vst.msk [vmem:[%s292 + $0x38] sm:$0xff] %vm2217, %v7265
        %7410 = vst.msk [vmem:[%s292 + $0x40] sm:$0xff] %vm2217, %v7266
        %7411 = vst.msk [vmem:[%s292 + $0x48] sm:$0xff] %vm2217, %v7267
        %7412 = vst.msk [vmem:[%s292 + $0x50] sm:$0xff] %vm2217, %v7268
        %7413 = vst.msk [vmem:[%s292 + $0x58] sm:$0xff] %vm2217, %v7269
        %7414 = vst.msk [vmem:[%s292 + $0x60] sm:$0xff] %vm2217, %v7270
        %7415 = vst.msk [vmem:[%s292 + $0x68] sm:$0xff] %vm2217, %v7271
        %7416 = vst.msk [vmem:[%s292 + $0x70] sm:$0xff] %vm2217, %v7272
        %7417 = vst.msk [vmem:[%s292 + $0x78] sm:$0xff] %vm2217, %v7273
        %7418 = vst.msk [vmem:[%s292 + $0x80] sm:$0xff] %vm2217, %v7274
        %7419 = vst.msk [vmem:[%s292 + $0x88] sm:$0xff] %vm2217, %v7275
        %7420 = vst.msk [vmem:[%s292 + $0x90] sm:$0xff] %vm2217, %v7276
        %7421 = vst.msk [vmem:[%s292 + $0x98] sm:$0xff] %vm2217, %v7277
        %7422 = vst.msk [vmem:[%s292 + $0xa0] sm:$0xff] %vm2217, %v7278
        %7423 = vst.msk [vmem:[%s292 + $0xa8] sm:$0xff] %vm2217, %v7279
        %7424 = vst.msk [vmem:[%s292 + $0xb0] sm:$0xff] %vm2217, %v7280
        %7425 = vst.msk [vmem:[%s292 + $0xb8] sm:$0xff] %vm2217, %v7281
        %7426 = vst.msk [vmem:[%s292 + $0xc0] sm:$0xff] %vm2217, %v7282
        %7427 = vst.msk [vmem:[%s292 + $0xc8] sm:$0xff] %vm2217, %v7283
        %7428 = vst.msk [vmem:[%s292 + $0xd0] sm:$0xff] %vm2217, %v7284
        %7429 = vst.msk [vmem:[%s292 + $0xd8] sm:$0xff] %vm2217, %v7285
        %7430 = vst.msk [vmem:[%s292 + $0xe0] sm:$0xff] %vm2217, %v7286
        %7431 = vst.msk [vmem:[%s292 + $0xe8] sm:$0xff] %vm2217, %v7287
        %7432 = vst.msk [vmem:[%s292 + $0xf0] sm:$0xff] %vm2217, %v7288
        %7433 = vst.msk [vmem:[%s292 + $0xf8] sm:$0xff] %vm2217, %v7289
        %7434 = vst.msk [vmem:[%s292 + $0x100] sm:$0xff] %vm2217, %v7290
        %7435 = vst.msk [vmem:[%s292 + $0x108] sm:$0xff] %vm2217, %v7291
        %7436 = vst.msk [vmem:[%s292 + $0x110] sm:$0xff] %vm2217, %v7292
        %7437 = vst.msk [vmem:[%s292 + $0x118] sm:$0xff] %vm2217, %v7293
        %7438 = vst.msk [vmem:[%s292 + $0x120] sm:$0xff] %vm2217, %v7294
        %7439 = vst.msk [vmem:[%s292 + $0x128] sm:$0xff] %vm2217, %v7295
        %7440 = vst.msk [vmem:[%s292 + $0x130] sm:$0xff] %vm2217, %v7296
        %7441 = vst.msk [vmem:[%s292 + $0x138] sm:$0xff] %vm2217, %v7297
        %7442 = vst.msk [vmem:[%s292 + $0x140] sm:$0xff] %vm2217, %v7298
        %7443 = vst.msk [vmem:[%s292 + $0x148] sm:$0xff] %vm2217, %v7299
        %7444 = vst.msk [vmem:[%s292 + $0x150] sm:$0xff] %vm2217, %v7300
        %7445 = vst.msk [vmem:[%s292 + $0x158] sm:$0xff] %vm2217, %v7301
        %7446 = vst.msk [vmem:[%s292 + $0x160] sm:$0xff] %vm2217, %v7302
        %7447 = vst.msk [vmem:[%s292 + $0x168] sm:$0xff] %vm2217, %v7303
        %7448 = vst.msk [vmem:[%s292 + $0x170] sm:$0xff] %vm2217, %v7304
        %7449 = vst.msk [vmem:[%s292 + $0x178] sm:$0xff] %vm2217, %v7305
        %7450 = vst.msk [vmem:[%s292 + $0x180] sm:$0xff] %vm2217, %v7306
        %7451 = vst.msk [vmem:[%s292 + $0x188] sm:$0xff] %vm2217, %v7307
        %7452 = vst.msk [vmem:[%s292 + $0x190] sm:$0xff] %vm2217, %v7308
        %7453 = vst.msk [vmem:[%s292 + $0x198] sm:$0xff] %vm2217, %v7309
        %7454 = vst.msk [vmem:[%s292 + $0x1a0] sm:$0xff] %vm2217, %v7310
        %7455 = vst.msk [vmem:[%s292 + $0x1a8] sm:$0xff] %vm2217, %v7311
        %7456 = vst.msk [vmem:[%s292 + $0x1b0] sm:$0xff] %vm2217, %v7312
        %7457 = vst.msk [vmem:[%s292 + $0x1b8] sm:$0xff] %vm2217, %v7313
        %7458 = vst.msk [vmem:[%s292 + $0x1c0] sm:$0xff] %vm2217, %v7314
        %7459 = vst.msk [vmem:[%s292 + $0x1c8] sm:$0xff] %vm2217, %v7315
        %7460 = vst.msk [vmem:[%s292 + $0x1d0] sm:$0xff] %vm2217, %v7316
        %7461 = vst.msk [vmem:[%s292 + $0x1d8] sm:$0xff] %vm2217, %v7317
        %7462 = vst.msk [vmem:[%s292 + $0x1e0] sm:$0xff] %vm2217, %v7318
        %7463 = vst.msk [vmem:[%s292 + $0x1e8] sm:$0xff] %vm2217, %v7319
        %7464 = vst.msk [vmem:[%s292 + $0x1f0] sm:$0xff] %vm2217, %v7320
        %7465 = vst.msk [vmem:[%s292 + $0x1f8] sm:$0xff] %vm2217, %v7321
        %7466 = vst.msk [vmem:[%s292 + $0x200] sm:$0xff] %vm2217, %v7322
        %7467 = vst.msk [vmem:[%s292 + $0x208] sm:$0xff] %vm2217, %v7323
        %7468 = vst.msk [vmem:[%s292 + $0x210] sm:$0xff] %vm2217, %v7324
        %7469 = vst.msk [vmem:[%s292 + $0x218] sm:$0xff] %vm2217, %v7325
        %7470 = vst.msk [vmem:[%s292 + $0x220] sm:$0xff] %vm2217, %v7326
        %7471 = vst.msk [vmem:[%s292 + $0x228] sm:$0xff] %vm2217, %v7327
        %7472 = vst.msk [vmem:[%s292 + $0x230] sm:$0xff] %vm2217, %v7328
        %7473 = vst.msk [vmem:[%s292 + $0x238] sm:$0xff] %vm2217, %v7329
        %7474 = vst.msk [vmem:[%s292 + $0x240] sm:$0xff] %vm2217, %v7330
        %7475 = vst.msk [vmem:[%s292 + $0x248] sm:$0xff] %vm2217, %v7331
        %7476 = vst.msk [vmem:[%s292 + $0x250] sm:$0xff] %vm2217, %v7332
        %7477 = vst.msk [vmem:[%s292 + $0x258] sm:$0xff] %vm2217, %v7333
        %7478 = vst.msk [vmem:[%s292 + $0x260] sm:$0xff] %vm2217, %v7334
        %7479 = vst.msk [vmem:[%s292 + $0x268] sm:$0xff] %vm2217, %v7335
        %7480 = vst.msk [vmem:[%s292 + $0x270] sm:$0xff] %vm2217, %v7336
        %7481 = vst.msk [vmem:[%s292 + $0x278] sm:$0xff] %vm2217, %v7337
        %7482 = vst.msk [vmem:[%s292 + $0x280] sm:$0xff] %vm2217, %v7338
        %7483 = vst.msk [vmem:[%s292 + $0x288] sm:$0xff] %vm2217, %v7339
        %7484 = vst.msk [vmem:[%s292 + $0x290] sm:$0xff] %vm2217, %v7340
        %7485 = vst.msk [vmem:[%s292 + $0x298] sm:$0xff] %vm2217, %v7341
        %7486 = vst.msk [vmem:[%s292 + $0x2a0] sm:$0xff] %vm2217, %v7342
        %7487 = vst.msk [vmem:[%s292 + $0x2a8] sm:$0xff] %vm2217, %v7343
        %7488 = vst.msk [vmem:[%s292 + $0x2b0] sm:$0xff] %vm2217, %v7344
        %7489 = vst.msk [vmem:[%s292 + $0x2b8] sm:$0xff] %vm2217, %v7345
        %7490 = vst.msk [vmem:[%s292 + $0x2c0] sm:$0xff] %vm2217, %v7346
        %7491 = vst.msk [vmem:[%s292 + $0x2c8] sm:$0xff] %vm2217, %v7347
        %7492 = vst.msk [vmem:[%s292 + $0x2d0] sm:$0xff] %vm2217, %v7348
        %7493 = vst.msk [vmem:[%s292 + $0x2d8] sm:$0xff] %vm2217, %v7349
        %7494 = vst.msk [vmem:[%s292 + $0x2e0] sm:$0xff] %vm2217, %v7350
        %7495 = vst.msk [vmem:[%s292 + $0x2e8] sm:$0xff] %vm2217, %v7351
        %7496 = vst.msk [vmem:[%s292 + $0x2f0] sm:$0xff] %vm2217, %v7352
        %7497 = vst.msk [vmem:[%s292 + $0x2f8] sm:$0xff] %vm2217, %v7353
        %7498 = vst.msk [vmem:[%s292 + $0x300] sm:$0xff] %vm2217, %v7354
        %7499 = vst.msk [vmem:[%s292 + $0x308] sm:$0xff] %vm2217, %v7355
        %7500 = vst.msk [vmem:[%s292 + $0x310] sm:$0xff] %vm2217, %v7356
        %7501 = vst.msk [vmem:[%s292 + $0x318] sm:$0xff] %vm2217, %v7357
        %7502 = vst.msk [vmem:[%s292 + $0x320] sm:$0xff] %vm2217, %v7358
        %7503 = vst.msk [vmem:[%s292 + $0x328] sm:$0xff] %vm2217, %v7359
        %7504 = vst.msk [vmem:[%s292 + $0x330] sm:$0xff] %vm2217, %v7360
        %7505 = vst.msk [vmem:[%s292 + $0x338] sm:$0xff] %vm2217, %v7361
        %7506 = vst.msk [vmem:[%s292 + $0x340] sm:$0xff] %vm2217, %v7362
        %7507 = vst.msk [vmem:[%s292 + $0x348] sm:$0xff] %vm2217, %v7363
        %7508 = vst.msk [vmem:[%s292 + $0x350] sm:$0xff] %vm2217, %v7364
        %7509 = vst.msk [vmem:[%s292 + $0x358] sm:$0xff] %vm2217, %v7365
        %7510 = vst.msk [vmem:[%s292 + $0x360] sm:$0xff] %vm2217, %v7366
        %7511 = vst.msk [vmem:[%s292 + $0x368] sm:$0xff] %vm2217, %v7367
        %7512 = vst.msk [vmem:[%s292 + $0x370] sm:$0xff] %vm2217, %v7368
        %7513 = vst.msk [vmem:[%s292 + $0x378] sm:$0xff] %vm2217, %v7369
        %7514 = vst.msk [vmem:[%s292 + $0x380] sm:$0xff] %vm2217, %v7370
        %7515 = vst.msk [vmem:[%s292 + $0x388] sm:$0xff] %vm2217, %v7371
        %7516 = vst.msk [vmem:[%s292 + $0x390] sm:$0xff] %vm2217, %v7372
        %7517 = vst.msk [vmem:[%s292 + $0x398] sm:$0xff] %vm2217, %v7373
        %7518 = vst.msk [vmem:[%s292 + $0x3a0] sm:$0xff] %vm2217, %v7374
        %7519 = vst.msk [vmem:[%s292 + $0x3a8] sm:$0xff] %vm2217, %v7375
        %7520 = vst.msk [vmem:[%s292 + $0x3b0] sm:$0xff] %vm2217, %v7376
        %7521 = vst.msk [vmem:[%s292 + $0x3b8] sm:$0xff] %vm2217, %v7377
        %7522 = vst.msk [vmem:[%s292 + $0x3c0] sm:$0xff] %vm2217, %v7378
        %7523 = vst.msk [vmem:[%s292 + $0x3c8] sm:$0xff] %vm2217, %v7379
        %7524 = vst.msk [vmem:[%s292 + $0x3d0] sm:$0xff] %vm2217, %v7380
        %7525 = vst.msk [vmem:[%s292 + $0x3d8] sm:$0xff] %vm2217, %v7381
        %7526 = vst.msk [vmem:[%s292 + $0x3e0] sm:$0xff] %vm2217, %v7382
        %7527 = vst.msk [vmem:[%s292 + $0x3e8] sm:$0xff] %vm2217, %v7383
        %7528 = vst.msk [vmem:[%s292 + $0x3f0] sm:$0xff] %vm2217, %v7384
        %7529 = vst.msk [vmem:[%s292 + $0x3f8] sm:$0xff] %vm2217, %v7385
        %7530 = vst.msk [vmem:[%s292 + $0x400] sm:$0xff] %vm2217, %v7386
        %7531 = vst.msk [vmem:[%s292 + $0x408] sm:$0xff] %vm2217, %v7387
        %7532 = vst.msk [vmem:[%s292 + $0x410] sm:$0xff] %vm2217, %v7388
        %7533 = vst.msk [vmem:[%s292 + $0x418] sm:$0xff] %vm2217, %v7389
        %7534 = vst.msk [vmem:[%s292 + $0x420] sm:$0xff] %vm2217, %v7390
        %7535 = vst.msk [vmem:[%s292 + $0x428] sm:$0xff] %vm2217, %v7391
        %7536 = vst.msk [vmem:[%s292 + $0x430] sm:$0xff] %vm2217, %v7392
        %7537 = vst.msk [vmem:[%s292 + $0x438] sm:$0xff] %vm2217, %v7393
        %7538 = vst.msk [vmem:[%s292 + $0x440] sm:$0xff] %vm2217, %v7394
        %7539 = vst.msk [vmem:[%s292 + $0x448] sm:$0xff] %vm2217, %v7395
        %7540 = vst.msk [vmem:[%s292 + $0x450] sm:$0xff] %vm2217, %v7396
        %7541 = vst.msk [vmem:[%s292 + $0x458] sm:$0xff] %vm2217, %v7397
        %7542 = vst.msk [vmem:[%s292 + $0x460] sm:$0xff] %vm2217, %v7398
        %7543 = vst.msk [vmem:[%s292 + $0x468] sm:$0xff] %vm2217, %v7399
        %7544 = vst.msk [vmem:[%s292 + $0x470] sm:$0xff] %vm2217, %v7400
        %7545 = vst.msk [vmem:[%s292 + $0x478] sm:$0xff] %vm2217, %v7401
        %s7546 = smul.u32 144, %s19
        %p7547 = scmp.lt.s32.totalorder %s7546, 287
        %s7548 = scalar_select %p7547, %s7546, 287
        %s7549 = smul.addr %s7548, 8
        %s7550 = scalar_lea.vmem %s5, %s7549
        // Predicated region
        $region45: #{tpu_custom_call.1} parent=39 // pred_check
          %p7551 = pneg %p157
        $region46: #{tpu_custom_call.1} parent=39 // pred_check_branch
          %7553 = sbr.rel (%p7551) target = $region48
        $region47: #{tpu_custom_call.1} parent=39 // pred_region
          %s7554 = smul.u32 144, %s19
        $region48: #{tpu_custom_call.1} parent=39 // pred_fallthru
          _
      $region40: #{tpu_custom_call.1} parent=5 // pred_fallthru
        _
      %p7555 = scmp.le.s32.totalorder 2, %s14
      // Predicated region
      $region49: #{tpu_custom_call.1} parent=5 // pred_check
        %p7556 = pneg %p7555
      $region50: #{tpu_custom_call.1} parent=5 // pred_check_branch
        %7558 = sbr.rel (%p7556) target = $region52
      $region51: #{tpu_custom_call.1} parent=5 // pred_region
        %s7559 = ssub.s32 %s14, 2
        // Predicated region
        $region53: #{tpu_custom_call.1} parent=51 // pred_check
          %p7560 = pneg %p163
        $region54: #{tpu_custom_call.1} parent=51 // pred_check_branch
          %7562 = sbr.rel (%p7560) target = $region56
        $region55: #{tpu_custom_call.1} parent=51 // pred_region
          %s7563 = smul.u32 144, %s20
          %p7564 = scmp.lt.s32.totalorder %s7563, 287
          %s7565 = scalar_select %p7564, %s7563, 287
          %s7566 = smul.addr %s7565, 8
          %s7567 = scalar_lea.vmem %s5, %s7566
        $region56: #{tpu_custom_call.1} parent=51 // pred_fallthru
          _
      $region52: #{tpu_custom_call.1} parent=5 // pred_fallthru
        _
    $region6: #{tpu_custom_call.1} parent=1 // loop_footer
      %s18 = sadd.s32 1, %s14
    $region7: #{tpu_custom_call.1} parent=1 // loop_footer_branch
      %13 = sbr.rel target = $region3
    $region8: #{tpu_custom_call.1} parent=1 // loop_exit
      _
    %7568 = vsyncpa [#allocation3], 1
    %s7569 = scalar_lea.sflag [#allocation3], 1
    %7570 = vsyncpa %s7569, 1

</llo_original>
